<compile_context>
chip_gen: v7x
topology: tpu7x:2x2x1
jax: 0.10.0
libtpu: 0.0.40
codegen_flags: <defaults>
</compile_context>

<pallas_src>
import jax
import jax.numpy as jnp
from jax.experimental import pallas as pl
from jax.experimental.pallas import tpu as pltpu

VOCAB = 100      # input_size (vocabulary size for nn.Embedding)
HIDDEN = 32      # hidden_size
SEQ = 8          # sequence length
BATCH = 2        # batch size


# --------------------------------------------------------------------------
# Kernel
# --------------------------------------------------------------------------
def _bigru_mlp_kernel(
    x_ref,          # (T*B, H)  embedded input, time-major flattened (row = t*B + b)
    w_ih0_ref,      # (2, 3, H, H)      layer-0 input->hidden, [dir, gate, in, out]
    w_hh_ref,       # (2, 2, 3, H, H)   hidden->hidden, [layer, dir, gate, in, out]
    w_ih1_ref,      # (2, 3, 2, H, H)   layer-1 input->hidden, [dir, gate, src_half, in, out]
    bias_ref,       # (2, 2, 4, 1, H)   [layer, dir, {r_comb, z_comb, b_in, b_hn}, 1, H]
    fc1w_ref,       # (2, H, 2H)        fc1 weight split per source half
    fc1b_ref,       # (1, 2H)
    fc2w_ref,       # (2H, 1)
    fc2b_ref,       # (1, 1)
    out_ref,        # (B, 1)            sigmoid output
    l0f_ref,        # VMEM scratch (T*B, H): layer-0 forward outputs
    l0b_ref,        # VMEM scratch (T*B, H): layer-0 backward outputs
):
    TB, H = x_ref.shape
    B = out_ref.shape[0]
    T = TB // B

    def dot(a, b):
        return jnp.dot(a, b, preferred_element_type=jnp.float32)

    def gru_step(h, gi_r, gi_z, gi_n, w_r, w_z, w_n, b_hn):
        # PyTorch GRU cell (gate order r, z, n). gi_* already include the
        # input projections and the hoistable biases.
        r = jax.nn.sigmoid(gi_r + dot(h, w_r))
        z = jax.nn.sigmoid(gi_z + dot(h, w_z))
        n = jnp.tanh(gi_n + r * (dot(h, w_n) + b_hn))
        return (1.0 - z) * n + z * h

    x = x_ref[...]                                   # (T*B, H)
    h0 = jnp.zeros((B, H), jnp.float32)

    # ----------------------- layer 0 -----------------------
    # Hoisted input projections: one (T*B,H)@(H,H) matmul per (dir, gate).
    gi0 = [[dot(x, w_ih0_ref[d, g]) + bias_ref[0, d, g] for g in range(3)]
           for d in range(2)]
    whh0 = [[w_hh_ref[0, d, g] for g in range(3)] for d in range(2)]
    bhn0 = [bias_ref[0, d, 3] for d in range(2)]

    hf, hb = h0, h0
    for i in range(T):                               # fully unrolled, fwd+bwd fused
        sf = i * B                                   # forward time index i
        sb = (T - 1 - i) * B                         # backward time index T-1-i
        hf = gru_step(hf,
                      gi0[0][0][sf:sf + B], gi0[0][1][sf:sf + B], gi0[0][2][sf:sf + B],
                      whh0[0][0], whh0[0][1], whh0[0][2], bhn0[0])
        hb = gru_step(hb,
                      gi0[1][0][sb:sb + B], gi0[1][1][sb:sb + B], gi0[1][2][sb:sb + B],
                      whh0[1][0], whh0[1][1], whh0[1][2], bhn0[1])
        l0f_ref[sf:sf + B, :] = hf
        l0b_ref[sb:sb + B, :] = hb

    # ----------------------- layer 1 -----------------------
    # Hoisted input projections from the layer-0 output scratch; the 2H-wide
    # input is handled as two split-weight accumulates (no lane concat).
    l0f = l0f_ref[...]                               # (T*B, H)
    l0b = l0b_ref[...]
    gi1 = [[dot(l0f, w_ih1_ref[d, g, 0]) + dot(l0b, w_ih1_ref[d, g, 1])
            + bias_ref[1, d, g] for g in range(3)] for d in range(2)]
    whh1 = [[w_hh_ref[1, d, g] for g in range(3)] for d in range(2)]
    bhn1 = [bias_ref[1, d, 3] for d in range(2)]

    hf, hb = h0, h0
    for i in range(T):
        sf = i * B
        sb = (T - 1 - i) * B
        hf = gru_step(hf,
                      gi1[0][0][sf:sf + B], gi1[0][1][sf:sf + B], gi1[0][2][sf:sf + B],
                      whh1[0][0], whh1[0][1], whh1[0][2], bhn1[0])
        hb = gru_step(hb,
                      gi1[1][0][sb:sb + B], gi1[1][1][sb:sb + B], gi1[1][2][sb:sb + B],
                      whh1[1][0], whh1[1][1], whh1[1][2], bhn1[1])

    # ----------------------- head -----------------------
    # feat = [hf | hb]; replaced by split fc1 weight (no lane concat).
    hidden = jax.nn.relu(dot(hf, fc1w_ref[0]) + dot(hb, fc1w_ref[1]) + fc1b_ref[...])
    logit = dot(hidden, fc2w_ref[...]) + fc2b_ref[...]
    out_ref[...] = jax.nn.sigmoid(logit)


# --------------------------------------------------------------------------
# Parameters: PyTorch-shaped init + host-side packing into kernel slabs
# --------------------------------------------------------------------------
def init_params(key, vocab=VOCAB, hidden=HIDDEN):
    """Deterministic synthetic parameters in PyTorch nn.GRU / nn.Linear layout."""
    H = hidden
    scale = 1.0 / jnp.sqrt(H)
    shapes = {
        "embedding": (vocab, H),
        # layer 0 (input size H), forward / reverse
        "w_ih_l0": (3 * H, H), "w_hh_l0": (3 * H, H), "b_ih_l0": (3 * H,), "b_hh_l0": (3 * H,),
        "w_ih_l0r": (3 * H, H), "w_hh_l0r": (3 * H, H), "b_ih_l0r": (3 * H,), "b_hh_l0r": (3 * H,),
        # layer 1 (input size 2H), forward / reverse
        "w_ih_l1": (3 * H, 2 * H), "w_hh_l1": (3 * H, H), "b_ih_l1": (3 * H,), "b_hh_l1": (3 * H,),
        "w_ih_l1r": (3 * H, 2 * H), "w_hh_l1r": (3 * H, H), "b_ih_l1r": (3 * H,), "b_hh_l1r": (3 * H,),
        # head
        "fc1_w": (2 * H, 2 * H), "fc1_b": (2 * H,),
        "fc2_w": (1, 2 * H), "fc2_b": (1,),
    }
    params = {}
    keys = jax.random.split(key, len(shapes))
    for k, (name, shp) in zip(keys, sorted(shapes.items())):
        params[name] = jax.random.uniform(
            k, shp, dtype=jnp.float32, minval=-scale, maxval=scale)
    return params


def pack_params(p, H):
    """Pack PyTorch-layout GRU/Linear params into per-gate, lane-aligned slabs."""

    def gates_t(w):                       # (3H, H) -> (3, H, H), transposed per gate
        return jnp.stack([w[g * H:(g + 1) * H, :].T for g in range(3)], axis=0)

    def gates_t_split(w):                 # (3H, 2H) -> (3, 2, H, H): per gate, per src half
        out = []
        for g in range(3):
            wg = w[g * H:(g + 1) * H, :]                      # (H, 2H)
            out.append(jnp.stack([wg[:, :H].T, wg[:, H:].T], axis=0))
        return jnp.stack(out, axis=0)

    def bias_pack(b_ih, b_hh):            # -> (4, 1, H): r_comb, z_comb, b_in, b_hn
        br = b_ih[0:H] + b_hh[0:H]
        bz = b_ih[H:2 * H] + b_hh[H:2 * H]
        bin_ = b_ih[2 * H:3 * H]
        bhn = b_hh[2 * H:3 * H]
        return jnp.stack([br, bz, bin_, bhn], axis=0)[:, None, :]

    w_ih0 = jnp.stack([gates_t(p["w_ih_l0"]), gates_t(p["w_ih_l0r"])], axis=0)
    w_hh = jnp.stack([
        jnp.stack([gates_t(p["w_hh_l0"]), gates_t(p["w_hh_l0r"])], axis=0),
        jnp.stack([gates_t(p["w_hh_l1"]), gates_t(p["w_hh_l1r"])], axis=0),
    ], axis=0)
    w_ih1 = jnp.stack([gates_t_split(p["w_ih_l1"]), gates_t_split(p["w_ih_l1r"])], axis=0)
    bias = jnp.stack([
        jnp.stack([bias_pack(p["b_ih_l0"], p["b_hh_l0"]),
                   bias_pack(p["b_ih_l0r"], p["b_hh_l0r"])], axis=0),
        jnp.stack([bias_pack(p["b_ih_l1"], p["b_hh_l1"]),
                   bias_pack(p["b_ih_l1r"], p["b_hh_l1r"])], axis=0),
    ], axis=0)

    fc1w_t = p["fc1_w"].T                                      # (2H_in, 2H_out)
    fc1w = jnp.stack([fc1w_t[:H, :], fc1w_t[H:, :]], axis=0)   # (2, H, 2H)
    fc1b = p["fc1_b"][None, :]                                 # (1, 2H)
    fc2w = p["fc2_w"].T                                        # (2H, 1)
    fc2b = p["fc2_b"][None, :]                                 # (1, 1)

    return dict(w_ih0=w_ih0, w_hh=w_hh, w_ih1=w_ih1, bias=bias,
                fc1w=fc1w, fc1b=fc1b, fc2w=fc2w, fc2b=fc2b)


# --------------------------------------------------------------------------
# Wrapper
# --------------------------------------------------------------------------
def disaster_tweets_bigru(tokens, params):
    """tokens: (B, T) int32 -> probabilities (B,) float32."""
    B, T = tokens.shape
    H = params["embedding"].shape[1]
    packed = pack_params(params, H)

    # Embedding gather (glue, plain JAX); time-major flattened layout for the
    # hoisted batched input projections inside the kernel.
    emb = jnp.take(params["embedding"], tokens, axis=0)            # (B, T, H)
    x = jnp.transpose(emb, (1, 0, 2)).reshape(T * B, H).astype(jnp.float32)

    args = [x, packed["w_ih0"], packed["w_hh"], packed["w_ih1"], packed["bias"],
            packed["fc1w"], packed["fc1b"], packed["fc2w"], packed["fc2b"]]
    vmem = pl.BlockSpec(memory_space=pltpu.MemorySpace.VMEM)

    out = pl.pallas_call(
        _bigru_mlp_kernel,
        out_shape=jax.ShapeDtypeStruct((B, 1), jnp.float32),
        in_specs=[vmem] * len(args),
        out_specs=vmem,
        scratch_shapes=[
            pltpu.VMEM((T * B, H), jnp.float32),   # layer-0 forward outputs
            pltpu.VMEM((T * B, H), jnp.float32),   # layer-0 backward outputs
        ],
    )(*args)
    return out.reshape(-1)


if __name__ == "__main__":
    key = jax.random.PRNGKey(0)
    k_tok, k_par = jax.random.split(key)

    tokens = jax.random.randint(k_tok, (BATCH, SEQ), 0, VOCAB, dtype=jnp.int32)
    params = init_params(k_par)

    fwd = jax.jit(disaster_tweets_bigru)
    out = fwd(tokens, params)
    out = jax.block_until_ready(out)

    assert out.shape == (BATCH,), out.shape
    assert bool(jnp.all(jnp.isfinite(out)))
    assert bool(jnp.all((out >= 0.0) & (out <= 1.0)))
    print("KERNEL_OK")
</pallas_src>

<mosaic_0001>
module attributes {stable_mosaic.version = 11 : i64} {
  func.func @_bigru_mlp_kernel(%arg0: memref<16x32xf32, #tpu.memory_space<vmem>>, %arg1: memref<2x3x32x32xf32, #tpu.memory_space<vmem>>, %arg2: memref<2x2x3x32x32xf32, #tpu.memory_space<vmem>>, %arg3: memref<2x3x2x32x32xf32, #tpu.memory_space<vmem>>, %arg4: memref<2x2x4x1x32xf32, #tpu.memory_space<vmem>>, %arg5: memref<2x32x64xf32, #tpu.memory_space<vmem>>, %arg6: memref<1x64xf32, #tpu.memory_space<vmem>>, %arg7: memref<64x1xf32, #tpu.memory_space<vmem>>, %arg8: memref<1x1xf32, #tpu.memory_space<vmem>>, %arg9: memref<2x1xf32, #tpu.memory_space<vmem>>, %arg10: memref<16x32xf32, #tpu.memory_space<vmem>>, %arg11: memref<16x32xf32, #tpu.memory_space<vmem>>) attributes {dimension_semantics = [], scalar_prefetch = 0 : i64, scratch_operands = 2 : i64, tpu.core_type = #tpu.core_type<tc>} {
    %c0 = arith.constant 0 : index
    %c0_0 = arith.constant 0 : index
    %0 = vector.load %arg0[%c0, %c0_0] : memref<16x32xf32, #tpu.memory_space<vmem>>, vector<16x32xf32>
    %cst = arith.constant 0.000000e+00 : f32
    %1 = vector.broadcast %cst : f32 to vector<2x32xf32>
    %c0_1 = arith.constant 0 : index
    %c0_2 = arith.constant 0 : index
    %c0_3 = arith.constant 0 : index
    %c0_4 = arith.constant 0 : index
    %2 = vector.load %arg1[%c0_1, %c0_2, %c0_3, %c0_4] : memref<2x3x32x32xf32, #tpu.memory_space<vmem>>, vector<1x1x32x32xf32>
    %3 = vector.shape_cast %2 : vector<1x1x32x32xf32> to vector<32x32xf32>
    %cst_5 = arith.constant dense<0.000000e+00> : vector<16x32xf32>
    %4 = tpu.matmul %0, %3, %cst_5 {dimension_numbers = #tpu.dot_dimension_numbers<[1], [0], [0], [1], [0, 0, 1, 1], [], []>} : vector<16x32xf32>, vector<32x32xf32>, vector<16x32xf32> -> vector<16x32xf32>
    %c0_6 = arith.constant 0 : index
    %c0_7 = arith.constant 0 : index
    %c0_8 = arith.constant 0 : index
    %c0_9 = arith.constant 0 : index
    %c0_10 = arith.constant 0 : index
    %5 = vector.load %arg4[%c0_6, %c0_7, %c0_8, %c0_9, %c0_10] : memref<2x2x4x1x32xf32, #tpu.memory_space<vmem>>, vector<1x1x1x1x32xf32>
    %6 = vector.shape_cast %5 : vector<1x1x1x1x32xf32> to vector<1x32xf32>
    %7 = vector.broadcast %6 : vector<1x32xf32> to vector<16x32xf32>
    %8 = arith.addf %4, %7 : vector<16x32xf32>
    %c0_11 = arith.constant 0 : index
    %c1 = arith.constant 1 : index
    %c0_12 = arith.constant 0 : index
    %c0_13 = arith.constant 0 : index
    %9 = vector.load %arg1[%c0_11, %c1, %c0_12, %c0_13] : memref<2x3x32x32xf32, #tpu.memory_space<vmem>>, vector<1x1x32x32xf32>
    %10 = vector.shape_cast %9 : vector<1x1x32x32xf32> to vector<32x32xf32>
    %cst_14 = arith.constant dense<0.000000e+00> : vector<16x32xf32>
    %11 = tpu.matmul %0, %10, %cst_14 {dimension_numbers = #tpu.dot_dimension_numbers<[1], [0], [0], [1], [0, 0, 1, 1], [], []>} : vector<16x32xf32>, vector<32x32xf32>, vector<16x32xf32> -> vector<16x32xf32>
    %c0_15 = arith.constant 0 : index
    %c0_16 = arith.constant 0 : index
    %c1_17 = arith.constant 1 : index
    %c0_18 = arith.constant 0 : index
    %c0_19 = arith.constant 0 : index
    %12 = vector.load %arg4[%c0_15, %c0_16, %c1_17, %c0_18, %c0_19] : memref<2x2x4x1x32xf32, #tpu.memory_space<vmem>>, vector<1x1x1x1x32xf32>
    %13 = vector.shape_cast %12 : vector<1x1x1x1x32xf32> to vector<1x32xf32>
    %14 = vector.broadcast %13 : vector<1x32xf32> to vector<16x32xf32>
    %15 = arith.addf %11, %14 : vector<16x32xf32>
    %c0_20 = arith.constant 0 : index
    %c2 = arith.constant 2 : index
    %c0_21 = arith.constant 0 : index
    %c0_22 = arith.constant 0 : index
    %16 = vector.load %arg1[%c0_20, %c2, %c0_21, %c0_22] : memref<2x3x32x32xf32, #tpu.memory_space<vmem>>, vector<1x1x32x32xf32>
    %17 = vector.shape_cast %16 : vector<1x1x32x32xf32> to vector<32x32xf32>
    %cst_23 = arith.constant dense<0.000000e+00> : vector<16x32xf32>
    %18 = tpu.matmul %0, %17, %cst_23 {dimension_numbers = #tpu.dot_dimension_numbers<[1], [0], [0], [1], [0, 0, 1, 1], [], []>} : vector<16x32xf32>, vector<32x32xf32>, vector<16x32xf32> -> vector<16x32xf32>
    %c0_24 = arith.constant 0 : index
    %c0_25 = arith.constant 0 : index
    %c2_26 = arith.constant 2 : index
    %c0_27 = arith.constant 0 : index
    %c0_28 = arith.constant 0 : index
    %19 = vector.load %arg4[%c0_24, %c0_25, %c2_26, %c0_27, %c0_28] : memref<2x2x4x1x32xf32, #tpu.memory_space<vmem>>, vector<1x1x1x1x32xf32>
    %20 = vector.shape_cast %19 : vector<1x1x1x1x32xf32> to vector<1x32xf32>
    %21 = vector.broadcast %20 : vector<1x32xf32> to vector<16x32xf32>
    %22 = arith.addf %18, %21 : vector<16x32xf32>
    %c1_29 = arith.constant 1 : index
    %c0_30 = arith.constant 0 : index
    %c0_31 = arith.constant 0 : index
    %c0_32 = arith.constant 0 : index
    %23 = vector.load %arg1[%c1_29, %c0_30, %c0_31, %c0_32] : memref<2x3x32x32xf32, #tpu.memory_space<vmem>>, vector<1x1x32x32xf32>
    %24 = vector.shape_cast %23 : vector<1x1x32x32xf32> to vector<32x32xf32>
    %cst_33 = arith.constant dense<0.000000e+00> : vector<16x32xf32>
    %25 = tpu.matmul %0, %24, %cst_33 {dimension_numbers = #tpu.dot_dimension_numbers<[1], [0], [0], [1], [0, 0, 1, 1], [], []>} : vector<16x32xf32>, vector<32x32xf32>, vector<16x32xf32> -> vector<16x32xf32>
    %c0_34 = arith.constant 0 : index
    %c1_35 = arith.constant 1 : index
    %c0_36 = arith.constant 0 : index
    %c0_37 = arith.constant 0 : index
    %c0_38 = arith.constant 0 : index
    %26 = vector.load %arg4[%c0_34, %c1_35, %c0_36, %c0_37, %c0_38] : memref<2x2x4x1x32xf32, #tpu.memory_space<vmem>>, vector<1x1x1x1x32xf32>
    %27 = vector.shape_cast %26 : vector<1x1x1x1x32xf32> to vector<1x32xf32>
    %28 = vector.broadcast %27 : vector<1x32xf32> to vector<16x32xf32>
    %29 = arith.addf %25, %28 : vector<16x32xf32>
    %c1_39 = arith.constant 1 : index
    %c1_40 = arith.constant 1 : index
    %c0_41 = arith.constant 0 : index
    %c0_42 = arith.constant 0 : index
    %30 = vector.load %arg1[%c1_39, %c1_40, %c0_41, %c0_42] : memref<2x3x32x32xf32, #tpu.memory_space<vmem>>, vector<1x1x32x32xf32>
    %31 = vector.shape_cast %30 : vector<1x1x32x32xf32> to vector<32x32xf32>
    %cst_43 = arith.constant dense<0.000000e+00> : vector<16x32xf32>
    %32 = tpu.matmul %0, %31, %cst_43 {dimension_numbers = #tpu.dot_dimension_numbers<[1], [0], [0], [1], [0, 0, 1, 1], [], []>} : vector<16x32xf32>, vector<32x32xf32>, vector<16x32xf32> -> vector<16x32xf32>
    %c0_44 = arith.constant 0 : index
    %c1_45 = arith.constant 1 : index
    %c1_46 = arith.constant 1 : index
    %c0_47 = arith.constant 0 : index
    %c0_48 = arith.constant 0 : index
    %33 = vector.load %arg4[%c0_44, %c1_45, %c1_46, %c0_47, %c0_48] : memref<2x2x4x1x32xf32, #tpu.memory_space<vmem>>, vector<1x1x1x1x32xf32>
    %34 = vector.shape_cast %33 : vector<1x1x1x1x32xf32> to vector<1x32xf32>
    %35 = vector.broadcast %34 : vector<1x32xf32> to vector<16x32xf32>
    %36 = arith.addf %32, %35 : vector<16x32xf32>
    %c1_49 = arith.constant 1 : index
    %c2_50 = arith.constant 2 : index
    %c0_51 = arith.constant 0 : index
    %c0_52 = arith.constant 0 : index
    %37 = vector.load %arg1[%c1_49, %c2_50, %c0_51, %c0_52] : memref<2x3x32x32xf32, #tpu.memory_space<vmem>>, vector<1x1x32x32xf32>
    %38 = vector.shape_cast %37 : vector<1x1x32x32xf32> to vector<32x32xf32>
    %cst_53 = arith.constant dense<0.000000e+00> : vector<16x32xf32>
    %39 = tpu.matmul %0, %38, %cst_53 {dimension_numbers = #tpu.dot_dimension_numbers<[1], [0], [0], [1], [0, 0, 1, 1], [], []>} : vector<16x32xf32>, vector<32x32xf32>, vector<16x32xf32> -> vector<16x32xf32>
    %c0_54 = arith.constant 0 : index
    %c1_55 = arith.constant 1 : index
    %c2_56 = arith.constant 2 : index
    %c0_57 = arith.constant 0 : index
    %c0_58 = arith.constant 0 : index
    %40 = vector.load %arg4[%c0_54, %c1_55, %c2_56, %c0_57, %c0_58] : memref<2x2x4x1x32xf32, #tpu.memory_space<vmem>>, vector<1x1x1x1x32xf32>
    %41 = vector.shape_cast %40 : vector<1x1x1x1x32xf32> to vector<1x32xf32>
    %42 = vector.broadcast %41 : vector<1x32xf32> to vector<16x32xf32>
    %43 = arith.addf %39, %42 : vector<16x32xf32>
    %c0_59 = arith.constant 0 : index
    %c0_60 = arith.constant 0 : index
    %c0_61 = arith.constant 0 : index
    %c0_62 = arith.constant 0 : index
    %c0_63 = arith.constant 0 : index
    %44 = vector.load %arg2[%c0_59, %c0_60, %c0_61, %c0_62, %c0_63] : memref<2x2x3x32x32xf32, #tpu.memory_space<vmem>>, vector<1x1x1x32x32xf32>
    %45 = vector.shape_cast %44 : vector<1x1x1x32x32xf32> to vector<32x32xf32>
    %c0_64 = arith.constant 0 : index
    %c0_65 = arith.constant 0 : index
    %c1_66 = arith.constant 1 : index
    %c0_67 = arith.constant 0 : index
    %c0_68 = arith.constant 0 : index
    %46 = vector.load %arg2[%c0_64, %c0_65, %c1_66, %c0_67, %c0_68] : memref<2x2x3x32x32xf32, #tpu.memory_space<vmem>>, vector<1x1x1x32x32xf32>
    %47 = vector.shape_cast %46 : vector<1x1x1x32x32xf32> to vector<32x32xf32>
    %c0_69 = arith.constant 0 : index
    %c0_70 = arith.constant 0 : index
    %c2_71 = arith.constant 2 : index
    %c0_72 = arith.constant 0 : index
    %c0_73 = arith.constant 0 : index
    %48 = vector.load %arg2[%c0_69, %c0_70, %c2_71, %c0_72, %c0_73] : memref<2x2x3x32x32xf32, #tpu.memory_space<vmem>>, vector<1x1x1x32x32xf32>
    %49 = vector.shape_cast %48 : vector<1x1x1x32x32xf32> to vector<32x32xf32>
    %c0_74 = arith.constant 0 : index
    %c1_75 = arith.constant 1 : index
    %c0_76 = arith.constant 0 : index
    %c0_77 = arith.constant 0 : index
    %c0_78 = arith.constant 0 : index
    %50 = vector.load %arg2[%c0_74, %c1_75, %c0_76, %c0_77, %c0_78] : memref<2x2x3x32x32xf32, #tpu.memory_space<vmem>>, vector<1x1x1x32x32xf32>
    %51 = vector.shape_cast %50 : vector<1x1x1x32x32xf32> to vector<32x32xf32>
    %c0_79 = arith.constant 0 : index
    %c1_80 = arith.constant 1 : index
    %c1_81 = arith.constant 1 : index
    %c0_82 = arith.constant 0 : index
    %c0_83 = arith.constant 0 : index
    %52 = vector.load %arg2[%c0_79, %c1_80, %c1_81, %c0_82, %c0_83] : memref<2x2x3x32x32xf32, #tpu.memory_space<vmem>>, vector<1x1x1x32x32xf32>
    %53 = vector.shape_cast %52 : vector<1x1x1x32x32xf32> to vector<32x32xf32>
    %c0_84 = arith.constant 0 : index
    %c1_85 = arith.constant 1 : index
    %c2_86 = arith.constant 2 : index
    %c0_87 = arith.constant 0 : index
    %c0_88 = arith.constant 0 : index
    %54 = vector.load %arg2[%c0_84, %c1_85, %c2_86, %c0_87, %c0_88] : memref<2x2x3x32x32xf32, #tpu.memory_space<vmem>>, vector<1x1x1x32x32xf32>
    %55 = vector.shape_cast %54 : vector<1x1x1x32x32xf32> to vector<32x32xf32>
    %c0_89 = arith.constant 0 : index
    %c0_90 = arith.constant 0 : index
    %c3 = arith.constant 3 : index
    %c0_91 = arith.constant 0 : index
    %c0_92 = arith.constant 0 : index
    %56 = vector.load %arg4[%c0_89, %c0_90, %c3, %c0_91, %c0_92] : memref<2x2x4x1x32xf32, #tpu.memory_space<vmem>>, vector<1x1x1x1x32xf32>
    %57 = vector.shape_cast %56 : vector<1x1x1x1x32xf32> to vector<1x32xf32>
    %c0_93 = arith.constant 0 : index
    %c1_94 = arith.constant 1 : index
    %c3_95 = arith.constant 3 : index
    %c0_96 = arith.constant 0 : index
    %c0_97 = arith.constant 0 : index
    %58 = vector.load %arg4[%c0_93, %c1_94, %c3_95, %c0_96, %c0_97] : memref<2x2x4x1x32xf32, #tpu.memory_space<vmem>>, vector<1x1x1x1x32xf32>
    %59 = vector.shape_cast %58 : vector<1x1x1x1x32xf32> to vector<1x32xf32>
    %60 = vector.extract_strided_slice %8 {offsets = [0, 0], sizes = [2, 32], strides = [1, 1]} : vector<16x32xf32> to vector<2x32xf32>
    %61 = vector.extract_strided_slice %15 {offsets = [0, 0], sizes = [2, 32], strides = [1, 1]} : vector<16x32xf32> to vector<2x32xf32>
    %62 = vector.extract_strided_slice %22 {offsets = [0, 0], sizes = [2, 32], strides = [1, 1]} : vector<16x32xf32> to vector<2x32xf32>
    %cst_98 = arith.constant dense<0.000000e+00> : vector<2x32xf32>
    %63 = tpu.matmul %1, %45, %cst_98 {dimension_numbers = #tpu.dot_dimension_numbers<[1], [0], [0], [1], [0, 0, 1, 1], [], []>} : vector<2x32xf32>, vector<32x32xf32>, vector<2x32xf32> -> vector<2x32xf32>
    %64 = arith.addf %60, %63 : vector<2x32xf32>
    %65 = arith.negf %64 : vector<2x32xf32>
    %66 = math.exp %65 : vector<2x32xf32>
    %cst_99 = arith.constant 1.000000e+00 : f32
    %67 = vector.broadcast %cst_99 : f32 to vector<2x32xf32>
    %68 = arith.addf %67, %66 : vector<2x32xf32>
    %69 = arith.divf %67, %68 : vector<2x32xf32>
    %cst_100 = arith.constant dense<0.000000e+00> : vector<2x32xf32>
    %70 = tpu.matmul %1, %47, %cst_100 {dimension_numbers = #tpu.dot_dimension_numbers<[1], [0], [0], [1], [0, 0, 1, 1], [], []>} : vector<2x32xf32>, vector<32x32xf32>, vector<2x32xf32> -> vector<2x32xf32>
    %71 = arith.addf %61, %70 : vector<2x32xf32>
    %72 = arith.negf %71 : vector<2x32xf32>
    %73 = math.exp %72 : vector<2x32xf32>
    %cst_101 = arith.constant 1.000000e+00 : f32
    %74 = vector.broadcast %cst_101 : f32 to vector<2x32xf32>
    %75 = arith.addf %74, %73 : vector<2x32xf32>
    %76 = arith.divf %74, %75 : vector<2x32xf32>
    %cst_102 = arith.constant dense<0.000000e+00> : vector<2x32xf32>
    %77 = tpu.matmul %1, %49, %cst_102 {dimension_numbers = #tpu.dot_dimension_numbers<[1], [0], [0], [1], [0, 0, 1, 1], [], []>} : vector<2x32xf32>, vector<32x32xf32>, vector<2x32xf32> -> vector<2x32xf32>
    %78 = vector.broadcast %57 : vector<1x32xf32> to vector<2x32xf32>
    %79 = arith.addf %77, %78 : vector<2x32xf32>
    %80 = arith.mulf %69, %79 : vector<2x32xf32>
    %81 = arith.addf %62, %80 : vector<2x32xf32>
    %82 = math.tanh %81 : vector<2x32xf32>
    %cst_103 = arith.constant 1.000000e+00 : f32
    %83 = vector.broadcast %cst_103 : f32 to vector<2x32xf32>
    %84 = arith.subf %83, %76 : vector<2x32xf32>
    %85 = arith.mulf %84, %82 : vector<2x32xf32>
    %86 = arith.mulf %76, %1 : vector<2x32xf32>
    %87 = arith.addf %85, %86 : vector<2x32xf32>
    %88 = vector.extract_strided_slice %29 {offsets = [14, 0], sizes = [2, 32], strides = [1, 1]} : vector<16x32xf32> to vector<2x32xf32>
    %89 = vector.extract_strided_slice %36 {offsets = [14, 0], sizes = [2, 32], strides = [1, 1]} : vector<16x32xf32> to vector<2x32xf32>
    %90 = vector.extract_strided_slice %43 {offsets = [14, 0], sizes = [2, 32], strides = [1, 1]} : vector<16x32xf32> to vector<2x32xf32>
    %cst_104 = arith.constant dense<0.000000e+00> : vector<2x32xf32>
    %91 = tpu.matmul %1, %51, %cst_104 {dimension_numbers = #tpu.dot_dimension_numbers<[1], [0], [0], [1], [0, 0, 1, 1], [], []>} : vector<2x32xf32>, vector<32x32xf32>, vector<2x32xf32> -> vector<2x32xf32>
    %92 = arith.addf %88, %91 : vector<2x32xf32>
    %93 = arith.negf %92 : vector<2x32xf32>
    %94 = math.exp %93 : vector<2x32xf32>
    %cst_105 = arith.constant 1.000000e+00 : f32
    %95 = vector.broadcast %cst_105 : f32 to vector<2x32xf32>
    %96 = arith.addf %95, %94 : vector<2x32xf32>
    %97 = arith.divf %95, %96 : vector<2x32xf32>
    %cst_106 = arith.constant dense<0.000000e+00> : vector<2x32xf32>
    %98 = tpu.matmul %1, %53, %cst_106 {dimension_numbers = #tpu.dot_dimension_numbers<[1], [0], [0], [1], [0, 0, 1, 1], [], []>} : vector<2x32xf32>, vector<32x32xf32>, vector<2x32xf32> -> vector<2x32xf32>
    %99 = arith.addf %89, %98 : vector<2x32xf32>
    %100 = arith.negf %99 : vector<2x32xf32>
    %101 = math.exp %100 : vector<2x32xf32>
    %cst_107 = arith.constant 1.000000e+00 : f32
    %102 = vector.broadcast %cst_107 : f32 to vector<2x32xf32>
    %103 = arith.addf %102, %101 : vector<2x32xf32>
    %104 = arith.divf %102, %103 : vector<2x32xf32>
    %cst_108 = arith.constant dense<0.000000e+00> : vector<2x32xf32>
    %105 = tpu.matmul %1, %55, %cst_108 {dimension_numbers = #tpu.dot_dimension_numbers<[1], [0], [0], [1], [0, 0, 1, 1], [], []>} : vector<2x32xf32>, vector<32x32xf32>, vector<2x32xf32> -> vector<2x32xf32>
    %106 = vector.broadcast %59 : vector<1x32xf32> to vector<2x32xf32>
    %107 = arith.addf %105, %106 : vector<2x32xf32>
    %108 = arith.mulf %97, %107 : vector<2x32xf32>
    %109 = arith.addf %90, %108 : vector<2x32xf32>
    %110 = math.tanh %109 : vector<2x32xf32>
    %cst_109 = arith.constant 1.000000e+00 : f32
    %111 = vector.broadcast %cst_109 : f32 to vector<2x32xf32>
    %112 = arith.subf %111, %104 : vector<2x32xf32>
    %113 = arith.mulf %112, %110 : vector<2x32xf32>
    %114 = arith.mulf %104, %1 : vector<2x32xf32>
    %115 = arith.addf %113, %114 : vector<2x32xf32>
    %c0_110 = arith.constant 0 : index
    %c0_111 = arith.constant 0 : index
    %116 = vector.load %arg10[%c0_110, %c0_111] : memref<16x32xf32, #tpu.memory_space<vmem>>, vector<2x32xf32>
    tpu.vector_store %arg10[%c0_110, %c0_111], %87 {strides = array<i32>} : memref<16x32xf32, #tpu.memory_space<vmem>>, vector<2x32xf32>,
    %c14 = arith.constant 14 : index
    %c0_112 = arith.constant 0 : index
    %117 = vector.load %arg11[%c14, %c0_112] : memref<16x32xf32, #tpu.memory_space<vmem>>, vector<2x32xf32>
    tpu.vector_store %arg11[%c14, %c0_112], %115 {strides = array<i32>} : memref<16x32xf32, #tpu.memory_space<vmem>>, vector<2x32xf32>,
    %118 = vector.extract_strided_slice %8 {offsets = [2, 0], sizes = [2, 32], strides = [1, 1]} : vector<16x32xf32> to vector<2x32xf32>
    %119 = vector.extract_strided_slice %15 {offsets = [2, 0], sizes = [2, 32], strides = [1, 1]} : vector<16x32xf32> to vector<2x32xf32>
    %120 = vector.extract_strided_slice %22 {offsets = [2, 0], sizes = [2, 32], strides = [1, 1]} : vector<16x32xf32> to vector<2x32xf32>
    %cst_113 = arith.constant dense<0.000000e+00> : vector<2x32xf32>
    %121 = tpu.matmul %87, %45, %cst_113 {dimension_numbers = #tpu.dot_dimension_numbers<[1], [0], [0], [1], [0, 0, 1, 1], [], []>} : vector<2x32xf32>, vector<32x32xf32>, vector<2x32xf32> -> vector<2x32xf32>
    %122 = arith.addf %118, %121 : vector<2x32xf32>
    %123 = arith.negf %122 : vector<2x32xf32>
    %124 = math.exp %123 : vector<2x32xf32>
    %cst_114 = arith.constant 1.000000e+00 : f32
    %125 = vector.broadcast %cst_114 : f32 to vector<2x32xf32>
    %126 = arith.addf %125, %124 : vector<2x32xf32>
    %127 = arith.divf %125, %126 : vector<2x32xf32>
    %cst_115 = arith.constant dense<0.000000e+00> : vector<2x32xf32>
    %128 = tpu.matmul %87, %47, %cst_115 {dimension_numbers = #tpu.dot_dimension_numbers<[1], [0], [0], [1], [0, 0, 1, 1], [], []>} : vector<2x32xf32>, vector<32x32xf32>, vector<2x32xf32> -> vector<2x32xf32>
    %129 = arith.addf %119, %128 : vector<2x32xf32>
    %130 = arith.negf %129 : vector<2x32xf32>
    %131 = math.exp %130 : vector<2x32xf32>
    %cst_116 = arith.constant 1.000000e+00 : f32
    %132 = vector.broadcast %cst_116 : f32 to vector<2x32xf32>
    %133 = arith.addf %132, %131 : vector<2x32xf32>
    %134 = arith.divf %132, %133 : vector<2x32xf32>
    %cst_117 = arith.constant dense<0.000000e+00> : vector<2x32xf32>
    %135 = tpu.matmul %87, %49, %cst_117 {dimension_numbers = #tpu.dot_dimension_numbers<[1], [0], [0], [1], [0, 0, 1, 1], [], []>} : vector<2x32xf32>, vector<32x32xf32>, vector<2x32xf32> -> vector<2x32xf32>
    %136 = vector.broadcast %57 : vector<1x32xf32> to vector<2x32xf32>
    %137 = arith.addf %135, %136 : vector<2x32xf32>
    %138 = arith.mulf %127, %137 : vector<2x32xf32>
    %139 = arith.addf %120, %138 : vector<2x32xf32>
    %140 = math.tanh %139 : vector<2x32xf32>
    %cst_118 = arith.constant 1.000000e+00 : f32
    %141 = vector.broadcast %cst_118 : f32 to vector<2x32xf32>
    %142 = arith.subf %141, %134 : vector<2x32xf32>
    %143 = arith.mulf %142, %140 : vector<2x32xf32>
    %144 = arith.mulf %134, %87 : vector<2x32xf32>
    %145 = arith.addf %143, %144 : vector<2x32xf32>
    %146 = vector.extract_strided_slice %29 {offsets = [12, 0], sizes = [2, 32], strides = [1, 1]} : vector<16x32xf32> to vector<2x32xf32>
    %147 = vector.extract_strided_slice %36 {offsets = [12, 0], sizes = [2, 32], strides = [1, 1]} : vector<16x32xf32> to vector<2x32xf32>
    %148 = vector.extract_strided_slice %43 {offsets = [12, 0], sizes = [2, 32], strides = [1, 1]} : vector<16x32xf32> to vector<2x32xf32>
    %cst_119 = arith.constant dense<0.000000e+00> : vector<2x32xf32>
    %149 = tpu.matmul %115, %51, %cst_119 {dimension_numbers = #tpu.dot_dimension_numbers<[1], [0], [0], [1], [0, 0, 1, 1], [], []>} : vector<2x32xf32>, vector<32x32xf32>, vector<2x32xf32> -> vector<2x32xf32>
    %150 = arith.addf %146, %149 : vector<2x32xf32>
    %151 = arith.negf %150 : vector<2x32xf32>
    %152 = math.exp %151 : vector<2x32xf32>
    %cst_120 = arith.constant 1.000000e+00 : f32
    %153 = vector.broadcast %cst_120 : f32 to vector<2x32xf32>
    %154 = arith.addf %153, %152 : vector<2x32xf32>
    %155 = arith.divf %153, %154 : vector<2x32xf32>
    %cst_121 = arith.constant dense<0.000000e+00> : vector<2x32xf32>
    %156 = tpu.matmul %115, %53, %cst_121 {dimension_numbers = #tpu.dot_dimension_numbers<[1], [0], [0], [1], [0, 0, 1, 1], [], []>} : vector<2x32xf32>, vector<32x32xf32>, vector<2x32xf32> -> vector<2x32xf32>
    %157 = arith.addf %147, %156 : vector<2x32xf32>
    %158 = arith.negf %157 : vector<2x32xf32>
    %159 = math.exp %158 : vector<2x32xf32>
    %cst_122 = arith.constant 1.000000e+00 : f32
    %160 = vector.broadcast %cst_122 : f32 to vector<2x32xf32>
    %161 = arith.addf %160, %159 : vector<2x32xf32>
    %162 = arith.divf %160, %161 : vector<2x32xf32>
    %cst_123 = arith.constant dense<0.000000e+00> : vector<2x32xf32>
    %163 = tpu.matmul %115, %55, %cst_123 {dimension_numbers = #tpu.dot_dimension_numbers<[1], [0], [0], [1], [0, 0, 1, 1], [], []>} : vector<2x32xf32>, vector<32x32xf32>, vector<2x32xf32> -> vector<2x32xf32>
    %164 = vector.broadcast %59 : vector<1x32xf32> to vector<2x32xf32>
    %165 = arith.addf %163, %164 : vector<2x32xf32>
    %166 = arith.mulf %155, %165 : vector<2x32xf32>
    %167 = arith.addf %148, %166 : vector<2x32xf32>
    %168 = math.tanh %167 : vector<2x32xf32>
    %cst_124 = arith.constant 1.000000e+00 : f32
    %169 = vector.broadcast %cst_124 : f32 to vector<2x32xf32>
    %170 = arith.subf %169, %162 : vector<2x32xf32>
    %171 = arith.mulf %170, %168 : vector<2x32xf32>
    %172 = arith.mulf %162, %115 : vector<2x32xf32>
    %173 = arith.addf %171, %172 : vector<2x32xf32>
    %c2_125 = arith.constant 2 : index
    %c0_126 = arith.constant 0 : index
    %174 = vector.load %arg10[%c2_125, %c0_126] : memref<16x32xf32, #tpu.memory_space<vmem>>, vector<2x32xf32>
    tpu.vector_store %arg10[%c2_125, %c0_126], %145 {strides = array<i32>} : memref<16x32xf32, #tpu.memory_space<vmem>>, vector<2x32xf32>,
    %c12 = arith.constant 12 : index
    %c0_127 = arith.constant 0 : index
    %175 = vector.load %arg11[%c12, %c0_127] : memref<16x32xf32, #tpu.memory_space<vmem>>, vector<2x32xf32>
    tpu.vector_store %arg11[%c12, %c0_127], %173 {strides = array<i32>} : memref<16x32xf32, #tpu.memory_space<vmem>>, vector<2x32xf32>,
    %176 = vector.extract_strided_slice %8 {offsets = [4, 0], sizes = [2, 32], strides = [1, 1]} : vector<16x32xf32> to vector<2x32xf32>
    %177 = vector.extract_strided_slice %15 {offsets = [4, 0], sizes = [2, 32], strides = [1, 1]} : vector<16x32xf32> to vector<2x32xf32>
    %178 = vector.extract_strided_slice %22 {offsets = [4, 0], sizes = [2, 32], strides = [1, 1]} : vector<16x32xf32> to vector<2x32xf32>
    %cst_128 = arith.constant dense<0.000000e+00> : vector<2x32xf32>
    %179 = tpu.matmul %145, %45, %cst_128 {dimension_numbers = #tpu.dot_dimension_numbers<[1], [0], [0], [1], [0, 0, 1, 1], [], []>} : vector<2x32xf32>, vector<32x32xf32>, vector<2x32xf32> -> vector<2x32xf32>
    %180 = arith.addf %176, %179 : vector<2x32xf32>
    %181 = arith.negf %180 : vector<2x32xf32>
    %182 = math.exp %181 : vector<2x32xf32>
    %cst_129 = arith.constant 1.000000e+00 : f32
    %183 = vector.broadcast %cst_129 : f32 to vector<2x32xf32>
    %184 = arith.addf %183, %182 : vector<2x32xf32>
    %185 = arith.divf %183, %184 : vector<2x32xf32>
    %cst_130 = arith.constant dense<0.000000e+00> : vector<2x32xf32>
    %186 = tpu.matmul %145, %47, %cst_130 {dimension_numbers = #tpu.dot_dimension_numbers<[1], [0], [0], [1], [0, 0, 1, 1], [], []>} : vector<2x32xf32>, vector<32x32xf32>, vector<2x32xf32> -> vector<2x32xf32>
    %187 = arith.addf %177, %186 : vector<2x32xf32>
    %188 = arith.negf %187 : vector<2x32xf32>
    %189 = math.exp %188 : vector<2x32xf32>
    %cst_131 = arith.constant 1.000000e+00 : f32
    %190 = vector.broadcast %cst_131 : f32 to vector<2x32xf32>
    %191 = arith.addf %190, %189 : vector<2x32xf32>
    %192 = arith.divf %190, %191 : vector<2x32xf32>
    %cst_132 = arith.constant dense<0.000000e+00> : vector<2x32xf32>
    %193 = tpu.matmul %145, %49, %cst_132 {dimension_numbers = #tpu.dot_dimension_numbers<[1], [0], [0], [1], [0, 0, 1, 1], [], []>} : vector<2x32xf32>, vector<32x32xf32>, vector<2x32xf32> -> vector<2x32xf32>
    %194 = vector.broadcast %57 : vector<1x32xf32> to vector<2x32xf32>
    %195 = arith.addf %193, %194 : vector<2x32xf32>
    %196 = arith.mulf %185, %195 : vector<2x32xf32>
    %197 = arith.addf %178, %196 : vector<2x32xf32>
    %198 = math.tanh %197 : vector<2x32xf32>
    %cst_133 = arith.constant 1.000000e+00 : f32
    %199 = vector.broadcast %cst_133 : f32 to vector<2x32xf32>
    %200 = arith.subf %199, %192 : vector<2x32xf32>
    %201 = arith.mulf %200, %198 : vector<2x32xf32>
    %202 = arith.mulf %192, %145 : vector<2x32xf32>
    %203 = arith.addf %201, %202 : vector<2x32xf32>
    %204 = vector.extract_strided_slice %29 {offsets = [10, 0], sizes = [2, 32], strides = [1, 1]} : vector<16x32xf32> to vector<2x32xf32>
    %205 = vector.extract_strided_slice %36 {offsets = [10, 0], sizes = [2, 32], strides = [1, 1]} : vector<16x32xf32> to vector<2x32xf32>
    %206 = vector.extract_strided_slice %43 {offsets = [10, 0], sizes = [2, 32], strides = [1, 1]} : vector<16x32xf32> to vector<2x32xf32>
    %cst_134 = arith.constant dense<0.000000e+00> : vector<2x32xf32>
    %207 = tpu.matmul %173, %51, %cst_134 {dimension_numbers = #tpu.dot_dimension_numbers<[1], [0], [0], [1], [0, 0, 1, 1], [], []>} : vector<2x32xf32>, vector<32x32xf32>, vector<2x32xf32> -> vector<2x32xf32>
    %208 = arith.addf %204, %207 : vector<2x32xf32>
    %209 = arith.negf %208 : vector<2x32xf32>
    %210 = math.exp %209 : vector<2x32xf32>
    %cst_135 = arith.constant 1.000000e+00 : f32
    %211 = vector.broadcast %cst_135 : f32 to vector<2x32xf32>
    %212 = arith.addf %211, %210 : vector<2x32xf32>
    %213 = arith.divf %211, %212 : vector<2x32xf32>
    %cst_136 = arith.constant dense<0.000000e+00> : vector<2x32xf32>
    %214 = tpu.matmul %173, %53, %cst_136 {dimension_numbers = #tpu.dot_dimension_numbers<[1], [0], [0], [1], [0, 0, 1, 1], [], []>} : vector<2x32xf32>, vector<32x32xf32>, vector<2x32xf32> -> vector<2x32xf32>
    %215 = arith.addf %205, %214 : vector<2x32xf32>
    %216 = arith.negf %215 : vector<2x32xf32>
    %217 = math.exp %216 : vector<2x32xf32>
    %cst_137 = arith.constant 1.000000e+00 : f32
    %218 = vector.broadcast %cst_137 : f32 to vector<2x32xf32>
    %219 = arith.addf %218, %217 : vector<2x32xf32>
    %220 = arith.divf %218, %219 : vector<2x32xf32>
    %cst_138 = arith.constant dense<0.000000e+00> : vector<2x32xf32>
    %221 = tpu.matmul %173, %55, %cst_138 {dimension_numbers = #tpu.dot_dimension_numbers<[1], [0], [0], [1], [0, 0, 1, 1], [], []>} : vector<2x32xf32>, vector<32x32xf32>, vector<2x32xf32> -> vector<2x32xf32>
    %222 = vector.broadcast %59 : vector<1x32xf32> to vector<2x32xf32>
    %223 = arith.addf %221, %222 : vector<2x32xf32>
    %224 = arith.mulf %213, %223 : vector<2x32xf32>
    %225 = arith.addf %206, %224 : vector<2x32xf32>
    %226 = math.tanh %225 : vector<2x32xf32>
    %cst_139 = arith.constant 1.000000e+00 : f32
    %227 = vector.broadcast %cst_139 : f32 to vector<2x32xf32>
    %228 = arith.subf %227, %220 : vector<2x32xf32>
    %229 = arith.mulf %228, %226 : vector<2x32xf32>
    %230 = arith.mulf %220, %173 : vector<2x32xf32>
    %231 = arith.addf %229, %230 : vector<2x32xf32>
    %c4 = arith.constant 4 : index
    %c0_140 = arith.constant 0 : index
    %232 = vector.load %arg10[%c4, %c0_140] : memref<16x32xf32, #tpu.memory_space<vmem>>, vector<2x32xf32>
    tpu.vector_store %arg10[%c4, %c0_140], %203 {strides = array<i32>} : memref<16x32xf32, #tpu.memory_space<vmem>>, vector<2x32xf32>,
    %c10 = arith.constant 10 : index
    %c0_141 = arith.constant 0 : index
    %233 = vector.load %arg11[%c10, %c0_141] : memref<16x32xf32, #tpu.memory_space<vmem>>, vector<2x32xf32>
    tpu.vector_store %arg11[%c10, %c0_141], %231 {strides = array<i32>} : memref<16x32xf32, #tpu.memory_space<vmem>>, vector<2x32xf32>,
    %234 = vector.extract_strided_slice %8 {offsets = [6, 0], sizes = [2, 32], strides = [1, 1]} : vector<16x32xf32> to vector<2x32xf32>
    %235 = vector.extract_strided_slice %15 {offsets = [6, 0], sizes = [2, 32], strides = [1, 1]} : vector<16x32xf32> to vector<2x32xf32>
    %236 = vector.extract_strided_slice %22 {offsets = [6, 0], sizes = [2, 32], strides = [1, 1]} : vector<16x32xf32> to vector<2x32xf32>
    %cst_142 = arith.constant dense<0.000000e+00> : vector<2x32xf32>
    %237 = tpu.matmul %203, %45, %cst_142 {dimension_numbers = #tpu.dot_dimension_numbers<[1], [0], [0], [1], [0, 0, 1, 1], [], []>} : vector<2x32xf32>, vector<32x32xf32>, vector<2x32xf32> -> vector<2x32xf32>
    %238 = arith.addf %234, %237 : vector<2x32xf32>
    %239 = arith.negf %238 : vector<2x32xf32>
    %240 = math.exp %239 : vector<2x32xf32>
    %cst_143 = arith.constant 1.000000e+00 : f32
    %241 = vector.broadcast %cst_143 : f32 to vector<2x32xf32>
    %242 = arith.addf %241, %240 : vector<2x32xf32>
    %243 = arith.divf %241, %242 : vector<2x32xf32>
    %cst_144 = arith.constant dense<0.000000e+00> : vector<2x32xf32>
    %244 = tpu.matmul %203, %47, %cst_144 {dimension_numbers = #tpu.dot_dimension_numbers<[1], [0], [0], [1], [0, 0, 1, 1], [], []>} : vector<2x32xf32>, vector<32x32xf32>, vector<2x32xf32> -> vector<2x32xf32>
    %245 = arith.addf %235, %244 : vector<2x32xf32>
    %246 = arith.negf %245 : vector<2x32xf32>
    %247 = math.exp %246 : vector<2x32xf32>
    %cst_145 = arith.constant 1.000000e+00 : f32
    %248 = vector.broadcast %cst_145 : f32 to vector<2x32xf32>
    %249 = arith.addf %248, %247 : vector<2x32xf32>
    %250 = arith.divf %248, %249 : vector<2x32xf32>
    %cst_146 = arith.constant dense<0.000000e+00> : vector<2x32xf32>
    %251 = tpu.matmul %203, %49, %cst_146 {dimension_numbers = #tpu.dot_dimension_numbers<[1], [0], [0], [1], [0, 0, 1, 1], [], []>} : vector<2x32xf32>, vector<32x32xf32>, vector<2x32xf32> -> vector<2x32xf32>
    %252 = vector.broadcast %57 : vector<1x32xf32> to vector<2x32xf32>
    %253 = arith.addf %251, %252 : vector<2x32xf32>
    %254 = arith.mulf %243, %253 : vector<2x32xf32>
    %255 = arith.addf %236, %254 : vector<2x32xf32>
    %256 = math.tanh %255 : vector<2x32xf32>
    %cst_147 = arith.constant 1.000000e+00 : f32
    %257 = vector.broadcast %cst_147 : f32 to vector<2x32xf32>
    %258 = arith.subf %257, %250 : vector<2x32xf32>
    %259 = arith.mulf %258, %256 : vector<2x32xf32>
    %260 = arith.mulf %250, %203 : vector<2x32xf32>
    %261 = arith.addf %259, %260 : vector<2x32xf32>
    %262 = vector.extract_strided_slice %29 {offsets = [8, 0], sizes = [2, 32], strides = [1, 1]} : vector<16x32xf32> to vector<2x32xf32>
    %263 = vector.extract_strided_slice %36 {offsets = [8, 0], sizes = [2, 32], strides = [1, 1]} : vector<16x32xf32> to vector<2x32xf32>
    %264 = vector.extract_strided_slice %43 {offsets = [8, 0], sizes = [2, 32], strides = [1, 1]} : vector<16x32xf32> to vector<2x32xf32>
    %cst_148 = arith.constant dense<0.000000e+00> : vector<2x32xf32>
    %265 = tpu.matmul %231, %51, %cst_148 {dimension_numbers = #tpu.dot_dimension_numbers<[1], [0], [0], [1], [0, 0, 1, 1], [], []>} : vector<2x32xf32>, vector<32x32xf32>, vector<2x32xf32> -> vector<2x32xf32>
    %266 = arith.addf %262, %265 : vector<2x32xf32>
    %267 = arith.negf %266 : vector<2x32xf32>
    %268 = math.exp %267 : vector<2x32xf32>
    %cst_149 = arith.constant 1.000000e+00 : f32
    %269 = vector.broadcast %cst_149 : f32 to vector<2x32xf32>
    %270 = arith.addf %269, %268 : vector<2x32xf32>
    %271 = arith.divf %269, %270 : vector<2x32xf32>
    %cst_150 = arith.constant dense<0.000000e+00> : vector<2x32xf32>
    %272 = tpu.matmul %231, %53, %cst_150 {dimension_numbers = #tpu.dot_dimension_numbers<[1], [0], [0], [1], [0, 0, 1, 1], [], []>} : vector<2x32xf32>, vector<32x32xf32>, vector<2x32xf32> -> vector<2x32xf32>
    %273 = arith.addf %263, %272 : vector<2x32xf32>
    %274 = arith.negf %273 : vector<2x32xf32>
    %275 = math.exp %274 : vector<2x32xf32>
    %cst_151 = arith.constant 1.000000e+00 : f32
    %276 = vector.broadcast %cst_151 : f32 to vector<2x32xf32>
    %277 = arith.addf %276, %275 : vector<2x32xf32>
    %278 = arith.divf %276, %277 : vector<2x32xf32>
    %cst_152 = arith.constant dense<0.000000e+00> : vector<2x32xf32>
    %279 = tpu.matmul %231, %55, %cst_152 {dimension_numbers = #tpu.dot_dimension_numbers<[1], [0], [0], [1], [0, 0, 1, 1], [], []>} : vector<2x32xf32>, vector<32x32xf32>, vector<2x32xf32> -> vector<2x32xf32>
    %280 = vector.broadcast %59 : vector<1x32xf32> to vector<2x32xf32>
    %281 = arith.addf %279, %280 : vector<2x32xf32>
    %282 = arith.mulf %271, %281 : vector<2x32xf32>
    %283 = arith.addf %264, %282 : vector<2x32xf32>
    %284 = math.tanh %283 : vector<2x32xf32>
    %cst_153 = arith.constant 1.000000e+00 : f32
    %285 = vector.broadcast %cst_153 : f32 to vector<2x32xf32>
    %286 = arith.subf %285, %278 : vector<2x32xf32>
    %287 = arith.mulf %286, %284 : vector<2x32xf32>
    %288 = arith.mulf %278, %231 : vector<2x32xf32>
    %289 = arith.addf %287, %288 : vector<2x32xf32>
    %c6 = arith.constant 6 : index
    %c0_154 = arith.constant 0 : index
    %290 = vector.load %arg10[%c6, %c0_154] : memref<16x32xf32, #tpu.memory_space<vmem>>, vector<2x32xf32>
    tpu.vector_store %arg10[%c6, %c0_154], %261 {strides = array<i32>} : memref<16x32xf32, #tpu.memory_space<vmem>>, vector<2x32xf32>,
    %c8 = arith.constant 8 : index
    %c0_155 = arith.constant 0 : index
    %291 = vector.load %arg11[%c8, %c0_155] : memref<16x32xf32, #tpu.memory_space<vmem>>, vector<2x32xf32>
    tpu.vector_store %arg11[%c8, %c0_155], %289 {strides = array<i32>} : memref<16x32xf32, #tpu.memory_space<vmem>>, vector<2x32xf32>,
    %292 = vector.extract_strided_slice %8 {offsets = [8, 0], sizes = [2, 32], strides = [1, 1]} : vector<16x32xf32> to vector<2x32xf32>
    %293 = vector.extract_strided_slice %15 {offsets = [8, 0], sizes = [2, 32], strides = [1, 1]} : vector<16x32xf32> to vector<2x32xf32>
    %294 = vector.extract_strided_slice %22 {offsets = [8, 0], sizes = [2, 32], strides = [1, 1]} : vector<16x32xf32> to vector<2x32xf32>
    %cst_156 = arith.constant dense<0.000000e+00> : vector<2x32xf32>
    %295 = tpu.matmul %261, %45, %cst_156 {dimension_numbers = #tpu.dot_dimension_numbers<[1], [0], [0], [1], [0, 0, 1, 1], [], []>} : vector<2x32xf32>, vector<32x32xf32>, vector<2x32xf32> -> vector<2x32xf32>
    %296 = arith.addf %292, %295 : vector<2x32xf32>
    %297 = arith.negf %296 : vector<2x32xf32>
    %298 = math.exp %297 : vector<2x32xf32>
    %cst_157 = arith.constant 1.000000e+00 : f32
    %299 = vector.broadcast %cst_157 : f32 to vector<2x32xf32>
    %300 = arith.addf %299, %298 : vector<2x32xf32>
    %301 = arith.divf %299, %300 : vector<2x32xf32>
    %cst_158 = arith.constant dense<0.000000e+00> : vector<2x32xf32>
    %302 = tpu.matmul %261, %47, %cst_158 {dimension_numbers = #tpu.dot_dimension_numbers<[1], [0], [0], [1], [0, 0, 1, 1], [], []>} : vector<2x32xf32>, vector<32x32xf32>, vector<2x32xf32> -> vector<2x32xf32>
    %303 = arith.addf %293, %302 : vector<2x32xf32>
    %304 = arith.negf %303 : vector<2x32xf32>
    %305 = math.exp %304 : vector<2x32xf32>
    %cst_159 = arith.constant 1.000000e+00 : f32
    %306 = vector.broadcast %cst_159 : f32 to vector<2x32xf32>
    %307 = arith.addf %306, %305 : vector<2x32xf32>
    %308 = arith.divf %306, %307 : vector<2x32xf32>
    %cst_160 = arith.constant dense<0.000000e+00> : vector<2x32xf32>
    %309 = tpu.matmul %261, %49, %cst_160 {dimension_numbers = #tpu.dot_dimension_numbers<[1], [0], [0], [1], [0, 0, 1, 1], [], []>} : vector<2x32xf32>, vector<32x32xf32>, vector<2x32xf32> -> vector<2x32xf32>
    %310 = vector.broadcast %57 : vector<1x32xf32> to vector<2x32xf32>
    %311 = arith.addf %309, %310 : vector<2x32xf32>
    %312 = arith.mulf %301, %311 : vector<2x32xf32>
    %313 = arith.addf %294, %312 : vector<2x32xf32>
    %314 = math.tanh %313 : vector<2x32xf32>
    %cst_161 = arith.constant 1.000000e+00 : f32
    %315 = vector.broadcast %cst_161 : f32 to vector<2x32xf32>
    %316 = arith.subf %315, %308 : vector<2x32xf32>
    %317 = arith.mulf %316, %314 : vector<2x32xf32>
    %318 = arith.mulf %308, %261 : vector<2x32xf32>
    %319 = arith.addf %317, %318 : vector<2x32xf32>
    %320 = vector.extract_strided_slice %29 {offsets = [6, 0], sizes = [2, 32], strides = [1, 1]} : vector<16x32xf32> to vector<2x32xf32>
    %321 = vector.extract_strided_slice %36 {offsets = [6, 0], sizes = [2, 32], strides = [1, 1]} : vector<16x32xf32> to vector<2x32xf32>
    %322 = vector.extract_strided_slice %43 {offsets = [6, 0], sizes = [2, 32], strides = [1, 1]} : vector<16x32xf32> to vector<2x32xf32>
    %cst_162 = arith.constant dense<0.000000e+00> : vector<2x32xf32>
    %323 = tpu.matmul %289, %51, %cst_162 {dimension_numbers = #tpu.dot_dimension_numbers<[1], [0], [0], [1], [0, 0, 1, 1], [], []>} : vector<2x32xf32>, vector<32x32xf32>, vector<2x32xf32> -> vector<2x32xf32>
    %324 = arith.addf %320, %323 : vector<2x32xf32>
    %325 = arith.negf %324 : vector<2x32xf32>
    %326 = math.exp %325 : vector<2x32xf32>
    %cst_163 = arith.constant 1.000000e+00 : f32
    %327 = vector.broadcast %cst_163 : f32 to vector<2x32xf32>
    %328 = arith.addf %327, %326 : vector<2x32xf32>
    %329 = arith.divf %327, %328 : vector<2x32xf32>
    %cst_164 = arith.constant dense<0.000000e+00> : vector<2x32xf32>
    %330 = tpu.matmul %289, %53, %cst_164 {dimension_numbers = #tpu.dot_dimension_numbers<[1], [0], [0], [1], [0, 0, 1, 1], [], []>} : vector<2x32xf32>, vector<32x32xf32>, vector<2x32xf32> -> vector<2x32xf32>
    %331 = arith.addf %321, %330 : vector<2x32xf32>
    %332 = arith.negf %331 : vector<2x32xf32>
    %333 = math.exp %332 : vector<2x32xf32>
    %cst_165 = arith.constant 1.000000e+00 : f32
    %334 = vector.broadcast %cst_165 : f32 to vector<2x32xf32>
    %335 = arith.addf %334, %333 : vector<2x32xf32>
    %336 = arith.divf %334, %335 : vector<2x32xf32>
    %cst_166 = arith.constant dense<0.000000e+00> : vector<2x32xf32>
    %337 = tpu.matmul %289, %55, %cst_166 {dimension_numbers = #tpu.dot_dimension_numbers<[1], [0], [0], [1], [0, 0, 1, 1], [], []>} : vector<2x32xf32>, vector<32x32xf32>, vector<2x32xf32> -> vector<2x32xf32>
    %338 = vector.broadcast %59 : vector<1x32xf32> to vector<2x32xf32>
    %339 = arith.addf %337, %338 : vector<2x32xf32>
    %340 = arith.mulf %329, %339 : vector<2x32xf32>
    %341 = arith.addf %322, %340 : vector<2x32xf32>
    %342 = math.tanh %341 : vector<2x32xf32>
    %cst_167 = arith.constant 1.000000e+00 : f32
    %343 = vector.broadcast %cst_167 : f32 to vector<2x32xf32>
    %344 = arith.subf %343, %336 : vector<2x32xf32>
    %345 = arith.mulf %344, %342 : vector<2x32xf32>
    %346 = arith.mulf %336, %289 : vector<2x32xf32>
    %347 = arith.addf %345, %346 : vector<2x32xf32>
    %c8_168 = arith.constant 8 : index
    %c0_169 = arith.constant 0 : index
    %348 = vector.load %arg10[%c8_168, %c0_169] : memref<16x32xf32, #tpu.memory_space<vmem>>, vector<2x32xf32>
    tpu.vector_store %arg10[%c8_168, %c0_169], %319 {strides = array<i32>} : memref<16x32xf32, #tpu.memory_space<vmem>>, vector<2x32xf32>,
    %c6_170 = arith.constant 6 : index
    %c0_171 = arith.constant 0 : index
    %349 = vector.load %arg11[%c6_170, %c0_171] : memref<16x32xf32, #tpu.memory_space<vmem>>, vector<2x32xf32>
    tpu.vector_store %arg11[%c6_170, %c0_171], %347 {strides = array<i32>} : memref<16x32xf32, #tpu.memory_space<vmem>>, vector<2x32xf32>,
    %350 = vector.extract_strided_slice %8 {offsets = [10, 0], sizes = [2, 32], strides = [1, 1]} : vector<16x32xf32> to vector<2x32xf32>
    %351 = vector.extract_strided_slice %15 {offsets = [10, 0], sizes = [2, 32], strides = [1, 1]} : vector<16x32xf32> to vector<2x32xf32>
    %352 = vector.extract_strided_slice %22 {offsets = [10, 0], sizes = [2, 32], strides = [1, 1]} : vector<16x32xf32> to vector<2x32xf32>
    %cst_172 = arith.constant dense<0.000000e+00> : vector<2x32xf32>
    %353 = tpu.matmul %319, %45, %cst_172 {dimension_numbers = #tpu.dot_dimension_numbers<[1], [0], [0], [1], [0, 0, 1, 1], [], []>} : vector<2x32xf32>, vector<32x32xf32>, vector<2x32xf32> -> vector<2x32xf32>
    %354 = arith.addf %350, %353 : vector<2x32xf32>
    %355 = arith.negf %354 : vector<2x32xf32>
    %356 = math.exp %355 : vector<2x32xf32>
    %cst_173 = arith.constant 1.000000e+00 : f32
    %357 = vector.broadcast %cst_173 : f32 to vector<2x32xf32>
    %358 = arith.addf %357, %356 : vector<2x32xf32>
    %359 = arith.divf %357, %358 : vector<2x32xf32>
    %cst_174 = arith.constant dense<0.000000e+00> : vector<2x32xf32>
    %360 = tpu.matmul %319, %47, %cst_174 {dimension_numbers = #tpu.dot_dimension_numbers<[1], [0], [0], [1], [0, 0, 1, 1], [], []>} : vector<2x32xf32>, vector<32x32xf32>, vector<2x32xf32> -> vector<2x32xf32>
    %361 = arith.addf %351, %360 : vector<2x32xf32>
    %362 = arith.negf %361 : vector<2x32xf32>
    %363 = math.exp %362 : vector<2x32xf32>
    %cst_175 = arith.constant 1.000000e+00 : f32
    %364 = vector.broadcast %cst_175 : f32 to vector<2x32xf32>
    %365 = arith.addf %364, %363 : vector<2x32xf32>
    %366 = arith.divf %364, %365 : vector<2x32xf32>
    %cst_176 = arith.constant dense<0.000000e+00> : vector<2x32xf32>
    %367 = tpu.matmul %319, %49, %cst_176 {dimension_numbers = #tpu.dot_dimension_numbers<[1], [0], [0], [1], [0, 0, 1, 1], [], []>} : vector<2x32xf32>, vector<32x32xf32>, vector<2x32xf32> -> vector<2x32xf32>
    %368 = vector.broadcast %57 : vector<1x32xf32> to vector<2x32xf32>
    %369 = arith.addf %367, %368 : vector<2x32xf32>
    %370 = arith.mulf %359, %369 : vector<2x32xf32>
    %371 = arith.addf %352, %370 : vector<2x32xf32>
    %372 = math.tanh %371 : vector<2x32xf32>
    %cst_177 = arith.constant 1.000000e+00 : f32
    %373 = vector.broadcast %cst_177 : f32 to vector<2x32xf32>
    %374 = arith.subf %373, %366 : vector<2x32xf32>
    %375 = arith.mulf %374, %372 : vector<2x32xf32>
    %376 = arith.mulf %366, %319 : vector<2x32xf32>
    %377 = arith.addf %375, %376 : vector<2x32xf32>
    %378 = vector.extract_strided_slice %29 {offsets = [4, 0], sizes = [2, 32], strides = [1, 1]} : vector<16x32xf32> to vector<2x32xf32>
    %379 = vector.extract_strided_slice %36 {offsets = [4, 0], sizes = [2, 32], strides = [1, 1]} : vector<16x32xf32> to vector<2x32xf32>
    %380 = vector.extract_strided_slice %43 {offsets = [4, 0], sizes = [2, 32], strides = [1, 1]} : vector<16x32xf32> to vector<2x32xf32>
    %cst_178 = arith.constant dense<0.000000e+00> : vector<2x32xf32>
    %381 = tpu.matmul %347, %51, %cst_178 {dimension_numbers = #tpu.dot_dimension_numbers<[1], [0], [0], [1], [0, 0, 1, 1], [], []>} : vector<2x32xf32>, vector<32x32xf32>, vector<2x32xf32> -> vector<2x32xf32>
    %382 = arith.addf %378, %381 : vector<2x32xf32>
    %383 = arith.negf %382 : vector<2x32xf32>
    %384 = math.exp %383 : vector<2x32xf32>
    %cst_179 = arith.constant 1.000000e+00 : f32
    %385 = vector.broadcast %cst_179 : f32 to vector<2x32xf32>
    %386 = arith.addf %385, %384 : vector<2x32xf32>
    %387 = arith.divf %385, %386 : vector<2x32xf32>
    %cst_180 = arith.constant dense<0.000000e+00> : vector<2x32xf32>
    %388 = tpu.matmul %347, %53, %cst_180 {dimension_numbers = #tpu.dot_dimension_numbers<[1], [0], [0], [1], [0, 0, 1, 1], [], []>} : vector<2x32xf32>, vector<32x32xf32>, vector<2x32xf32> -> vector<2x32xf32>
    %389 = arith.addf %379, %388 : vector<2x32xf32>
    %390 = arith.negf %389 : vector<2x32xf32>
    %391 = math.exp %390 : vector<2x32xf32>
    %cst_181 = arith.constant 1.000000e+00 : f32
    %392 = vector.broadcast %cst_181 : f32 to vector<2x32xf32>
    %393 = arith.addf %392, %391 : vector<2x32xf32>
    %394 = arith.divf %392, %393 : vector<2x32xf32>
    %cst_182 = arith.constant dense<0.000000e+00> : vector<2x32xf32>
    %395 = tpu.matmul %347, %55, %cst_182 {dimension_numbers = #tpu.dot_dimension_numbers<[1], [0], [0], [1], [0, 0, 1, 1], [], []>} : vector<2x32xf32>, vector<32x32xf32>, vector<2x32xf32> -> vector<2x32xf32>
    %396 = vector.broadcast %59 : vector<1x32xf32> to vector<2x32xf32>
    %397 = arith.addf %395, %396 : vector<2x32xf32>
    %398 = arith.mulf %387, %397 : vector<2x32xf32>
    %399 = arith.addf %380, %398 : vector<2x32xf32>
    %400 = math.tanh %399 : vector<2x32xf32>
    %cst_183 = arith.constant 1.000000e+00 : f32
    %401 = vector.broadcast %cst_183 : f32 to vector<2x32xf32>
    %402 = arith.subf %401, %394 : vector<2x32xf32>
    %403 = arith.mulf %402, %400 : vector<2x32xf32>
    %404 = arith.mulf %394, %347 : vector<2x32xf32>
    %405 = arith.addf %403, %404 : vector<2x32xf32>
    %c10_184 = arith.constant 10 : index
    %c0_185 = arith.constant 0 : index
    %406 = vector.load %arg10[%c10_184, %c0_185] : memref<16x32xf32, #tpu.memory_space<vmem>>, vector<2x32xf32>
    tpu.vector_store %arg10[%c10_184, %c0_185], %377 {strides = array<i32>} : memref<16x32xf32, #tpu.memory_space<vmem>>, vector<2x32xf32>,
    %c4_186 = arith.constant 4 : index
    %c0_187 = arith.constant 0 : index
    %407 = vector.load %arg11[%c4_186, %c0_187] : memref<16x32xf32, #tpu.memory_space<vmem>>, vector<2x32xf32>
    tpu.vector_store %arg11[%c4_186, %c0_187], %405 {strides = array<i32>} : memref<16x32xf32, #tpu.memory_space<vmem>>, vector<2x32xf32>,
    %408 = vector.extract_strided_slice %8 {offsets = [12, 0], sizes = [2, 32], strides = [1, 1]} : vector<16x32xf32> to vector<2x32xf32>
    %409 = vector.extract_strided_slice %15 {offsets = [12, 0], sizes = [2, 32], strides = [1, 1]} : vector<16x32xf32> to vector<2x32xf32>
    %410 = vector.extract_strided_slice %22 {offsets = [12, 0], sizes = [2, 32], strides = [1, 1]} : vector<16x32xf32> to vector<2x32xf32>
    %cst_188 = arith.constant dense<0.000000e+00> : vector<2x32xf32>
    %411 = tpu.matmul %377, %45, %cst_188 {dimension_numbers = #tpu.dot_dimension_numbers<[1], [0], [0], [1], [0, 0, 1, 1], [], []>} : vector<2x32xf32>, vector<32x32xf32>, vector<2x32xf32> -> vector<2x32xf32>
    %412 = arith.addf %408, %411 : vector<2x32xf32>
    %413 = arith.negf %412 : vector<2x32xf32>
    %414 = math.exp %413 : vector<2x32xf32>
    %cst_189 = arith.constant 1.000000e+00 : f32
    %415 = vector.broadcast %cst_189 : f32 to vector<2x32xf32>
    %416 = arith.addf %415, %414 : vector<2x32xf32>
    %417 = arith.divf %415, %416 : vector<2x32xf32>
    %cst_190 = arith.constant dense<0.000000e+00> : vector<2x32xf32>
    %418 = tpu.matmul %377, %47, %cst_190 {dimension_numbers = #tpu.dot_dimension_numbers<[1], [0], [0], [1], [0, 0, 1, 1], [], []>} : vector<2x32xf32>, vector<32x32xf32>, vector<2x32xf32> -> vector<2x32xf32>
    %419 = arith.addf %409, %418 : vector<2x32xf32>
    %420 = arith.negf %419 : vector<2x32xf32>
    %421 = math.exp %420 : vector<2x32xf32>
    %cst_191 = arith.constant 1.000000e+00 : f32
    %422 = vector.broadcast %cst_191 : f32 to vector<2x32xf32>
    %423 = arith.addf %422, %421 : vector<2x32xf32>
    %424 = arith.divf %422, %423 : vector<2x32xf32>
    %cst_192 = arith.constant dense<0.000000e+00> : vector<2x32xf32>
    %425 = tpu.matmul %377, %49, %cst_192 {dimension_numbers = #tpu.dot_dimension_numbers<[1], [0], [0], [1], [0, 0, 1, 1], [], []>} : vector<2x32xf32>, vector<32x32xf32>, vector<2x32xf32> -> vector<2x32xf32>
    %426 = vector.broadcast %57 : vector<1x32xf32> to vector<2x32xf32>
    %427 = arith.addf %425, %426 : vector<2x32xf32>
    %428 = arith.mulf %417, %427 : vector<2x32xf32>
    %429 = arith.addf %410, %428 : vector<2x32xf32>
    %430 = math.tanh %429 : vector<2x32xf32>
    %cst_193 = arith.constant 1.000000e+00 : f32
    %431 = vector.broadcast %cst_193 : f32 to vector<2x32xf32>
    %432 = arith.subf %431, %424 : vector<2x32xf32>
    %433 = arith.mulf %432, %430 : vector<2x32xf32>
    %434 = arith.mulf %424, %377 : vector<2x32xf32>
    %435 = arith.addf %433, %434 : vector<2x32xf32>
    %436 = vector.extract_strided_slice %29 {offsets = [2, 0], sizes = [2, 32], strides = [1, 1]} : vector<16x32xf32> to vector<2x32xf32>
    %437 = vector.extract_strided_slice %36 {offsets = [2, 0], sizes = [2, 32], strides = [1, 1]} : vector<16x32xf32> to vector<2x32xf32>
    %438 = vector.extract_strided_slice %43 {offsets = [2, 0], sizes = [2, 32], strides = [1, 1]} : vector<16x32xf32> to vector<2x32xf32>
    %cst_194 = arith.constant dense<0.000000e+00> : vector<2x32xf32>
    %439 = tpu.matmul %405, %51, %cst_194 {dimension_numbers = #tpu.dot_dimension_numbers<[1], [0], [0], [1], [0, 0, 1, 1], [], []>} : vector<2x32xf32>, vector<32x32xf32>, vector<2x32xf32> -> vector<2x32xf32>
    %440 = arith.addf %436, %439 : vector<2x32xf32>
    %441 = arith.negf %440 : vector<2x32xf32>
    %442 = math.exp %441 : vector<2x32xf32>
    %cst_195 = arith.constant 1.000000e+00 : f32
    %443 = vector.broadcast %cst_195 : f32 to vector<2x32xf32>
    %444 = arith.addf %443, %442 : vector<2x32xf32>
    %445 = arith.divf %443, %444 : vector<2x32xf32>
    %cst_196 = arith.constant dense<0.000000e+00> : vector<2x32xf32>
    %446 = tpu.matmul %405, %53, %cst_196 {dimension_numbers = #tpu.dot_dimension_numbers<[1], [0], [0], [1], [0, 0, 1, 1], [], []>} : vector<2x32xf32>, vector<32x32xf32>, vector<2x32xf32> -> vector<2x32xf32>
    %447 = arith.addf %437, %446 : vector<2x32xf32>
    %448 = arith.negf %447 : vector<2x32xf32>
    %449 = math.exp %448 : vector<2x32xf32>
    %cst_197 = arith.constant 1.000000e+00 : f32
    %450 = vector.broadcast %cst_197 : f32 to vector<2x32xf32>
    %451 = arith.addf %450, %449 : vector<2x32xf32>
    %452 = arith.divf %450, %451 : vector<2x32xf32>
    %cst_198 = arith.constant dense<0.000000e+00> : vector<2x32xf32>
    %453 = tpu.matmul %405, %55, %cst_198 {dimension_numbers = #tpu.dot_dimension_numbers<[1], [0], [0], [1], [0, 0, 1, 1], [], []>} : vector<2x32xf32>, vector<32x32xf32>, vector<2x32xf32> -> vector<2x32xf32>
    %454 = vector.broadcast %59 : vector<1x32xf32> to vector<2x32xf32>
    %455 = arith.addf %453, %454 : vector<2x32xf32>
    %456 = arith.mulf %445, %455 : vector<2x32xf32>
    %457 = arith.addf %438, %456 : vector<2x32xf32>
    %458 = math.tanh %457 : vector<2x32xf32>
    %cst_199 = arith.constant 1.000000e+00 : f32
    %459 = vector.broadcast %cst_199 : f32 to vector<2x32xf32>
    %460 = arith.subf %459, %452 : vector<2x32xf32>
    %461 = arith.mulf %460, %458 : vector<2x32xf32>
    %462 = arith.mulf %452, %405 : vector<2x32xf32>
    %463 = arith.addf %461, %462 : vector<2x32xf32>
    %c12_200 = arith.constant 12 : index
    %c0_201 = arith.constant 0 : index
    %464 = vector.load %arg10[%c12_200, %c0_201] : memref<16x32xf32, #tpu.memory_space<vmem>>, vector<2x32xf32>
    tpu.vector_store %arg10[%c12_200, %c0_201], %435 {strides = array<i32>} : memref<16x32xf32, #tpu.memory_space<vmem>>, vector<2x32xf32>,
    %c2_202 = arith.constant 2 : index
    %c0_203 = arith.constant 0 : index
    %465 = vector.load %arg11[%c2_202, %c0_203] : memref<16x32xf32, #tpu.memory_space<vmem>>, vector<2x32xf32>
    tpu.vector_store %arg11[%c2_202, %c0_203], %463 {strides = array<i32>} : memref<16x32xf32, #tpu.memory_space<vmem>>, vector<2x32xf32>,
    %466 = vector.extract_strided_slice %8 {offsets = [14, 0], sizes = [2, 32], strides = [1, 1]} : vector<16x32xf32> to vector<2x32xf32>
    %467 = vector.extract_strided_slice %15 {offsets = [14, 0], sizes = [2, 32], strides = [1, 1]} : vector<16x32xf32> to vector<2x32xf32>
    %468 = vector.extract_strided_slice %22 {offsets = [14, 0], sizes = [2, 32], strides = [1, 1]} : vector<16x32xf32> to vector<2x32xf32>
    %cst_204 = arith.constant dense<0.000000e+00> : vector<2x32xf32>
    %469 = tpu.matmul %435, %45, %cst_204 {dimension_numbers = #tpu.dot_dimension_numbers<[1], [0], [0], [1], [0, 0, 1, 1], [], []>} : vector<2x32xf32>, vector<32x32xf32>, vector<2x32xf32> -> vector<2x32xf32>
    %470 = arith.addf %466, %469 : vector<2x32xf32>
    %471 = arith.negf %470 : vector<2x32xf32>
    %472 = math.exp %471 : vector<2x32xf32>
    %cst_205 = arith.constant 1.000000e+00 : f32
    %473 = vector.broadcast %cst_205 : f32 to vector<2x32xf32>
    %474 = arith.addf %473, %472 : vector<2x32xf32>
    %475 = arith.divf %473, %474 : vector<2x32xf32>
    %cst_206 = arith.constant dense<0.000000e+00> : vector<2x32xf32>
    %476 = tpu.matmul %435, %47, %cst_206 {dimension_numbers = #tpu.dot_dimension_numbers<[1], [0], [0], [1], [0, 0, 1, 1], [], []>} : vector<2x32xf32>, vector<32x32xf32>, vector<2x32xf32> -> vector<2x32xf32>
    %477 = arith.addf %467, %476 : vector<2x32xf32>
    %478 = arith.negf %477 : vector<2x32xf32>
    %479 = math.exp %478 : vector<2x32xf32>
    %cst_207 = arith.constant 1.000000e+00 : f32
    %480 = vector.broadcast %cst_207 : f32 to vector<2x32xf32>
    %481 = arith.addf %480, %479 : vector<2x32xf32>
    %482 = arith.divf %480, %481 : vector<2x32xf32>
    %cst_208 = arith.constant dense<0.000000e+00> : vector<2x32xf32>
    %483 = tpu.matmul %435, %49, %cst_208 {dimension_numbers = #tpu.dot_dimension_numbers<[1], [0], [0], [1], [0, 0, 1, 1], [], []>} : vector<2x32xf32>, vector<32x32xf32>, vector<2x32xf32> -> vector<2x32xf32>
    %484 = vector.broadcast %57 : vector<1x32xf32> to vector<2x32xf32>
    %485 = arith.addf %483, %484 : vector<2x32xf32>
    %486 = arith.mulf %475, %485 : vector<2x32xf32>
    %487 = arith.addf %468, %486 : vector<2x32xf32>
    %488 = math.tanh %487 : vector<2x32xf32>
    %cst_209 = arith.constant 1.000000e+00 : f32
    %489 = vector.broadcast %cst_209 : f32 to vector<2x32xf32>
    %490 = arith.subf %489, %482 : vector<2x32xf32>
    %491 = arith.mulf %490, %488 : vector<2x32xf32>
    %492 = arith.mulf %482, %435 : vector<2x32xf32>
    %493 = arith.addf %491, %492 : vector<2x32xf32>
    %494 = vector.extract_strided_slice %29 {offsets = [0, 0], sizes = [2, 32], strides = [1, 1]} : vector<16x32xf32> to vector<2x32xf32>
    %495 = vector.extract_strided_slice %36 {offsets = [0, 0], sizes = [2, 32], strides = [1, 1]} : vector<16x32xf32> to vector<2x32xf32>
    %496 = vector.extract_strided_slice %43 {offsets = [0, 0], sizes = [2, 32], strides = [1, 1]} : vector<16x32xf32> to vector<2x32xf32>
    %cst_210 = arith.constant dense<0.000000e+00> : vector<2x32xf32>
    %497 = tpu.matmul %463, %51, %cst_210 {dimension_numbers = #tpu.dot_dimension_numbers<[1], [0], [0], [1], [0, 0, 1, 1], [], []>} : vector<2x32xf32>, vector<32x32xf32>, vector<2x32xf32> -> vector<2x32xf32>
    %498 = arith.addf %494, %497 : vector<2x32xf32>
    %499 = arith.negf %498 : vector<2x32xf32>
    %500 = math.exp %499 : vector<2x32xf32>
    %cst_211 = arith.constant 1.000000e+00 : f32
    %501 = vector.broadcast %cst_211 : f32 to vector<2x32xf32>
    %502 = arith.addf %501, %500 : vector<2x32xf32>
    %503 = arith.divf %501, %502 : vector<2x32xf32>
    %cst_212 = arith.constant dense<0.000000e+00> : vector<2x32xf32>
    %504 = tpu.matmul %463, %53, %cst_212 {dimension_numbers = #tpu.dot_dimension_numbers<[1], [0], [0], [1], [0, 0, 1, 1], [], []>} : vector<2x32xf32>, vector<32x32xf32>, vector<2x32xf32> -> vector<2x32xf32>
    %505 = arith.addf %495, %504 : vector<2x32xf32>
    %506 = arith.negf %505 : vector<2x32xf32>
    %507 = math.exp %506 : vector<2x32xf32>
    %cst_213 = arith.constant 1.000000e+00 : f32
    %508 = vector.broadcast %cst_213 : f32 to vector<2x32xf32>
    %509 = arith.addf %508, %507 : vector<2x32xf32>
    %510 = arith.divf %508, %509 : vector<2x32xf32>
    %cst_214 = arith.constant dense<0.000000e+00> : vector<2x32xf32>
    %511 = tpu.matmul %463, %55, %cst_214 {dimension_numbers = #tpu.dot_dimension_numbers<[1], [0], [0], [1], [0, 0, 1, 1], [], []>} : vector<2x32xf32>, vector<32x32xf32>, vector<2x32xf32> -> vector<2x32xf32>
    %512 = vector.broadcast %59 : vector<1x32xf32> to vector<2x32xf32>
    %513 = arith.addf %511, %512 : vector<2x32xf32>
    %514 = arith.mulf %503, %513 : vector<2x32xf32>
    %515 = arith.addf %496, %514 : vector<2x32xf32>
    %516 = math.tanh %515 : vector<2x32xf32>
    %cst_215 = arith.constant 1.000000e+00 : f32
    %517 = vector.broadcast %cst_215 : f32 to vector<2x32xf32>
    %518 = arith.subf %517, %510 : vector<2x32xf32>
    %519 = arith.mulf %518, %516 : vector<2x32xf32>
    %520 = arith.mulf %510, %463 : vector<2x32xf32>
    %521 = arith.addf %519, %520 : vector<2x32xf32>
    %c14_216 = arith.constant 14 : index
    %c0_217 = arith.constant 0 : index
    %522 = vector.load %arg10[%c14_216, %c0_217] : memref<16x32xf32, #tpu.memory_space<vmem>>, vector<2x32xf32>
    tpu.vector_store %arg10[%c14_216, %c0_217], %493 {strides = array<i32>} : memref<16x32xf32, #tpu.memory_space<vmem>>, vector<2x32xf32>,
    %c0_218 = arith.constant 0 : index
    %c0_219 = arith.constant 0 : index
    %523 = vector.load %arg11[%c0_218, %c0_219] : memref<16x32xf32, #tpu.memory_space<vmem>>, vector<2x32xf32>
    tpu.vector_store %arg11[%c0_218, %c0_219], %521 {strides = array<i32>} : memref<16x32xf32, #tpu.memory_space<vmem>>, vector<2x32xf32>,
    %c0_220 = arith.constant 0 : index
    %c0_221 = arith.constant 0 : index
    %524 = vector.load %arg10[%c0_220, %c0_221] : memref<16x32xf32, #tpu.memory_space<vmem>>, vector<16x32xf32>
    %c0_222 = arith.constant 0 : index
    %c0_223 = arith.constant 0 : index
    %525 = vector.load %arg11[%c0_222, %c0_223] : memref<16x32xf32, #tpu.memory_space<vmem>>, vector<16x32xf32>
    %c0_224 = arith.constant 0 : index
    %c0_225 = arith.constant 0 : index
    %c0_226 = arith.constant 0 : index
    %c0_227 = arith.constant 0 : index
    %c0_228 = arith.constant 0 : index
    %526 = vector.load %arg3[%c0_224, %c0_225, %c0_226, %c0_227, %c0_228] : memref<2x3x2x32x32xf32, #tpu.memory_space<vmem>>, vector<1x1x1x32x32xf32>
    %527 = vector.shape_cast %526 : vector<1x1x1x32x32xf32> to vector<32x32xf32>
    %cst_229 = arith.constant dense<0.000000e+00> : vector<16x32xf32>
    %528 = tpu.matmul %524, %527, %cst_229 {dimension_numbers = #tpu.dot_dimension_numbers<[1], [0], [0], [1], [0, 0, 1, 1], [], []>} : vector<16x32xf32>, vector<32x32xf32>, vector<16x32xf32> -> vector<16x32xf32>
    %c0_230 = arith.constant 0 : index
    %c0_231 = arith.constant 0 : index
    %c1_232 = arith.constant 1 : index
    %c0_233 = arith.constant 0 : index
    %c0_234 = arith.constant 0 : index
    %529 = vector.load %arg3[%c0_230, %c0_231, %c1_232, %c0_233, %c0_234] : memref<2x3x2x32x32xf32, #tpu.memory_space<vmem>>, vector<1x1x1x32x32xf32>
    %530 = vector.shape_cast %529 : vector<1x1x1x32x32xf32> to vector<32x32xf32>
    %cst_235 = arith.constant dense<0.000000e+00> : vector<16x32xf32>
    %531 = tpu.matmul %525, %530, %cst_235 {dimension_numbers = #tpu.dot_dimension_numbers<[1], [0], [0], [1], [0, 0, 1, 1], [], []>} : vector<16x32xf32>, vector<32x32xf32>, vector<16x32xf32> -> vector<16x32xf32>
    %532 = arith.addf %528, %531 : vector<16x32xf32>
    %c1_236 = arith.constant 1 : index
    %c0_237 = arith.constant 0 : index
    %c0_238 = arith.constant 0 : index
    %c0_239 = arith.constant 0 : index
    %c0_240 = arith.constant 0 : index
    %533 = vector.load %arg4[%c1_236, %c0_237, %c0_238, %c0_239, %c0_240] : memref<2x2x4x1x32xf32, #tpu.memory_space<vmem>>, vector<1x1x1x1x32xf32>
    %534 = vector.shape_cast %533 : vector<1x1x1x1x32xf32> to vector<1x32xf32>
    %535 = vector.broadcast %534 : vector<1x32xf32> to vector<16x32xf32>
    %536 = arith.addf %532, %535 : vector<16x32xf32>
    %c0_241 = arith.constant 0 : index
    %c1_242 = arith.constant 1 : index
    %c0_243 = arith.constant 0 : index
    %c0_244 = arith.constant 0 : index
    %c0_245 = arith.constant 0 : index
    %537 = vector.load %arg3[%c0_241, %c1_242, %c0_243, %c0_244, %c0_245] : memref<2x3x2x32x32xf32, #tpu.memory_space<vmem>>, vector<1x1x1x32x32xf32>
    %538 = vector.shape_cast %537 : vector<1x1x1x32x32xf32> to vector<32x32xf32>
    %cst_246 = arith.constant dense<0.000000e+00> : vector<16x32xf32>
    %539 = tpu.matmul %524, %538, %cst_246 {dimension_numbers = #tpu.dot_dimension_numbers<[1], [0], [0], [1], [0, 0, 1, 1], [], []>} : vector<16x32xf32>, vector<32x32xf32>, vector<16x32xf32> -> vector<16x32xf32>
    %c0_247 = arith.constant 0 : index
    %c1_248 = arith.constant 1 : index
    %c1_249 = arith.constant 1 : index
    %c0_250 = arith.constant 0 : index
    %c0_251 = arith.constant 0 : index
    %540 = vector.load %arg3[%c0_247, %c1_248, %c1_249, %c0_250, %c0_251] : memref<2x3x2x32x32xf32, #tpu.memory_space<vmem>>, vector<1x1x1x32x32xf32>
    %541 = vector.shape_cast %540 : vector<1x1x1x32x32xf32> to vector<32x32xf32>
    %cst_252 = arith.constant dense<0.000000e+00> : vector<16x32xf32>
    %542 = tpu.matmul %525, %541, %cst_252 {dimension_numbers = #tpu.dot_dimension_numbers<[1], [0], [0], [1], [0, 0, 1, 1], [], []>} : vector<16x32xf32>, vector<32x32xf32>, vector<16x32xf32> -> vector<16x32xf32>
    %543 = arith.addf %539, %542 : vector<16x32xf32>
    %c1_253 = arith.constant 1 : index
    %c0_254 = arith.constant 0 : index
    %c1_255 = arith.constant 1 : index
    %c0_256 = arith.constant 0 : index
    %c0_257 = arith.constant 0 : index
    %544 = vector.load %arg4[%c1_253, %c0_254, %c1_255, %c0_256, %c0_257] : memref<2x2x4x1x32xf32, #tpu.memory_space<vmem>>, vector<1x1x1x1x32xf32>
    %545 = vector.shape_cast %544 : vector<1x1x1x1x32xf32> to vector<1x32xf32>
    %546 = vector.broadcast %545 : vector<1x32xf32> to vector<16x32xf32>
    %547 = arith.addf %543, %546 : vector<16x32xf32>
    %c0_258 = arith.constant 0 : index
    %c2_259 = arith.constant 2 : index
    %c0_260 = arith.constant 0 : index
    %c0_261 = arith.constant 0 : index
    %c0_262 = arith.constant 0 : index
    %548 = vector.load %arg3[%c0_258, %c2_259, %c0_260, %c0_261, %c0_262] : memref<2x3x2x32x32xf32, #tpu.memory_space<vmem>>, vector<1x1x1x32x32xf32>
    %549 = vector.shape_cast %548 : vector<1x1x1x32x32xf32> to vector<32x32xf32>
    %cst_263 = arith.constant dense<0.000000e+00> : vector<16x32xf32>
    %550 = tpu.matmul %524, %549, %cst_263 {dimension_numbers = #tpu.dot_dimension_numbers<[1], [0], [0], [1], [0, 0, 1, 1], [], []>} : vector<16x32xf32>, vector<32x32xf32>, vector<16x32xf32> -> vector<16x32xf32>
    %c0_264 = arith.constant 0 : index
    %c2_265 = arith.constant 2 : index
    %c1_266 = arith.constant 1 : index
    %c0_267 = arith.constant 0 : index
    %c0_268 = arith.constant 0 : index
    %551 = vector.load %arg3[%c0_264, %c2_265, %c1_266, %c0_267, %c0_268] : memref<2x3x2x32x32xf32, #tpu.memory_space<vmem>>, vector<1x1x1x32x32xf32>
    %552 = vector.shape_cast %551 : vector<1x1x1x32x32xf32> to vector<32x32xf32>
    %cst_269 = arith.constant dense<0.000000e+00> : vector<16x32xf32>
    %553 = tpu.matmul %525, %552, %cst_269 {dimension_numbers = #tpu.dot_dimension_numbers<[1], [0], [0], [1], [0, 0, 1, 1], [], []>} : vector<16x32xf32>, vector<32x32xf32>, vector<16x32xf32> -> vector<16x32xf32>
    %554 = arith.addf %550, %553 : vector<16x32xf32>
    %c1_270 = arith.constant 1 : index
    %c0_271 = arith.constant 0 : index
    %c2_272 = arith.constant 2 : index
    %c0_273 = arith.constant 0 : index
    %c0_274 = arith.constant 0 : index
    %555 = vector.load %arg4[%c1_270, %c0_271, %c2_272, %c0_273, %c0_274] : memref<2x2x4x1x32xf32, #tpu.memory_space<vmem>>, vector<1x1x1x1x32xf32>
    %556 = vector.shape_cast %555 : vector<1x1x1x1x32xf32> to vector<1x32xf32>
    %557 = vector.broadcast %556 : vector<1x32xf32> to vector<16x32xf32>
    %558 = arith.addf %554, %557 : vector<16x32xf32>
    %c1_275 = arith.constant 1 : index
    %c0_276 = arith.constant 0 : index
    %c0_277 = arith.constant 0 : index
    %c0_278 = arith.constant 0 : index
    %c0_279 = arith.constant 0 : index
    %559 = vector.load %arg3[%c1_275, %c0_276, %c0_277, %c0_278, %c0_279] : memref<2x3x2x32x32xf32, #tpu.memory_space<vmem>>, vector<1x1x1x32x32xf32>
    %560 = vector.shape_cast %559 : vector<1x1x1x32x32xf32> to vector<32x32xf32>
    %cst_280 = arith.constant dense<0.000000e+00> : vector<16x32xf32>
    %561 = tpu.matmul %524, %560, %cst_280 {dimension_numbers = #tpu.dot_dimension_numbers<[1], [0], [0], [1], [0, 0, 1, 1], [], []>} : vector<16x32xf32>, vector<32x32xf32>, vector<16x32xf32> -> vector<16x32xf32>
    %c1_281 = arith.constant 1 : index
    %c0_282 = arith.constant 0 : index
    %c1_283 = arith.constant 1 : index
    %c0_284 = arith.constant 0 : index
    %c0_285 = arith.constant 0 : index
    %562 = vector.load %arg3[%c1_281, %c0_282, %c1_283, %c0_284, %c0_285] : memref<2x3x2x32x32xf32, #tpu.memory_space<vmem>>, vector<1x1x1x32x32xf32>
    %563 = vector.shape_cast %562 : vector<1x1x1x32x32xf32> to vector<32x32xf32>
    %cst_286 = arith.constant dense<0.000000e+00> : vector<16x32xf32>
    %564 = tpu.matmul %525, %563, %cst_286 {dimension_numbers = #tpu.dot_dimension_numbers<[1], [0], [0], [1], [0, 0, 1, 1], [], []>} : vector<16x32xf32>, vector<32x32xf32>, vector<16x32xf32> -> vector<16x32xf32>
    %565 = arith.addf %561, %564 : vector<16x32xf32>
    %c1_287 = arith.constant 1 : index
    %c1_288 = arith.constant 1 : index
    %c0_289 = arith.constant 0 : index
    %c0_290 = arith.constant 0 : index
    %c0_291 = arith.constant 0 : index
    %566 = vector.load %arg4[%c1_287, %c1_288, %c0_289, %c0_290, %c0_291] : memref<2x2x4x1x32xf32, #tpu.memory_space<vmem>>, vector<1x1x1x1x32xf32>
    %567 = vector.shape_cast %566 : vector<1x1x1x1x32xf32> to vector<1x32xf32>
    %568 = vector.broadcast %567 : vector<1x32xf32> to vector<16x32xf32>
    %569 = arith.addf %565, %568 : vector<16x32xf32>
    %c1_292 = arith.constant 1 : index
    %c1_293 = arith.constant 1 : index
    %c0_294 = arith.constant 0 : index
    %c0_295 = arith.constant 0 : index
    %c0_296 = arith.constant 0 : index
    %570 = vector.load %arg3[%c1_292, %c1_293, %c0_294, %c0_295, %c0_296] : memref<2x3x2x32x32xf32, #tpu.memory_space<vmem>>, vector<1x1x1x32x32xf32>
    %571 = vector.shape_cast %570 : vector<1x1x1x32x32xf32> to vector<32x32xf32>
    %cst_297 = arith.constant dense<0.000000e+00> : vector<16x32xf32>
    %572 = tpu.matmul %524, %571, %cst_297 {dimension_numbers = #tpu.dot_dimension_numbers<[1], [0], [0], [1], [0, 0, 1, 1], [], []>} : vector<16x32xf32>, vector<32x32xf32>, vector<16x32xf32> -> vector<16x32xf32>
    %c1_298 = arith.constant 1 : index
    %c1_299 = arith.constant 1 : index
    %c1_300 = arith.constant 1 : index
    %c0_301 = arith.constant 0 : index
    %c0_302 = arith.constant 0 : index
    %573 = vector.load %arg3[%c1_298, %c1_299, %c1_300, %c0_301, %c0_302] : memref<2x3x2x32x32xf32, #tpu.memory_space<vmem>>, vector<1x1x1x32x32xf32>
    %574 = vector.shape_cast %573 : vector<1x1x1x32x32xf32> to vector<32x32xf32>
    %cst_303 = arith.constant dense<0.000000e+00> : vector<16x32xf32>
    %575 = tpu.matmul %525, %574, %cst_303 {dimension_numbers = #tpu.dot_dimension_numbers<[1], [0], [0], [1], [0, 0, 1, 1], [], []>} : vector<16x32xf32>, vector<32x32xf32>, vector<16x32xf32> -> vector<16x32xf32>
    %576 = arith.addf %572, %575 : vector<16x32xf32>
    %c1_304 = arith.constant 1 : index
    %c1_305 = arith.constant 1 : index
    %c1_306 = arith.constant 1 : index
    %c0_307 = arith.constant 0 : index
    %c0_308 = arith.constant 0 : index
    %577 = vector.load %arg4[%c1_304, %c1_305, %c1_306, %c0_307, %c0_308] : memref<2x2x4x1x32xf32, #tpu.memory_space<vmem>>, vector<1x1x1x1x32xf32>
    %578 = vector.shape_cast %577 : vector<1x1x1x1x32xf32> to vector<1x32xf32>
    %579 = vector.broadcast %578 : vector<1x32xf32> to vector<16x32xf32>
    %580 = arith.addf %576, %579 : vector<16x32xf32>
    %c1_309 = arith.constant 1 : index
    %c2_310 = arith.constant 2 : index
    %c0_311 = arith.constant 0 : index
    %c0_312 = arith.constant 0 : index
    %c0_313 = arith.constant 0 : index
    %581 = vector.load %arg3[%c1_309, %c2_310, %c0_311, %c0_312, %c0_313] : memref<2x3x2x32x32xf32, #tpu.memory_space<vmem>>, vector<1x1x1x32x32xf32>
    %582 = vector.shape_cast %581 : vector<1x1x1x32x32xf32> to vector<32x32xf32>
    %cst_314 = arith.constant dense<0.000000e+00> : vector<16x32xf32>
    %583 = tpu.matmul %524, %582, %cst_314 {dimension_numbers = #tpu.dot_dimension_numbers<[1], [0], [0], [1], [0, 0, 1, 1], [], []>} : vector<16x32xf32>, vector<32x32xf32>, vector<16x32xf32> -> vector<16x32xf32>
    %c1_315 = arith.constant 1 : index
    %c2_316 = arith.constant 2 : index
    %c1_317 = arith.constant 1 : index
    %c0_318 = arith.constant 0 : index
    %c0_319 = arith.constant 0 : index
    %584 = vector.load %arg3[%c1_315, %c2_316, %c1_317, %c0_318, %c0_319] : memref<2x3x2x32x32xf32, #tpu.memory_space<vmem>>, vector<1x1x1x32x32xf32>
    %585 = vector.shape_cast %584 : vector<1x1x1x32x32xf32> to vector<32x32xf32>
    %cst_320 = arith.constant dense<0.000000e+00> : vector<16x32xf32>
    %586 = tpu.matmul %525, %585, %cst_320 {dimension_numbers = #tpu.dot_dimension_numbers<[1], [0], [0], [1], [0, 0, 1, 1], [], []>} : vector<16x32xf32>, vector<32x32xf32>, vector<16x32xf32> -> vector<16x32xf32>
    %587 = arith.addf %583, %586 : vector<16x32xf32>
    %c1_321 = arith.constant 1 : index
    %c1_322 = arith.constant 1 : index
    %c2_323 = arith.constant 2 : index
    %c0_324 = arith.constant 0 : index
    %c0_325 = arith.constant 0 : index
    %588 = vector.load %arg4[%c1_321, %c1_322, %c2_323, %c0_324, %c0_325] : memref<2x2x4x1x32xf32, #tpu.memory_space<vmem>>, vector<1x1x1x1x32xf32>
    %589 = vector.shape_cast %588 : vector<1x1x1x1x32xf32> to vector<1x32xf32>
    %590 = vector.broadcast %589 : vector<1x32xf32> to vector<16x32xf32>
    %591 = arith.addf %587, %590 : vector<16x32xf32>
    %c1_326 = arith.constant 1 : index
    %c0_327 = arith.constant 0 : index
    %c0_328 = arith.constant 0 : index
    %c0_329 = arith.constant 0 : index
    %c0_330 = arith.constant 0 : index
    %592 = vector.load %arg2[%c1_326, %c0_327, %c0_328, %c0_329, %c0_330] : memref<2x2x3x32x32xf32, #tpu.memory_space<vmem>>, vector<1x1x1x32x32xf32>
    %593 = vector.shape_cast %592 : vector<1x1x1x32x32xf32> to vector<32x32xf32>
    %c1_331 = arith.constant 1 : index
    %c0_332 = arith.constant 0 : index
    %c1_333 = arith.constant 1 : index
    %c0_334 = arith.constant 0 : index
    %c0_335 = arith.constant 0 : index
    %594 = vector.load %arg2[%c1_331, %c0_332, %c1_333, %c0_334, %c0_335] : memref<2x2x3x32x32xf32, #tpu.memory_space<vmem>>, vector<1x1x1x32x32xf32>
    %595 = vector.shape_cast %594 : vector<1x1x1x32x32xf32> to vector<32x32xf32>
    %c1_336 = arith.constant 1 : index
    %c0_337 = arith.constant 0 : index
    %c2_338 = arith.constant 2 : index
    %c0_339 = arith.constant 0 : index
    %c0_340 = arith.constant 0 : index
    %596 = vector.load %arg2[%c1_336, %c0_337, %c2_338, %c0_339, %c0_340] : memref<2x2x3x32x32xf32, #tpu.memory_space<vmem>>, vector<1x1x1x32x32xf32>
    %597 = vector.shape_cast %596 : vector<1x1x1x32x32xf32> to vector<32x32xf32>
    %c1_341 = arith.constant 1 : index
    %c1_342 = arith.constant 1 : index
    %c0_343 = arith.constant 0 : index
    %c0_344 = arith.constant 0 : index
    %c0_345 = arith.constant 0 : index
    %598 = vector.load %arg2[%c1_341, %c1_342, %c0_343, %c0_344, %c0_345] : memref<2x2x3x32x32xf32, #tpu.memory_space<vmem>>, vector<1x1x1x32x32xf32>
    %599 = vector.shape_cast %598 : vector<1x1x1x32x32xf32> to vector<32x32xf32>
    %c1_346 = arith.constant 1 : index
    %c1_347 = arith.constant 1 : index
    %c1_348 = arith.constant 1 : index
    %c0_349 = arith.constant 0 : index
    %c0_350 = arith.constant 0 : index
    %600 = vector.load %arg2[%c1_346, %c1_347, %c1_348, %c0_349, %c0_350] : memref<2x2x3x32x32xf32, #tpu.memory_space<vmem>>, vector<1x1x1x32x32xf32>
    %601 = vector.shape_cast %600 : vector<1x1x1x32x32xf32> to vector<32x32xf32>
    %c1_351 = arith.constant 1 : index
    %c1_352 = arith.constant 1 : index
    %c2_353 = arith.constant 2 : index
    %c0_354 = arith.constant 0 : index
    %c0_355 = arith.constant 0 : index
    %602 = vector.load %arg2[%c1_351, %c1_352, %c2_353, %c0_354, %c0_355] : memref<2x2x3x32x32xf32, #tpu.memory_space<vmem>>, vector<1x1x1x32x32xf32>
    %603 = vector.shape_cast %602 : vector<1x1x1x32x32xf32> to vector<32x32xf32>
    %c1_356 = arith.constant 1 : index
    %c0_357 = arith.constant 0 : index
    %c3_358 = arith.constant 3 : index
    %c0_359 = arith.constant 0 : index
    %c0_360 = arith.constant 0 : index
    %604 = vector.load %arg4[%c1_356, %c0_357, %c3_358, %c0_359, %c0_360] : memref<2x2x4x1x32xf32, #tpu.memory_space<vmem>>, vector<1x1x1x1x32xf32>
    %605 = vector.shape_cast %604 : vector<1x1x1x1x32xf32> to vector<1x32xf32>
    %c1_361 = arith.constant 1 : index
    %c1_362 = arith.constant 1 : index
    %c3_363 = arith.constant 3 : index
    %c0_364 = arith.constant 0 : index
    %c0_365 = arith.constant 0 : index
    %606 = vector.load %arg4[%c1_361, %c1_362, %c3_363, %c0_364, %c0_365] : memref<2x2x4x1x32xf32, #tpu.memory_space<vmem>>, vector<1x1x1x1x32xf32>
    %607 = vector.shape_cast %606 : vector<1x1x1x1x32xf32> to vector<1x32xf32>
    %608 = vector.extract_strided_slice %536 {offsets = [0, 0], sizes = [2, 32], strides = [1, 1]} : vector<16x32xf32> to vector<2x32xf32>
    %609 = vector.extract_strided_slice %547 {offsets = [0, 0], sizes = [2, 32], strides = [1, 1]} : vector<16x32xf32> to vector<2x32xf32>
    %610 = vector.extract_strided_slice %558 {offsets = [0, 0], sizes = [2, 32], strides = [1, 1]} : vector<16x32xf32> to vector<2x32xf32>
    %cst_366 = arith.constant dense<0.000000e+00> : vector<2x32xf32>
    %611 = tpu.matmul %1, %593, %cst_366 {dimension_numbers = #tpu.dot_dimension_numbers<[1], [0], [0], [1], [0, 0, 1, 1], [], []>} : vector<2x32xf32>, vector<32x32xf32>, vector<2x32xf32> -> vector<2x32xf32>
    %612 = arith.addf %608, %611 : vector<2x32xf32>
    %613 = arith.negf %612 : vector<2x32xf32>
    %614 = math.exp %613 : vector<2x32xf32>
    %cst_367 = arith.constant 1.000000e+00 : f32
    %615 = vector.broadcast %cst_367 : f32 to vector<2x32xf32>
    %616 = arith.addf %615, %614 : vector<2x32xf32>
    %617 = arith.divf %615, %616 : vector<2x32xf32>
    %cst_368 = arith.constant dense<0.000000e+00> : vector<2x32xf32>
    %618 = tpu.matmul %1, %595, %cst_368 {dimension_numbers = #tpu.dot_dimension_numbers<[1], [0], [0], [1], [0, 0, 1, 1], [], []>} : vector<2x32xf32>, vector<32x32xf32>, vector<2x32xf32> -> vector<2x32xf32>
    %619 = arith.addf %609, %618 : vector<2x32xf32>
    %620 = arith.negf %619 : vector<2x32xf32>
    %621 = math.exp %620 : vector<2x32xf32>
    %cst_369 = arith.constant 1.000000e+00 : f32
    %622 = vector.broadcast %cst_369 : f32 to vector<2x32xf32>
    %623 = arith.addf %622, %621 : vector<2x32xf32>
    %624 = arith.divf %622, %623 : vector<2x32xf32>
    %cst_370 = arith.constant dense<0.000000e+00> : vector<2x32xf32>
    %625 = tpu.matmul %1, %597, %cst_370 {dimension_numbers = #tpu.dot_dimension_numbers<[1], [0], [0], [1], [0, 0, 1, 1], [], []>} : vector<2x32xf32>, vector<32x32xf32>, vector<2x32xf32> -> vector<2x32xf32>
    %626 = vector.broadcast %605 : vector<1x32xf32> to vector<2x32xf32>
    %627 = arith.addf %625, %626 : vector<2x32xf32>
    %628 = arith.mulf %617, %627 : vector<2x32xf32>
    %629 = arith.addf %610, %628 : vector<2x32xf32>
    %630 = math.tanh %629 : vector<2x32xf32>
    %cst_371 = arith.constant 1.000000e+00 : f32
    %631 = vector.broadcast %cst_371 : f32 to vector<2x32xf32>
    %632 = arith.subf %631, %624 : vector<2x32xf32>
    %633 = arith.mulf %632, %630 : vector<2x32xf32>
    %634 = arith.mulf %624, %1 : vector<2x32xf32>
    %635 = arith.addf %633, %634 : vector<2x32xf32>
    %636 = vector.extract_strided_slice %569 {offsets = [14, 0], sizes = [2, 32], strides = [1, 1]} : vector<16x32xf32> to vector<2x32xf32>
    %637 = vector.extract_strided_slice %580 {offsets = [14, 0], sizes = [2, 32], strides = [1, 1]} : vector<16x32xf32> to vector<2x32xf32>
    %638 = vector.extract_strided_slice %591 {offsets = [14, 0], sizes = [2, 32], strides = [1, 1]} : vector<16x32xf32> to vector<2x32xf32>
    %cst_372 = arith.constant dense<0.000000e+00> : vector<2x32xf32>
    %639 = tpu.matmul %1, %599, %cst_372 {dimension_numbers = #tpu.dot_dimension_numbers<[1], [0], [0], [1], [0, 0, 1, 1], [], []>} : vector<2x32xf32>, vector<32x32xf32>, vector<2x32xf32> -> vector<2x32xf32>
    %640 = arith.addf %636, %639 : vector<2x32xf32>
    %641 = arith.negf %640 : vector<2x32xf32>
    %642 = math.exp %641 : vector<2x32xf32>
    %cst_373 = arith.constant 1.000000e+00 : f32
    %643 = vector.broadcast %cst_373 : f32 to vector<2x32xf32>
    %644 = arith.addf %643, %642 : vector<2x32xf32>
    %645 = arith.divf %643, %644 : vector<2x32xf32>
    %cst_374 = arith.constant dense<0.000000e+00> : vector<2x32xf32>
    %646 = tpu.matmul %1, %601, %cst_374 {dimension_numbers = #tpu.dot_dimension_numbers<[1], [0], [0], [1], [0, 0, 1, 1], [], []>} : vector<2x32xf32>, vector<32x32xf32>, vector<2x32xf32> -> vector<2x32xf32>
    %647 = arith.addf %637, %646 : vector<2x32xf32>
    %648 = arith.negf %647 : vector<2x32xf32>
    %649 = math.exp %648 : vector<2x32xf32>
    %cst_375 = arith.constant 1.000000e+00 : f32
    %650 = vector.broadcast %cst_375 : f32 to vector<2x32xf32>
    %651 = arith.addf %650, %649 : vector<2x32xf32>
    %652 = arith.divf %650, %651 : vector<2x32xf32>
    %cst_376 = arith.constant dense<0.000000e+00> : vector<2x32xf32>
    %653 = tpu.matmul %1, %603, %cst_376 {dimension_numbers = #tpu.dot_dimension_numbers<[1], [0], [0], [1], [0, 0, 1, 1], [], []>} : vector<2x32xf32>, vector<32x32xf32>, vector<2x32xf32> -> vector<2x32xf32>
    %654 = vector.broadcast %607 : vector<1x32xf32> to vector<2x32xf32>
    %655 = arith.addf %653, %654 : vector<2x32xf32>
    %656 = arith.mulf %645, %655 : vector<2x32xf32>
    %657 = arith.addf %638, %656 : vector<2x32xf32>
    %658 = math.tanh %657 : vector<2x32xf32>
    %cst_377 = arith.constant 1.000000e+00 : f32
    %659 = vector.broadcast %cst_377 : f32 to vector<2x32xf32>
    %660 = arith.subf %659, %652 : vector<2x32xf32>
    %661 = arith.mulf %660, %658 : vector<2x32xf32>
    %662 = arith.mulf %652, %1 : vector<2x32xf32>
    %663 = arith.addf %661, %662 : vector<2x32xf32>
    %664 = vector.extract_strided_slice %536 {offsets = [2, 0], sizes = [2, 32], strides = [1, 1]} : vector<16x32xf32> to vector<2x32xf32>
    %665 = vector.extract_strided_slice %547 {offsets = [2, 0], sizes = [2, 32], strides = [1, 1]} : vector<16x32xf32> to vector<2x32xf32>
    %666 = vector.extract_strided_slice %558 {offsets = [2, 0], sizes = [2, 32], strides = [1, 1]} : vector<16x32xf32> to vector<2x32xf32>
    %cst_378 = arith.constant dense<0.000000e+00> : vector<2x32xf32>
    %667 = tpu.matmul %635, %593, %cst_378 {dimension_numbers = #tpu.dot_dimension_numbers<[1], [0], [0], [1], [0, 0, 1, 1], [], []>} : vector<2x32xf32>, vector<32x32xf32>, vector<2x32xf32> -> vector<2x32xf32>
    %668 = arith.addf %664, %667 : vector<2x32xf32>
    %669 = arith.negf %668 : vector<2x32xf32>
    %670 = math.exp %669 : vector<2x32xf32>
    %cst_379 = arith.constant 1.000000e+00 : f32
    %671 = vector.broadcast %cst_379 : f32 to vector<2x32xf32>
    %672 = arith.addf %671, %670 : vector<2x32xf32>
    %673 = arith.divf %671, %672 : vector<2x32xf32>
    %cst_380 = arith.constant dense<0.000000e+00> : vector<2x32xf32>
    %674 = tpu.matmul %635, %595, %cst_380 {dimension_numbers = #tpu.dot_dimension_numbers<[1], [0], [0], [1], [0, 0, 1, 1], [], []>} : vector<2x32xf32>, vector<32x32xf32>, vector<2x32xf32> -> vector<2x32xf32>
    %675 = arith.addf %665, %674 : vector<2x32xf32>
    %676 = arith.negf %675 : vector<2x32xf32>
    %677 = math.exp %676 : vector<2x32xf32>
    %cst_381 = arith.constant 1.000000e+00 : f32
    %678 = vector.broadcast %cst_381 : f32 to vector<2x32xf32>
    %679 = arith.addf %678, %677 : vector<2x32xf32>
    %680 = arith.divf %678, %679 : vector<2x32xf32>
    %cst_382 = arith.constant dense<0.000000e+00> : vector<2x32xf32>
    %681 = tpu.matmul %635, %597, %cst_382 {dimension_numbers = #tpu.dot_dimension_numbers<[1], [0], [0], [1], [0, 0, 1, 1], [], []>} : vector<2x32xf32>, vector<32x32xf32>, vector<2x32xf32> -> vector<2x32xf32>
    %682 = vector.broadcast %605 : vector<1x32xf32> to vector<2x32xf32>
    %683 = arith.addf %681, %682 : vector<2x32xf32>
    %684 = arith.mulf %673, %683 : vector<2x32xf32>
    %685 = arith.addf %666, %684 : vector<2x32xf32>
    %686 = math.tanh %685 : vector<2x32xf32>
    %cst_383 = arith.constant 1.000000e+00 : f32
    %687 = vector.broadcast %cst_383 : f32 to vector<2x32xf32>
    %688 = arith.subf %687, %680 : vector<2x32xf32>
    %689 = arith.mulf %688, %686 : vector<2x32xf32>
    %690 = arith.mulf %680, %635 : vector<2x32xf32>
    %691 = arith.addf %689, %690 : vector<2x32xf32>
    %692 = vector.extract_strided_slice %569 {offsets = [12, 0], sizes = [2, 32], strides = [1, 1]} : vector<16x32xf32> to vector<2x32xf32>
    %693 = vector.extract_strided_slice %580 {offsets = [12, 0], sizes = [2, 32], strides = [1, 1]} : vector<16x32xf32> to vector<2x32xf32>
    %694 = vector.extract_strided_slice %591 {offsets = [12, 0], sizes = [2, 32], strides = [1, 1]} : vector<16x32xf32> to vector<2x32xf32>
    %cst_384 = arith.constant dense<0.000000e+00> : vector<2x32xf32>
    %695 = tpu.matmul %663, %599, %cst_384 {dimension_numbers = #tpu.dot_dimension_numbers<[1], [0], [0], [1], [0, 0, 1, 1], [], []>} : vector<2x32xf32>, vector<32x32xf32>, vector<2x32xf32> -> vector<2x32xf32>
    %696 = arith.addf %692, %695 : vector<2x32xf32>
    %697 = arith.negf %696 : vector<2x32xf32>
    %698 = math.exp %697 : vector<2x32xf32>
    %cst_385 = arith.constant 1.000000e+00 : f32
    %699 = vector.broadcast %cst_385 : f32 to vector<2x32xf32>
    %700 = arith.addf %699, %698 : vector<2x32xf32>
    %701 = arith.divf %699, %700 : vector<2x32xf32>
    %cst_386 = arith.constant dense<0.000000e+00> : vector<2x32xf32>
    %702 = tpu.matmul %663, %601, %cst_386 {dimension_numbers = #tpu.dot_dimension_numbers<[1], [0], [0], [1], [0, 0, 1, 1], [], []>} : vector<2x32xf32>, vector<32x32xf32>, vector<2x32xf32> -> vector<2x32xf32>
    %703 = arith.addf %693, %702 : vector<2x32xf32>
    %704 = arith.negf %703 : vector<2x32xf32>
    %705 = math.exp %704 : vector<2x32xf32>
    %cst_387 = arith.constant 1.000000e+00 : f32
    %706 = vector.broadcast %cst_387 : f32 to vector<2x32xf32>
    %707 = arith.addf %706, %705 : vector<2x32xf32>
    %708 = arith.divf %706, %707 : vector<2x32xf32>
    %cst_388 = arith.constant dense<0.000000e+00> : vector<2x32xf32>
    %709 = tpu.matmul %663, %603, %cst_388 {dimension_numbers = #tpu.dot_dimension_numbers<[1], [0], [0], [1], [0, 0, 1, 1], [], []>} : vector<2x32xf32>, vector<32x32xf32>, vector<2x32xf32> -> vector<2x32xf32>
    %710 = vector.broadcast %607 : vector<1x32xf32> to vector<2x32xf32>
    %711 = arith.addf %709, %710 : vector<2x32xf32>
    %712 = arith.mulf %701, %711 : vector<2x32xf32>
    %713 = arith.addf %694, %712 : vector<2x32xf32>
    %714 = math.tanh %713 : vector<2x32xf32>
    %cst_389 = arith.constant 1.000000e+00 : f32
    %715 = vector.broadcast %cst_389 : f32 to vector<2x32xf32>
    %716 = arith.subf %715, %708 : vector<2x32xf32>
    %717 = arith.mulf %716, %714 : vector<2x32xf32>
    %718 = arith.mulf %708, %663 : vector<2x32xf32>
    %719 = arith.addf %717, %718 : vector<2x32xf32>
    %720 = vector.extract_strided_slice %536 {offsets = [4, 0], sizes = [2, 32], strides = [1, 1]} : vector<16x32xf32> to vector<2x32xf32>
    %721 = vector.extract_strided_slice %547 {offsets = [4, 0], sizes = [2, 32], strides = [1, 1]} : vector<16x32xf32> to vector<2x32xf32>
    %722 = vector.extract_strided_slice %558 {offsets = [4, 0], sizes = [2, 32], strides = [1, 1]} : vector<16x32xf32> to vector<2x32xf32>
    %cst_390 = arith.constant dense<0.000000e+00> : vector<2x32xf32>
    %723 = tpu.matmul %691, %593, %cst_390 {dimension_numbers = #tpu.dot_dimension_numbers<[1], [0], [0], [1], [0, 0, 1, 1], [], []>} : vector<2x32xf32>, vector<32x32xf32>, vector<2x32xf32> -> vector<2x32xf32>
    %724 = arith.addf %720, %723 : vector<2x32xf32>
    %725 = arith.negf %724 : vector<2x32xf32>
    %726 = math.exp %725 : vector<2x32xf32>
    %cst_391 = arith.constant 1.000000e+00 : f32
    %727 = vector.broadcast %cst_391 : f32 to vector<2x32xf32>
    %728 = arith.addf %727, %726 : vector<2x32xf32>
    %729 = arith.divf %727, %728 : vector<2x32xf32>
    %cst_392 = arith.constant dense<0.000000e+00> : vector<2x32xf32>
    %730 = tpu.matmul %691, %595, %cst_392 {dimension_numbers = #tpu.dot_dimension_numbers<[1], [0], [0], [1], [0, 0, 1, 1], [], []>} : vector<2x32xf32>, vector<32x32xf32>, vector<2x32xf32> -> vector<2x32xf32>
    %731 = arith.addf %721, %730 : vector<2x32xf32>
    %732 = arith.negf %731 : vector<2x32xf32>
    %733 = math.exp %732 : vector<2x32xf32>
    %cst_393 = arith.constant 1.000000e+00 : f32
    %734 = vector.broadcast %cst_393 : f32 to vector<2x32xf32>
    %735 = arith.addf %734, %733 : vector<2x32xf32>
    %736 = arith.divf %734, %735 : vector<2x32xf32>
    %cst_394 = arith.constant dense<0.000000e+00> : vector<2x32xf32>
    %737 = tpu.matmul %691, %597, %cst_394 {dimension_numbers = #tpu.dot_dimension_numbers<[1], [0], [0], [1], [0, 0, 1, 1], [], []>} : vector<2x32xf32>, vector<32x32xf32>, vector<2x32xf32> -> vector<2x32xf32>
    %738 = vector.broadcast %605 : vector<1x32xf32> to vector<2x32xf32>
    %739 = arith.addf %737, %738 : vector<2x32xf32>
    %740 = arith.mulf %729, %739 : vector<2x32xf32>
    %741 = arith.addf %722, %740 : vector<2x32xf32>
    %742 = math.tanh %741 : vector<2x32xf32>
    %cst_395 = arith.constant 1.000000e+00 : f32
    %743 = vector.broadcast %cst_395 : f32 to vector<2x32xf32>
    %744 = arith.subf %743, %736 : vector<2x32xf32>
    %745 = arith.mulf %744, %742 : vector<2x32xf32>
    %746 = arith.mulf %736, %691 : vector<2x32xf32>
    %747 = arith.addf %745, %746 : vector<2x32xf32>
    %748 = vector.extract_strided_slice %569 {offsets = [10, 0], sizes = [2, 32], strides = [1, 1]} : vector<16x32xf32> to vector<2x32xf32>
    %749 = vector.extract_strided_slice %580 {offsets = [10, 0], sizes = [2, 32], strides = [1, 1]} : vector<16x32xf32> to vector<2x32xf32>
    %750 = vector.extract_strided_slice %591 {offsets = [10, 0], sizes = [2, 32], strides = [1, 1]} : vector<16x32xf32> to vector<2x32xf32>
    %cst_396 = arith.constant dense<0.000000e+00> : vector<2x32xf32>
    %751 = tpu.matmul %719, %599, %cst_396 {dimension_numbers = #tpu.dot_dimension_numbers<[1], [0], [0], [1], [0, 0, 1, 1], [], []>} : vector<2x32xf32>, vector<32x32xf32>, vector<2x32xf32> -> vector<2x32xf32>
    %752 = arith.addf %748, %751 : vector<2x32xf32>
    %753 = arith.negf %752 : vector<2x32xf32>
    %754 = math.exp %753 : vector<2x32xf32>
    %cst_397 = arith.constant 1.000000e+00 : f32
    %755 = vector.broadcast %cst_397 : f32 to vector<2x32xf32>
    %756 = arith.addf %755, %754 : vector<2x32xf32>
    %757 = arith.divf %755, %756 : vector<2x32xf32>
    %cst_398 = arith.constant dense<0.000000e+00> : vector<2x32xf32>
    %758 = tpu.matmul %719, %601, %cst_398 {dimension_numbers = #tpu.dot_dimension_numbers<[1], [0], [0], [1], [0, 0, 1, 1], [], []>} : vector<2x32xf32>, vector<32x32xf32>, vector<2x32xf32> -> vector<2x32xf32>
    %759 = arith.addf %749, %758 : vector<2x32xf32>
    %760 = arith.negf %759 : vector<2x32xf32>
    %761 = math.exp %760 : vector<2x32xf32>
    %cst_399 = arith.constant 1.000000e+00 : f32
    %762 = vector.broadcast %cst_399 : f32 to vector<2x32xf32>
    %763 = arith.addf %762, %761 : vector<2x32xf32>
    %764 = arith.divf %762, %763 : vector<2x32xf32>
    %cst_400 = arith.constant dense<0.000000e+00> : vector<2x32xf32>
    %765 = tpu.matmul %719, %603, %cst_400 {dimension_numbers = #tpu.dot_dimension_numbers<[1], [0], [0], [1], [0, 0, 1, 1], [], []>} : vector<2x32xf32>, vector<32x32xf32>, vector<2x32xf32> -> vector<2x32xf32>
    %766 = vector.broadcast %607 : vector<1x32xf32> to vector<2x32xf32>
    %767 = arith.addf %765, %766 : vector<2x32xf32>
    %768 = arith.mulf %757, %767 : vector<2x32xf32>
    %769 = arith.addf %750, %768 : vector<2x32xf32>
    %770 = math.tanh %769 : vector<2x32xf32>
    %cst_401 = arith.constant 1.000000e+00 : f32
    %771 = vector.broadcast %cst_401 : f32 to vector<2x32xf32>
    %772 = arith.subf %771, %764 : vector<2x32xf32>
    %773 = arith.mulf %772, %770 : vector<2x32xf32>
    %774 = arith.mulf %764, %719 : vector<2x32xf32>
    %775 = arith.addf %773, %774 : vector<2x32xf32>
    %776 = vector.extract_strided_slice %536 {offsets = [6, 0], sizes = [2, 32], strides = [1, 1]} : vector<16x32xf32> to vector<2x32xf32>
    %777 = vector.extract_strided_slice %547 {offsets = [6, 0], sizes = [2, 32], strides = [1, 1]} : vector<16x32xf32> to vector<2x32xf32>
    %778 = vector.extract_strided_slice %558 {offsets = [6, 0], sizes = [2, 32], strides = [1, 1]} : vector<16x32xf32> to vector<2x32xf32>
    %cst_402 = arith.constant dense<0.000000e+00> : vector<2x32xf32>
    %779 = tpu.matmul %747, %593, %cst_402 {dimension_numbers = #tpu.dot_dimension_numbers<[1], [0], [0], [1], [0, 0, 1, 1], [], []>} : vector<2x32xf32>, vector<32x32xf32>, vector<2x32xf32> -> vector<2x32xf32>
    %780 = arith.addf %776, %779 : vector<2x32xf32>
    %781 = arith.negf %780 : vector<2x32xf32>
    %782 = math.exp %781 : vector<2x32xf32>
    %cst_403 = arith.constant 1.000000e+00 : f32
    %783 = vector.broadcast %cst_403 : f32 to vector<2x32xf32>
    %784 = arith.addf %783, %782 : vector<2x32xf32>
    %785 = arith.divf %783, %784 : vector<2x32xf32>
    %cst_404 = arith.constant dense<0.000000e+00> : vector<2x32xf32>
    %786 = tpu.matmul %747, %595, %cst_404 {dimension_numbers = #tpu.dot_dimension_numbers<[1], [0], [0], [1], [0, 0, 1, 1], [], []>} : vector<2x32xf32>, vector<32x32xf32>, vector<2x32xf32> -> vector<2x32xf32>
    %787 = arith.addf %777, %786 : vector<2x32xf32>
    %788 = arith.negf %787 : vector<2x32xf32>
    %789 = math.exp %788 : vector<2x32xf32>
    %cst_405 = arith.constant 1.000000e+00 : f32
    %790 = vector.broadcast %cst_405 : f32 to vector<2x32xf32>
    %791 = arith.addf %790, %789 : vector<2x32xf32>
    %792 = arith.divf %790, %791 : vector<2x32xf32>
    %cst_406 = arith.constant dense<0.000000e+00> : vector<2x32xf32>
    %793 = tpu.matmul %747, %597, %cst_406 {dimension_numbers = #tpu.dot_dimension_numbers<[1], [0], [0], [1], [0, 0, 1, 1], [], []>} : vector<2x32xf32>, vector<32x32xf32>, vector<2x32xf32> -> vector<2x32xf32>
    %794 = vector.broadcast %605 : vector<1x32xf32> to vector<2x32xf32>
    %795 = arith.addf %793, %794 : vector<2x32xf32>
    %796 = arith.mulf %785, %795 : vector<2x32xf32>
    %797 = arith.addf %778, %796 : vector<2x32xf32>
    %798 = math.tanh %797 : vector<2x32xf32>
    %cst_407 = arith.constant 1.000000e+00 : f32
    %799 = vector.broadcast %cst_407 : f32 to vector<2x32xf32>
    %800 = arith.subf %799, %792 : vector<2x32xf32>
    %801 = arith.mulf %800, %798 : vector<2x32xf32>
    %802 = arith.mulf %792, %747 : vector<2x32xf32>
    %803 = arith.addf %801, %802 : vector<2x32xf32>
    %804 = vector.extract_strided_slice %569 {offsets = [8, 0], sizes = [2, 32], strides = [1, 1]} : vector<16x32xf32> to vector<2x32xf32>
    %805 = vector.extract_strided_slice %580 {offsets = [8, 0], sizes = [2, 32], strides = [1, 1]} : vector<16x32xf32> to vector<2x32xf32>
    %806 = vector.extract_strided_slice %591 {offsets = [8, 0], sizes = [2, 32], strides = [1, 1]} : vector<16x32xf32> to vector<2x32xf32>
    %cst_408 = arith.constant dense<0.000000e+00> : vector<2x32xf32>
    %807 = tpu.matmul %775, %599, %cst_408 {dimension_numbers = #tpu.dot_dimension_numbers<[1], [0], [0], [1], [0, 0, 1, 1], [], []>} : vector<2x32xf32>, vector<32x32xf32>, vector<2x32xf32> -> vector<2x32xf32>
    %808 = arith.addf %804, %807 : vector<2x32xf32>
    %809 = arith.negf %808 : vector<2x32xf32>
    %810 = math.exp %809 : vector<2x32xf32>
    %cst_409 = arith.constant 1.000000e+00 : f32
    %811 = vector.broadcast %cst_409 : f32 to vector<2x32xf32>
    %812 = arith.addf %811, %810 : vector<2x32xf32>
    %813 = arith.divf %811, %812 : vector<2x32xf32>
    %cst_410 = arith.constant dense<0.000000e+00> : vector<2x32xf32>
    %814 = tpu.matmul %775, %601, %cst_410 {dimension_numbers = #tpu.dot_dimension_numbers<[1], [0], [0], [1], [0, 0, 1, 1], [], []>} : vector<2x32xf32>, vector<32x32xf32>, vector<2x32xf32> -> vector<2x32xf32>
    %815 = arith.addf %805, %814 : vector<2x32xf32>
    %816 = arith.negf %815 : vector<2x32xf32>
    %817 = math.exp %816 : vector<2x32xf32>
    %cst_411 = arith.constant 1.000000e+00 : f32
    %818 = vector.broadcast %cst_411 : f32 to vector<2x32xf32>
    %819 = arith.addf %818, %817 : vector<2x32xf32>
    %820 = arith.divf %818, %819 : vector<2x32xf32>
    %cst_412 = arith.constant dense<0.000000e+00> : vector<2x32xf32>
    %821 = tpu.matmul %775, %603, %cst_412 {dimension_numbers = #tpu.dot_dimension_numbers<[1], [0], [0], [1], [0, 0, 1, 1], [], []>} : vector<2x32xf32>, vector<32x32xf32>, vector<2x32xf32> -> vector<2x32xf32>
    %822 = vector.broadcast %607 : vector<1x32xf32> to vector<2x32xf32>
    %823 = arith.addf %821, %822 : vector<2x32xf32>
    %824 = arith.mulf %813, %823 : vector<2x32xf32>
    %825 = arith.addf %806, %824 : vector<2x32xf32>
    %826 = math.tanh %825 : vector<2x32xf32>
    %cst_413 = arith.constant 1.000000e+00 : f32
    %827 = vector.broadcast %cst_413 : f32 to vector<2x32xf32>
    %828 = arith.subf %827, %820 : vector<2x32xf32>
    %829 = arith.mulf %828, %826 : vector<2x32xf32>
    %830 = arith.mulf %820, %775 : vector<2x32xf32>
    %831 = arith.addf %829, %830 : vector<2x32xf32>
    %832 = vector.extract_strided_slice %536 {offsets = [8, 0], sizes = [2, 32], strides = [1, 1]} : vector<16x32xf32> to vector<2x32xf32>
    %833 = vector.extract_strided_slice %547 {offsets = [8, 0], sizes = [2, 32], strides = [1, 1]} : vector<16x32xf32> to vector<2x32xf32>
    %834 = vector.extract_strided_slice %558 {offsets = [8, 0], sizes = [2, 32], strides = [1, 1]} : vector<16x32xf32> to vector<2x32xf32>
    %cst_414 = arith.constant dense<0.000000e+00> : vector<2x32xf32>
    %835 = tpu.matmul %803, %593, %cst_414 {dimension_numbers = #tpu.dot_dimension_numbers<[1], [0], [0], [1], [0, 0, 1, 1], [], []>} : vector<2x32xf32>, vector<32x32xf32>, vector<2x32xf32> -> vector<2x32xf32>
    %836 = arith.addf %832, %835 : vector<2x32xf32>
    %837 = arith.negf %836 : vector<2x32xf32>
    %838 = math.exp %837 : vector<2x32xf32>
    %cst_415 = arith.constant 1.000000e+00 : f32
    %839 = vector.broadcast %cst_415 : f32 to vector<2x32xf32>
    %840 = arith.addf %839, %838 : vector<2x32xf32>
    %841 = arith.divf %839, %840 : vector<2x32xf32>
    %cst_416 = arith.constant dense<0.000000e+00> : vector<2x32xf32>
    %842 = tpu.matmul %803, %595, %cst_416 {dimension_numbers = #tpu.dot_dimension_numbers<[1], [0], [0], [1], [0, 0, 1, 1], [], []>} : vector<2x32xf32>, vector<32x32xf32>, vector<2x32xf32> -> vector<2x32xf32>
    %843 = arith.addf %833, %842 : vector<2x32xf32>
    %844 = arith.negf %843 : vector<2x32xf32>
    %845 = math.exp %844 : vector<2x32xf32>
    %cst_417 = arith.constant 1.000000e+00 : f32
    %846 = vector.broadcast %cst_417 : f32 to vector<2x32xf32>
    %847 = arith.addf %846, %845 : vector<2x32xf32>
    %848 = arith.divf %846, %847 : vector<2x32xf32>
    %cst_418 = arith.constant dense<0.000000e+00> : vector<2x32xf32>
    %849 = tpu.matmul %803, %597, %cst_418 {dimension_numbers = #tpu.dot_dimension_numbers<[1], [0], [0], [1], [0, 0, 1, 1], [], []>} : vector<2x32xf32>, vector<32x32xf32>, vector<2x32xf32> -> vector<2x32xf32>
    %850 = vector.broadcast %605 : vector<1x32xf32> to vector<2x32xf32>
    %851 = arith.addf %849, %850 : vector<2x32xf32>
    %852 = arith.mulf %841, %851 : vector<2x32xf32>
    %853 = arith.addf %834, %852 : vector<2x32xf32>
    %854 = math.tanh %853 : vector<2x32xf32>
    %cst_419 = arith.constant 1.000000e+00 : f32
    %855 = vector.broadcast %cst_419 : f32 to vector<2x32xf32>
    %856 = arith.subf %855, %848 : vector<2x32xf32>
    %857 = arith.mulf %856, %854 : vector<2x32xf32>
    %858 = arith.mulf %848, %803 : vector<2x32xf32>
    %859 = arith.addf %857, %858 : vector<2x32xf32>
    %860 = vector.extract_strided_slice %569 {offsets = [6, 0], sizes = [2, 32], strides = [1, 1]} : vector<16x32xf32> to vector<2x32xf32>
    %861 = vector.extract_strided_slice %580 {offsets = [6, 0], sizes = [2, 32], strides = [1, 1]} : vector<16x32xf32> to vector<2x32xf32>
    %862 = vector.extract_strided_slice %591 {offsets = [6, 0], sizes = [2, 32], strides = [1, 1]} : vector<16x32xf32> to vector<2x32xf32>
    %cst_420 = arith.constant dense<0.000000e+00> : vector<2x32xf32>
    %863 = tpu.matmul %831, %599, %cst_420 {dimension_numbers = #tpu.dot_dimension_numbers<[1], [0], [0], [1], [0, 0, 1, 1], [], []>} : vector<2x32xf32>, vector<32x32xf32>, vector<2x32xf32> -> vector<2x32xf32>
    %864 = arith.addf %860, %863 : vector<2x32xf32>
    %865 = arith.negf %864 : vector<2x32xf32>
    %866 = math.exp %865 : vector<2x32xf32>
    %cst_421 = arith.constant 1.000000e+00 : f32
    %867 = vector.broadcast %cst_421 : f32 to vector<2x32xf32>
    %868 = arith.addf %867, %866 : vector<2x32xf32>
    %869 = arith.divf %867, %868 : vector<2x32xf32>
    %cst_422 = arith.constant dense<0.000000e+00> : vector<2x32xf32>
    %870 = tpu.matmul %831, %601, %cst_422 {dimension_numbers = #tpu.dot_dimension_numbers<[1], [0], [0], [1], [0, 0, 1, 1], [], []>} : vector<2x32xf32>, vector<32x32xf32>, vector<2x32xf32> -> vector<2x32xf32>
    %871 = arith.addf %861, %870 : vector<2x32xf32>
    %872 = arith.negf %871 : vector<2x32xf32>
    %873 = math.exp %872 : vector<2x32xf32>
    %cst_423 = arith.constant 1.000000e+00 : f32
    %874 = vector.broadcast %cst_423 : f32 to vector<2x32xf32>
    %875 = arith.addf %874, %873 : vector<2x32xf32>
    %876 = arith.divf %874, %875 : vector<2x32xf32>
    %cst_424 = arith.constant dense<0.000000e+00> : vector<2x32xf32>
    %877 = tpu.matmul %831, %603, %cst_424 {dimension_numbers = #tpu.dot_dimension_numbers<[1], [0], [0], [1], [0, 0, 1, 1], [], []>} : vector<2x32xf32>, vector<32x32xf32>, vector<2x32xf32> -> vector<2x32xf32>
    %878 = vector.broadcast %607 : vector<1x32xf32> to vector<2x32xf32>
    %879 = arith.addf %877, %878 : vector<2x32xf32>
    %880 = arith.mulf %869, %879 : vector<2x32xf32>
    %881 = arith.addf %862, %880 : vector<2x32xf32>
    %882 = math.tanh %881 : vector<2x32xf32>
    %cst_425 = arith.constant 1.000000e+00 : f32
    %883 = vector.broadcast %cst_425 : f32 to vector<2x32xf32>
    %884 = arith.subf %883, %876 : vector<2x32xf32>
    %885 = arith.mulf %884, %882 : vector<2x32xf32>
    %886 = arith.mulf %876, %831 : vector<2x32xf32>
    %887 = arith.addf %885, %886 : vector<2x32xf32>
    %888 = vector.extract_strided_slice %536 {offsets = [10, 0], sizes = [2, 32], strides = [1, 1]} : vector<16x32xf32> to vector<2x32xf32>
    %889 = vector.extract_strided_slice %547 {offsets = [10, 0], sizes = [2, 32], strides = [1, 1]} : vector<16x32xf32> to vector<2x32xf32>
    %890 = vector.extract_strided_slice %558 {offsets = [10, 0], sizes = [2, 32], strides = [1, 1]} : vector<16x32xf32> to vector<2x32xf32>
    %cst_426 = arith.constant dense<0.000000e+00> : vector<2x32xf32>
    %891 = tpu.matmul %859, %593, %cst_426 {dimension_numbers = #tpu.dot_dimension_numbers<[1], [0], [0], [1], [0, 0, 1, 1], [], []>} : vector<2x32xf32>, vector<32x32xf32>, vector<2x32xf32> -> vector<2x32xf32>
    %892 = arith.addf %888, %891 : vector<2x32xf32>
    %893 = arith.negf %892 : vector<2x32xf32>
    %894 = math.exp %893 : vector<2x32xf32>
    %cst_427 = arith.constant 1.000000e+00 : f32
    %895 = vector.broadcast %cst_427 : f32 to vector<2x32xf32>
    %896 = arith.addf %895, %894 : vector<2x32xf32>
    %897 = arith.divf %895, %896 : vector<2x32xf32>
    %cst_428 = arith.constant dense<0.000000e+00> : vector<2x32xf32>
    %898 = tpu.matmul %859, %595, %cst_428 {dimension_numbers = #tpu.dot_dimension_numbers<[1], [0], [0], [1], [0, 0, 1, 1], [], []>} : vector<2x32xf32>, vector<32x32xf32>, vector<2x32xf32> -> vector<2x32xf32>
    %899 = arith.addf %889, %898 : vector<2x32xf32>
    %900 = arith.negf %899 : vector<2x32xf32>
    %901 = math.exp %900 : vector<2x32xf32>
    %cst_429 = arith.constant 1.000000e+00 : f32
    %902 = vector.broadcast %cst_429 : f32 to vector<2x32xf32>
    %903 = arith.addf %902, %901 : vector<2x32xf32>
    %904 = arith.divf %902, %903 : vector<2x32xf32>
    %cst_430 = arith.constant dense<0.000000e+00> : vector<2x32xf32>
    %905 = tpu.matmul %859, %597, %cst_430 {dimension_numbers = #tpu.dot_dimension_numbers<[1], [0], [0], [1], [0, 0, 1, 1], [], []>} : vector<2x32xf32>, vector<32x32xf32>, vector<2x32xf32> -> vector<2x32xf32>
    %906 = vector.broadcast %605 : vector<1x32xf32> to vector<2x32xf32>
    %907 = arith.addf %905, %906 : vector<2x32xf32>
    %908 = arith.mulf %897, %907 : vector<2x32xf32>
    %909 = arith.addf %890, %908 : vector<2x32xf32>
    %910 = math.tanh %909 : vector<2x32xf32>
    %cst_431 = arith.constant 1.000000e+00 : f32
    %911 = vector.broadcast %cst_431 : f32 to vector<2x32xf32>
    %912 = arith.subf %911, %904 : vector<2x32xf32>
    %913 = arith.mulf %912, %910 : vector<2x32xf32>
    %914 = arith.mulf %904, %859 : vector<2x32xf32>
    %915 = arith.addf %913, %914 : vector<2x32xf32>
    %916 = vector.extract_strided_slice %569 {offsets = [4, 0], sizes = [2, 32], strides = [1, 1]} : vector<16x32xf32> to vector<2x32xf32>
    %917 = vector.extract_strided_slice %580 {offsets = [4, 0], sizes = [2, 32], strides = [1, 1]} : vector<16x32xf32> to vector<2x32xf32>
    %918 = vector.extract_strided_slice %591 {offsets = [4, 0], sizes = [2, 32], strides = [1, 1]} : vector<16x32xf32> to vector<2x32xf32>
    %cst_432 = arith.constant dense<0.000000e+00> : vector<2x32xf32>
    %919 = tpu.matmul %887, %599, %cst_432 {dimension_numbers = #tpu.dot_dimension_numbers<[1], [0], [0], [1], [0, 0, 1, 1], [], []>} : vector<2x32xf32>, vector<32x32xf32>, vector<2x32xf32> -> vector<2x32xf32>
    %920 = arith.addf %916, %919 : vector<2x32xf32>
    %921 = arith.negf %920 : vector<2x32xf32>
    %922 = math.exp %921 : vector<2x32xf32>
    %cst_433 = arith.constant 1.000000e+00 : f32
    %923 = vector.broadcast %cst_433 : f32 to vector<2x32xf32>
    %924 = arith.addf %923, %922 : vector<2x32xf32>
    %925 = arith.divf %923, %924 : vector<2x32xf32>
    %cst_434 = arith.constant dense<0.000000e+00> : vector<2x32xf32>
    %926 = tpu.matmul %887, %601, %cst_434 {dimension_numbers = #tpu.dot_dimension_numbers<[1], [0], [0], [1], [0, 0, 1, 1], [], []>} : vector<2x32xf32>, vector<32x32xf32>, vector<2x32xf32> -> vector<2x32xf32>
    %927 = arith.addf %917, %926 : vector<2x32xf32>
    %928 = arith.negf %927 : vector<2x32xf32>
    %929 = math.exp %928 : vector<2x32xf32>
    %cst_435 = arith.constant 1.000000e+00 : f32
    %930 = vector.broadcast %cst_435 : f32 to vector<2x32xf32>
    %931 = arith.addf %930, %929 : vector<2x32xf32>
    %932 = arith.divf %930, %931 : vector<2x32xf32>
    %cst_436 = arith.constant dense<0.000000e+00> : vector<2x32xf32>
    %933 = tpu.matmul %887, %603, %cst_436 {dimension_numbers = #tpu.dot_dimension_numbers<[1], [0], [0], [1], [0, 0, 1, 1], [], []>} : vector<2x32xf32>, vector<32x32xf32>, vector<2x32xf32> -> vector<2x32xf32>
    %934 = vector.broadcast %607 : vector<1x32xf32> to vector<2x32xf32>
    %935 = arith.addf %933, %934 : vector<2x32xf32>
    %936 = arith.mulf %925, %935 : vector<2x32xf32>
    %937 = arith.addf %918, %936 : vector<2x32xf32>
    %938 = math.tanh %937 : vector<2x32xf32>
    %cst_437 = arith.constant 1.000000e+00 : f32
    %939 = vector.broadcast %cst_437 : f32 to vector<2x32xf32>
    %940 = arith.subf %939, %932 : vector<2x32xf32>
    %941 = arith.mulf %940, %938 : vector<2x32xf32>
    %942 = arith.mulf %932, %887 : vector<2x32xf32>
    %943 = arith.addf %941, %942 : vector<2x32xf32>
    %944 = vector.extract_strided_slice %536 {offsets = [12, 0], sizes = [2, 32], strides = [1, 1]} : vector<16x32xf32> to vector<2x32xf32>
    %945 = vector.extract_strided_slice %547 {offsets = [12, 0], sizes = [2, 32], strides = [1, 1]} : vector<16x32xf32> to vector<2x32xf32>
    %946 = vector.extract_strided_slice %558 {offsets = [12, 0], sizes = [2, 32], strides = [1, 1]} : vector<16x32xf32> to vector<2x32xf32>
    %cst_438 = arith.constant dense<0.000000e+00> : vector<2x32xf32>
    %947 = tpu.matmul %915, %593, %cst_438 {dimension_numbers = #tpu.dot_dimension_numbers<[1], [0], [0], [1], [0, 0, 1, 1], [], []>} : vector<2x32xf32>, vector<32x32xf32>, vector<2x32xf32> -> vector<2x32xf32>
    %948 = arith.addf %944, %947 : vector<2x32xf32>
    %949 = arith.negf %948 : vector<2x32xf32>
    %950 = math.exp %949 : vector<2x32xf32>
    %cst_439 = arith.constant 1.000000e+00 : f32
    %951 = vector.broadcast %cst_439 : f32 to vector<2x32xf32>
    %952 = arith.addf %951, %950 : vector<2x32xf32>
    %953 = arith.divf %951, %952 : vector<2x32xf32>
    %cst_440 = arith.constant dense<0.000000e+00> : vector<2x32xf32>
    %954 = tpu.matmul %915, %595, %cst_440 {dimension_numbers = #tpu.dot_dimension_numbers<[1], [0], [0], [1], [0, 0, 1, 1], [], []>} : vector<2x32xf32>, vector<32x32xf32>, vector<2x32xf32> -> vector<2x32xf32>
    %955 = arith.addf %945, %954 : vector<2x32xf32>
    %956 = arith.negf %955 : vector<2x32xf32>
    %957 = math.exp %956 : vector<2x32xf32>
    %cst_441 = arith.constant 1.000000e+00 : f32
    %958 = vector.broadcast %cst_441 : f32 to vector<2x32xf32>
    %959 = arith.addf %958, %957 : vector<2x32xf32>
    %960 = arith.divf %958, %959 : vector<2x32xf32>
    %cst_442 = arith.constant dense<0.000000e+00> : vector<2x32xf32>
    %961 = tpu.matmul %915, %597, %cst_442 {dimension_numbers = #tpu.dot_dimension_numbers<[1], [0], [0], [1], [0, 0, 1, 1], [], []>} : vector<2x32xf32>, vector<32x32xf32>, vector<2x32xf32> -> vector<2x32xf32>
    %962 = vector.broadcast %605 : vector<1x32xf32> to vector<2x32xf32>
    %963 = arith.addf %961, %962 : vector<2x32xf32>
    %964 = arith.mulf %953, %963 : vector<2x32xf32>
    %965 = arith.addf %946, %964 : vector<2x32xf32>
    %966 = math.tanh %965 : vector<2x32xf32>
    %cst_443 = arith.constant 1.000000e+00 : f32
    %967 = vector.broadcast %cst_443 : f32 to vector<2x32xf32>
    %968 = arith.subf %967, %960 : vector<2x32xf32>
    %969 = arith.mulf %968, %966 : vector<2x32xf32>
    %970 = arith.mulf %960, %915 : vector<2x32xf32>
    %971 = arith.addf %969, %970 : vector<2x32xf32>
    %972 = vector.extract_strided_slice %569 {offsets = [2, 0], sizes = [2, 32], strides = [1, 1]} : vector<16x32xf32> to vector<2x32xf32>
    %973 = vector.extract_strided_slice %580 {offsets = [2, 0], sizes = [2, 32], strides = [1, 1]} : vector<16x32xf32> to vector<2x32xf32>
    %974 = vector.extract_strided_slice %591 {offsets = [2, 0], sizes = [2, 32], strides = [1, 1]} : vector<16x32xf32> to vector<2x32xf32>
    %cst_444 = arith.constant dense<0.000000e+00> : vector<2x32xf32>
    %975 = tpu.matmul %943, %599, %cst_444 {dimension_numbers = #tpu.dot_dimension_numbers<[1], [0], [0], [1], [0, 0, 1, 1], [], []>} : vector<2x32xf32>, vector<32x32xf32>, vector<2x32xf32> -> vector<2x32xf32>
    %976 = arith.addf %972, %975 : vector<2x32xf32>
    %977 = arith.negf %976 : vector<2x32xf32>
    %978 = math.exp %977 : vector<2x32xf32>
    %cst_445 = arith.constant 1.000000e+00 : f32
    %979 = vector.broadcast %cst_445 : f32 to vector<2x32xf32>
    %980 = arith.addf %979, %978 : vector<2x32xf32>
    %981 = arith.divf %979, %980 : vector<2x32xf32>
    %cst_446 = arith.constant dense<0.000000e+00> : vector<2x32xf32>
    %982 = tpu.matmul %943, %601, %cst_446 {dimension_numbers = #tpu.dot_dimension_numbers<[1], [0], [0], [1], [0, 0, 1, 1], [], []>} : vector<2x32xf32>, vector<32x32xf32>, vector<2x32xf32> -> vector<2x32xf32>
    %983 = arith.addf %973, %982 : vector<2x32xf32>
    %984 = arith.negf %983 : vector<2x32xf32>
    %985 = math.exp %984 : vector<2x32xf32>
    %cst_447 = arith.constant 1.000000e+00 : f32
    %986 = vector.broadcast %cst_447 : f32 to vector<2x32xf32>
    %987 = arith.addf %986, %985 : vector<2x32xf32>
    %988 = arith.divf %986, %987 : vector<2x32xf32>
    %cst_448 = arith.constant dense<0.000000e+00> : vector<2x32xf32>
    %989 = tpu.matmul %943, %603, %cst_448 {dimension_numbers = #tpu.dot_dimension_numbers<[1], [0], [0], [1], [0, 0, 1, 1], [], []>} : vector<2x32xf32>, vector<32x32xf32>, vector<2x32xf32> -> vector<2x32xf32>
    %990 = vector.broadcast %607 : vector<1x32xf32> to vector<2x32xf32>
    %991 = arith.addf %989, %990 : vector<2x32xf32>
    %992 = arith.mulf %981, %991 : vector<2x32xf32>
    %993 = arith.addf %974, %992 : vector<2x32xf32>
    %994 = math.tanh %993 : vector<2x32xf32>
    %cst_449 = arith.constant 1.000000e+00 : f32
    %995 = vector.broadcast %cst_449 : f32 to vector<2x32xf32>
    %996 = arith.subf %995, %988 : vector<2x32xf32>
    %997 = arith.mulf %996, %994 : vector<2x32xf32>
    %998 = arith.mulf %988, %943 : vector<2x32xf32>
    %999 = arith.addf %997, %998 : vector<2x32xf32>
    %1000 = vector.extract_strided_slice %536 {offsets = [14, 0], sizes = [2, 32], strides = [1, 1]} : vector<16x32xf32> to vector<2x32xf32>
    %1001 = vector.extract_strided_slice %547 {offsets = [14, 0], sizes = [2, 32], strides = [1, 1]} : vector<16x32xf32> to vector<2x32xf32>
    %1002 = vector.extract_strided_slice %558 {offsets = [14, 0], sizes = [2, 32], strides = [1, 1]} : vector<16x32xf32> to vector<2x32xf32>
    %cst_450 = arith.constant dense<0.000000e+00> : vector<2x32xf32>
    %1003 = tpu.matmul %971, %593, %cst_450 {dimension_numbers = #tpu.dot_dimension_numbers<[1], [0], [0], [1], [0, 0, 1, 1], [], []>} : vector<2x32xf32>, vector<32x32xf32>, vector<2x32xf32> -> vector<2x32xf32>
    %1004 = arith.addf %1000, %1003 : vector<2x32xf32>
    %1005 = arith.negf %1004 : vector<2x32xf32>
    %1006 = math.exp %1005 : vector<2x32xf32>
    %cst_451 = arith.constant 1.000000e+00 : f32
    %1007 = vector.broadcast %cst_451 : f32 to vector<2x32xf32>
    %1008 = arith.addf %1007, %1006 : vector<2x32xf32>
    %1009 = arith.divf %1007, %1008 : vector<2x32xf32>
    %cst_452 = arith.constant dense<0.000000e+00> : vector<2x32xf32>
    %1010 = tpu.matmul %971, %595, %cst_452 {dimension_numbers = #tpu.dot_dimension_numbers<[1], [0], [0], [1], [0, 0, 1, 1], [], []>} : vector<2x32xf32>, vector<32x32xf32>, vector<2x32xf32> -> vector<2x32xf32>
    %1011 = arith.addf %1001, %1010 : vector<2x32xf32>
    %1012 = arith.negf %1011 : vector<2x32xf32>
    %1013 = math.exp %1012 : vector<2x32xf32>
    %cst_453 = arith.constant 1.000000e+00 : f32
    %1014 = vector.broadcast %cst_453 : f32 to vector<2x32xf32>
    %1015 = arith.addf %1014, %1013 : vector<2x32xf32>
    %1016 = arith.divf %1014, %1015 : vector<2x32xf32>
    %cst_454 = arith.constant dense<0.000000e+00> : vector<2x32xf32>
    %1017 = tpu.matmul %971, %597, %cst_454 {dimension_numbers = #tpu.dot_dimension_numbers<[1], [0], [0], [1], [0, 0, 1, 1], [], []>} : vector<2x32xf32>, vector<32x32xf32>, vector<2x32xf32> -> vector<2x32xf32>
    %1018 = vector.broadcast %605 : vector<1x32xf32> to vector<2x32xf32>
    %1019 = arith.addf %1017, %1018 : vector<2x32xf32>
    %1020 = arith.mulf %1009, %1019 : vector<2x32xf32>
    %1021 = arith.addf %1002, %1020 : vector<2x32xf32>
    %1022 = math.tanh %1021 : vector<2x32xf32>
    %cst_455 = arith.constant 1.000000e+00 : f32
    %1023 = vector.broadcast %cst_455 : f32 to vector<2x32xf32>
    %1024 = arith.subf %1023, %1016 : vector<2x32xf32>
    %1025 = arith.mulf %1024, %1022 : vector<2x32xf32>
    %1026 = arith.mulf %1016, %971 : vector<2x32xf32>
    %1027 = arith.addf %1025, %1026 : vector<2x32xf32>
    %1028 = vector.extract_strided_slice %569 {offsets = [0, 0], sizes = [2, 32], strides = [1, 1]} : vector<16x32xf32> to vector<2x32xf32>
    %1029 = vector.extract_strided_slice %580 {offsets = [0, 0], sizes = [2, 32], strides = [1, 1]} : vector<16x32xf32> to vector<2x32xf32>
    %1030 = vector.extract_strided_slice %591 {offsets = [0, 0], sizes = [2, 32], strides = [1, 1]} : vector<16x32xf32> to vector<2x32xf32>
    %cst_456 = arith.constant dense<0.000000e+00> : vector<2x32xf32>
    %1031 = tpu.matmul %999, %599, %cst_456 {dimension_numbers = #tpu.dot_dimension_numbers<[1], [0], [0], [1], [0, 0, 1, 1], [], []>} : vector<2x32xf32>, vector<32x32xf32>, vector<2x32xf32> -> vector<2x32xf32>
    %1032 = arith.addf %1028, %1031 : vector<2x32xf32>
    %1033 = arith.negf %1032 : vector<2x32xf32>
    %1034 = math.exp %1033 : vector<2x32xf32>
    %cst_457 = arith.constant 1.000000e+00 : f32
    %1035 = vector.broadcast %cst_457 : f32 to vector<2x32xf32>
    %1036 = arith.addf %1035, %1034 : vector<2x32xf32>
    %1037 = arith.divf %1035, %1036 : vector<2x32xf32>
    %cst_458 = arith.constant dense<0.000000e+00> : vector<2x32xf32>
    %1038 = tpu.matmul %999, %601, %cst_458 {dimension_numbers = #tpu.dot_dimension_numbers<[1], [0], [0], [1], [0, 0, 1, 1], [], []>} : vector<2x32xf32>, vector<32x32xf32>, vector<2x32xf32> -> vector<2x32xf32>
    %1039 = arith.addf %1029, %1038 : vector<2x32xf32>
    %1040 = arith.negf %1039 : vector<2x32xf32>
    %1041 = math.exp %1040 : vector<2x32xf32>
    %cst_459 = arith.constant 1.000000e+00 : f32
    %1042 = vector.broadcast %cst_459 : f32 to vector<2x32xf32>
    %1043 = arith.addf %1042, %1041 : vector<2x32xf32>
    %1044 = arith.divf %1042, %1043 : vector<2x32xf32>
    %cst_460 = arith.constant dense<0.000000e+00> : vector<2x32xf32>
    %1045 = tpu.matmul %999, %603, %cst_460 {dimension_numbers = #tpu.dot_dimension_numbers<[1], [0], [0], [1], [0, 0, 1, 1], [], []>} : vector<2x32xf32>, vector<32x32xf32>, vector<2x32xf32> -> vector<2x32xf32>
    %1046 = vector.broadcast %607 : vector<1x32xf32> to vector<2x32xf32>
    %1047 = arith.addf %1045, %1046 : vector<2x32xf32>
    %1048 = arith.mulf %1037, %1047 : vector<2x32xf32>
    %1049 = arith.addf %1030, %1048 : vector<2x32xf32>
    %1050 = math.tanh %1049 : vector<2x32xf32>
    %cst_461 = arith.constant 1.000000e+00 : f32
    %1051 = vector.broadcast %cst_461 : f32 to vector<2x32xf32>
    %1052 = arith.subf %1051, %1044 : vector<2x32xf32>
    %1053 = arith.mulf %1052, %1050 : vector<2x32xf32>
    %1054 = arith.mulf %1044, %999 : vector<2x32xf32>
    %1055 = arith.addf %1053, %1054 : vector<2x32xf32>
    %c0_462 = arith.constant 0 : index
    %c0_463 = arith.constant 0 : index
    %c0_464 = arith.constant 0 : index
    %1056 = vector.load %arg5[%c0_462, %c0_463, %c0_464] : memref<2x32x64xf32, #tpu.memory_space<vmem>>, vector<1x32x64xf32>
    %1057 = vector.shape_cast %1056 : vector<1x32x64xf32> to vector<32x64xf32>
    %cst_465 = arith.constant dense<0.000000e+00> : vector<2x64xf32>
    %1058 = tpu.matmul %1027, %1057, %cst_465 {dimension_numbers = #tpu.dot_dimension_numbers<[1], [0], [0], [1], [0, 0, 1, 1], [], []>} : vector<2x32xf32>, vector<32x64xf32>, vector<2x64xf32> -> vector<2x64xf32>
    %c1_466 = arith.constant 1 : index
    %c0_467 = arith.constant 0 : index
    %c0_468 = arith.constant 0 : index
    %1059 = vector.load %arg5[%c1_466, %c0_467, %c0_468] : memref<2x32x64xf32, #tpu.memory_space<vmem>>, vector<1x32x64xf32>
    %1060 = vector.shape_cast %1059 : vector<1x32x64xf32> to vector<32x64xf32>
    %cst_469 = arith.constant dense<0.000000e+00> : vector<2x64xf32>
    %1061 = tpu.matmul %1055, %1060, %cst_469 {dimension_numbers = #tpu.dot_dimension_numbers<[1], [0], [0], [1], [0, 0, 1, 1], [], []>} : vector<2x32xf32>, vector<32x64xf32>, vector<2x64xf32> -> vector<2x64xf32>
    %1062 = arith.addf %1058, %1061 : vector<2x64xf32>
    %c0_470 = arith.constant 0 : index
    %c0_471 = arith.constant 0 : index
    %1063 = vector.load %arg6[%c0_470, %c0_471] : memref<1x64xf32, #tpu.memory_space<vmem>>, vector<1x64xf32>
    %1064 = vector.broadcast %1063 : vector<1x64xf32> to vector<2x64xf32>
    %1065 = arith.addf %1062, %1064 : vector<2x64xf32>
    %cst_472 = arith.constant 0.000000e+00 : f32
    %1066 = vector.broadcast %cst_472 : f32 to vector<2x64xf32>
    %1067 = arith.maximumf %1065, %1066 : vector<2x64xf32>
    %c0_473 = arith.constant 0 : index
    %c0_474 = arith.constant 0 : index
    %1068 = vector.load %arg7[%c0_473, %c0_474] : memref<64x1xf32, #tpu.memory_space<vmem>>, vector<64x1xf32>
    %cst_475 = arith.constant dense<0.000000e+00> : vector<2x1xf32>
    %1069 = tpu.matmul %1067, %1068, %cst_475 {dimension_numbers = #tpu.dot_dimension_numbers<[1], [0], [0], [1], [0, 0, 1, 1], [], []>} : vector<2x64xf32>, vector<64x1xf32>, vector<2x1xf32> -> vector<2x1xf32>
    %c0_476 = arith.constant 0 : index
    %c0_477 = arith.constant 0 : index
    %1070 = vector.load %arg8[%c0_476, %c0_477] : memref<1x1xf32, #tpu.memory_space<vmem>>, vector<1x1xf32>
    %1071 = vector.broadcast %1070 : vector<1x1xf32> to vector<2x1xf32>
    %1072 = arith.addf %1069, %1071 : vector<2x1xf32>
    %1073 = arith.negf %1072 : vector<2x1xf32>
    %1074 = math.exp %1073 : vector<2x1xf32>
    %cst_478 = arith.constant 1.000000e+00 : f32
    %1075 = vector.broadcast %cst_478 : f32 to vector<2x1xf32>
    %1076 = arith.addf %1075, %1074 : vector<2x1xf32>
    %1077 = arith.divf %1075, %1076 : vector<2x1xf32>
    %c0_479 = arith.constant 0 : index
    %c0_480 = arith.constant 0 : index
    %1078 = vector.load %arg9[%c0_479, %c0_480] : memref<2x1xf32, #tpu.memory_space<vmem>>, vector<2x1xf32>
    tpu.vector_store %arg9[%c0_479, %c0_480], %1077 {strides = array<i32>} : memref<2x1xf32, #tpu.memory_space<vmem>>, vector<2x1xf32>,
    return
  }
}

</mosaic_0001>

<llo_original>
// kernel: disaster_tweets_bigru.1
$region0: #{disaster_tweets_bigru.1}
  #allocation0 [shape = 'u32[]', space=smem, size = 0x4, offset = 0x4, fixed_abs, tag = 'smem constant byte address 0x4 - core index']
  #allocation1 [shape = 'u32[144,128]{1,0:T(1,128)}', space=vmem, size = 0x12000, scoped, tag = 'internal scratch']
  #allocation2 [shape = 'f32[16,32]{1,0:T(8,128)}', space=vmem, size = 0x2000, scoped, tag = 'scratch operand']
  #allocation3 [shape = 'f32[16,32]{1,0:T(8,128)}', space=vmem, size = 0x2000, scoped, tag = 'scratch operand']
  #allocation4 [shape = 'f32[1,1]{1,0:T(1,128)S(1)}', space=vmem, size = 0x200, scoped, tag = 'scoped memory for disaster_tweets_bigru.1']
  %s0 = inlined_call_operand.vmem [shape: f32[16,32], index: 0, kind: input, shape index: {}]
  %s1 = inlined_call_operand.vmem [shape: f32[2,3,32,32], index: 1, kind: input, shape index: {}]
  %s2 = inlined_call_operand.vmem [shape: f32[2,2,3,32,32], index: 2, kind: input, shape index: {}]
  %s3 = inlined_call_operand.vmem [shape: f32[2,3,2,32,32], index: 3, kind: input, shape index: {}]
  %s4 = inlined_call_operand.vmem [shape: f32[2,2,4,1,32], index: 4, kind: input, shape index: {}]
  %s5 = inlined_call_operand.vmem [shape: f32[2,32,64], index: 5, kind: input, shape index: {}]
  %s6 = inlined_call_operand.vmem [shape: f32[1,64], index: 6, kind: input, shape index: {}]
  %s7 = inlined_call_operand.vmem [shape: f32[64,1], index: 7, kind: input, shape index: {}]
  %s8 = inlined_call_operand.<no memory space> [shape: f32[1,1], index: 8, kind: input, shape index: {}]
  %s9 = inlined_call_operand.vmem [shape: f32[2,1], index: 9, kind: output, shape index: {}]
  %s10 = sld [smem:[#allocation0]]
  $region46: #{disaster_tweets_bigru.1} parent=0
    _
  %s12 = ssub.s32 1, %s10
  %s13 = scalar_select 0, %s12, %s10
  %v14 = vstv %s8
  %15 = vst [vmem:[#allocation4] sm:$0x1] %v14
  // Predicated region
  $region2: #{disaster_tweets_bigru.1} parent=0 // pred_check
    _
  $region3: #{disaster_tweets_bigru.1} parent=0 // pred_check_branch
    %17 = sbr.rel (0) target = $region5
  $region4: #{disaster_tweets_bigru.1} parent=0 // pred_region
    _
  $region5: #{disaster_tweets_bigru.1} parent=0 // pred_fallthru
    _
  // Predicated region
  $region6: #{disaster_tweets_bigru.1} parent=0 // pred_check
    _
  $region7: #{disaster_tweets_bigru.1} parent=0 // pred_check_branch
    %19 = sbr.rel (0) target = $region9
  $region8: #{disaster_tweets_bigru.1} parent=0 // pred_region
    _
  $region9: #{disaster_tweets_bigru.1} parent=0 // pred_fallthru
    _
  // Predicated region
  $region10: #{disaster_tweets_bigru.1} parent=0 // pred_check
    _
  $region11: #{disaster_tweets_bigru.1} parent=0 // pred_check_branch
    %21 = sbr.rel (0) target = $region13
  $region12: #{disaster_tweets_bigru.1} parent=0 // pred_region
    _
  $region13: #{disaster_tweets_bigru.1} parent=0 // pred_fallthru
    _
  // Predicated region
  $region14: #{disaster_tweets_bigru.1} parent=0 // pred_check
    _
  $region15: #{disaster_tweets_bigru.1} parent=0 // pred_check_branch
    %23 = sbr.rel (0) target = $region17
  $region16: #{disaster_tweets_bigru.1} parent=0 // pred_region
    _
  $region17: #{disaster_tweets_bigru.1} parent=0 // pred_fallthru
    _
  // Predicated region
  $region18: #{disaster_tweets_bigru.1} parent=0 // pred_check
    _
  $region19: #{disaster_tweets_bigru.1} parent=0 // pred_check_branch
    %25 = sbr.rel (0) target = $region21
  $region20: #{disaster_tweets_bigru.1} parent=0 // pred_region
    _
  $region21: #{disaster_tweets_bigru.1} parent=0 // pred_fallthru
    _
  // Predicated region
  $region22: #{disaster_tweets_bigru.1} parent=0 // pred_check
    _
  $region23: #{disaster_tweets_bigru.1} parent=0 // pred_check_branch
    %27 = sbr.rel (0) target = $region25
  $region24: #{disaster_tweets_bigru.1} parent=0 // pred_region
    _
  $region25: #{disaster_tweets_bigru.1} parent=0 // pred_fallthru
    _
  // Predicated region
  $region26: #{disaster_tweets_bigru.1} parent=0 // pred_check
    _
  $region27: #{disaster_tweets_bigru.1} parent=0 // pred_check_branch
    %29 = sbr.rel (0) target = $region29
  $region28: #{disaster_tweets_bigru.1} parent=0 // pred_region
    _
  $region29: #{disaster_tweets_bigru.1} parent=0 // pred_fallthru
    _
  // Predicated region
  $region30: #{disaster_tweets_bigru.1} parent=0 // pred_check
    _
  $region31: #{disaster_tweets_bigru.1} parent=0 // pred_check_branch
    %31 = sbr.rel (0) target = $region33
  $region32: #{disaster_tweets_bigru.1} parent=0 // pred_region
    _
  $region33: #{disaster_tweets_bigru.1} parent=0 // pred_fallthru
    _
  // Predicated region
  $region34: #{disaster_tweets_bigru.1} parent=0 // pred_check
    _
  $region35: #{disaster_tweets_bigru.1} parent=0 // pred_check_branch
    %33 = sbr.rel (0) target = $region37
  $region36: #{disaster_tweets_bigru.1} parent=0 // pred_region
    _
  $region37: #{disaster_tweets_bigru.1} parent=0 // pred_fallthru
    _
  %v34 = vld [vmem:[%s0] sm:$0xff]
  %v35 = vld [vmem:[%s0 + $0x8] sm:$0xff]
  %v36 = vld [vmem:[%s1] sm:$0xff]
  %v37 = vld [vmem:[%s1 + $0x8] sm:$0xff]
  %v38 = vld [vmem:[%s1 + $0x10] sm:$0xff]
  %v39 = vld [vmem:[%s1 + $0x18] sm:$0xff]
  %v40 = vld [vmem:[%s4] sm:$0x1]
  %v42 = vlaneseq
  %v43 = vshrl.u32 %v42, 7
  %v44 = vsub.s32 0, %v43
  %v45 = vrot.slane %v40, %v44
  %vm47 = vcmask 261120
  %v49 = vsel %vm47, %v34, 0
  %v52 = vsel %vm47, %v35, 0
  %54 = vmatprep.subr.mxu0 0.0
  %55 = vmatpush1.msra.mxu0 %v36
  %56 = vmatprep.subr.mxu0 0.0
  %57 = vmatpush1.msra.mxu0 %v37
  %58 = vmatprep.subr.mxu0 0.0
  %59 = vmatpush1.msra.mxu0 %v38
  %60 = vmatprep.subr.mxu0 0.0
  %61 = vmatpush1.msra.mxu0 %v39
  %62 = vmatprep.subr.mxu0 0.0
  %63 = vmatpush1.msra.mxu0 0.0
  %64 = vmatprep.subr.mxu0 0.0
  %65 = vmatpush1.msra.mxu0 0.0
  %66 = vmatprep.subr.mxu0 0.0
  %67 = vmatpush1.msra.mxu0 0.0
  %68 = vmatprep.subr.mxu0 0.0
  %69 = vmatpush1.msra.mxu0 0.0
  %70 = vmatprep.subr.mxu0 0.0
  %71 = vmatpush1.msra.mxu0 0.0
  %72 = vmatprep.subr.mxu0 0.0
  %73 = vmatpush1.msra.mxu0 0.0
  %74 = vmatprep.subr.mxu0 0.0
  %75 = vmatpush1.msra.mxu0 0.0
  %76 = vmatprep.subr.mxu0 0.0
  %77 = vmatpush1.msra.mxu0 0.0
  %78 = vmatprep.subr.mxu0 0.0
  %79 = vmatpush1.msra.mxu0 0.0
  %80 = vmatprep.subr.mxu0 0.0
  %81 = vmatpush1.msra.mxu0 0.0
  %82 = vmatprep.subr.mxu0 0.0
  %83 = vmatpush1.msra.mxu0 0.0
  %84 = vmatprep.subr.mxu0 0.0
  %85 = vmatpush1.msra.mxu0 0.0
  %86 = vmatprep.subr.mxu0 0.0
  %87 = vmatpush1.msra.mxu0 0.0
  %88 = vmatprep.subr.mxu0 0.0
  %89 = vmatpush1.msra.mxu0 0.0
  %90 = vmatprep.subr.mxu0 0.0
  %91 = vmatpush1.msra.mxu0 0.0
  %92 = vmatprep.subr.mxu0 0.0
  %93 = vmatpush1.msra.mxu0 0.0
  %94 = vmatprep.subr.mxu0 0.0
  %95 = vmatpush1.msra.mxu0 0.0
  %96 = vmatprep.subr.mxu0 0.0
  %97 = vmatpush1.msra.mxu0 0.0
  %98 = vmatprep.subr.mxu0 0.0
  %99 = vmatpush1.msra.mxu0 0.0
  %100 = vmatprep.subr.mxu0 0.0
  %101 = vmatpush1.msra.mxu0 0.0
  %102 = vmatprep.subr.mxu0 0.0
  %103 = vmatpush1.msra.mxu0 0.0
  %104 = vmatprep.subr.mxu0 0.0
  %105 = vmatpush1.msra.mxu0 0.0
  %106 = vmatprep.subr.mxu0 0.0
  %107 = vmatpush1.msra.mxu0 0.0
  %108 = vmatprep.subr.mxu0 0.0
  %109 = vmatpush1.msra.mxu0 0.0
  %110 = vmatprep.subr.mxu0 0.0
  %111 = vmatpush1.msra.mxu0 0.0
  %112 = vmatprep.subr.mxu0 0.0
  %113 = vmatpush1.msra.mxu0 0.0
  %114 = vmatprep.subr.mxu0 0.0
  %115 = vmatpush1.msra.mxu0 0.0
  %116 = vmatprep.subr.mxu0 0.0
  %117 = vmatpush1.msra.mxu0 0.0
  %118 = vmatprep.mubr.f32.mxu0 0.0
  %119 = vmatmul.mubr.f32.gmra.mrb[0].mxu0 %v49
  %v120 = vpop.f32.mrb[0].mxu0
  %v121 = vadd.f32 %v45, %v120
  %v122 = vpop.f32.mrb[0].mxu0
  %123 = vmatprep.mubr.f32.mxu0 0.0
  %124 = vmatmul.mubr.f32.gmra.mrb[0].mxu0 %v52
  %v125 = vpop.f32.mrb[0].mxu0
  %v126 = vadd.f32 %v45, %v125
  %v127 = vpop.f32.mrb[0].mxu0
  %128 = vdwg.mxu0
  %s129 = scalar_lea.vmem %s1, 32
  %v130 = vld [vmem:[%s129] sm:$0xff]
  %v131 = vld [vmem:[%s129 + $0x8] sm:$0xff]
  %v132 = vld [vmem:[%s129 + $0x10] sm:$0xff]
  %v133 = vld [vmem:[%s129 + $0x18] sm:$0xff]
  %s134 = scalar_lea.vmem %s4, 1
  %v135 = vld [vmem:[%s134] sm:$0x1]
  %v137 = vlaneseq
  %v138 = vshrl.u32 %v137, 7
  %v139 = vsub.s32 0, %v138
  %v140 = vrot.slane %v135, %v139
  %142 = vmatprep.subr.mxu0 0.0
  %143 = vmatpush1.msra.mxu0 %v130
  %144 = vmatprep.subr.mxu0 0.0
  %145 = vmatpush1.msra.mxu0 %v131
  %146 = vmatprep.subr.mxu0 0.0
  %147 = vmatpush1.msra.mxu0 %v132
  %148 = vmatprep.subr.mxu0 0.0
  %149 = vmatpush1.msra.mxu0 %v133
  %150 = vmatprep.subr.mxu0 0.0
  %151 = vmatpush1.msra.mxu0 0.0
  %152 = vmatprep.subr.mxu0 0.0
  %153 = vmatpush1.msra.mxu0 0.0
  %154 = vmatprep.subr.mxu0 0.0
  %155 = vmatpush1.msra.mxu0 0.0
  %156 = vmatprep.subr.mxu0 0.0
  %157 = vmatpush1.msra.mxu0 0.0
  %158 = vmatprep.subr.mxu0 0.0
  %159 = vmatpush1.msra.mxu0 0.0
  %160 = vmatprep.subr.mxu0 0.0
  %161 = vmatpush1.msra.mxu0 0.0
  %162 = vmatprep.subr.mxu0 0.0
  %163 = vmatpush1.msra.mxu0 0.0
  %164 = vmatprep.subr.mxu0 0.0
  %165 = vmatpush1.msra.mxu0 0.0
  %166 = vmatprep.subr.mxu0 0.0
  %167 = vmatpush1.msra.mxu0 0.0
  %168 = vmatprep.subr.mxu0 0.0
  %169 = vmatpush1.msra.mxu0 0.0
  %170 = vmatprep.subr.mxu0 0.0
  %171 = vmatpush1.msra.mxu0 0.0
  %172 = vmatprep.subr.mxu0 0.0
  %173 = vmatpush1.msra.mxu0 0.0
  %174 = vmatprep.subr.mxu0 0.0
  %175 = vmatpush1.msra.mxu0 0.0
  %176 = vmatprep.subr.mxu0 0.0
  %177 = vmatpush1.msra.mxu0 0.0
  %178 = vmatprep.subr.mxu0 0.0
  %179 = vmatpush1.msra.mxu0 0.0
  %180 = vmatprep.subr.mxu0 0.0
  %181 = vmatpush1.msra.mxu0 0.0
  %182 = vmatprep.subr.mxu0 0.0
  %183 = vmatpush1.msra.mxu0 0.0
  %184 = vmatprep.subr.mxu0 0.0
  %185 = vmatpush1.msra.mxu0 0.0
  %186 = vmatprep.subr.mxu0 0.0
  %187 = vmatpush1.msra.mxu0 0.0
  %188 = vmatprep.subr.mxu0 0.0
  %189 = vmatpush1.msra.mxu0 0.0
  %190 = vmatprep.subr.mxu0 0.0
  %191 = vmatpush1.msra.mxu0 0.0
  %192 = vmatprep.subr.mxu0 0.0
  %193 = vmatpush1.msra.mxu0 0.0
  %194 = vmatprep.subr.mxu0 0.0
  %195 = vmatpush1.msra.mxu0 0.0
  %196 = vmatprep.subr.mxu0 0.0
  %197 = vmatpush1.msra.mxu0 0.0
  %198 = vmatprep.subr.mxu0 0.0
  %199 = vmatpush1.msra.mxu0 0.0
  %200 = vmatprep.subr.mxu0 0.0
  %201 = vmatpush1.msra.mxu0 0.0
  %202 = vmatprep.subr.mxu0 0.0
  %203 = vmatpush1.msra.mxu0 0.0
  %204 = vmatprep.subr.mxu0 0.0
  %205 = vmatpush1.msra.mxu0 0.0
  %206 = vmatprep.mubr.f32.mxu0 0.0
  %207 = vmatmul.mubr.f32.gmra.mrb[0].mxu0 %v49
  %v208 = vpop.f32.mrb[0].mxu0
  %v209 = vadd.f32 %v140, %v208
  %v210 = vpop.f32.mrb[0].mxu0
  %211 = vmatprep.mubr.f32.mxu0 0.0
  %212 = vmatmul.mubr.f32.gmra.mrb[0].mxu0 %v52
  %v213 = vpop.f32.mrb[0].mxu0
  %v214 = vadd.f32 %v140, %v213
  %v215 = vpop.f32.mrb[0].mxu0
  %216 = vdwg.mxu0
  %s217 = scalar_lea.vmem %s1, 64
  %v218 = vld [vmem:[%s217] sm:$0xff]
  %v219 = vld [vmem:[%s217 + $0x8] sm:$0xff]
  %v220 = vld [vmem:[%s217 + $0x10] sm:$0xff]
  %v221 = vld [vmem:[%s217 + $0x18] sm:$0xff]
  %s222 = scalar_lea.vmem %s4, 2
  %v223 = vld [vmem:[%s222] sm:$0x1]
  %v225 = vlaneseq
  %v226 = vshrl.u32 %v225, 7
  %v227 = vsub.s32 0, %v226
  %v228 = vrot.slane %v223, %v227
  %230 = vmatprep.subr.mxu0 0.0
  %231 = vmatpush1.msra.mxu0 %v218
  %232 = vmatprep.subr.mxu0 0.0
  %233 = vmatpush1.msra.mxu0 %v219
  %234 = vmatprep.subr.mxu0 0.0
  %235 = vmatpush1.msra.mxu0 %v220
  %236 = vmatprep.subr.mxu0 0.0
  %237 = vmatpush1.msra.mxu0 %v221
  %238 = vmatprep.subr.mxu0 0.0
  %239 = vmatpush1.msra.mxu0 0.0
  %240 = vmatprep.subr.mxu0 0.0
  %241 = vmatpush1.msra.mxu0 0.0
  %242 = vmatprep.subr.mxu0 0.0
  %243 = vmatpush1.msra.mxu0 0.0
  %244 = vmatprep.subr.mxu0 0.0
  %245 = vmatpush1.msra.mxu0 0.0
  %246 = vmatprep.subr.mxu0 0.0
  %247 = vmatpush1.msra.mxu0 0.0
  %248 = vmatprep.subr.mxu0 0.0
  %249 = vmatpush1.msra.mxu0 0.0
  %250 = vmatprep.subr.mxu0 0.0
  %251 = vmatpush1.msra.mxu0 0.0
  %252 = vmatprep.subr.mxu0 0.0
  %253 = vmatpush1.msra.mxu0 0.0
  %254 = vmatprep.subr.mxu0 0.0
  %255 = vmatpush1.msra.mxu0 0.0
  %256 = vmatprep.subr.mxu0 0.0
  %257 = vmatpush1.msra.mxu0 0.0
  %258 = vmatprep.subr.mxu0 0.0
  %259 = vmatpush1.msra.mxu0 0.0
  %260 = vmatprep.subr.mxu0 0.0
  %261 = vmatpush1.msra.mxu0 0.0
  %262 = vmatprep.subr.mxu0 0.0
  %263 = vmatpush1.msra.mxu0 0.0
  %264 = vmatprep.subr.mxu0 0.0
  %265 = vmatpush1.msra.mxu0 0.0
  %266 = vmatprep.subr.mxu0 0.0
  %267 = vmatpush1.msra.mxu0 0.0
  %268 = vmatprep.subr.mxu0 0.0
  %269 = vmatpush1.msra.mxu0 0.0
  %270 = vmatprep.subr.mxu0 0.0
  %271 = vmatpush1.msra.mxu0 0.0
  %272 = vmatprep.subr.mxu0 0.0
  %273 = vmatpush1.msra.mxu0 0.0
  %274 = vmatprep.subr.mxu0 0.0
  %275 = vmatpush1.msra.mxu0 0.0
  %276 = vmatprep.subr.mxu0 0.0
  %277 = vmatpush1.msra.mxu0 0.0
  %278 = vmatprep.subr.mxu0 0.0
  %279 = vmatpush1.msra.mxu0 0.0
  %280 = vmatprep.subr.mxu0 0.0
  %281 = vmatpush1.msra.mxu0 0.0
  %282 = vmatprep.subr.mxu0 0.0
  %283 = vmatpush1.msra.mxu0 0.0
  %284 = vmatprep.subr.mxu0 0.0
  %285 = vmatpush1.msra.mxu0 0.0
  %286 = vmatprep.subr.mxu0 0.0
  %287 = vmatpush1.msra.mxu0 0.0
  %288 = vmatprep.subr.mxu0 0.0
  %289 = vmatpush1.msra.mxu0 0.0
  %290 = vmatprep.subr.mxu0 0.0
  %291 = vmatpush1.msra.mxu0 0.0
  %292 = vmatprep.subr.mxu0 0.0
  %293 = vmatpush1.msra.mxu0 0.0
  %294 = vmatprep.mubr.f32.mxu0 0.0
  %295 = vmatmul.mubr.f32.gmra.mrb[0].mxu0 %v49
  %v296 = vpop.f32.mrb[0].mxu0
  %v297 = vadd.f32 %v228, %v296
  %v298 = vpop.f32.mrb[0].mxu0
  %299 = vmatprep.mubr.f32.mxu0 0.0
  %300 = vmatmul.mubr.f32.gmra.mrb[0].mxu0 %v52
  %v301 = vpop.f32.mrb[0].mxu0
  %v302 = vadd.f32 %v228, %v301
  %v303 = vpop.f32.mrb[0].mxu0
  %304 = vdwg.mxu0
  %s305 = scalar_lea.vmem %s1, 96
  %v306 = vld [vmem:[%s305] sm:$0xff]
  %v307 = vld [vmem:[%s305 + $0x8] sm:$0xff]
  %v308 = vld [vmem:[%s305 + $0x10] sm:$0xff]
  %v309 = vld [vmem:[%s305 + $0x18] sm:$0xff]
  %s310 = scalar_lea.vmem %s4, 4
  %v311 = vld [vmem:[%s310] sm:$0x1]
  %v313 = vlaneseq
  %v314 = vshrl.u32 %v313, 7
  %v315 = vsub.s32 0, %v314
  %v316 = vrot.slane %v311, %v315
  %318 = vmatprep.subr.mxu0 0.0
  %319 = vmatpush1.msra.mxu0 %v306
  %320 = vmatprep.subr.mxu0 0.0
  %321 = vmatpush1.msra.mxu0 %v307
  %322 = vmatprep.subr.mxu0 0.0
  %323 = vmatpush1.msra.mxu0 %v308
  %324 = vmatprep.subr.mxu0 0.0
  %325 = vmatpush1.msra.mxu0 %v309
  %326 = vmatprep.subr.mxu0 0.0
  %327 = vmatpush1.msra.mxu0 0.0
  %328 = vmatprep.subr.mxu0 0.0
  %329 = vmatpush1.msra.mxu0 0.0
  %330 = vmatprep.subr.mxu0 0.0
  %331 = vmatpush1.msra.mxu0 0.0
  %332 = vmatprep.subr.mxu0 0.0
  %333 = vmatpush1.msra.mxu0 0.0
  %334 = vmatprep.subr.mxu0 0.0
  %335 = vmatpush1.msra.mxu0 0.0
  %336 = vmatprep.subr.mxu0 0.0
  %337 = vmatpush1.msra.mxu0 0.0
  %338 = vmatprep.subr.mxu0 0.0
  %339 = vmatpush1.msra.mxu0 0.0
  %340 = vmatprep.subr.mxu0 0.0
  %341 = vmatpush1.msra.mxu0 0.0
  %342 = vmatprep.subr.mxu0 0.0
  %343 = vmatpush1.msra.mxu0 0.0
  %344 = vmatprep.subr.mxu0 0.0
  %345 = vmatpush1.msra.mxu0 0.0
  %346 = vmatprep.subr.mxu0 0.0
  %347 = vmatpush1.msra.mxu0 0.0
  %348 = vmatprep.subr.mxu0 0.0
  %349 = vmatpush1.msra.mxu0 0.0
  %350 = vmatprep.subr.mxu0 0.0
  %351 = vmatpush1.msra.mxu0 0.0
  %352 = vmatprep.subr.mxu0 0.0
  %353 = vmatpush1.msra.mxu0 0.0
  %354 = vmatprep.subr.mxu0 0.0
  %355 = vmatpush1.msra.mxu0 0.0
  %356 = vmatprep.subr.mxu0 0.0
  %357 = vmatpush1.msra.mxu0 0.0
  %358 = vmatprep.subr.mxu0 0.0
  %359 = vmatpush1.msra.mxu0 0.0
  %360 = vmatprep.subr.mxu0 0.0
  %361 = vmatpush1.msra.mxu0 0.0
  %362 = vmatprep.subr.mxu0 0.0
  %363 = vmatpush1.msra.mxu0 0.0
  %364 = vmatprep.subr.mxu0 0.0
  %365 = vmatpush1.msra.mxu0 0.0
  %366 = vmatprep.subr.mxu0 0.0
  %367 = vmatpush1.msra.mxu0 0.0
  %368 = vmatprep.subr.mxu0 0.0
  %369 = vmatpush1.msra.mxu0 0.0
  %370 = vmatprep.subr.mxu0 0.0
  %371 = vmatpush1.msra.mxu0 0.0
  %372 = vmatprep.subr.mxu0 0.0
  %373 = vmatpush1.msra.mxu0 0.0
  %374 = vmatprep.subr.mxu0 0.0
  %375 = vmatpush1.msra.mxu0 0.0
  %376 = vmatprep.subr.mxu0 0.0
  %377 = vmatpush1.msra.mxu0 0.0
  %378 = vmatprep.subr.mxu0 0.0
  %379 = vmatpush1.msra.mxu0 0.0
  %380 = vmatprep.subr.mxu0 0.0
  %381 = vmatpush1.msra.mxu0 0.0
  %382 = vmatprep.mubr.f32.mxu0 0.0
  %383 = vmatmul.mubr.f32.gmra.mrb[0].mxu0 %v49
  %v384 = vpop.f32.mrb[0].mxu0
  %v385 = vadd.f32 %v316, %v384
  %v386 = vpop.f32.mrb[0].mxu0
  %387 = vmatprep.mubr.f32.mxu0 0.0
  %388 = vmatmul.mubr.f32.gmra.mrb[0].mxu0 %v52
  %v389 = vpop.f32.mrb[0].mxu0
  %v390 = vadd.f32 %v316, %v389
  %v391 = vpop.f32.mrb[0].mxu0
  %392 = vdwg.mxu0
  %s393 = scalar_lea.vmem %s1, 128
  %v394 = vld [vmem:[%s393] sm:$0xff]
  %v395 = vld [vmem:[%s393 + $0x8] sm:$0xff]
  %v396 = vld [vmem:[%s393 + $0x10] sm:$0xff]
  %v397 = vld [vmem:[%s393 + $0x18] sm:$0xff]
  %s398 = scalar_lea.vmem %s4, 5
  %v399 = vld [vmem:[%s398] sm:$0x1]
  %v401 = vlaneseq
  %v402 = vshrl.u32 %v401, 7
  %v403 = vsub.s32 0, %v402
  %v404 = vrot.slane %v399, %v403
  %406 = vmatprep.subr.mxu0 0.0
  %407 = vmatpush1.msra.mxu0 %v394
  %408 = vmatprep.subr.mxu0 0.0
  %409 = vmatpush1.msra.mxu0 %v395
  %410 = vmatprep.subr.mxu0 0.0
  %411 = vmatpush1.msra.mxu0 %v396
  %412 = vmatprep.subr.mxu0 0.0
  %413 = vmatpush1.msra.mxu0 %v397
  %414 = vmatprep.subr.mxu0 0.0
  %415 = vmatpush1.msra.mxu0 0.0
  %416 = vmatprep.subr.mxu0 0.0
  %417 = vmatpush1.msra.mxu0 0.0
  %418 = vmatprep.subr.mxu0 0.0
  %419 = vmatpush1.msra.mxu0 0.0
  %420 = vmatprep.subr.mxu0 0.0
  %421 = vmatpush1.msra.mxu0 0.0
  %422 = vmatprep.subr.mxu0 0.0
  %423 = vmatpush1.msra.mxu0 0.0
  %424 = vmatprep.subr.mxu0 0.0
  %425 = vmatpush1.msra.mxu0 0.0
  %426 = vmatprep.subr.mxu0 0.0
  %427 = vmatpush1.msra.mxu0 0.0
  %428 = vmatprep.subr.mxu0 0.0
  %429 = vmatpush1.msra.mxu0 0.0
  %430 = vmatprep.subr.mxu0 0.0
  %431 = vmatpush1.msra.mxu0 0.0
  %432 = vmatprep.subr.mxu0 0.0
  %433 = vmatpush1.msra.mxu0 0.0
  %434 = vmatprep.subr.mxu0 0.0
  %435 = vmatpush1.msra.mxu0 0.0
  %436 = vmatprep.subr.mxu0 0.0
  %437 = vmatpush1.msra.mxu0 0.0
  %438 = vmatprep.subr.mxu0 0.0
  %439 = vmatpush1.msra.mxu0 0.0
  %440 = vmatprep.subr.mxu0 0.0
  %441 = vmatpush1.msra.mxu0 0.0
  %442 = vmatprep.subr.mxu0 0.0
  %443 = vmatpush1.msra.mxu0 0.0
  %444 = vmatprep.subr.mxu0 0.0
  %445 = vmatpush1.msra.mxu0 0.0
  %446 = vmatprep.subr.mxu0 0.0
  %447 = vmatpush1.msra.mxu0 0.0
  %448 = vmatprep.subr.mxu0 0.0
  %449 = vmatpush1.msra.mxu0 0.0
  %450 = vmatprep.subr.mxu0 0.0
  %451 = vmatpush1.msra.mxu0 0.0
  %452 = vmatprep.subr.mxu0 0.0
  %453 = vmatpush1.msra.mxu0 0.0
  %454 = vmatprep.subr.mxu0 0.0
  %455 = vmatpush1.msra.mxu0 0.0
  %456 = vmatprep.subr.mxu0 0.0
  %457 = vmatpush1.msra.mxu0 0.0
  %458 = vmatprep.subr.mxu0 0.0
  %459 = vmatpush1.msra.mxu0 0.0
  %460 = vmatprep.subr.mxu0 0.0
  %461 = vmatpush1.msra.mxu0 0.0
  %462 = vmatprep.subr.mxu0 0.0
  %463 = vmatpush1.msra.mxu0 0.0
  %464 = vmatprep.subr.mxu0 0.0
  %465 = vmatpush1.msra.mxu0 0.0
  %466 = vmatprep.subr.mxu0 0.0
  %467 = vmatpush1.msra.mxu0 0.0
  %468 = vmatprep.subr.mxu0 0.0
  %469 = vmatpush1.msra.mxu0 0.0
  %470 = vmatprep.mubr.f32.mxu0 0.0
  %471 = vmatmul.mubr.f32.gmra.mrb[0].mxu0 %v49
  %v472 = vpop.f32.mrb[0].mxu0
  %v473 = vadd.f32 %v404, %v472
  %v474 = vpop.f32.mrb[0].mxu0
  %475 = vmatprep.mubr.f32.mxu0 0.0
  %476 = vmatmul.mubr.f32.gmra.mrb[0].mxu0 %v52
  %v477 = vpop.f32.mrb[0].mxu0
  %v478 = vadd.f32 %v404, %v477
  %v479 = vpop.f32.mrb[0].mxu0
  %480 = vdwg.mxu0
  %s481 = scalar_lea.vmem %s1, 160
  %v482 = vld [vmem:[%s481] sm:$0xff]
  %v483 = vld [vmem:[%s481 + $0x8] sm:$0xff]
  %v484 = vld [vmem:[%s481 + $0x10] sm:$0xff]
  %v485 = vld [vmem:[%s481 + $0x18] sm:$0xff]
  %s486 = scalar_lea.vmem %s4, 6
  %v487 = vld [vmem:[%s486] sm:$0x1]
  %v489 = vlaneseq
  %v490 = vshrl.u32 %v489, 7
  %v491 = vsub.s32 0, %v490
  %v492 = vrot.slane %v487, %v491
  %494 = vmatprep.subr.mxu0 0.0
  %495 = vmatpush1.msra.mxu0 %v482
  %496 = vmatprep.subr.mxu0 0.0
  %497 = vmatpush1.msra.mxu0 %v483
  %498 = vmatprep.subr.mxu0 0.0
  %499 = vmatpush1.msra.mxu0 %v484
  %500 = vmatprep.subr.mxu0 0.0
  %501 = vmatpush1.msra.mxu0 %v485
  %502 = vmatprep.subr.mxu0 0.0
  %503 = vmatpush1.msra.mxu0 0.0
  %504 = vmatprep.subr.mxu0 0.0
  %505 = vmatpush1.msra.mxu0 0.0
  %506 = vmatprep.subr.mxu0 0.0
  %507 = vmatpush1.msra.mxu0 0.0
  %508 = vmatprep.subr.mxu0 0.0
  %509 = vmatpush1.msra.mxu0 0.0
  %510 = vmatprep.subr.mxu0 0.0
  %511 = vmatpush1.msra.mxu0 0.0
  %512 = vmatprep.subr.mxu0 0.0
  %513 = vmatpush1.msra.mxu0 0.0
  %514 = vmatprep.subr.mxu0 0.0
  %515 = vmatpush1.msra.mxu0 0.0
  %516 = vmatprep.subr.mxu0 0.0
  %517 = vmatpush1.msra.mxu0 0.0
  %518 = vmatprep.subr.mxu0 0.0
  %519 = vmatpush1.msra.mxu0 0.0
  %520 = vmatprep.subr.mxu0 0.0
  %521 = vmatpush1.msra.mxu0 0.0
  %522 = vmatprep.subr.mxu0 0.0
  %523 = vmatpush1.msra.mxu0 0.0
  %524 = vmatprep.subr.mxu0 0.0
  %525 = vmatpush1.msra.mxu0 0.0
  %526 = vmatprep.subr.mxu0 0.0
  %527 = vmatpush1.msra.mxu0 0.0
  %528 = vmatprep.subr.mxu0 0.0
  %529 = vmatpush1.msra.mxu0 0.0
  %530 = vmatprep.subr.mxu0 0.0
  %531 = vmatpush1.msra.mxu0 0.0
  %532 = vmatprep.subr.mxu0 0.0
  %533 = vmatpush1.msra.mxu0 0.0
  %534 = vmatprep.subr.mxu0 0.0
  %535 = vmatpush1.msra.mxu0 0.0
  %536 = vmatprep.subr.mxu0 0.0
  %537 = vmatpush1.msra.mxu0 0.0
  %538 = vmatprep.subr.mxu0 0.0
  %539 = vmatpush1.msra.mxu0 0.0
  %540 = vmatprep.subr.mxu0 0.0
  %541 = vmatpush1.msra.mxu0 0.0
  %542 = vmatprep.subr.mxu0 0.0
  %543 = vmatpush1.msra.mxu0 0.0
  %544 = vmatprep.subr.mxu0 0.0
  %545 = vmatpush1.msra.mxu0 0.0
  %546 = vmatprep.subr.mxu0 0.0
  %547 = vmatpush1.msra.mxu0 0.0
  %548 = vmatprep.subr.mxu0 0.0
  %549 = vmatpush1.msra.mxu0 0.0
  %550 = vmatprep.subr.mxu0 0.0
  %551 = vmatpush1.msra.mxu0 0.0
  %552 = vmatprep.subr.mxu0 0.0
  %553 = vmatpush1.msra.mxu0 0.0
  %554 = vmatprep.subr.mxu0 0.0
  %555 = vmatpush1.msra.mxu0 0.0
  %556 = vmatprep.subr.mxu0 0.0
  %557 = vmatpush1.msra.mxu0 0.0
  %558 = vmatprep.mubr.f32.mxu0 0.0
  %559 = vmatmul.mubr.f32.gmra.mrb[0].mxu0 %v49
  %v560 = vpop.f32.mrb[0].mxu0
  %v561 = vadd.f32 %v492, %v560
  %v562 = vpop.f32.mrb[0].mxu0
  %563 = vmatprep.mubr.f32.mxu0 0.0
  %564 = vmatmul.mubr.f32.gmra.mrb[0].mxu0 %v52
  %v565 = vpop.f32.mrb[0].mxu0
  %v566 = vadd.f32 %v492, %v565
  %v567 = vpop.f32.mrb[0].mxu0
  %568 = vdwg.mxu0
  %v569 = vld [vmem:[%s2] sm:$0xff]
  %v570 = vld [vmem:[%s2 + $0x8] sm:$0xff]
  %v571 = vld [vmem:[%s2 + $0x10] sm:$0xff]
  %v572 = vld [vmem:[%s2 + $0x18] sm:$0xff]
  %s573 = scalar_lea.vmem %s2, 32
  %v574 = vld [vmem:[%s573] sm:$0xff]
  %v575 = vld [vmem:[%s573 + $0x8] sm:$0xff]
  %v576 = vld [vmem:[%s573 + $0x10] sm:$0xff]
  %v577 = vld [vmem:[%s573 + $0x18] sm:$0xff]
  %s578 = scalar_lea.vmem %s2, 64
  %v579 = vld [vmem:[%s578] sm:$0xff]
  %v580 = vld [vmem:[%s578 + $0x8] sm:$0xff]
  %v581 = vld [vmem:[%s578 + $0x10] sm:$0xff]
  %v582 = vld [vmem:[%s578 + $0x18] sm:$0xff]
  %s583 = scalar_lea.vmem %s2, 96
  %v584 = vld [vmem:[%s583] sm:$0xff]
  %v585 = vld [vmem:[%s583 + $0x8] sm:$0xff]
  %v586 = vld [vmem:[%s583 + $0x10] sm:$0xff]
  %v587 = vld [vmem:[%s583 + $0x18] sm:$0xff]
  %s588 = scalar_lea.vmem %s2, 128
  %v589 = vld [vmem:[%s588] sm:$0xff]
  %v590 = vld [vmem:[%s588 + $0x8] sm:$0xff]
  %v591 = vld [vmem:[%s588 + $0x10] sm:$0xff]
  %v592 = vld [vmem:[%s588 + $0x18] sm:$0xff]
  %s593 = scalar_lea.vmem %s2, 160
  %v594 = vld [vmem:[%s593] sm:$0xff]
  %v595 = vld [vmem:[%s593 + $0x8] sm:$0xff]
  %v596 = vld [vmem:[%s593 + $0x10] sm:$0xff]
  %v597 = vld [vmem:[%s593 + $0x18] sm:$0xff]
  %s598 = scalar_lea.vmem %s4, 3
  %v599 = vld [vmem:[%s598] sm:$0x1]
  %s600 = scalar_lea.vmem %s4, 7
  %v601 = vld [vmem:[%s600] sm:$0x1]
  %v603 = vsel %vm47, 0.0, 0
  %605 = vmatprep.subr.mxu0 0.0
  %606 = vmatpush1.msra.mxu0 %v569
  %607 = vmatprep.subr.mxu0 0.0
  %608 = vmatpush1.msra.mxu0 %v570
  %609 = vmatprep.subr.mxu0 0.0
  %610 = vmatpush1.msra.mxu0 %v571
  %611 = vmatprep.subr.mxu0 0.0
  %612 = vmatpush1.msra.mxu0 %v572
  %613 = vmatprep.subr.mxu0 0.0
  %614 = vmatpush1.msra.mxu0 0.0
  %615 = vmatprep.subr.mxu0 0.0
  %616 = vmatpush1.msra.mxu0 0.0
  %617 = vmatprep.subr.mxu0 0.0
  %618 = vmatpush1.msra.mxu0 0.0
  %619 = vmatprep.subr.mxu0 0.0
  %620 = vmatpush1.msra.mxu0 0.0
  %621 = vmatprep.subr.mxu0 0.0
  %622 = vmatpush1.msra.mxu0 0.0
  %623 = vmatprep.subr.mxu0 0.0
  %624 = vmatpush1.msra.mxu0 0.0
  %625 = vmatprep.subr.mxu0 0.0
  %626 = vmatpush1.msra.mxu0 0.0
  %627 = vmatprep.subr.mxu0 0.0
  %628 = vmatpush1.msra.mxu0 0.0
  %629 = vmatprep.subr.mxu0 0.0
  %630 = vmatpush1.msra.mxu0 0.0
  %631 = vmatprep.subr.mxu0 0.0
  %632 = vmatpush1.msra.mxu0 0.0
  %633 = vmatprep.subr.mxu0 0.0
  %634 = vmatpush1.msra.mxu0 0.0
  %635 = vmatprep.subr.mxu0 0.0
  %636 = vmatpush1.msra.mxu0 0.0
  %637 = vmatprep.subr.mxu0 0.0
  %638 = vmatpush1.msra.mxu0 0.0
  %639 = vmatprep.subr.mxu0 0.0
  %640 = vmatpush1.msra.mxu0 0.0
  %641 = vmatprep.subr.mxu0 0.0
  %642 = vmatpush1.msra.mxu0 0.0
  %643 = vmatprep.subr.mxu0 0.0
  %644 = vmatpush1.msra.mxu0 0.0
  %645 = vmatprep.subr.mxu0 0.0
  %646 = vmatpush1.msra.mxu0 0.0
  %647 = vmatprep.subr.mxu0 0.0
  %648 = vmatpush1.msra.mxu0 0.0
  %649 = vmatprep.subr.mxu0 0.0
  %650 = vmatpush1.msra.mxu0 0.0
  %651 = vmatprep.subr.mxu0 0.0
  %652 = vmatpush1.msra.mxu0 0.0
  %653 = vmatprep.subr.mxu0 0.0
  %654 = vmatpush1.msra.mxu0 0.0
  %655 = vmatprep.subr.mxu0 0.0
  %656 = vmatpush1.msra.mxu0 0.0
  %657 = vmatprep.subr.mxu0 0.0
  %658 = vmatpush1.msra.mxu0 0.0
  %659 = vmatprep.subr.mxu0 0.0
  %660 = vmatpush1.msra.mxu0 0.0
  %661 = vmatprep.subr.mxu0 0.0
  %662 = vmatpush1.msra.mxu0 0.0
  %663 = vmatprep.subr.mxu0 0.0
  %664 = vmatpush1.msra.mxu0 0.0
  %665 = vmatprep.subr.mxu0 0.0
  %666 = vmatpush1.msra.mxu0 0.0
  %667 = vmatprep.subr.mxu0 0.0
  %668 = vmatpush1.msra.mxu0 0.0
  %669 = vmatprep.mubr.f32.mxu0 0.0
  %670 = vmatmul.mubr.f32.gmra.mrb[0].mxu0 %v603
  %v671 = vpop.f32.mrb[0].mxu0
  %v672 = vadd.f32 0.0, %v671
  %v673 = vpop.f32.mrb[0].mxu0
  %674 = vdwg.mxu0
  %v675 = vadd.f32 %v121, %v672
  %v676 = vxor.u32 %v675, 2147483648
  %v677 = vmul.f32 %v676, 1.442695
  %v678 = vpow.pop %v677
  %v679 = vadd.f32 %v678, 1.0
  %v680 = vrcp.pop %v679
  %v681 = vmul.f32 1.0, %v680
  %682 = vmatprep.subr.mxu0 0.0
  %683 = vmatpush1.msra.mxu0 %v574
  %684 = vmatprep.subr.mxu0 0.0
  %685 = vmatpush1.msra.mxu0 %v575
  %686 = vmatprep.subr.mxu0 0.0
  %687 = vmatpush1.msra.mxu0 %v576
  %688 = vmatprep.subr.mxu0 0.0
  %689 = vmatpush1.msra.mxu0 %v577
  %690 = vmatprep.subr.mxu0 0.0
  %691 = vmatpush1.msra.mxu0 0.0
  %692 = vmatprep.subr.mxu0 0.0
  %693 = vmatpush1.msra.mxu0 0.0
  %694 = vmatprep.subr.mxu0 0.0
  %695 = vmatpush1.msra.mxu0 0.0
  %696 = vmatprep.subr.mxu0 0.0
  %697 = vmatpush1.msra.mxu0 0.0
  %698 = vmatprep.subr.mxu0 0.0
  %699 = vmatpush1.msra.mxu0 0.0
  %700 = vmatprep.subr.mxu0 0.0
  %701 = vmatpush1.msra.mxu0 0.0
  %702 = vmatprep.subr.mxu0 0.0
  %703 = vmatpush1.msra.mxu0 0.0
  %704 = vmatprep.subr.mxu0 0.0
  %705 = vmatpush1.msra.mxu0 0.0
  %706 = vmatprep.subr.mxu0 0.0
  %707 = vmatpush1.msra.mxu0 0.0
  %708 = vmatprep.subr.mxu0 0.0
  %709 = vmatpush1.msra.mxu0 0.0
  %710 = vmatprep.subr.mxu0 0.0
  %711 = vmatpush1.msra.mxu0 0.0
  %712 = vmatprep.subr.mxu0 0.0
  %713 = vmatpush1.msra.mxu0 0.0
  %714 = vmatprep.subr.mxu0 0.0
  %715 = vmatpush1.msra.mxu0 0.0
  %716 = vmatprep.subr.mxu0 0.0
  %717 = vmatpush1.msra.mxu0 0.0
  %718 = vmatprep.subr.mxu0 0.0
  %719 = vmatpush1.msra.mxu0 0.0
  %720 = vmatprep.subr.mxu0 0.0
  %721 = vmatpush1.msra.mxu0 0.0
  %722 = vmatprep.subr.mxu0 0.0
  %723 = vmatpush1.msra.mxu0 0.0
  %724 = vmatprep.subr.mxu0 0.0
  %725 = vmatpush1.msra.mxu0 0.0
  %726 = vmatprep.subr.mxu0 0.0
  %727 = vmatpush1.msra.mxu0 0.0
  %728 = vmatprep.subr.mxu0 0.0
  %729 = vmatpush1.msra.mxu0 0.0
  %730 = vmatprep.subr.mxu0 0.0
  %731 = vmatpush1.msra.mxu0 0.0
  %732 = vmatprep.subr.mxu0 0.0
  %733 = vmatpush1.msra.mxu0 0.0
  %734 = vmatprep.subr.mxu0 0.0
  %735 = vmatpush1.msra.mxu0 0.0
  %736 = vmatprep.subr.mxu0 0.0
  %737 = vmatpush1.msra.mxu0 0.0
  %738 = vmatprep.subr.mxu0 0.0
  %739 = vmatpush1.msra.mxu0 0.0
  %740 = vmatprep.subr.mxu0 0.0
  %741 = vmatpush1.msra.mxu0 0.0
  %742 = vmatprep.subr.mxu0 0.0
  %743 = vmatpush1.msra.mxu0 0.0
  %744 = vmatprep.subr.mxu0 0.0
  %745 = vmatpush1.msra.mxu0 0.0
  %746 = vmatprep.mubr.f32.mxu0 0.0
  %747 = vmatmul.mubr.f32.gmra.mrb[0].mxu0 %v603
  %v748 = vpop.f32.mrb[0].mxu0
  %v749 = vadd.f32 0.0, %v748
  %v750 = vpop.f32.mrb[0].mxu0
  %751 = vdwg.mxu0
  %v752 = vadd.f32 %v209, %v749
  %v753 = vxor.u32 %v752, 2147483648
  %v754 = vmul.f32 %v753, 1.442695
  %v755 = vpow.pop %v754
  %v756 = vadd.f32 %v755, 1.0
  %v757 = vrcp.pop %v756
  %v758 = vmul.f32 1.0, %v757
  %v760 = vlaneseq
  %v761 = vshrl.u32 %v760, 7
  %v762 = vsub.s32 0, %v761
  %v763 = vrot.slane %v599, %v762
  %765 = vmatprep.subr.mxu0 0.0
  %766 = vmatpush1.msra.mxu0 %v579
  %767 = vmatprep.subr.mxu0 0.0
  %768 = vmatpush1.msra.mxu0 %v580
  %769 = vmatprep.subr.mxu0 0.0
  %770 = vmatpush1.msra.mxu0 %v581
  %771 = vmatprep.subr.mxu0 0.0
  %772 = vmatpush1.msra.mxu0 %v582
  %773 = vmatprep.subr.mxu0 0.0
  %774 = vmatpush1.msra.mxu0 0.0
  %775 = vmatprep.subr.mxu0 0.0
  %776 = vmatpush1.msra.mxu0 0.0
  %777 = vmatprep.subr.mxu0 0.0
  %778 = vmatpush1.msra.mxu0 0.0
  %779 = vmatprep.subr.mxu0 0.0
  %780 = vmatpush1.msra.mxu0 0.0
  %781 = vmatprep.subr.mxu0 0.0
  %782 = vmatpush1.msra.mxu0 0.0
  %783 = vmatprep.subr.mxu0 0.0
  %784 = vmatpush1.msra.mxu0 0.0
  %785 = vmatprep.subr.mxu0 0.0
  %786 = vmatpush1.msra.mxu0 0.0
  %787 = vmatprep.subr.mxu0 0.0
  %788 = vmatpush1.msra.mxu0 0.0
  %789 = vmatprep.subr.mxu0 0.0
  %790 = vmatpush1.msra.mxu0 0.0
  %791 = vmatprep.subr.mxu0 0.0
  %792 = vmatpush1.msra.mxu0 0.0
  %793 = vmatprep.subr.mxu0 0.0
  %794 = vmatpush1.msra.mxu0 0.0
  %795 = vmatprep.subr.mxu0 0.0
  %796 = vmatpush1.msra.mxu0 0.0
  %797 = vmatprep.subr.mxu0 0.0
  %798 = vmatpush1.msra.mxu0 0.0
  %799 = vmatprep.subr.mxu0 0.0
  %800 = vmatpush1.msra.mxu0 0.0
  %801 = vmatprep.subr.mxu0 0.0
  %802 = vmatpush1.msra.mxu0 0.0
  %803 = vmatprep.subr.mxu0 0.0
  %804 = vmatpush1.msra.mxu0 0.0
  %805 = vmatprep.subr.mxu0 0.0
  %806 = vmatpush1.msra.mxu0 0.0
  %807 = vmatprep.subr.mxu0 0.0
  %808 = vmatpush1.msra.mxu0 0.0
  %809 = vmatprep.subr.mxu0 0.0
  %810 = vmatpush1.msra.mxu0 0.0
  %811 = vmatprep.subr.mxu0 0.0
  %812 = vmatpush1.msra.mxu0 0.0
  %813 = vmatprep.subr.mxu0 0.0
  %814 = vmatpush1.msra.mxu0 0.0
  %815 = vmatprep.subr.mxu0 0.0
  %816 = vmatpush1.msra.mxu0 0.0
  %817 = vmatprep.subr.mxu0 0.0
  %818 = vmatpush1.msra.mxu0 0.0
  %819 = vmatprep.subr.mxu0 0.0
  %820 = vmatpush1.msra.mxu0 0.0
  %821 = vmatprep.subr.mxu0 0.0
  %822 = vmatpush1.msra.mxu0 0.0
  %823 = vmatprep.subr.mxu0 0.0
  %824 = vmatpush1.msra.mxu0 0.0
  %825 = vmatprep.subr.mxu0 0.0
  %826 = vmatpush1.msra.mxu0 0.0
  %827 = vmatprep.subr.mxu0 0.0
  %828 = vmatpush1.msra.mxu0 0.0
  %829 = vmatprep.mubr.f32.mxu0 0.0
  %830 = vmatmul.mubr.f32.gmra.mrb[0].mxu0 %v603
  %v831 = vpop.f32.mrb[0].mxu0
  %v832 = vadd.f32 %v763, %v831
  %v833 = vpop.f32.mrb[0].mxu0
  %834 = vdwg.mxu0
  %v835 = vmul.f32 %v681, %v832
  %v836 = vadd.f32 %v297, %v835
  %v837 = vtanh.pop %v836
  %v838 = vsub.f32 1.0, %v758
  %v839 = vmul.f32 %v838, %v837
  %v840 = vmul.f32 %v758, 0.0
  %v841 = vadd.f32 %v839, %v840
  %842 = vmatprep.subr.mxu0 0.0
  %843 = vmatpush1.msra.mxu0 %v584
  %844 = vmatprep.subr.mxu0 0.0
  %845 = vmatpush1.msra.mxu0 %v585
  %846 = vmatprep.subr.mxu0 0.0
  %847 = vmatpush1.msra.mxu0 %v586
  %848 = vmatprep.subr.mxu0 0.0
  %849 = vmatpush1.msra.mxu0 %v587
  %850 = vmatprep.subr.mxu0 0.0
  %851 = vmatpush1.msra.mxu0 0.0
  %852 = vmatprep.subr.mxu0 0.0
  %853 = vmatpush1.msra.mxu0 0.0
  %854 = vmatprep.subr.mxu0 0.0
  %855 = vmatpush1.msra.mxu0 0.0
  %856 = vmatprep.subr.mxu0 0.0
  %857 = vmatpush1.msra.mxu0 0.0
  %858 = vmatprep.subr.mxu0 0.0
  %859 = vmatpush1.msra.mxu0 0.0
  %860 = vmatprep.subr.mxu0 0.0
  %861 = vmatpush1.msra.mxu0 0.0
  %862 = vmatprep.subr.mxu0 0.0
  %863 = vmatpush1.msra.mxu0 0.0
  %864 = vmatprep.subr.mxu0 0.0
  %865 = vmatpush1.msra.mxu0 0.0
  %866 = vmatprep.subr.mxu0 0.0
  %867 = vmatpush1.msra.mxu0 0.0
  %868 = vmatprep.subr.mxu0 0.0
  %869 = vmatpush1.msra.mxu0 0.0
  %870 = vmatprep.subr.mxu0 0.0
  %871 = vmatpush1.msra.mxu0 0.0
  %872 = vmatprep.subr.mxu0 0.0
  %873 = vmatpush1.msra.mxu0 0.0
  %874 = vmatprep.subr.mxu0 0.0
  %875 = vmatpush1.msra.mxu0 0.0
  %876 = vmatprep.subr.mxu0 0.0
  %877 = vmatpush1.msra.mxu0 0.0
  %878 = vmatprep.subr.mxu0 0.0
  %879 = vmatpush1.msra.mxu0 0.0
  %880 = vmatprep.subr.mxu0 0.0
  %881 = vmatpush1.msra.mxu0 0.0
  %882 = vmatprep.subr.mxu0 0.0
  %883 = vmatpush1.msra.mxu0 0.0
  %884 = vmatprep.subr.mxu0 0.0
  %885 = vmatpush1.msra.mxu0 0.0
  %886 = vmatprep.subr.mxu0 0.0
  %887 = vmatpush1.msra.mxu0 0.0
  %888 = vmatprep.subr.mxu0 0.0
  %889 = vmatpush1.msra.mxu0 0.0
  %890 = vmatprep.subr.mxu0 0.0
  %891 = vmatpush1.msra.mxu0 0.0
  %892 = vmatprep.subr.mxu0 0.0
  %893 = vmatpush1.msra.mxu0 0.0
  %894 = vmatprep.subr.mxu0 0.0
  %895 = vmatpush1.msra.mxu0 0.0
  %896 = vmatprep.subr.mxu0 0.0
  %897 = vmatpush1.msra.mxu0 0.0
  %898 = vmatprep.subr.mxu0 0.0
  %899 = vmatpush1.msra.mxu0 0.0
  %900 = vmatprep.subr.mxu0 0.0
  %901 = vmatpush1.msra.mxu0 0.0
  %902 = vmatprep.subr.mxu0 0.0
  %903 = vmatpush1.msra.mxu0 0.0
  %904 = vmatprep.subr.mxu0 0.0
  %905 = vmatpush1.msra.mxu0 0.0
  %906 = vmatprep.mubr.f32.mxu0 0.0
  %907 = vmatmul.mubr.f32.gmra.mrb[0].mxu0 %v603
  %v908 = vpop.f32.mrb[0].mxu0
  %v909 = vadd.f32 0.0, %v908
  %v910 = vpop.f32.mrb[0].mxu0
  %911 = vdwg.mxu0
  %v913 = vrot.slane %v909, 2
  %v915 = vadd.f32 %v390, %v913
  %v916 = vxor.u32 %v915, 2147483648
  %v917 = vmul.f32 %v916, 1.442695
  %v918 = vpow.pop %v917
  %v919 = vadd.f32 %v918, 1.0
  %v920 = vrcp.pop %v919
  %v921 = vmul.f32 1.0, %v920
  %922 = vmatprep.subr.mxu0 0.0
  %923 = vmatpush1.msra.mxu0 %v589
  %924 = vmatprep.subr.mxu0 0.0
  %925 = vmatpush1.msra.mxu0 %v590
  %926 = vmatprep.subr.mxu0 0.0
  %927 = vmatpush1.msra.mxu0 %v591
  %928 = vmatprep.subr.mxu0 0.0
  %929 = vmatpush1.msra.mxu0 %v592
  %930 = vmatprep.subr.mxu0 0.0
  %931 = vmatpush1.msra.mxu0 0.0
  %932 = vmatprep.subr.mxu0 0.0
  %933 = vmatpush1.msra.mxu0 0.0
  %934 = vmatprep.subr.mxu0 0.0
  %935 = vmatpush1.msra.mxu0 0.0
  %936 = vmatprep.subr.mxu0 0.0
  %937 = vmatpush1.msra.mxu0 0.0
  %938 = vmatprep.subr.mxu0 0.0
  %939 = vmatpush1.msra.mxu0 0.0
  %940 = vmatprep.subr.mxu0 0.0
  %941 = vmatpush1.msra.mxu0 0.0
  %942 = vmatprep.subr.mxu0 0.0
  %943 = vmatpush1.msra.mxu0 0.0
  %944 = vmatprep.subr.mxu0 0.0
  %945 = vmatpush1.msra.mxu0 0.0
  %946 = vmatprep.subr.mxu0 0.0
  %947 = vmatpush1.msra.mxu0 0.0
  %948 = vmatprep.subr.mxu0 0.0
  %949 = vmatpush1.msra.mxu0 0.0
  %950 = vmatprep.subr.mxu0 0.0
  %951 = vmatpush1.msra.mxu0 0.0
  %952 = vmatprep.subr.mxu0 0.0
  %953 = vmatpush1.msra.mxu0 0.0
  %954 = vmatprep.subr.mxu0 0.0
  %955 = vmatpush1.msra.mxu0 0.0
  %956 = vmatprep.subr.mxu0 0.0
  %957 = vmatpush1.msra.mxu0 0.0
  %958 = vmatprep.subr.mxu0 0.0
  %959 = vmatpush1.msra.mxu0 0.0
  %960 = vmatprep.subr.mxu0 0.0
  %961 = vmatpush1.msra.mxu0 0.0
  %962 = vmatprep.subr.mxu0 0.0
  %963 = vmatpush1.msra.mxu0 0.0
  %964 = vmatprep.subr.mxu0 0.0
  %965 = vmatpush1.msra.mxu0 0.0
  %966 = vmatprep.subr.mxu0 0.0
  %967 = vmatpush1.msra.mxu0 0.0
  %968 = vmatprep.subr.mxu0 0.0
  %969 = vmatpush1.msra.mxu0 0.0
  %970 = vmatprep.subr.mxu0 0.0
  %971 = vmatpush1.msra.mxu0 0.0
  %972 = vmatprep.subr.mxu0 0.0
  %973 = vmatpush1.msra.mxu0 0.0
  %974 = vmatprep.subr.mxu0 0.0
  %975 = vmatpush1.msra.mxu0 0.0
  %976 = vmatprep.subr.mxu0 0.0
  %977 = vmatpush1.msra.mxu0 0.0
  %978 = vmatprep.subr.mxu0 0.0
  %979 = vmatpush1.msra.mxu0 0.0
  %980 = vmatprep.subr.mxu0 0.0
  %981 = vmatpush1.msra.mxu0 0.0
  %982 = vmatprep.subr.mxu0 0.0
  %983 = vmatpush1.msra.mxu0 0.0
  %984 = vmatprep.subr.mxu0 0.0
  %985 = vmatpush1.msra.mxu0 0.0
  %986 = vmatprep.mubr.f32.mxu0 0.0
  %987 = vmatmul.mubr.f32.gmra.mrb[0].mxu0 %v603
  %v988 = vpop.f32.mrb[0].mxu0
  %v989 = vadd.f32 0.0, %v988
  %v990 = vpop.f32.mrb[0].mxu0
  %991 = vdwg.mxu0
  %v993 = vrot.slane %v989, 2
  %v995 = vadd.f32 %v478, %v993
  %v996 = vxor.u32 %v995, 2147483648
  %v997 = vmul.f32 %v996, 1.442695
  %v998 = vpow.pop %v997
  %v999 = vadd.f32 %v998, 1.0
  %v1000 = vrcp.pop %v999
  %v1001 = vmul.f32 1.0, %v1000
  %v1003 = vlaneseq
  %v1004 = vshrl.u32 %v1003, 7
  %v1005 = vsub.s32 0, %v1004
  %v1006 = vrot.slane %v601, %v1005
  %1008 = vmatprep.subr.mxu0 0.0
  %1009 = vmatpush1.msra.mxu0 %v594
  %1010 = vmatprep.subr.mxu0 0.0
  %1011 = vmatpush1.msra.mxu0 %v595
  %1012 = vmatprep.subr.mxu0 0.0
  %1013 = vmatpush1.msra.mxu0 %v596
  %1014 = vmatprep.subr.mxu0 0.0
  %1015 = vmatpush1.msra.mxu0 %v597
  %1016 = vmatprep.subr.mxu0 0.0
  %1017 = vmatpush1.msra.mxu0 0.0
  %1018 = vmatprep.subr.mxu0 0.0
  %1019 = vmatpush1.msra.mxu0 0.0
  %1020 = vmatprep.subr.mxu0 0.0
  %1021 = vmatpush1.msra.mxu0 0.0
  %1022 = vmatprep.subr.mxu0 0.0
  %1023 = vmatpush1.msra.mxu0 0.0
  %1024 = vmatprep.subr.mxu0 0.0
  %1025 = vmatpush1.msra.mxu0 0.0
  %1026 = vmatprep.subr.mxu0 0.0
  %1027 = vmatpush1.msra.mxu0 0.0
  %1028 = vmatprep.subr.mxu0 0.0
  %1029 = vmatpush1.msra.mxu0 0.0
  %1030 = vmatprep.subr.mxu0 0.0
  %1031 = vmatpush1.msra.mxu0 0.0
  %1032 = vmatprep.subr.mxu0 0.0
  %1033 = vmatpush1.msra.mxu0 0.0
  %1034 = vmatprep.subr.mxu0 0.0
  %1035 = vmatpush1.msra.mxu0 0.0
  %1036 = vmatprep.subr.mxu0 0.0
  %1037 = vmatpush1.msra.mxu0 0.0
  %1038 = vmatprep.subr.mxu0 0.0
  %1039 = vmatpush1.msra.mxu0 0.0
  %1040 = vmatprep.subr.mxu0 0.0
  %1041 = vmatpush1.msra.mxu0 0.0
  %1042 = vmatprep.subr.mxu0 0.0
  %1043 = vmatpush1.msra.mxu0 0.0
  %1044 = vmatprep.subr.mxu0 0.0
  %1045 = vmatpush1.msra.mxu0 0.0
  %1046 = vmatprep.subr.mxu0 0.0
  %1047 = vmatpush1.msra.mxu0 0.0
  %1048 = vmatprep.subr.mxu0 0.0
  %1049 = vmatpush1.msra.mxu0 0.0
  %1050 = vmatprep.subr.mxu0 0.0
  %1051 = vmatpush1.msra.mxu0 0.0
  %1052 = vmatprep.subr.mxu0 0.0
  %1053 = vmatpush1.msra.mxu0 0.0
  %1054 = vmatprep.subr.mxu0 0.0
  %1055 = vmatpush1.msra.mxu0 0.0
  %1056 = vmatprep.subr.mxu0 0.0
  %1057 = vmatpush1.msra.mxu0 0.0
  %1058 = vmatprep.subr.mxu0 0.0
  %1059 = vmatpush1.msra.mxu0 0.0
  %1060 = vmatprep.subr.mxu0 0.0
  %1061 = vmatpush1.msra.mxu0 0.0
  %1062 = vmatprep.subr.mxu0 0.0
  %1063 = vmatpush1.msra.mxu0 0.0
  %1064 = vmatprep.subr.mxu0 0.0
  %1065 = vmatpush1.msra.mxu0 0.0
  %1066 = vmatprep.subr.mxu0 0.0
  %1067 = vmatpush1.msra.mxu0 0.0
  %1068 = vmatprep.subr.mxu0 0.0
  %1069 = vmatpush1.msra.mxu0 0.0
  %1070 = vmatprep.subr.mxu0 0.0
  %1071 = vmatpush1.msra.mxu0 0.0
  %1072 = vmatprep.mubr.f32.mxu0 0.0
  %1073 = vmatmul.mubr.f32.gmra.mrb[0].mxu0 %v603
  %v1074 = vpop.f32.mrb[0].mxu0
  %v1075 = vadd.f32 %v1006, %v1074
  %v1076 = vpop.f32.mrb[0].mxu0
  %1077 = vdwg.mxu0
  %v1079 = vrot.slane %v1075, 2
  %v1081 = vmul.f32 %v921, %v1079
  %v1082 = vadd.f32 %v566, %v1081
  %v1083 = vtanh.pop %v1082
  %v1084 = vsub.f32 1.0, %v1001
  %v1085 = vmul.f32 %v1084, %v1083
  %v1086 = vmul.f32 %v1001, 0.0
  %v1087 = vadd.f32 %v1085, %v1086
  %vm1088 = vcmask 254976
  %1089 = vst.msk [vmem:[#allocation2] sm:$0x3] %vm1088, %v841
  %vm1090 = vcmask 261126
  %1091 = vst.msk [vmem:[#allocation3 + $0x8] sm:$0xc0] %vm1090, %v1087
  %v1093 = vsel %vm47, %v841, 0
  %1095 = vmatprep.subr.mxu0 0.0
  %1096 = vmatpush1.msra.mxu0 %v569
  %1097 = vmatprep.subr.mxu0 0.0
  %1098 = vmatpush1.msra.mxu0 %v570
  %1099 = vmatprep.subr.mxu0 0.0
  %1100 = vmatpush1.msra.mxu0 %v571
  %1101 = vmatprep.subr.mxu0 0.0
  %1102 = vmatpush1.msra.mxu0 %v572
  %1103 = vmatprep.subr.mxu0 0.0
  %1104 = vmatpush1.msra.mxu0 0.0
  %1105 = vmatprep.subr.mxu0 0.0
  %1106 = vmatpush1.msra.mxu0 0.0
  %1107 = vmatprep.subr.mxu0 0.0
  %1108 = vmatpush1.msra.mxu0 0.0
  %1109 = vmatprep.subr.mxu0 0.0
  %1110 = vmatpush1.msra.mxu0 0.0
  %1111 = vmatprep.subr.mxu0 0.0
  %1112 = vmatpush1.msra.mxu0 0.0
  %1113 = vmatprep.subr.mxu0 0.0
  %1114 = vmatpush1.msra.mxu0 0.0
  %1115 = vmatprep.subr.mxu0 0.0
  %1116 = vmatpush1.msra.mxu0 0.0
  %1117 = vmatprep.subr.mxu0 0.0
  %1118 = vmatpush1.msra.mxu0 0.0
  %1119 = vmatprep.subr.mxu0 0.0
  %1120 = vmatpush1.msra.mxu0 0.0
  %1121 = vmatprep.subr.mxu0 0.0
  %1122 = vmatpush1.msra.mxu0 0.0
  %1123 = vmatprep.subr.mxu0 0.0
  %1124 = vmatpush1.msra.mxu0 0.0
  %1125 = vmatprep.subr.mxu0 0.0
  %1126 = vmatpush1.msra.mxu0 0.0
  %1127 = vmatprep.subr.mxu0 0.0
  %1128 = vmatpush1.msra.mxu0 0.0
  %1129 = vmatprep.subr.mxu0 0.0
  %1130 = vmatpush1.msra.mxu0 0.0
  %1131 = vmatprep.subr.mxu0 0.0
  %1132 = vmatpush1.msra.mxu0 0.0
  %1133 = vmatprep.subr.mxu0 0.0
  %1134 = vmatpush1.msra.mxu0 0.0
  %1135 = vmatprep.subr.mxu0 0.0
  %1136 = vmatpush1.msra.mxu0 0.0
  %1137 = vmatprep.subr.mxu0 0.0
  %1138 = vmatpush1.msra.mxu0 0.0
  %1139 = vmatprep.subr.mxu0 0.0
  %1140 = vmatpush1.msra.mxu0 0.0
  %1141 = vmatprep.subr.mxu0 0.0
  %1142 = vmatpush1.msra.mxu0 0.0
  %1143 = vmatprep.subr.mxu0 0.0
  %1144 = vmatpush1.msra.mxu0 0.0
  %1145 = vmatprep.subr.mxu0 0.0
  %1146 = vmatpush1.msra.mxu0 0.0
  %1147 = vmatprep.subr.mxu0 0.0
  %1148 = vmatpush1.msra.mxu0 0.0
  %1149 = vmatprep.subr.mxu0 0.0
  %1150 = vmatpush1.msra.mxu0 0.0
  %1151 = vmatprep.subr.mxu0 0.0
  %1152 = vmatpush1.msra.mxu0 0.0
  %1153 = vmatprep.subr.mxu0 0.0
  %1154 = vmatpush1.msra.mxu0 0.0
  %1155 = vmatprep.subr.mxu0 0.0
  %1156 = vmatpush1.msra.mxu0 0.0
  %1157 = vmatprep.subr.mxu0 0.0
  %1158 = vmatpush1.msra.mxu0 0.0
  %1159 = vmatprep.mubr.f32.mxu0 0.0
  %1160 = vmatmul.mubr.f32.gmra.mrb[0].mxu0 %v1093
  %v1161 = vpop.f32.mrb[0].mxu0
  %v1162 = vadd.f32 0.0, %v1161
  %v1163 = vpop.f32.mrb[0].mxu0
  %1164 = vdwg.mxu0
  %v1166 = vrot.slane %v1162, 6
  %v1168 = vadd.f32 %v121, %v1166
  %v1169 = vxor.u32 %v1168, 2147483648
  %v1170 = vmul.f32 %v1169, 1.442695
  %v1171 = vpow.pop %v1170
  %v1172 = vadd.f32 %v1171, 1.0
  %v1173 = vrcp.pop %v1172
  %v1174 = vmul.f32 1.0, %v1173
  %1175 = vmatprep.subr.mxu0 0.0
  %1176 = vmatpush1.msra.mxu0 %v574
  %1177 = vmatprep.subr.mxu0 0.0
  %1178 = vmatpush1.msra.mxu0 %v575
  %1179 = vmatprep.subr.mxu0 0.0
  %1180 = vmatpush1.msra.mxu0 %v576
  %1181 = vmatprep.subr.mxu0 0.0
  %1182 = vmatpush1.msra.mxu0 %v577
  %1183 = vmatprep.subr.mxu0 0.0
  %1184 = vmatpush1.msra.mxu0 0.0
  %1185 = vmatprep.subr.mxu0 0.0
  %1186 = vmatpush1.msra.mxu0 0.0
  %1187 = vmatprep.subr.mxu0 0.0
  %1188 = vmatpush1.msra.mxu0 0.0
  %1189 = vmatprep.subr.mxu0 0.0
  %1190 = vmatpush1.msra.mxu0 0.0
  %1191 = vmatprep.subr.mxu0 0.0
  %1192 = vmatpush1.msra.mxu0 0.0
  %1193 = vmatprep.subr.mxu0 0.0
  %1194 = vmatpush1.msra.mxu0 0.0
  %1195 = vmatprep.subr.mxu0 0.0
  %1196 = vmatpush1.msra.mxu0 0.0
  %1197 = vmatprep.subr.mxu0 0.0
  %1198 = vmatpush1.msra.mxu0 0.0
  %1199 = vmatprep.subr.mxu0 0.0
  %1200 = vmatpush1.msra.mxu0 0.0
  %1201 = vmatprep.subr.mxu0 0.0
  %1202 = vmatpush1.msra.mxu0 0.0
  %1203 = vmatprep.subr.mxu0 0.0
  %1204 = vmatpush1.msra.mxu0 0.0
  %1205 = vmatprep.subr.mxu0 0.0
  %1206 = vmatpush1.msra.mxu0 0.0
  %1207 = vmatprep.subr.mxu0 0.0
  %1208 = vmatpush1.msra.mxu0 0.0
  %1209 = vmatprep.subr.mxu0 0.0
  %1210 = vmatpush1.msra.mxu0 0.0
  %1211 = vmatprep.subr.mxu0 0.0
  %1212 = vmatpush1.msra.mxu0 0.0
  %1213 = vmatprep.subr.mxu0 0.0
  %1214 = vmatpush1.msra.mxu0 0.0
  %1215 = vmatprep.subr.mxu0 0.0
  %1216 = vmatpush1.msra.mxu0 0.0
  %1217 = vmatprep.subr.mxu0 0.0
  %1218 = vmatpush1.msra.mxu0 0.0
  %1219 = vmatprep.subr.mxu0 0.0
  %1220 = vmatpush1.msra.mxu0 0.0
  %1221 = vmatprep.subr.mxu0 0.0
  %1222 = vmatpush1.msra.mxu0 0.0
  %1223 = vmatprep.subr.mxu0 0.0
  %1224 = vmatpush1.msra.mxu0 0.0
  %1225 = vmatprep.subr.mxu0 0.0
  %1226 = vmatpush1.msra.mxu0 0.0
  %1227 = vmatprep.subr.mxu0 0.0
  %1228 = vmatpush1.msra.mxu0 0.0
  %1229 = vmatprep.subr.mxu0 0.0
  %1230 = vmatpush1.msra.mxu0 0.0
  %1231 = vmatprep.subr.mxu0 0.0
  %1232 = vmatpush1.msra.mxu0 0.0
  %1233 = vmatprep.subr.mxu0 0.0
  %1234 = vmatpush1.msra.mxu0 0.0
  %1235 = vmatprep.subr.mxu0 0.0
  %1236 = vmatpush1.msra.mxu0 0.0
  %1237 = vmatprep.subr.mxu0 0.0
  %1238 = vmatpush1.msra.mxu0 0.0
  %1239 = vmatprep.mubr.f32.mxu0 0.0
  %1240 = vmatmul.mubr.f32.gmra.mrb[0].mxu0 %v1093
  %v1241 = vpop.f32.mrb[0].mxu0
  %v1242 = vadd.f32 0.0, %v1241
  %v1243 = vpop.f32.mrb[0].mxu0
  %1244 = vdwg.mxu0
  %v1246 = vrot.slane %v1242, 6
  %v1248 = vadd.f32 %v209, %v1246
  %v1249 = vxor.u32 %v1248, 2147483648
  %v1250 = vmul.f32 %v1249, 1.442695
  %v1251 = vpow.pop %v1250
  %v1252 = vadd.f32 %v1251, 1.0
  %v1253 = vrcp.pop %v1252
  %v1254 = vmul.f32 1.0, %v1253
  %1255 = vmatprep.subr.mxu0 0.0
  %1256 = vmatpush1.msra.mxu0 %v579
  %1257 = vmatprep.subr.mxu0 0.0
  %1258 = vmatpush1.msra.mxu0 %v580
  %1259 = vmatprep.subr.mxu0 0.0
  %1260 = vmatpush1.msra.mxu0 %v581
  %1261 = vmatprep.subr.mxu0 0.0
  %1262 = vmatpush1.msra.mxu0 %v582
  %1263 = vmatprep.subr.mxu0 0.0
  %1264 = vmatpush1.msra.mxu0 0.0
  %1265 = vmatprep.subr.mxu0 0.0
  %1266 = vmatpush1.msra.mxu0 0.0
  %1267 = vmatprep.subr.mxu0 0.0
  %1268 = vmatpush1.msra.mxu0 0.0
  %1269 = vmatprep.subr.mxu0 0.0
  %1270 = vmatpush1.msra.mxu0 0.0
  %1271 = vmatprep.subr.mxu0 0.0
  %1272 = vmatpush1.msra.mxu0 0.0
  %1273 = vmatprep.subr.mxu0 0.0
  %1274 = vmatpush1.msra.mxu0 0.0
  %1275 = vmatprep.subr.mxu0 0.0
  %1276 = vmatpush1.msra.mxu0 0.0
  %1277 = vmatprep.subr.mxu0 0.0
  %1278 = vmatpush1.msra.mxu0 0.0
  %1279 = vmatprep.subr.mxu0 0.0
  %1280 = vmatpush1.msra.mxu0 0.0
  %1281 = vmatprep.subr.mxu0 0.0
  %1282 = vmatpush1.msra.mxu0 0.0
  %1283 = vmatprep.subr.mxu0 0.0
  %1284 = vmatpush1.msra.mxu0 0.0
  %1285 = vmatprep.subr.mxu0 0.0
  %1286 = vmatpush1.msra.mxu0 0.0
  %1287 = vmatprep.subr.mxu0 0.0
  %1288 = vmatpush1.msra.mxu0 0.0
  %1289 = vmatprep.subr.mxu0 0.0
  %1290 = vmatpush1.msra.mxu0 0.0
  %1291 = vmatprep.subr.mxu0 0.0
  %1292 = vmatpush1.msra.mxu0 0.0
  %1293 = vmatprep.subr.mxu0 0.0
  %1294 = vmatpush1.msra.mxu0 0.0
  %1295 = vmatprep.subr.mxu0 0.0
  %1296 = vmatpush1.msra.mxu0 0.0
  %1297 = vmatprep.subr.mxu0 0.0
  %1298 = vmatpush1.msra.mxu0 0.0
  %1299 = vmatprep.subr.mxu0 0.0
  %1300 = vmatpush1.msra.mxu0 0.0
  %1301 = vmatprep.subr.mxu0 0.0
  %1302 = vmatpush1.msra.mxu0 0.0
  %1303 = vmatprep.subr.mxu0 0.0
  %1304 = vmatpush1.msra.mxu0 0.0
  %1305 = vmatprep.subr.mxu0 0.0
  %1306 = vmatpush1.msra.mxu0 0.0
  %1307 = vmatprep.subr.mxu0 0.0
  %1308 = vmatpush1.msra.mxu0 0.0
  %1309 = vmatprep.subr.mxu0 0.0
  %1310 = vmatpush1.msra.mxu0 0.0
  %1311 = vmatprep.subr.mxu0 0.0
  %1312 = vmatpush1.msra.mxu0 0.0
  %1313 = vmatprep.subr.mxu0 0.0
  %1314 = vmatpush1.msra.mxu0 0.0
  %1315 = vmatprep.subr.mxu0 0.0
  %1316 = vmatpush1.msra.mxu0 0.0
  %1317 = vmatprep.subr.mxu0 0.0
  %1318 = vmatpush1.msra.mxu0 0.0
  %1319 = vmatprep.mubr.f32.mxu0 0.0
  %1320 = vmatmul.mubr.f32.gmra.mrb[0].mxu0 %v1093
  %v1321 = vpop.f32.mrb[0].mxu0
  %v1322 = vadd.f32 %v763, %v1321
  %v1323 = vpop.f32.mrb[0].mxu0
  %1324 = vdwg.mxu0
  %v1326 = vrot.slane %v1322, 6
  %v1328 = vmul.f32 %v1174, %v1326
  %v1329 = vadd.f32 %v297, %v1328
  %v1330 = vtanh.pop %v1329
  %v1331 = vsub.f32 1.0, %v1254
  %v1332 = vmul.f32 %v1331, %v1330
  %v1333 = vrot.slane %v841, 6
  %v1335 = vmul.f32 %v1254, %v1333
  %v1336 = vadd.f32 %v1332, %v1335
  %v1338 = vrot.slane %v1087, 6
  %v1339 = vsel %vm47, %v1338, 0
  %1341 = vmatprep.subr.mxu0 0.0
  %1342 = vmatpush1.msra.mxu0 %v584
  %1343 = vmatprep.subr.mxu0 0.0
  %1344 = vmatpush1.msra.mxu0 %v585
  %1345 = vmatprep.subr.mxu0 0.0
  %1346 = vmatpush1.msra.mxu0 %v586
  %1347 = vmatprep.subr.mxu0 0.0
  %1348 = vmatpush1.msra.mxu0 %v587
  %1349 = vmatprep.subr.mxu0 0.0
  %1350 = vmatpush1.msra.mxu0 0.0
  %1351 = vmatprep.subr.mxu0 0.0
  %1352 = vmatpush1.msra.mxu0 0.0
  %1353 = vmatprep.subr.mxu0 0.0
  %1354 = vmatpush1.msra.mxu0 0.0
  %1355 = vmatprep.subr.mxu0 0.0
  %1356 = vmatpush1.msra.mxu0 0.0
  %1357 = vmatprep.subr.mxu0 0.0
  %1358 = vmatpush1.msra.mxu0 0.0
  %1359 = vmatprep.subr.mxu0 0.0
  %1360 = vmatpush1.msra.mxu0 0.0
  %1361 = vmatprep.subr.mxu0 0.0
  %1362 = vmatpush1.msra.mxu0 0.0
  %1363 = vmatprep.subr.mxu0 0.0
  %1364 = vmatpush1.msra.mxu0 0.0
  %1365 = vmatprep.subr.mxu0 0.0
  %1366 = vmatpush1.msra.mxu0 0.0
  %1367 = vmatprep.subr.mxu0 0.0
  %1368 = vmatpush1.msra.mxu0 0.0
  %1369 = vmatprep.subr.mxu0 0.0
  %1370 = vmatpush1.msra.mxu0 0.0
  %1371 = vmatprep.subr.mxu0 0.0
  %1372 = vmatpush1.msra.mxu0 0.0
  %1373 = vmatprep.subr.mxu0 0.0
  %1374 = vmatpush1.msra.mxu0 0.0
  %1375 = vmatprep.subr.mxu0 0.0
  %1376 = vmatpush1.msra.mxu0 0.0
  %1377 = vmatprep.subr.mxu0 0.0
  %1378 = vmatpush1.msra.mxu0 0.0
  %1379 = vmatprep.subr.mxu0 0.0
  %1380 = vmatpush1.msra.mxu0 0.0
  %1381 = vmatprep.subr.mxu0 0.0
  %1382 = vmatpush1.msra.mxu0 0.0
  %1383 = vmatprep.subr.mxu0 0.0
  %1384 = vmatpush1.msra.mxu0 0.0
  %1385 = vmatprep.subr.mxu0 0.0
  %1386 = vmatpush1.msra.mxu0 0.0
  %1387 = vmatprep.subr.mxu0 0.0
  %1388 = vmatpush1.msra.mxu0 0.0
  %1389 = vmatprep.subr.mxu0 0.0
  %1390 = vmatpush1.msra.mxu0 0.0
  %1391 = vmatprep.subr.mxu0 0.0
  %1392 = vmatpush1.msra.mxu0 0.0
  %1393 = vmatprep.subr.mxu0 0.0
  %1394 = vmatpush1.msra.mxu0 0.0
  %1395 = vmatprep.subr.mxu0 0.0
  %1396 = vmatpush1.msra.mxu0 0.0
  %1397 = vmatprep.subr.mxu0 0.0
  %1398 = vmatpush1.msra.mxu0 0.0
  %1399 = vmatprep.subr.mxu0 0.0
  %1400 = vmatpush1.msra.mxu0 0.0
  %1401 = vmatprep.subr.mxu0 0.0
  %1402 = vmatpush1.msra.mxu0 0.0
  %1403 = vmatprep.subr.mxu0 0.0
  %1404 = vmatpush1.msra.mxu0 0.0
  %1405 = vmatprep.mubr.f32.mxu0 0.0
  %1406 = vmatmul.mubr.f32.gmra.mrb[0].mxu0 %v1339
  %v1407 = vpop.f32.mrb[0].mxu0
  %v1408 = vadd.f32 0.0, %v1407
  %v1409 = vpop.f32.mrb[0].mxu0
  %1410 = vdwg.mxu0
  %v1412 = vrot.slane %v1408, 4
  %v1414 = vadd.f32 %v390, %v1412
  %v1415 = vxor.u32 %v1414, 2147483648
  %v1416 = vmul.f32 %v1415, 1.442695
  %v1417 = vpow.pop %v1416
  %v1418 = vadd.f32 %v1417, 1.0
  %v1419 = vrcp.pop %v1418
  %v1420 = vmul.f32 1.0, %v1419
  %1421 = vmatprep.subr.mxu0 0.0
  %1422 = vmatpush1.msra.mxu0 %v589
  %1423 = vmatprep.subr.mxu0 0.0
  %1424 = vmatpush1.msra.mxu0 %v590
  %1425 = vmatprep.subr.mxu0 0.0
  %1426 = vmatpush1.msra.mxu0 %v591
  %1427 = vmatprep.subr.mxu0 0.0
  %1428 = vmatpush1.msra.mxu0 %v592
  %1429 = vmatprep.subr.mxu0 0.0
  %1430 = vmatpush1.msra.mxu0 0.0
  %1431 = vmatprep.subr.mxu0 0.0
  %1432 = vmatpush1.msra.mxu0 0.0
  %1433 = vmatprep.subr.mxu0 0.0
  %1434 = vmatpush1.msra.mxu0 0.0
  %1435 = vmatprep.subr.mxu0 0.0
  %1436 = vmatpush1.msra.mxu0 0.0
  %1437 = vmatprep.subr.mxu0 0.0
  %1438 = vmatpush1.msra.mxu0 0.0
  %1439 = vmatprep.subr.mxu0 0.0
  %1440 = vmatpush1.msra.mxu0 0.0
  %1441 = vmatprep.subr.mxu0 0.0
  %1442 = vmatpush1.msra.mxu0 0.0
  %1443 = vmatprep.subr.mxu0 0.0
  %1444 = vmatpush1.msra.mxu0 0.0
  %1445 = vmatprep.subr.mxu0 0.0
  %1446 = vmatpush1.msra.mxu0 0.0
  %1447 = vmatprep.subr.mxu0 0.0
  %1448 = vmatpush1.msra.mxu0 0.0
  %1449 = vmatprep.subr.mxu0 0.0
  %1450 = vmatpush1.msra.mxu0 0.0
  %1451 = vmatprep.subr.mxu0 0.0
  %1452 = vmatpush1.msra.mxu0 0.0
  %1453 = vmatprep.subr.mxu0 0.0
  %1454 = vmatpush1.msra.mxu0 0.0
  %1455 = vmatprep.subr.mxu0 0.0
  %1456 = vmatpush1.msra.mxu0 0.0
  %1457 = vmatprep.subr.mxu0 0.0
  %1458 = vmatpush1.msra.mxu0 0.0
  %1459 = vmatprep.subr.mxu0 0.0
  %1460 = vmatpush1.msra.mxu0 0.0
  %1461 = vmatprep.subr.mxu0 0.0
  %1462 = vmatpush1.msra.mxu0 0.0
  %1463 = vmatprep.subr.mxu0 0.0
  %1464 = vmatpush1.msra.mxu0 0.0
  %1465 = vmatprep.subr.mxu0 0.0
  %1466 = vmatpush1.msra.mxu0 0.0
  %1467 = vmatprep.subr.mxu0 0.0
  %1468 = vmatpush1.msra.mxu0 0.0
  %1469 = vmatprep.subr.mxu0 0.0
  %1470 = vmatpush1.msra.mxu0 0.0
  %1471 = vmatprep.subr.mxu0 0.0
  %1472 = vmatpush1.msra.mxu0 0.0
  %1473 = vmatprep.subr.mxu0 0.0
  %1474 = vmatpush1.msra.mxu0 0.0
  %1475 = vmatprep.subr.mxu0 0.0
  %1476 = vmatpush1.msra.mxu0 0.0
  %1477 = vmatprep.subr.mxu0 0.0
  %1478 = vmatpush1.msra.mxu0 0.0
  %1479 = vmatprep.subr.mxu0 0.0
  %1480 = vmatpush1.msra.mxu0 0.0
  %1481 = vmatprep.subr.mxu0 0.0
  %1482 = vmatpush1.msra.mxu0 0.0
  %1483 = vmatprep.subr.mxu0 0.0
  %1484 = vmatpush1.msra.mxu0 0.0
  %1485 = vmatprep.mubr.f32.mxu0 0.0
  %1486 = vmatmul.mubr.f32.gmra.mrb[0].mxu0 %v1339
  %v1487 = vpop.f32.mrb[0].mxu0
  %v1488 = vadd.f32 0.0, %v1487
  %v1489 = vpop.f32.mrb[0].mxu0
  %1490 = vdwg.mxu0
  %v1492 = vrot.slane %v1488, 4
  %v1494 = vadd.f32 %v478, %v1492
  %v1495 = vxor.u32 %v1494, 2147483648
  %v1496 = vmul.f32 %v1495, 1.442695
  %v1497 = vpow.pop %v1496
  %v1498 = vadd.f32 %v1497, 1.0
  %v1499 = vrcp.pop %v1498
  %v1500 = vmul.f32 1.0, %v1499
  %1501 = vmatprep.subr.mxu0 0.0
  %1502 = vmatpush1.msra.mxu0 %v594
  %1503 = vmatprep.subr.mxu0 0.0
  %1504 = vmatpush1.msra.mxu0 %v595
  %1505 = vmatprep.subr.mxu0 0.0
  %1506 = vmatpush1.msra.mxu0 %v596
  %1507 = vmatprep.subr.mxu0 0.0
  %1508 = vmatpush1.msra.mxu0 %v597
  %1509 = vmatprep.subr.mxu0 0.0
  %1510 = vmatpush1.msra.mxu0 0.0
  %1511 = vmatprep.subr.mxu0 0.0
  %1512 = vmatpush1.msra.mxu0 0.0
  %1513 = vmatprep.subr.mxu0 0.0
  %1514 = vmatpush1.msra.mxu0 0.0
  %1515 = vmatprep.subr.mxu0 0.0
  %1516 = vmatpush1.msra.mxu0 0.0
  %1517 = vmatprep.subr.mxu0 0.0
  %1518 = vmatpush1.msra.mxu0 0.0
  %1519 = vmatprep.subr.mxu0 0.0
  %1520 = vmatpush1.msra.mxu0 0.0
  %1521 = vmatprep.subr.mxu0 0.0
  %1522 = vmatpush1.msra.mxu0 0.0
  %1523 = vmatprep.subr.mxu0 0.0
  %1524 = vmatpush1.msra.mxu0 0.0
  %1525 = vmatprep.subr.mxu0 0.0
  %1526 = vmatpush1.msra.mxu0 0.0
  %1527 = vmatprep.subr.mxu0 0.0
  %1528 = vmatpush1.msra.mxu0 0.0
  %1529 = vmatprep.subr.mxu0 0.0
  %1530 = vmatpush1.msra.mxu0 0.0
  %1531 = vmatprep.subr.mxu0 0.0
  %1532 = vmatpush1.msra.mxu0 0.0
  %1533 = vmatprep.subr.mxu0 0.0
  %1534 = vmatpush1.msra.mxu0 0.0
  %1535 = vmatprep.subr.mxu0 0.0
  %1536 = vmatpush1.msra.mxu0 0.0
  %1537 = vmatprep.subr.mxu0 0.0
  %1538 = vmatpush1.msra.mxu0 0.0
  %1539 = vmatprep.subr.mxu0 0.0
  %1540 = vmatpush1.msra.mxu0 0.0
  %1541 = vmatprep.subr.mxu0 0.0
  %1542 = vmatpush1.msra.mxu0 0.0
  %1543 = vmatprep.subr.mxu0 0.0
  %1544 = vmatpush1.msra.mxu0 0.0
  %1545 = vmatprep.subr.mxu0 0.0
  %1546 = vmatpush1.msra.mxu0 0.0
  %1547 = vmatprep.subr.mxu0 0.0
  %1548 = vmatpush1.msra.mxu0 0.0
  %1549 = vmatprep.subr.mxu0 0.0
  %1550 = vmatpush1.msra.mxu0 0.0
  %1551 = vmatprep.subr.mxu0 0.0
  %1552 = vmatpush1.msra.mxu0 0.0
  %1553 = vmatprep.subr.mxu0 0.0
  %1554 = vmatpush1.msra.mxu0 0.0
  %1555 = vmatprep.subr.mxu0 0.0
  %1556 = vmatpush1.msra.mxu0 0.0
  %1557 = vmatprep.subr.mxu0 0.0
  %1558 = vmatpush1.msra.mxu0 0.0
  %1559 = vmatprep.subr.mxu0 0.0
  %1560 = vmatpush1.msra.mxu0 0.0
  %1561 = vmatprep.subr.mxu0 0.0
  %1562 = vmatpush1.msra.mxu0 0.0
  %1563 = vmatprep.subr.mxu0 0.0
  %1564 = vmatpush1.msra.mxu0 0.0
  %1565 = vmatprep.mubr.f32.mxu0 0.0
  %1566 = vmatmul.mubr.f32.gmra.mrb[0].mxu0 %v1339
  %v1567 = vpop.f32.mrb[0].mxu0
  %v1568 = vadd.f32 %v1006, %v1567
  %v1569 = vpop.f32.mrb[0].mxu0
  %1570 = vdwg.mxu0
  %v1572 = vrot.slane %v1568, 4
  %v1574 = vmul.f32 %v1420, %v1572
  %v1575 = vadd.f32 %v566, %v1574
  %v1576 = vtanh.pop %v1575
  %v1577 = vsub.f32 1.0, %v1500
  %v1578 = vmul.f32 %v1577, %v1576
  %v1579 = vrot.slane %v1087, 2
  %v1581 = vmul.f32 %v1500, %v1579
  %v1582 = vadd.f32 %v1578, %v1581
  %vm1583 = vcmask 257026
  %1584 = vst.msk [vmem:[#allocation2] sm:$0xc] %vm1583, %v1336
  %vm1585 = vcmask 259076
  %1586 = vst.msk [vmem:[#allocation3 + $0x8] sm:$0x30] %vm1585, %v1582
  %v1588 = vrot.slane %v1336, 2
  %v1589 = vsel %vm47, %v1588, 0
  %1591 = vmatprep.subr.mxu0 0.0
  %1592 = vmatpush1.msra.mxu0 %v569
  %1593 = vmatprep.subr.mxu0 0.0
  %1594 = vmatpush1.msra.mxu0 %v570
  %1595 = vmatprep.subr.mxu0 0.0
  %1596 = vmatpush1.msra.mxu0 %v571
  %1597 = vmatprep.subr.mxu0 0.0
  %1598 = vmatpush1.msra.mxu0 %v572
  %1599 = vmatprep.subr.mxu0 0.0
  %1600 = vmatpush1.msra.mxu0 0.0
  %1601 = vmatprep.subr.mxu0 0.0
  %1602 = vmatpush1.msra.mxu0 0.0
  %1603 = vmatprep.subr.mxu0 0.0
  %1604 = vmatpush1.msra.mxu0 0.0
  %1605 = vmatprep.subr.mxu0 0.0
  %1606 = vmatpush1.msra.mxu0 0.0
  %1607 = vmatprep.subr.mxu0 0.0
  %1608 = vmatpush1.msra.mxu0 0.0
  %1609 = vmatprep.subr.mxu0 0.0
  %1610 = vmatpush1.msra.mxu0 0.0
  %1611 = vmatprep.subr.mxu0 0.0
  %1612 = vmatpush1.msra.mxu0 0.0
  %1613 = vmatprep.subr.mxu0 0.0
  %1614 = vmatpush1.msra.mxu0 0.0
  %1615 = vmatprep.subr.mxu0 0.0
  %1616 = vmatpush1.msra.mxu0 0.0
  %1617 = vmatprep.subr.mxu0 0.0
  %1618 = vmatpush1.msra.mxu0 0.0
  %1619 = vmatprep.subr.mxu0 0.0
  %1620 = vmatpush1.msra.mxu0 0.0
  %1621 = vmatprep.subr.mxu0 0.0
  %1622 = vmatpush1.msra.mxu0 0.0
  %1623 = vmatprep.subr.mxu0 0.0
  %1624 = vmatpush1.msra.mxu0 0.0
  %1625 = vmatprep.subr.mxu0 0.0
  %1626 = vmatpush1.msra.mxu0 0.0
  %1627 = vmatprep.subr.mxu0 0.0
  %1628 = vmatpush1.msra.mxu0 0.0
  %1629 = vmatprep.subr.mxu0 0.0
  %1630 = vmatpush1.msra.mxu0 0.0
  %1631 = vmatprep.subr.mxu0 0.0
  %1632 = vmatpush1.msra.mxu0 0.0
  %1633 = vmatprep.subr.mxu0 0.0
  %1634 = vmatpush1.msra.mxu0 0.0
  %1635 = vmatprep.subr.mxu0 0.0
  %1636 = vmatpush1.msra.mxu0 0.0
  %1637 = vmatprep.subr.mxu0 0.0
  %1638 = vmatpush1.msra.mxu0 0.0
  %1639 = vmatprep.subr.mxu0 0.0
  %1640 = vmatpush1.msra.mxu0 0.0
  %1641 = vmatprep.subr.mxu0 0.0
  %1642 = vmatpush1.msra.mxu0 0.0
  %1643 = vmatprep.subr.mxu0 0.0
  %1644 = vmatpush1.msra.mxu0 0.0
  %1645 = vmatprep.subr.mxu0 0.0
  %1646 = vmatpush1.msra.mxu0 0.0
  %1647 = vmatprep.subr.mxu0 0.0
  %1648 = vmatpush1.msra.mxu0 0.0
  %1649 = vmatprep.subr.mxu0 0.0
  %1650 = vmatpush1.msra.mxu0 0.0
  %1651 = vmatprep.subr.mxu0 0.0
  %1652 = vmatpush1.msra.mxu0 0.0
  %1653 = vmatprep.subr.mxu0 0.0
  %1654 = vmatpush1.msra.mxu0 0.0
  %1655 = vmatprep.mubr.f32.mxu0 0.0
  %1656 = vmatmul.mubr.f32.gmra.mrb[0].mxu0 %v1589
  %v1657 = vpop.f32.mrb[0].mxu0
  %v1658 = vadd.f32 0.0, %v1657
  %v1659 = vpop.f32.mrb[0].mxu0
  %1660 = vdwg.mxu0
  %v1662 = vrot.slane %v1658, 4
  %v1664 = vadd.f32 %v121, %v1662
  %v1665 = vxor.u32 %v1664, 2147483648
  %v1666 = vmul.f32 %v1665, 1.442695
  %v1667 = vpow.pop %v1666
  %v1668 = vadd.f32 %v1667, 1.0
  %v1669 = vrcp.pop %v1668
  %v1670 = vmul.f32 1.0, %v1669
  %1671 = vmatprep.subr.mxu0 0.0
  %1672 = vmatpush1.msra.mxu0 %v574
  %1673 = vmatprep.subr.mxu0 0.0
  %1674 = vmatpush1.msra.mxu0 %v575
  %1675 = vmatprep.subr.mxu0 0.0
  %1676 = vmatpush1.msra.mxu0 %v576
  %1677 = vmatprep.subr.mxu0 0.0
  %1678 = vmatpush1.msra.mxu0 %v577
  %1679 = vmatprep.subr.mxu0 0.0
  %1680 = vmatpush1.msra.mxu0 0.0
  %1681 = vmatprep.subr.mxu0 0.0
  %1682 = vmatpush1.msra.mxu0 0.0
  %1683 = vmatprep.subr.mxu0 0.0
  %1684 = vmatpush1.msra.mxu0 0.0
  %1685 = vmatprep.subr.mxu0 0.0
  %1686 = vmatpush1.msra.mxu0 0.0
  %1687 = vmatprep.subr.mxu0 0.0
  %1688 = vmatpush1.msra.mxu0 0.0
  %1689 = vmatprep.subr.mxu0 0.0
  %1690 = vmatpush1.msra.mxu0 0.0
  %1691 = vmatprep.subr.mxu0 0.0
  %1692 = vmatpush1.msra.mxu0 0.0
  %1693 = vmatprep.subr.mxu0 0.0
  %1694 = vmatpush1.msra.mxu0 0.0
  %1695 = vmatprep.subr.mxu0 0.0
  %1696 = vmatpush1.msra.mxu0 0.0
  %1697 = vmatprep.subr.mxu0 0.0
  %1698 = vmatpush1.msra.mxu0 0.0
  %1699 = vmatprep.subr.mxu0 0.0
  %1700 = vmatpush1.msra.mxu0 0.0
  %1701 = vmatprep.subr.mxu0 0.0
  %1702 = vmatpush1.msra.mxu0 0.0
  %1703 = vmatprep.subr.mxu0 0.0
  %1704 = vmatpush1.msra.mxu0 0.0
  %1705 = vmatprep.subr.mxu0 0.0
  %1706 = vmatpush1.msra.mxu0 0.0
  %1707 = vmatprep.subr.mxu0 0.0
  %1708 = vmatpush1.msra.mxu0 0.0
  %1709 = vmatprep.subr.mxu0 0.0
  %1710 = vmatpush1.msra.mxu0 0.0
  %1711 = vmatprep.subr.mxu0 0.0
  %1712 = vmatpush1.msra.mxu0 0.0
  %1713 = vmatprep.subr.mxu0 0.0
  %1714 = vmatpush1.msra.mxu0 0.0
  %1715 = vmatprep.subr.mxu0 0.0
  %1716 = vmatpush1.msra.mxu0 0.0
  %1717 = vmatprep.subr.mxu0 0.0
  %1718 = vmatpush1.msra.mxu0 0.0
  %1719 = vmatprep.subr.mxu0 0.0
  %1720 = vmatpush1.msra.mxu0 0.0
  %1721 = vmatprep.subr.mxu0 0.0
  %1722 = vmatpush1.msra.mxu0 0.0
  %1723 = vmatprep.subr.mxu0 0.0
  %1724 = vmatpush1.msra.mxu0 0.0
  %1725 = vmatprep.subr.mxu0 0.0
  %1726 = vmatpush1.msra.mxu0 0.0
  %1727 = vmatprep.subr.mxu0 0.0
  %1728 = vmatpush1.msra.mxu0 0.0
  %1729 = vmatprep.subr.mxu0 0.0
  %1730 = vmatpush1.msra.mxu0 0.0
  %1731 = vmatprep.subr.mxu0 0.0
  %1732 = vmatpush1.msra.mxu0 0.0
  %1733 = vmatprep.subr.mxu0 0.0
  %1734 = vmatpush1.msra.mxu0 0.0
  %1735 = vmatprep.mubr.f32.mxu0 0.0
  %1736 = vmatmul.mubr.f32.gmra.mrb[0].mxu0 %v1589
  %v1737 = vpop.f32.mrb[0].mxu0
  %v1738 = vadd.f32 0.0, %v1737
  %v1739 = vpop.f32.mrb[0].mxu0
  %1740 = vdwg.mxu0
  %v1742 = vrot.slane %v1738, 4
  %v1744 = vadd.f32 %v209, %v1742
  %v1745 = vxor.u32 %v1744, 2147483648
  %v1746 = vmul.f32 %v1745, 1.442695
  %v1747 = vpow.pop %v1746
  %v1748 = vadd.f32 %v1747, 1.0
  %v1749 = vrcp.pop %v1748
  %v1750 = vmul.f32 1.0, %v1749
  %1751 = vmatprep.subr.mxu0 0.0
  %1752 = vmatpush1.msra.mxu0 %v579
  %1753 = vmatprep.subr.mxu0 0.0
  %1754 = vmatpush1.msra.mxu0 %v580
  %1755 = vmatprep.subr.mxu0 0.0
  %1756 = vmatpush1.msra.mxu0 %v581
  %1757 = vmatprep.subr.mxu0 0.0
  %1758 = vmatpush1.msra.mxu0 %v582
  %1759 = vmatprep.subr.mxu0 0.0
  %1760 = vmatpush1.msra.mxu0 0.0
  %1761 = vmatprep.subr.mxu0 0.0
  %1762 = vmatpush1.msra.mxu0 0.0
  %1763 = vmatprep.subr.mxu0 0.0
  %1764 = vmatpush1.msra.mxu0 0.0
  %1765 = vmatprep.subr.mxu0 0.0
  %1766 = vmatpush1.msra.mxu0 0.0
  %1767 = vmatprep.subr.mxu0 0.0
  %1768 = vmatpush1.msra.mxu0 0.0
  %1769 = vmatprep.subr.mxu0 0.0
  %1770 = vmatpush1.msra.mxu0 0.0
  %1771 = vmatprep.subr.mxu0 0.0
  %1772 = vmatpush1.msra.mxu0 0.0
  %1773 = vmatprep.subr.mxu0 0.0
  %1774 = vmatpush1.msra.mxu0 0.0
  %1775 = vmatprep.subr.mxu0 0.0
  %1776 = vmatpush1.msra.mxu0 0.0
  %1777 = vmatprep.subr.mxu0 0.0
  %1778 = vmatpush1.msra.mxu0 0.0
  %1779 = vmatprep.subr.mxu0 0.0
  %1780 = vmatpush1.msra.mxu0 0.0
  %1781 = vmatprep.subr.mxu0 0.0
  %1782 = vmatpush1.msra.mxu0 0.0
  %1783 = vmatprep.subr.mxu0 0.0
  %1784 = vmatpush1.msra.mxu0 0.0
  %1785 = vmatprep.subr.mxu0 0.0
  %1786 = vmatpush1.msra.mxu0 0.0
  %1787 = vmatprep.subr.mxu0 0.0
  %1788 = vmatpush1.msra.mxu0 0.0
  %1789 = vmatprep.subr.mxu0 0.0
  %1790 = vmatpush1.msra.mxu0 0.0
  %1791 = vmatprep.subr.mxu0 0.0
  %1792 = vmatpush1.msra.mxu0 0.0
  %1793 = vmatprep.subr.mxu0 0.0
  %1794 = vmatpush1.msra.mxu0 0.0
  %1795 = vmatprep.subr.mxu0 0.0
  %1796 = vmatpush1.msra.mxu0 0.0
  %1797 = vmatprep.subr.mxu0 0.0
  %1798 = vmatpush1.msra.mxu0 0.0
  %1799 = vmatprep.subr.mxu0 0.0
  %1800 = vmatpush1.msra.mxu0 0.0
  %1801 = vmatprep.subr.mxu0 0.0
  %1802 = vmatpush1.msra.mxu0 0.0
  %1803 = vmatprep.subr.mxu0 0.0
  %1804 = vmatpush1.msra.mxu0 0.0
  %1805 = vmatprep.subr.mxu0 0.0
  %1806 = vmatpush1.msra.mxu0 0.0
  %1807 = vmatprep.subr.mxu0 0.0
  %1808 = vmatpush1.msra.mxu0 0.0
  %1809 = vmatprep.subr.mxu0 0.0
  %1810 = vmatpush1.msra.mxu0 0.0
  %1811 = vmatprep.subr.mxu0 0.0
  %1812 = vmatpush1.msra.mxu0 0.0
  %1813 = vmatprep.subr.mxu0 0.0
  %1814 = vmatpush1.msra.mxu0 0.0
  %1815 = vmatprep.mubr.f32.mxu0 0.0
  %1816 = vmatmul.mubr.f32.gmra.mrb[0].mxu0 %v1589
  %v1817 = vpop.f32.mrb[0].mxu0
  %v1818 = vadd.f32 %v763, %v1817
  %v1819 = vpop.f32.mrb[0].mxu0
  %1820 = vdwg.mxu0
  %v1822 = vrot.slane %v1818, 4
  %v1824 = vmul.f32 %v1670, %v1822
  %v1825 = vadd.f32 %v297, %v1824
  %v1826 = vtanh.pop %v1825
  %v1827 = vsub.f32 1.0, %v1750
  %v1828 = vmul.f32 %v1827, %v1826
  %v1829 = vrot.slane %v1336, 6
  %v1831 = vmul.f32 %v1750, %v1829
  %v1832 = vadd.f32 %v1828, %v1831
  %v1834 = vrot.slane %v1582, 4
  %v1835 = vsel %vm47, %v1834, 0
  %1837 = vmatprep.subr.mxu0 0.0
  %1838 = vmatpush1.msra.mxu0 %v584
  %1839 = vmatprep.subr.mxu0 0.0
  %1840 = vmatpush1.msra.mxu0 %v585
  %1841 = vmatprep.subr.mxu0 0.0
  %1842 = vmatpush1.msra.mxu0 %v586
  %1843 = vmatprep.subr.mxu0 0.0
  %1844 = vmatpush1.msra.mxu0 %v587
  %1845 = vmatprep.subr.mxu0 0.0
  %1846 = vmatpush1.msra.mxu0 0.0
  %1847 = vmatprep.subr.mxu0 0.0
  %1848 = vmatpush1.msra.mxu0 0.0
  %1849 = vmatprep.subr.mxu0 0.0
  %1850 = vmatpush1.msra.mxu0 0.0
  %1851 = vmatprep.subr.mxu0 0.0
  %1852 = vmatpush1.msra.mxu0 0.0
  %1853 = vmatprep.subr.mxu0 0.0
  %1854 = vmatpush1.msra.mxu0 0.0
  %1855 = vmatprep.subr.mxu0 0.0
  %1856 = vmatpush1.msra.mxu0 0.0
  %1857 = vmatprep.subr.mxu0 0.0
  %1858 = vmatpush1.msra.mxu0 0.0
  %1859 = vmatprep.subr.mxu0 0.0
  %1860 = vmatpush1.msra.mxu0 0.0
  %1861 = vmatprep.subr.mxu0 0.0
  %1862 = vmatpush1.msra.mxu0 0.0
  %1863 = vmatprep.subr.mxu0 0.0
  %1864 = vmatpush1.msra.mxu0 0.0
  %1865 = vmatprep.subr.mxu0 0.0
  %1866 = vmatpush1.msra.mxu0 0.0
  %1867 = vmatprep.subr.mxu0 0.0
  %1868 = vmatpush1.msra.mxu0 0.0
  %1869 = vmatprep.subr.mxu0 0.0
  %1870 = vmatpush1.msra.mxu0 0.0
  %1871 = vmatprep.subr.mxu0 0.0
  %1872 = vmatpush1.msra.mxu0 0.0
  %1873 = vmatprep.subr.mxu0 0.0
  %1874 = vmatpush1.msra.mxu0 0.0
  %1875 = vmatprep.subr.mxu0 0.0
  %1876 = vmatpush1.msra.mxu0 0.0
  %1877 = vmatprep.subr.mxu0 0.0
  %1878 = vmatpush1.msra.mxu0 0.0
  %1879 = vmatprep.subr.mxu0 0.0
  %1880 = vmatpush1.msra.mxu0 0.0
  %1881 = vmatprep.subr.mxu0 0.0
  %1882 = vmatpush1.msra.mxu0 0.0
  %1883 = vmatprep.subr.mxu0 0.0
  %1884 = vmatpush1.msra.mxu0 0.0
  %1885 = vmatprep.subr.mxu0 0.0
  %1886 = vmatpush1.msra.mxu0 0.0
  %1887 = vmatprep.subr.mxu0 0.0
  %1888 = vmatpush1.msra.mxu0 0.0
  %1889 = vmatprep.subr.mxu0 0.0
  %1890 = vmatpush1.msra.mxu0 0.0
  %1891 = vmatprep.subr.mxu0 0.0
  %1892 = vmatpush1.msra.mxu0 0.0
  %1893 = vmatprep.subr.mxu0 0.0
  %1894 = vmatpush1.msra.mxu0 0.0
  %1895 = vmatprep.subr.mxu0 0.0
  %1896 = vmatpush1.msra.mxu0 0.0
  %1897 = vmatprep.subr.mxu0 0.0
  %1898 = vmatpush1.msra.mxu0 0.0
  %1899 = vmatprep.subr.mxu0 0.0
  %1900 = vmatpush1.msra.mxu0 0.0
  %1901 = vmatprep.mubr.f32.mxu0 0.0
  %1902 = vmatmul.mubr.f32.gmra.mrb[0].mxu0 %v1835
  %v1903 = vpop.f32.mrb[0].mxu0
  %v1904 = vadd.f32 0.0, %v1903
  %v1905 = vpop.f32.mrb[0].mxu0
  %1906 = vdwg.mxu0
  %v1908 = vrot.slane %v1904, 6
  %v1910 = vadd.f32 %v390, %v1908
  %v1911 = vxor.u32 %v1910, 2147483648
  %v1912 = vmul.f32 %v1911, 1.442695
  %v1913 = vpow.pop %v1912
  %v1914 = vadd.f32 %v1913, 1.0
  %v1915 = vrcp.pop %v1914
  %v1916 = vmul.f32 1.0, %v1915
  %1917 = vmatprep.subr.mxu0 0.0
  %1918 = vmatpush1.msra.mxu0 %v589
  %1919 = vmatprep.subr.mxu0 0.0
  %1920 = vmatpush1.msra.mxu0 %v590
  %1921 = vmatprep.subr.mxu0 0.0
  %1922 = vmatpush1.msra.mxu0 %v591
  %1923 = vmatprep.subr.mxu0 0.0
  %1924 = vmatpush1.msra.mxu0 %v592
  %1925 = vmatprep.subr.mxu0 0.0
  %1926 = vmatpush1.msra.mxu0 0.0
  %1927 = vmatprep.subr.mxu0 0.0
  %1928 = vmatpush1.msra.mxu0 0.0
  %1929 = vmatprep.subr.mxu0 0.0
  %1930 = vmatpush1.msra.mxu0 0.0
  %1931 = vmatprep.subr.mxu0 0.0
  %1932 = vmatpush1.msra.mxu0 0.0
  %1933 = vmatprep.subr.mxu0 0.0
  %1934 = vmatpush1.msra.mxu0 0.0
  %1935 = vmatprep.subr.mxu0 0.0
  %1936 = vmatpush1.msra.mxu0 0.0
  %1937 = vmatprep.subr.mxu0 0.0
  %1938 = vmatpush1.msra.mxu0 0.0
  %1939 = vmatprep.subr.mxu0 0.0
  %1940 = vmatpush1.msra.mxu0 0.0
  %1941 = vmatprep.subr.mxu0 0.0
  %1942 = vmatpush1.msra.mxu0 0.0
  %1943 = vmatprep.subr.mxu0 0.0
  %1944 = vmatpush1.msra.mxu0 0.0
  %1945 = vmatprep.subr.mxu0 0.0
  %1946 = vmatpush1.msra.mxu0 0.0
  %1947 = vmatprep.subr.mxu0 0.0
  %1948 = vmatpush1.msra.mxu0 0.0
  %1949 = vmatprep.subr.mxu0 0.0
  %1950 = vmatpush1.msra.mxu0 0.0
  %1951 = vmatprep.subr.mxu0 0.0
  %1952 = vmatpush1.msra.mxu0 0.0
  %1953 = vmatprep.subr.mxu0 0.0
  %1954 = vmatpush1.msra.mxu0 0.0
  %1955 = vmatprep.subr.mxu0 0.0
  %1956 = vmatpush1.msra.mxu0 0.0
  %1957 = vmatprep.subr.mxu0 0.0
  %1958 = vmatpush1.msra.mxu0 0.0
  %1959 = vmatprep.subr.mxu0 0.0
  %1960 = vmatpush1.msra.mxu0 0.0
  %1961 = vmatprep.subr.mxu0 0.0
  %1962 = vmatpush1.msra.mxu0 0.0
  %1963 = vmatprep.subr.mxu0 0.0
  %1964 = vmatpush1.msra.mxu0 0.0
  %1965 = vmatprep.subr.mxu0 0.0
  %1966 = vmatpush1.msra.mxu0 0.0
  %1967 = vmatprep.subr.mxu0 0.0
  %1968 = vmatpush1.msra.mxu0 0.0
  %1969 = vmatprep.subr.mxu0 0.0
  %1970 = vmatpush1.msra.mxu0 0.0
  %1971 = vmatprep.subr.mxu0 0.0
  %1972 = vmatpush1.msra.mxu0 0.0
  %1973 = vmatprep.subr.mxu0 0.0
  %1974 = vmatpush1.msra.mxu0 0.0
  %1975 = vmatprep.subr.mxu0 0.0
  %1976 = vmatpush1.msra.mxu0 0.0
  %1977 = vmatprep.subr.mxu0 0.0
  %1978 = vmatpush1.msra.mxu0 0.0
  %1979 = vmatprep.subr.mxu0 0.0
  %1980 = vmatpush1.msra.mxu0 0.0
  %1981 = vmatprep.mubr.f32.mxu0 0.0
  %1982 = vmatmul.mubr.f32.gmra.mrb[0].mxu0 %v1835
  %v1983 = vpop.f32.mrb[0].mxu0
  %v1984 = vadd.f32 0.0, %v1983
  %v1985 = vpop.f32.mrb[0].mxu0
  %1986 = vdwg.mxu0
  %v1988 = vrot.slane %v1984, 6
  %v1990 = vadd.f32 %v478, %v1988
  %v1991 = vxor.u32 %v1990, 2147483648
  %v1992 = vmul.f32 %v1991, 1.442695
  %v1993 = vpow.pop %v1992
  %v1994 = vadd.f32 %v1993, 1.0
  %v1995 = vrcp.pop %v1994
  %v1996 = vmul.f32 1.0, %v1995
  %1997 = vmatprep.subr.mxu0 0.0
  %1998 = vmatpush1.msra.mxu0 %v594
  %1999 = vmatprep.subr.mxu0 0.0
  %2000 = vmatpush1.msra.mxu0 %v595
  %2001 = vmatprep.subr.mxu0 0.0
  %2002 = vmatpush1.msra.mxu0 %v596
  %2003 = vmatprep.subr.mxu0 0.0
  %2004 = vmatpush1.msra.mxu0 %v597
  %2005 = vmatprep.subr.mxu0 0.0
  %2006 = vmatpush1.msra.mxu0 0.0
  %2007 = vmatprep.subr.mxu0 0.0
  %2008 = vmatpush1.msra.mxu0 0.0
  %2009 = vmatprep.subr.mxu0 0.0
  %2010 = vmatpush1.msra.mxu0 0.0
  %2011 = vmatprep.subr.mxu0 0.0
  %2012 = vmatpush1.msra.mxu0 0.0
  %2013 = vmatprep.subr.mxu0 0.0
  %2014 = vmatpush1.msra.mxu0 0.0
  %2015 = vmatprep.subr.mxu0 0.0
  %2016 = vmatpush1.msra.mxu0 0.0
  %2017 = vmatprep.subr.mxu0 0.0
  %2018 = vmatpush1.msra.mxu0 0.0
  %2019 = vmatprep.subr.mxu0 0.0
  %2020 = vmatpush1.msra.mxu0 0.0
  %2021 = vmatprep.subr.mxu0 0.0
  %2022 = vmatpush1.msra.mxu0 0.0
  %2023 = vmatprep.subr.mxu0 0.0
  %2024 = vmatpush1.msra.mxu0 0.0
  %2025 = vmatprep.subr.mxu0 0.0
  %2026 = vmatpush1.msra.mxu0 0.0
  %2027 = vmatprep.subr.mxu0 0.0
  %2028 = vmatpush1.msra.mxu0 0.0
  %2029 = vmatprep.subr.mxu0 0.0
  %2030 = vmatpush1.msra.mxu0 0.0
  %2031 = vmatprep.subr.mxu0 0.0
  %2032 = vmatpush1.msra.mxu0 0.0
  %2033 = vmatprep.subr.mxu0 0.0
  %2034 = vmatpush1.msra.mxu0 0.0
  %2035 = vmatprep.subr.mxu0 0.0
  %2036 = vmatpush1.msra.mxu0 0.0
  %2037 = vmatprep.subr.mxu0 0.0
  %2038 = vmatpush1.msra.mxu0 0.0
  %2039 = vmatprep.subr.mxu0 0.0
  %2040 = vmatpush1.msra.mxu0 0.0
  %2041 = vmatprep.subr.mxu0 0.0
  %2042 = vmatpush1.msra.mxu0 0.0
  %2043 = vmatprep.subr.mxu0 0.0
  %2044 = vmatpush1.msra.mxu0 0.0
  %2045 = vmatprep.subr.mxu0 0.0
  %2046 = vmatpush1.msra.mxu0 0.0
  %2047 = vmatprep.subr.mxu0 0.0
  %2048 = vmatpush1.msra.mxu0 0.0
  %2049 = vmatprep.subr.mxu0 0.0
  %2050 = vmatpush1.msra.mxu0 0.0
  %2051 = vmatprep.subr.mxu0 0.0
  %2052 = vmatpush1.msra.mxu0 0.0
  %2053 = vmatprep.subr.mxu0 0.0
  %2054 = vmatpush1.msra.mxu0 0.0
  %2055 = vmatprep.subr.mxu0 0.0
  %2056 = vmatpush1.msra.mxu0 0.0
  %2057 = vmatprep.subr.mxu0 0.0
  %2058 = vmatpush1.msra.mxu0 0.0
  %2059 = vmatprep.subr.mxu0 0.0
  %2060 = vmatpush1.msra.mxu0 0.0
  %2061 = vmatprep.mubr.f32.mxu0 0.0
  %2062 = vmatmul.mubr.f32.gmra.mrb[0].mxu0 %v1835
  %v2063 = vpop.f32.mrb[0].mxu0
  %v2064 = vadd.f32 %v1006, %v2063
  %v2065 = vpop.f32.mrb[0].mxu0
  %2066 = vdwg.mxu0
  %v2068 = vrot.slane %v2064, 6
  %v2070 = vmul.f32 %v1916, %v2068
  %v2071 = vadd.f32 %v566, %v2070
  %v2072 = vtanh.pop %v2071
  %v2073 = vsub.f32 1.0, %v1996
  %v2074 = vmul.f32 %v2073, %v2072
  %v2075 = vrot.slane %v1582, 2
  %v2077 = vmul.f32 %v1996, %v2075
  %v2078 = vadd.f32 %v2074, %v2077
  %2079 = vst.msk [vmem:[#allocation2] sm:$0x30] %vm1585, %v1832
  %2080 = vst.msk [vmem:[#allocation3 + $0x8] sm:$0xc] %vm1583, %v2078
  %v2082 = vrot.slane %v1832, 4
  %v2083 = vsel %vm47, %v2082, 0
  %2085 = vmatprep.subr.mxu0 0.0
  %2086 = vmatpush1.msra.mxu0 %v569
  %2087 = vmatprep.subr.mxu0 0.0
  %2088 = vmatpush1.msra.mxu0 %v570
  %2089 = vmatprep.subr.mxu0 0.0
  %2090 = vmatpush1.msra.mxu0 %v571
  %2091 = vmatprep.subr.mxu0 0.0
  %2092 = vmatpush1.msra.mxu0 %v572
  %2093 = vmatprep.subr.mxu0 0.0
  %2094 = vmatpush1.msra.mxu0 0.0
  %2095 = vmatprep.subr.mxu0 0.0
  %2096 = vmatpush1.msra.mxu0 0.0
  %2097 = vmatprep.subr.mxu0 0.0
  %2098 = vmatpush1.msra.mxu0 0.0
  %2099 = vmatprep.subr.mxu0 0.0
  %2100 = vmatpush1.msra.mxu0 0.0
  %2101 = vmatprep.subr.mxu0 0.0
  %2102 = vmatpush1.msra.mxu0 0.0
  %2103 = vmatprep.subr.mxu0 0.0
  %2104 = vmatpush1.msra.mxu0 0.0
  %2105 = vmatprep.subr.mxu0 0.0
  %2106 = vmatpush1.msra.mxu0 0.0
  %2107 = vmatprep.subr.mxu0 0.0
  %2108 = vmatpush1.msra.mxu0 0.0
  %2109 = vmatprep.subr.mxu0 0.0
  %2110 = vmatpush1.msra.mxu0 0.0
  %2111 = vmatprep.subr.mxu0 0.0
  %2112 = vmatpush1.msra.mxu0 0.0
  %2113 = vmatprep.subr.mxu0 0.0
  %2114 = vmatpush1.msra.mxu0 0.0
  %2115 = vmatprep.subr.mxu0 0.0
  %2116 = vmatpush1.msra.mxu0 0.0
  %2117 = vmatprep.subr.mxu0 0.0
  %2118 = vmatpush1.msra.mxu0 0.0
  %2119 = vmatprep.subr.mxu0 0.0
  %2120 = vmatpush1.msra.mxu0 0.0
  %2121 = vmatprep.subr.mxu0 0.0
  %2122 = vmatpush1.msra.mxu0 0.0
  %2123 = vmatprep.subr.mxu0 0.0
  %2124 = vmatpush1.msra.mxu0 0.0
  %2125 = vmatprep.subr.mxu0 0.0
  %2126 = vmatpush1.msra.mxu0 0.0
  %2127 = vmatprep.subr.mxu0 0.0
  %2128 = vmatpush1.msra.mxu0 0.0
  %2129 = vmatprep.subr.mxu0 0.0
  %2130 = vmatpush1.msra.mxu0 0.0
  %2131 = vmatprep.subr.mxu0 0.0
  %2132 = vmatpush1.msra.mxu0 0.0
  %2133 = vmatprep.subr.mxu0 0.0
  %2134 = vmatpush1.msra.mxu0 0.0
  %2135 = vmatprep.subr.mxu0 0.0
  %2136 = vmatpush1.msra.mxu0 0.0
  %2137 = vmatprep.subr.mxu0 0.0
  %2138 = vmatpush1.msra.mxu0 0.0
  %2139 = vmatprep.subr.mxu0 0.0
  %2140 = vmatpush1.msra.mxu0 0.0
  %2141 = vmatprep.subr.mxu0 0.0
  %2142 = vmatpush1.msra.mxu0 0.0
  %2143 = vmatprep.subr.mxu0 0.0
  %2144 = vmatpush1.msra.mxu0 0.0
  %2145 = vmatprep.subr.mxu0 0.0
  %2146 = vmatpush1.msra.mxu0 0.0
  %2147 = vmatprep.subr.mxu0 0.0
  %2148 = vmatpush1.msra.mxu0 0.0
  %2149 = vmatprep.mubr.f32.mxu0 0.0
  %2150 = vmatmul.mubr.f32.gmra.mrb[0].mxu0 %v2083
  %v2151 = vpop.f32.mrb[0].mxu0
  %v2152 = vadd.f32 0.0, %v2151
  %v2153 = vpop.f32.mrb[0].mxu0
  %2154 = vdwg.mxu0
  %v2156 = vrot.slane %v2152, 2
  %v2158 = vadd.f32 %v121, %v2156
  %v2159 = vxor.u32 %v2158, 2147483648
  %v2160 = vmul.f32 %v2159, 1.442695
  %v2161 = vpow.pop %v2160
  %v2162 = vadd.f32 %v2161, 1.0
  %v2163 = vrcp.pop %v2162
  %v2164 = vmul.f32 1.0, %v2163
  %2165 = vmatprep.subr.mxu0 0.0
  %2166 = vmatpush1.msra.mxu0 %v574
  %2167 = vmatprep.subr.mxu0 0.0
  %2168 = vmatpush1.msra.mxu0 %v575
  %2169 = vmatprep.subr.mxu0 0.0
  %2170 = vmatpush1.msra.mxu0 %v576
  %2171 = vmatprep.subr.mxu0 0.0
  %2172 = vmatpush1.msra.mxu0 %v577
  %2173 = vmatprep.subr.mxu0 0.0
  %2174 = vmatpush1.msra.mxu0 0.0
  %2175 = vmatprep.subr.mxu0 0.0
  %2176 = vmatpush1.msra.mxu0 0.0
  %2177 = vmatprep.subr.mxu0 0.0
  %2178 = vmatpush1.msra.mxu0 0.0
  %2179 = vmatprep.subr.mxu0 0.0
  %2180 = vmatpush1.msra.mxu0 0.0
  %2181 = vmatprep.subr.mxu0 0.0
  %2182 = vmatpush1.msra.mxu0 0.0
  %2183 = vmatprep.subr.mxu0 0.0
  %2184 = vmatpush1.msra.mxu0 0.0
  %2185 = vmatprep.subr.mxu0 0.0
  %2186 = vmatpush1.msra.mxu0 0.0
  %2187 = vmatprep.subr.mxu0 0.0
  %2188 = vmatpush1.msra.mxu0 0.0
  %2189 = vmatprep.subr.mxu0 0.0
  %2190 = vmatpush1.msra.mxu0 0.0
  %2191 = vmatprep.subr.mxu0 0.0
  %2192 = vmatpush1.msra.mxu0 0.0
  %2193 = vmatprep.subr.mxu0 0.0
  %2194 = vmatpush1.msra.mxu0 0.0
  %2195 = vmatprep.subr.mxu0 0.0
  %2196 = vmatpush1.msra.mxu0 0.0
  %2197 = vmatprep.subr.mxu0 0.0
  %2198 = vmatpush1.msra.mxu0 0.0
  %2199 = vmatprep.subr.mxu0 0.0
  %2200 = vmatpush1.msra.mxu0 0.0
  %2201 = vmatprep.subr.mxu0 0.0
  %2202 = vmatpush1.msra.mxu0 0.0
  %2203 = vmatprep.subr.mxu0 0.0
  %2204 = vmatpush1.msra.mxu0 0.0
  %2205 = vmatprep.subr.mxu0 0.0
  %2206 = vmatpush1.msra.mxu0 0.0
  %2207 = vmatprep.subr.mxu0 0.0
  %2208 = vmatpush1.msra.mxu0 0.0
  %2209 = vmatprep.subr.mxu0 0.0
  %2210 = vmatpush1.msra.mxu0 0.0
  %2211 = vmatprep.subr.mxu0 0.0
  %2212 = vmatpush1.msra.mxu0 0.0
  %2213 = vmatprep.subr.mxu0 0.0
  %2214 = vmatpush1.msra.mxu0 0.0
  %2215 = vmatprep.subr.mxu0 0.0
  %2216 = vmatpush1.msra.mxu0 0.0
  %2217 = vmatprep.subr.mxu0 0.0
  %2218 = vmatpush1.msra.mxu0 0.0
  %2219 = vmatprep.subr.mxu0 0.0
  %2220 = vmatpush1.msra.mxu0 0.0
  %2221 = vmatprep.subr.mxu0 0.0
  %2222 = vmatpush1.msra.mxu0 0.0
  %2223 = vmatprep.subr.mxu0 0.0
  %2224 = vmatpush1.msra.mxu0 0.0
  %2225 = vmatprep.subr.mxu0 0.0
  %2226 = vmatpush1.msra.mxu0 0.0
  %2227 = vmatprep.subr.mxu0 0.0
  %2228 = vmatpush1.msra.mxu0 0.0
  %2229 = vmatprep.mubr.f32.mxu0 0.0
  %2230 = vmatmul.mubr.f32.gmra.mrb[0].mxu0 %v2083
  %v2231 = vpop.f32.mrb[0].mxu0
  %v2232 = vadd.f32 0.0, %v2231
  %v2233 = vpop.f32.mrb[0].mxu0
  %2234 = vdwg.mxu0
  %v2236 = vrot.slane %v2232, 2
  %v2238 = vadd.f32 %v209, %v2236
  %v2239 = vxor.u32 %v2238, 2147483648
  %v2240 = vmul.f32 %v2239, 1.442695
  %v2241 = vpow.pop %v2240
  %v2242 = vadd.f32 %v2241, 1.0
  %v2243 = vrcp.pop %v2242
  %v2244 = vmul.f32 1.0, %v2243
  %2245 = vmatprep.subr.mxu0 0.0
  %2246 = vmatpush1.msra.mxu0 %v579
  %2247 = vmatprep.subr.mxu0 0.0
  %2248 = vmatpush1.msra.mxu0 %v580
  %2249 = vmatprep.subr.mxu0 0.0
  %2250 = vmatpush1.msra.mxu0 %v581
  %2251 = vmatprep.subr.mxu0 0.0
  %2252 = vmatpush1.msra.mxu0 %v582
  %2253 = vmatprep.subr.mxu0 0.0
  %2254 = vmatpush1.msra.mxu0 0.0
  %2255 = vmatprep.subr.mxu0 0.0
  %2256 = vmatpush1.msra.mxu0 0.0
  %2257 = vmatprep.subr.mxu0 0.0
  %2258 = vmatpush1.msra.mxu0 0.0
  %2259 = vmatprep.subr.mxu0 0.0
  %2260 = vmatpush1.msra.mxu0 0.0
  %2261 = vmatprep.subr.mxu0 0.0
  %2262 = vmatpush1.msra.mxu0 0.0
  %2263 = vmatprep.subr.mxu0 0.0
  %2264 = vmatpush1.msra.mxu0 0.0
  %2265 = vmatprep.subr.mxu0 0.0
  %2266 = vmatpush1.msra.mxu0 0.0
  %2267 = vmatprep.subr.mxu0 0.0
  %2268 = vmatpush1.msra.mxu0 0.0
  %2269 = vmatprep.subr.mxu0 0.0
  %2270 = vmatpush1.msra.mxu0 0.0
  %2271 = vmatprep.subr.mxu0 0.0
  %2272 = vmatpush1.msra.mxu0 0.0
  %2273 = vmatprep.subr.mxu0 0.0
  %2274 = vmatpush1.msra.mxu0 0.0
  %2275 = vmatprep.subr.mxu0 0.0
  %2276 = vmatpush1.msra.mxu0 0.0
  %2277 = vmatprep.subr.mxu0 0.0
  %2278 = vmatpush1.msra.mxu0 0.0
  %2279 = vmatprep.subr.mxu0 0.0
  %2280 = vmatpush1.msra.mxu0 0.0
  %2281 = vmatprep.subr.mxu0 0.0
  %2282 = vmatpush1.msra.mxu0 0.0
  %2283 = vmatprep.subr.mxu0 0.0
  %2284 = vmatpush1.msra.mxu0 0.0
  %2285 = vmatprep.subr.mxu0 0.0
  %2286 = vmatpush1.msra.mxu0 0.0
  %2287 = vmatprep.subr.mxu0 0.0
  %2288 = vmatpush1.msra.mxu0 0.0
  %2289 = vmatprep.subr.mxu0 0.0
  %2290 = vmatpush1.msra.mxu0 0.0
  %2291 = vmatprep.subr.mxu0 0.0
  %2292 = vmatpush1.msra.mxu0 0.0
  %2293 = vmatprep.subr.mxu0 0.0
  %2294 = vmatpush1.msra.mxu0 0.0
  %2295 = vmatprep.subr.mxu0 0.0
  %2296 = vmatpush1.msra.mxu0 0.0
  %2297 = vmatprep.subr.mxu0 0.0
  %2298 = vmatpush1.msra.mxu0 0.0
  %2299 = vmatprep.subr.mxu0 0.0
  %2300 = vmatpush1.msra.mxu0 0.0
  %2301 = vmatprep.subr.mxu0 0.0
  %2302 = vmatpush1.msra.mxu0 0.0
  %2303 = vmatprep.subr.mxu0 0.0
  %2304 = vmatpush1.msra.mxu0 0.0
  %2305 = vmatprep.subr.mxu0 0.0
  %2306 = vmatpush1.msra.mxu0 0.0
  %2307 = vmatprep.subr.mxu0 0.0
  %2308 = vmatpush1.msra.mxu0 0.0
  %2309 = vmatprep.mubr.f32.mxu0 0.0
  %2310 = vmatmul.mubr.f32.gmra.mrb[0].mxu0 %v2083
  %v2311 = vpop.f32.mrb[0].mxu0
  %v2312 = vadd.f32 %v763, %v2311
  %v2313 = vpop.f32.mrb[0].mxu0
  %2314 = vdwg.mxu0
  %v2316 = vrot.slane %v2312, 2
  %v2318 = vmul.f32 %v2164, %v2316
  %v2319 = vadd.f32 %v297, %v2318
  %v2320 = vtanh.pop %v2319
  %v2321 = vsub.f32 1.0, %v2244
  %v2322 = vmul.f32 %v2321, %v2320
  %v2323 = vrot.slane %v1832, 6
  %v2325 = vmul.f32 %v2244, %v2323
  %v2326 = vadd.f32 %v2322, %v2325
  %v2328 = vrot.slane %v2078, 2
  %v2329 = vsel %vm47, %v2328, 0
  %2331 = vmatprep.subr.mxu0 0.0
  %2332 = vmatpush1.msra.mxu0 %v584
  %2333 = vmatprep.subr.mxu0 0.0
  %2334 = vmatpush1.msra.mxu0 %v585
  %2335 = vmatprep.subr.mxu0 0.0
  %2336 = vmatpush1.msra.mxu0 %v586
  %2337 = vmatprep.subr.mxu0 0.0
  %2338 = vmatpush1.msra.mxu0 %v587
  %2339 = vmatprep.subr.mxu0 0.0
  %2340 = vmatpush1.msra.mxu0 0.0
  %2341 = vmatprep.subr.mxu0 0.0
  %2342 = vmatpush1.msra.mxu0 0.0
  %2343 = vmatprep.subr.mxu0 0.0
  %2344 = vmatpush1.msra.mxu0 0.0
  %2345 = vmatprep.subr.mxu0 0.0
  %2346 = vmatpush1.msra.mxu0 0.0
  %2347 = vmatprep.subr.mxu0 0.0
  %2348 = vmatpush1.msra.mxu0 0.0
  %2349 = vmatprep.subr.mxu0 0.0
  %2350 = vmatpush1.msra.mxu0 0.0
  %2351 = vmatprep.subr.mxu0 0.0
  %2352 = vmatpush1.msra.mxu0 0.0
  %2353 = vmatprep.subr.mxu0 0.0
  %2354 = vmatpush1.msra.mxu0 0.0
  %2355 = vmatprep.subr.mxu0 0.0
  %2356 = vmatpush1.msra.mxu0 0.0
  %2357 = vmatprep.subr.mxu0 0.0
  %2358 = vmatpush1.msra.mxu0 0.0
  %2359 = vmatprep.subr.mxu0 0.0
  %2360 = vmatpush1.msra.mxu0 0.0
  %2361 = vmatprep.subr.mxu0 0.0
  %2362 = vmatpush1.msra.mxu0 0.0
  %2363 = vmatprep.subr.mxu0 0.0
  %2364 = vmatpush1.msra.mxu0 0.0
  %2365 = vmatprep.subr.mxu0 0.0
  %2366 = vmatpush1.msra.mxu0 0.0
  %2367 = vmatprep.subr.mxu0 0.0
  %2368 = vmatpush1.msra.mxu0 0.0
  %2369 = vmatprep.subr.mxu0 0.0
  %2370 = vmatpush1.msra.mxu0 0.0
  %2371 = vmatprep.subr.mxu0 0.0
  %2372 = vmatpush1.msra.mxu0 0.0
  %2373 = vmatprep.subr.mxu0 0.0
  %2374 = vmatpush1.msra.mxu0 0.0
  %2375 = vmatprep.subr.mxu0 0.0
  %2376 = vmatpush1.msra.mxu0 0.0
  %2377 = vmatprep.subr.mxu0 0.0
  %2378 = vmatpush1.msra.mxu0 0.0
  %2379 = vmatprep.subr.mxu0 0.0
  %2380 = vmatpush1.msra.mxu0 0.0
  %2381 = vmatprep.subr.mxu0 0.0
  %2382 = vmatpush1.msra.mxu0 0.0
  %2383 = vmatprep.subr.mxu0 0.0
  %2384 = vmatpush1.msra.mxu0 0.0
  %2385 = vmatprep.subr.mxu0 0.0
  %2386 = vmatpush1.msra.mxu0 0.0
  %2387 = vmatprep.subr.mxu0 0.0
  %2388 = vmatpush1.msra.mxu0 0.0
  %2389 = vmatprep.subr.mxu0 0.0
  %2390 = vmatpush1.msra.mxu0 0.0
  %2391 = vmatprep.subr.mxu0 0.0
  %2392 = vmatpush1.msra.mxu0 0.0
  %2393 = vmatprep.subr.mxu0 0.0
  %2394 = vmatpush1.msra.mxu0 0.0
  %2395 = vmatprep.mubr.f32.mxu0 0.0
  %2396 = vmatmul.mubr.f32.gmra.mrb[0].mxu0 %v2329
  %v2397 = vpop.f32.mrb[0].mxu0
  %v2398 = vadd.f32 0.0, %v2397
  %v2399 = vpop.f32.mrb[0].mxu0
  %2400 = vdwg.mxu0
  %v2401 = vadd.f32 %v390, %v2398
  %v2402 = vxor.u32 %v2401, 2147483648
  %v2403 = vmul.f32 %v2402, 1.442695
  %v2404 = vpow.pop %v2403
  %v2405 = vadd.f32 %v2404, 1.0
  %v2406 = vrcp.pop %v2405
  %v2407 = vmul.f32 1.0, %v2406
  %2408 = vmatprep.subr.mxu0 0.0
  %2409 = vmatpush1.msra.mxu0 %v589
  %2410 = vmatprep.subr.mxu0 0.0
  %2411 = vmatpush1.msra.mxu0 %v590
  %2412 = vmatprep.subr.mxu0 0.0
  %2413 = vmatpush1.msra.mxu0 %v591
  %2414 = vmatprep.subr.mxu0 0.0
  %2415 = vmatpush1.msra.mxu0 %v592
  %2416 = vmatprep.subr.mxu0 0.0
  %2417 = vmatpush1.msra.mxu0 0.0
  %2418 = vmatprep.subr.mxu0 0.0
  %2419 = vmatpush1.msra.mxu0 0.0
  %2420 = vmatprep.subr.mxu0 0.0
  %2421 = vmatpush1.msra.mxu0 0.0
  %2422 = vmatprep.subr.mxu0 0.0
  %2423 = vmatpush1.msra.mxu0 0.0
  %2424 = vmatprep.subr.mxu0 0.0
  %2425 = vmatpush1.msra.mxu0 0.0
  %2426 = vmatprep.subr.mxu0 0.0
  %2427 = vmatpush1.msra.mxu0 0.0
  %2428 = vmatprep.subr.mxu0 0.0
  %2429 = vmatpush1.msra.mxu0 0.0
  %2430 = vmatprep.subr.mxu0 0.0
  %2431 = vmatpush1.msra.mxu0 0.0
  %2432 = vmatprep.subr.mxu0 0.0
  %2433 = vmatpush1.msra.mxu0 0.0
  %2434 = vmatprep.subr.mxu0 0.0
  %2435 = vmatpush1.msra.mxu0 0.0
  %2436 = vmatprep.subr.mxu0 0.0
  %2437 = vmatpush1.msra.mxu0 0.0
  %2438 = vmatprep.subr.mxu0 0.0
  %2439 = vmatpush1.msra.mxu0 0.0
  %2440 = vmatprep.subr.mxu0 0.0
  %2441 = vmatpush1.msra.mxu0 0.0
  %2442 = vmatprep.subr.mxu0 0.0
  %2443 = vmatpush1.msra.mxu0 0.0
  %2444 = vmatprep.subr.mxu0 0.0
  %2445 = vmatpush1.msra.mxu0 0.0
  %2446 = vmatprep.subr.mxu0 0.0
  %2447 = vmatpush1.msra.mxu0 0.0
  %2448 = vmatprep.subr.mxu0 0.0
  %2449 = vmatpush1.msra.mxu0 0.0
  %2450 = vmatprep.subr.mxu0 0.0
  %2451 = vmatpush1.msra.mxu0 0.0
  %2452 = vmatprep.subr.mxu0 0.0
  %2453 = vmatpush1.msra.mxu0 0.0
  %2454 = vmatprep.subr.mxu0 0.0
  %2455 = vmatpush1.msra.mxu0 0.0
  %2456 = vmatprep.subr.mxu0 0.0
  %2457 = vmatpush1.msra.mxu0 0.0
  %2458 = vmatprep.subr.mxu0 0.0
  %2459 = vmatpush1.msra.mxu0 0.0
  %2460 = vmatprep.subr.mxu0 0.0
  %2461 = vmatpush1.msra.mxu0 0.0
  %2462 = vmatprep.subr.mxu0 0.0
  %2463 = vmatpush1.msra.mxu0 0.0
  %2464 = vmatprep.subr.mxu0 0.0
  %2465 = vmatpush1.msra.mxu0 0.0
  %2466 = vmatprep.subr.mxu0 0.0
  %2467 = vmatpush1.msra.mxu0 0.0
  %2468 = vmatprep.subr.mxu0 0.0
  %2469 = vmatpush1.msra.mxu0 0.0
  %2470 = vmatprep.subr.mxu0 0.0
  %2471 = vmatpush1.msra.mxu0 0.0
  %2472 = vmatprep.mubr.f32.mxu0 0.0
  %2473 = vmatmul.mubr.f32.gmra.mrb[0].mxu0 %v2329
  %v2474 = vpop.f32.mrb[0].mxu0
  %v2475 = vadd.f32 0.0, %v2474
  %v2476 = vpop.f32.mrb[0].mxu0
  %2477 = vdwg.mxu0
  %v2478 = vadd.f32 %v478, %v2475
  %v2479 = vxor.u32 %v2478, 2147483648
  %v2480 = vmul.f32 %v2479, 1.442695
  %v2481 = vpow.pop %v2480
  %v2482 = vadd.f32 %v2481, 1.0
  %v2483 = vrcp.pop %v2482
  %v2484 = vmul.f32 1.0, %v2483
  %2485 = vmatprep.subr.mxu0 0.0
  %2486 = vmatpush1.msra.mxu0 %v594
  %2487 = vmatprep.subr.mxu0 0.0
  %2488 = vmatpush1.msra.mxu0 %v595
  %2489 = vmatprep.subr.mxu0 0.0
  %2490 = vmatpush1.msra.mxu0 %v596
  %2491 = vmatprep.subr.mxu0 0.0
  %2492 = vmatpush1.msra.mxu0 %v597
  %2493 = vmatprep.subr.mxu0 0.0
  %2494 = vmatpush1.msra.mxu0 0.0
  %2495 = vmatprep.subr.mxu0 0.0
  %2496 = vmatpush1.msra.mxu0 0.0
  %2497 = vmatprep.subr.mxu0 0.0
  %2498 = vmatpush1.msra.mxu0 0.0
  %2499 = vmatprep.subr.mxu0 0.0
  %2500 = vmatpush1.msra.mxu0 0.0
  %2501 = vmatprep.subr.mxu0 0.0
  %2502 = vmatpush1.msra.mxu0 0.0
  %2503 = vmatprep.subr.mxu0 0.0
  %2504 = vmatpush1.msra.mxu0 0.0
  %2505 = vmatprep.subr.mxu0 0.0
  %2506 = vmatpush1.msra.mxu0 0.0
  %2507 = vmatprep.subr.mxu0 0.0
  %2508 = vmatpush1.msra.mxu0 0.0
  %2509 = vmatprep.subr.mxu0 0.0
  %2510 = vmatpush1.msra.mxu0 0.0
  %2511 = vmatprep.subr.mxu0 0.0
  %2512 = vmatpush1.msra.mxu0 0.0
  %2513 = vmatprep.subr.mxu0 0.0
  %2514 = vmatpush1.msra.mxu0 0.0
  %2515 = vmatprep.subr.mxu0 0.0
  %2516 = vmatpush1.msra.mxu0 0.0
  %2517 = vmatprep.subr.mxu0 0.0
  %2518 = vmatpush1.msra.mxu0 0.0
  %2519 = vmatprep.subr.mxu0 0.0
  %2520 = vmatpush1.msra.mxu0 0.0
  %2521 = vmatprep.subr.mxu0 0.0
  %2522 = vmatpush1.msra.mxu0 0.0
  %2523 = vmatprep.subr.mxu0 0.0
  %2524 = vmatpush1.msra.mxu0 0.0
  %2525 = vmatprep.subr.mxu0 0.0
  %2526 = vmatpush1.msra.mxu0 0.0
  %2527 = vmatprep.subr.mxu0 0.0
  %2528 = vmatpush1.msra.mxu0 0.0
  %2529 = vmatprep.subr.mxu0 0.0
  %2530 = vmatpush1.msra.mxu0 0.0
  %2531 = vmatprep.subr.mxu0 0.0
  %2532 = vmatpush1.msra.mxu0 0.0
  %2533 = vmatprep.subr.mxu0 0.0
  %2534 = vmatpush1.msra.mxu0 0.0
  %2535 = vmatprep.subr.mxu0 0.0
  %2536 = vmatpush1.msra.mxu0 0.0
  %2537 = vmatprep.subr.mxu0 0.0
  %2538 = vmatpush1.msra.mxu0 0.0
  %2539 = vmatprep.subr.mxu0 0.0
  %2540 = vmatpush1.msra.mxu0 0.0
  %2541 = vmatprep.subr.mxu0 0.0
  %2542 = vmatpush1.msra.mxu0 0.0
  %2543 = vmatprep.subr.mxu0 0.0
  %2544 = vmatpush1.msra.mxu0 0.0
  %2545 = vmatprep.subr.mxu0 0.0
  %2546 = vmatpush1.msra.mxu0 0.0
  %2547 = vmatprep.subr.mxu0 0.0
  %2548 = vmatpush1.msra.mxu0 0.0
  %2549 = vmatprep.mubr.f32.mxu0 0.0
  %2550 = vmatmul.mubr.f32.gmra.mrb[0].mxu0 %v2329
  %v2551 = vpop.f32.mrb[0].mxu0
  %v2552 = vadd.f32 %v1006, %v2551
  %v2553 = vpop.f32.mrb[0].mxu0
  %2554 = vdwg.mxu0
  %v2555 = vmul.f32 %v2407, %v2552
  %v2556 = vadd.f32 %v566, %v2555
  %v2557 = vtanh.pop %v2556
  %v2558 = vsub.f32 1.0, %v2484
  %v2559 = vmul.f32 %v2558, %v2557
  %v2561 = vmul.f32 %v2484, %v2328
  %v2562 = vadd.f32 %v2559, %v2561
  %2563 = vst.msk [vmem:[#allocation2] sm:$0xc0] %vm1090, %v2326
  %2564 = vst.msk [vmem:[#allocation3 + $0x8] sm:$0x3] %vm1088, %v2562
  %v2566 = vrot.slane %v2326, 6
  %v2567 = vsel %vm47, %v2566, 0
  %2569 = vmatprep.subr.mxu0 0.0
  %2570 = vmatpush1.msra.mxu0 %v569
  %2571 = vmatprep.subr.mxu0 0.0
  %2572 = vmatpush1.msra.mxu0 %v570
  %2573 = vmatprep.subr.mxu0 0.0
  %2574 = vmatpush1.msra.mxu0 %v571
  %2575 = vmatprep.subr.mxu0 0.0
  %2576 = vmatpush1.msra.mxu0 %v572
  %2577 = vmatprep.subr.mxu0 0.0
  %2578 = vmatpush1.msra.mxu0 0.0
  %2579 = vmatprep.subr.mxu0 0.0
  %2580 = vmatpush1.msra.mxu0 0.0
  %2581 = vmatprep.subr.mxu0 0.0
  %2582 = vmatpush1.msra.mxu0 0.0
  %2583 = vmatprep.subr.mxu0 0.0
  %2584 = vmatpush1.msra.mxu0 0.0
  %2585 = vmatprep.subr.mxu0 0.0
  %2586 = vmatpush1.msra.mxu0 0.0
  %2587 = vmatprep.subr.mxu0 0.0
  %2588 = vmatpush1.msra.mxu0 0.0
  %2589 = vmatprep.subr.mxu0 0.0
  %2590 = vmatpush1.msra.mxu0 0.0
  %2591 = vmatprep.subr.mxu0 0.0
  %2592 = vmatpush1.msra.mxu0 0.0
  %2593 = vmatprep.subr.mxu0 0.0
  %2594 = vmatpush1.msra.mxu0 0.0
  %2595 = vmatprep.subr.mxu0 0.0
  %2596 = vmatpush1.msra.mxu0 0.0
  %2597 = vmatprep.subr.mxu0 0.0
  %2598 = vmatpush1.msra.mxu0 0.0
  %2599 = vmatprep.subr.mxu0 0.0
  %2600 = vmatpush1.msra.mxu0 0.0
  %2601 = vmatprep.subr.mxu0 0.0
  %2602 = vmatpush1.msra.mxu0 0.0
  %2603 = vmatprep.subr.mxu0 0.0
  %2604 = vmatpush1.msra.mxu0 0.0
  %2605 = vmatprep.subr.mxu0 0.0
  %2606 = vmatpush1.msra.mxu0 0.0
  %2607 = vmatprep.subr.mxu0 0.0
  %2608 = vmatpush1.msra.mxu0 0.0
  %2609 = vmatprep.subr.mxu0 0.0
  %2610 = vmatpush1.msra.mxu0 0.0
  %2611 = vmatprep.subr.mxu0 0.0
  %2612 = vmatpush1.msra.mxu0 0.0
  %2613 = vmatprep.subr.mxu0 0.0
  %2614 = vmatpush1.msra.mxu0 0.0
  %2615 = vmatprep.subr.mxu0 0.0
  %2616 = vmatpush1.msra.mxu0 0.0
  %2617 = vmatprep.subr.mxu0 0.0
  %2618 = vmatpush1.msra.mxu0 0.0
  %2619 = vmatprep.subr.mxu0 0.0
  %2620 = vmatpush1.msra.mxu0 0.0
  %2621 = vmatprep.subr.mxu0 0.0
  %2622 = vmatpush1.msra.mxu0 0.0
  %2623 = vmatprep.subr.mxu0 0.0
  %2624 = vmatpush1.msra.mxu0 0.0
  %2625 = vmatprep.subr.mxu0 0.0
  %2626 = vmatpush1.msra.mxu0 0.0
  %2627 = vmatprep.subr.mxu0 0.0
  %2628 = vmatpush1.msra.mxu0 0.0
  %2629 = vmatprep.subr.mxu0 0.0
  %2630 = vmatpush1.msra.mxu0 0.0
  %2631 = vmatprep.subr.mxu0 0.0
  %2632 = vmatpush1.msra.mxu0 0.0
  %2633 = vmatprep.mubr.f32.mxu0 0.0
  %2634 = vmatmul.mubr.f32.gmra.mrb[0].mxu0 %v2567
  %v2635 = vpop.f32.mrb[0].mxu0
  %v2636 = vadd.f32 0.0, %v2635
  %v2637 = vpop.f32.mrb[0].mxu0
  %2638 = vdwg.mxu0
  %v2639 = vadd.f32 %v126, %v2636
  %v2640 = vxor.u32 %v2639, 2147483648
  %v2641 = vmul.f32 %v2640, 1.442695
  %v2642 = vpow.pop %v2641
  %v2643 = vadd.f32 %v2642, 1.0
  %v2644 = vrcp.pop %v2643
  %v2645 = vmul.f32 1.0, %v2644
  %2646 = vmatprep.subr.mxu0 0.0
  %2647 = vmatpush1.msra.mxu0 %v574
  %2648 = vmatprep.subr.mxu0 0.0
  %2649 = vmatpush1.msra.mxu0 %v575
  %2650 = vmatprep.subr.mxu0 0.0
  %2651 = vmatpush1.msra.mxu0 %v576
  %2652 = vmatprep.subr.mxu0 0.0
  %2653 = vmatpush1.msra.mxu0 %v577
  %2654 = vmatprep.subr.mxu0 0.0
  %2655 = vmatpush1.msra.mxu0 0.0
  %2656 = vmatprep.subr.mxu0 0.0
  %2657 = vmatpush1.msra.mxu0 0.0
  %2658 = vmatprep.subr.mxu0 0.0
  %2659 = vmatpush1.msra.mxu0 0.0
  %2660 = vmatprep.subr.mxu0 0.0
  %2661 = vmatpush1.msra.mxu0 0.0
  %2662 = vmatprep.subr.mxu0 0.0
  %2663 = vmatpush1.msra.mxu0 0.0
  %2664 = vmatprep.subr.mxu0 0.0
  %2665 = vmatpush1.msra.mxu0 0.0
  %2666 = vmatprep.subr.mxu0 0.0
  %2667 = vmatpush1.msra.mxu0 0.0
  %2668 = vmatprep.subr.mxu0 0.0
  %2669 = vmatpush1.msra.mxu0 0.0
  %2670 = vmatprep.subr.mxu0 0.0
  %2671 = vmatpush1.msra.mxu0 0.0
  %2672 = vmatprep.subr.mxu0 0.0
  %2673 = vmatpush1.msra.mxu0 0.0
  %2674 = vmatprep.subr.mxu0 0.0
  %2675 = vmatpush1.msra.mxu0 0.0
  %2676 = vmatprep.subr.mxu0 0.0
  %2677 = vmatpush1.msra.mxu0 0.0
  %2678 = vmatprep.subr.mxu0 0.0
  %2679 = vmatpush1.msra.mxu0 0.0
  %2680 = vmatprep.subr.mxu0 0.0
  %2681 = vmatpush1.msra.mxu0 0.0
  %2682 = vmatprep.subr.mxu0 0.0
  %2683 = vmatpush1.msra.mxu0 0.0
  %2684 = vmatprep.subr.mxu0 0.0
  %2685 = vmatpush1.msra.mxu0 0.0
  %2686 = vmatprep.subr.mxu0 0.0
  %2687 = vmatpush1.msra.mxu0 0.0
  %2688 = vmatprep.subr.mxu0 0.0
  %2689 = vmatpush1.msra.mxu0 0.0
  %2690 = vmatprep.subr.mxu0 0.0
  %2691 = vmatpush1.msra.mxu0 0.0
  %2692 = vmatprep.subr.mxu0 0.0
  %2693 = vmatpush1.msra.mxu0 0.0
  %2694 = vmatprep.subr.mxu0 0.0
  %2695 = vmatpush1.msra.mxu0 0.0
  %2696 = vmatprep.subr.mxu0 0.0
  %2697 = vmatpush1.msra.mxu0 0.0
  %2698 = vmatprep.subr.mxu0 0.0
  %2699 = vmatpush1.msra.mxu0 0.0
  %2700 = vmatprep.subr.mxu0 0.0
  %2701 = vmatpush1.msra.mxu0 0.0
  %2702 = vmatprep.subr.mxu0 0.0
  %2703 = vmatpush1.msra.mxu0 0.0
  %2704 = vmatprep.subr.mxu0 0.0
  %2705 = vmatpush1.msra.mxu0 0.0
  %2706 = vmatprep.subr.mxu0 0.0
  %2707 = vmatpush1.msra.mxu0 0.0
  %2708 = vmatprep.subr.mxu0 0.0
  %2709 = vmatpush1.msra.mxu0 0.0
  %2710 = vmatprep.mubr.f32.mxu0 0.0
  %2711 = vmatmul.mubr.f32.gmra.mrb[0].mxu0 %v2567
  %v2712 = vpop.f32.mrb[0].mxu0
  %v2713 = vadd.f32 0.0, %v2712
  %v2714 = vpop.f32.mrb[0].mxu0
  %2715 = vdwg.mxu0
  %v2716 = vadd.f32 %v214, %v2713
  %v2717 = vxor.u32 %v2716, 2147483648
  %v2718 = vmul.f32 %v2717, 1.442695
  %v2719 = vpow.pop %v2718
  %v2720 = vadd.f32 %v2719, 1.0
  %v2721 = vrcp.pop %v2720
  %v2722 = vmul.f32 1.0, %v2721
  %2723 = vmatprep.subr.mxu0 0.0
  %2724 = vmatpush1.msra.mxu0 %v579
  %2725 = vmatprep.subr.mxu0 0.0
  %2726 = vmatpush1.msra.mxu0 %v580
  %2727 = vmatprep.subr.mxu0 0.0
  %2728 = vmatpush1.msra.mxu0 %v581
  %2729 = vmatprep.subr.mxu0 0.0
  %2730 = vmatpush1.msra.mxu0 %v582
  %2731 = vmatprep.subr.mxu0 0.0
  %2732 = vmatpush1.msra.mxu0 0.0
  %2733 = vmatprep.subr.mxu0 0.0
  %2734 = vmatpush1.msra.mxu0 0.0
  %2735 = vmatprep.subr.mxu0 0.0
  %2736 = vmatpush1.msra.mxu0 0.0
  %2737 = vmatprep.subr.mxu0 0.0
  %2738 = vmatpush1.msra.mxu0 0.0
  %2739 = vmatprep.subr.mxu0 0.0
  %2740 = vmatpush1.msra.mxu0 0.0
  %2741 = vmatprep.subr.mxu0 0.0
  %2742 = vmatpush1.msra.mxu0 0.0
  %2743 = vmatprep.subr.mxu0 0.0
  %2744 = vmatpush1.msra.mxu0 0.0
  %2745 = vmatprep.subr.mxu0 0.0
  %2746 = vmatpush1.msra.mxu0 0.0
  %2747 = vmatprep.subr.mxu0 0.0
  %2748 = vmatpush1.msra.mxu0 0.0
  %2749 = vmatprep.subr.mxu0 0.0
  %2750 = vmatpush1.msra.mxu0 0.0
  %2751 = vmatprep.subr.mxu0 0.0
  %2752 = vmatpush1.msra.mxu0 0.0
  %2753 = vmatprep.subr.mxu0 0.0
  %2754 = vmatpush1.msra.mxu0 0.0
  %2755 = vmatprep.subr.mxu0 0.0
  %2756 = vmatpush1.msra.mxu0 0.0
  %2757 = vmatprep.subr.mxu0 0.0
  %2758 = vmatpush1.msra.mxu0 0.0
  %2759 = vmatprep.subr.mxu0 0.0
  %2760 = vmatpush1.msra.mxu0 0.0
  %2761 = vmatprep.subr.mxu0 0.0
  %2762 = vmatpush1.msra.mxu0 0.0
  %2763 = vmatprep.subr.mxu0 0.0
  %2764 = vmatpush1.msra.mxu0 0.0
  %2765 = vmatprep.subr.mxu0 0.0
  %2766 = vmatpush1.msra.mxu0 0.0
  %2767 = vmatprep.subr.mxu0 0.0
  %2768 = vmatpush1.msra.mxu0 0.0
  %2769 = vmatprep.subr.mxu0 0.0
  %2770 = vmatpush1.msra.mxu0 0.0
  %2771 = vmatprep.subr.mxu0 0.0
  %2772 = vmatpush1.msra.mxu0 0.0
  %2773 = vmatprep.subr.mxu0 0.0
  %2774 = vmatpush1.msra.mxu0 0.0
  %2775 = vmatprep.subr.mxu0 0.0
  %2776 = vmatpush1.msra.mxu0 0.0
  %2777 = vmatprep.subr.mxu0 0.0
  %2778 = vmatpush1.msra.mxu0 0.0
  %2779 = vmatprep.subr.mxu0 0.0
  %2780 = vmatpush1.msra.mxu0 0.0
  %2781 = vmatprep.subr.mxu0 0.0
  %2782 = vmatpush1.msra.mxu0 0.0
  %2783 = vmatprep.subr.mxu0 0.0
  %2784 = vmatpush1.msra.mxu0 0.0
  %2785 = vmatprep.subr.mxu0 0.0
  %2786 = vmatpush1.msra.mxu0 0.0
  %2787 = vmatprep.mubr.f32.mxu0 0.0
  %2788 = vmatmul.mubr.f32.gmra.mrb[0].mxu0 %v2567
  %v2789 = vpop.f32.mrb[0].mxu0
  %v2790 = vadd.f32 %v763, %v2789
  %v2791 = vpop.f32.mrb[0].mxu0
  %2792 = vdwg.mxu0
  %v2793 = vmul.f32 %v2645, %v2790
  %v2794 = vadd.f32 %v302, %v2793
  %v2795 = vtanh.pop %v2794
  %v2796 = vsub.f32 1.0, %v2722
  %v2797 = vmul.f32 %v2796, %v2795
  %v2799 = vmul.f32 %v2722, %v2566
  %v2800 = vadd.f32 %v2797, %v2799
  %v2802 = vsel %vm47, %v2562, 0
  %2804 = vmatprep.subr.mxu0 0.0
  %2805 = vmatpush1.msra.mxu0 %v584
  %2806 = vmatprep.subr.mxu0 0.0
  %2807 = vmatpush1.msra.mxu0 %v585
  %2808 = vmatprep.subr.mxu0 0.0
  %2809 = vmatpush1.msra.mxu0 %v586
  %2810 = vmatprep.subr.mxu0 0.0
  %2811 = vmatpush1.msra.mxu0 %v587
  %2812 = vmatprep.subr.mxu0 0.0
  %2813 = vmatpush1.msra.mxu0 0.0
  %2814 = vmatprep.subr.mxu0 0.0
  %2815 = vmatpush1.msra.mxu0 0.0
  %2816 = vmatprep.subr.mxu0 0.0
  %2817 = vmatpush1.msra.mxu0 0.0
  %2818 = vmatprep.subr.mxu0 0.0
  %2819 = vmatpush1.msra.mxu0 0.0
  %2820 = vmatprep.subr.mxu0 0.0
  %2821 = vmatpush1.msra.mxu0 0.0
  %2822 = vmatprep.subr.mxu0 0.0
  %2823 = vmatpush1.msra.mxu0 0.0
  %2824 = vmatprep.subr.mxu0 0.0
  %2825 = vmatpush1.msra.mxu0 0.0
  %2826 = vmatprep.subr.mxu0 0.0
  %2827 = vmatpush1.msra.mxu0 0.0
  %2828 = vmatprep.subr.mxu0 0.0
  %2829 = vmatpush1.msra.mxu0 0.0
  %2830 = vmatprep.subr.mxu0 0.0
  %2831 = vmatpush1.msra.mxu0 0.0
  %2832 = vmatprep.subr.mxu0 0.0
  %2833 = vmatpush1.msra.mxu0 0.0
  %2834 = vmatprep.subr.mxu0 0.0
  %2835 = vmatpush1.msra.mxu0 0.0
  %2836 = vmatprep.subr.mxu0 0.0
  %2837 = vmatpush1.msra.mxu0 0.0
  %2838 = vmatprep.subr.mxu0 0.0
  %2839 = vmatpush1.msra.mxu0 0.0
  %2840 = vmatprep.subr.mxu0 0.0
  %2841 = vmatpush1.msra.mxu0 0.0
  %2842 = vmatprep.subr.mxu0 0.0
  %2843 = vmatpush1.msra.mxu0 0.0
  %2844 = vmatprep.subr.mxu0 0.0
  %2845 = vmatpush1.msra.mxu0 0.0
  %2846 = vmatprep.subr.mxu0 0.0
  %2847 = vmatpush1.msra.mxu0 0.0
  %2848 = vmatprep.subr.mxu0 0.0
  %2849 = vmatpush1.msra.mxu0 0.0
  %2850 = vmatprep.subr.mxu0 0.0
  %2851 = vmatpush1.msra.mxu0 0.0
  %2852 = vmatprep.subr.mxu0 0.0
  %2853 = vmatpush1.msra.mxu0 0.0
  %2854 = vmatprep.subr.mxu0 0.0
  %2855 = vmatpush1.msra.mxu0 0.0
  %2856 = vmatprep.subr.mxu0 0.0
  %2857 = vmatpush1.msra.mxu0 0.0
  %2858 = vmatprep.subr.mxu0 0.0
  %2859 = vmatpush1.msra.mxu0 0.0
  %2860 = vmatprep.subr.mxu0 0.0
  %2861 = vmatpush1.msra.mxu0 0.0
  %2862 = vmatprep.subr.mxu0 0.0
  %2863 = vmatpush1.msra.mxu0 0.0
  %2864 = vmatprep.subr.mxu0 0.0
  %2865 = vmatpush1.msra.mxu0 0.0
  %2866 = vmatprep.subr.mxu0 0.0
  %2867 = vmatpush1.msra.mxu0 0.0
  %2868 = vmatprep.mubr.f32.mxu0 0.0
  %2869 = vmatmul.mubr.f32.gmra.mrb[0].mxu0 %v2802
  %v2870 = vpop.f32.mrb[0].mxu0
  %v2871 = vadd.f32 0.0, %v2870
  %v2872 = vpop.f32.mrb[0].mxu0
  %2873 = vdwg.mxu0
  %v2875 = vrot.slane %v2871, 2
  %v2877 = vadd.f32 %v385, %v2875
  %v2878 = vxor.u32 %v2877, 2147483648
  %v2879 = vmul.f32 %v2878, 1.442695
  %v2880 = vpow.pop %v2879
  %v2881 = vadd.f32 %v2880, 1.0
  %v2882 = vrcp.pop %v2881
  %v2883 = vmul.f32 1.0, %v2882
  %2884 = vmatprep.subr.mxu0 0.0
  %2885 = vmatpush1.msra.mxu0 %v589
  %2886 = vmatprep.subr.mxu0 0.0
  %2887 = vmatpush1.msra.mxu0 %v590
  %2888 = vmatprep.subr.mxu0 0.0
  %2889 = vmatpush1.msra.mxu0 %v591
  %2890 = vmatprep.subr.mxu0 0.0
  %2891 = vmatpush1.msra.mxu0 %v592
  %2892 = vmatprep.subr.mxu0 0.0
  %2893 = vmatpush1.msra.mxu0 0.0
  %2894 = vmatprep.subr.mxu0 0.0
  %2895 = vmatpush1.msra.mxu0 0.0
  %2896 = vmatprep.subr.mxu0 0.0
  %2897 = vmatpush1.msra.mxu0 0.0
  %2898 = vmatprep.subr.mxu0 0.0
  %2899 = vmatpush1.msra.mxu0 0.0
  %2900 = vmatprep.subr.mxu0 0.0
  %2901 = vmatpush1.msra.mxu0 0.0
  %2902 = vmatprep.subr.mxu0 0.0
  %2903 = vmatpush1.msra.mxu0 0.0
  %2904 = vmatprep.subr.mxu0 0.0
  %2905 = vmatpush1.msra.mxu0 0.0
  %2906 = vmatprep.subr.mxu0 0.0
  %2907 = vmatpush1.msra.mxu0 0.0
  %2908 = vmatprep.subr.mxu0 0.0
  %2909 = vmatpush1.msra.mxu0 0.0
  %2910 = vmatprep.subr.mxu0 0.0
  %2911 = vmatpush1.msra.mxu0 0.0
  %2912 = vmatprep.subr.mxu0 0.0
  %2913 = vmatpush1.msra.mxu0 0.0
  %2914 = vmatprep.subr.mxu0 0.0
  %2915 = vmatpush1.msra.mxu0 0.0
  %2916 = vmatprep.subr.mxu0 0.0
  %2917 = vmatpush1.msra.mxu0 0.0
  %2918 = vmatprep.subr.mxu0 0.0
  %2919 = vmatpush1.msra.mxu0 0.0
  %2920 = vmatprep.subr.mxu0 0.0
  %2921 = vmatpush1.msra.mxu0 0.0
  %2922 = vmatprep.subr.mxu0 0.0
  %2923 = vmatpush1.msra.mxu0 0.0
  %2924 = vmatprep.subr.mxu0 0.0
  %2925 = vmatpush1.msra.mxu0 0.0
  %2926 = vmatprep.subr.mxu0 0.0
  %2927 = vmatpush1.msra.mxu0 0.0
  %2928 = vmatprep.subr.mxu0 0.0
  %2929 = vmatpush1.msra.mxu0 0.0
  %2930 = vmatprep.subr.mxu0 0.0
  %2931 = vmatpush1.msra.mxu0 0.0
  %2932 = vmatprep.subr.mxu0 0.0
  %2933 = vmatpush1.msra.mxu0 0.0
  %2934 = vmatprep.subr.mxu0 0.0
  %2935 = vmatpush1.msra.mxu0 0.0
  %2936 = vmatprep.subr.mxu0 0.0
  %2937 = vmatpush1.msra.mxu0 0.0
  %2938 = vmatprep.subr.mxu0 0.0
  %2939 = vmatpush1.msra.mxu0 0.0
  %2940 = vmatprep.subr.mxu0 0.0
  %2941 = vmatpush1.msra.mxu0 0.0
  %2942 = vmatprep.subr.mxu0 0.0
  %2943 = vmatpush1.msra.mxu0 0.0
  %2944 = vmatprep.subr.mxu0 0.0
  %2945 = vmatpush1.msra.mxu0 0.0
  %2946 = vmatprep.subr.mxu0 0.0
  %2947 = vmatpush1.msra.mxu0 0.0
  %2948 = vmatprep.mubr.f32.mxu0 0.0
  %2949 = vmatmul.mubr.f32.gmra.mrb[0].mxu0 %v2802
  %v2950 = vpop.f32.mrb[0].mxu0
  %v2951 = vadd.f32 0.0, %v2950
  %v2952 = vpop.f32.mrb[0].mxu0
  %2953 = vdwg.mxu0
  %v2955 = vrot.slane %v2951, 2
  %v2957 = vadd.f32 %v473, %v2955
  %v2958 = vxor.u32 %v2957, 2147483648
  %v2959 = vmul.f32 %v2958, 1.442695
  %v2960 = vpow.pop %v2959
  %v2961 = vadd.f32 %v2960, 1.0
  %v2962 = vrcp.pop %v2961
  %v2963 = vmul.f32 1.0, %v2962
  %2964 = vmatprep.subr.mxu0 0.0
  %2965 = vmatpush1.msra.mxu0 %v594
  %2966 = vmatprep.subr.mxu0 0.0
  %2967 = vmatpush1.msra.mxu0 %v595
  %2968 = vmatprep.subr.mxu0 0.0
  %2969 = vmatpush1.msra.mxu0 %v596
  %2970 = vmatprep.subr.mxu0 0.0
  %2971 = vmatpush1.msra.mxu0 %v597
  %2972 = vmatprep.subr.mxu0 0.0
  %2973 = vmatpush1.msra.mxu0 0.0
  %2974 = vmatprep.subr.mxu0 0.0
  %2975 = vmatpush1.msra.mxu0 0.0
  %2976 = vmatprep.subr.mxu0 0.0
  %2977 = vmatpush1.msra.mxu0 0.0
  %2978 = vmatprep.subr.mxu0 0.0
  %2979 = vmatpush1.msra.mxu0 0.0
  %2980 = vmatprep.subr.mxu0 0.0
  %2981 = vmatpush1.msra.mxu0 0.0
  %2982 = vmatprep.subr.mxu0 0.0
  %2983 = vmatpush1.msra.mxu0 0.0
  %2984 = vmatprep.subr.mxu0 0.0
  %2985 = vmatpush1.msra.mxu0 0.0
  %2986 = vmatprep.subr.mxu0 0.0
  %2987 = vmatpush1.msra.mxu0 0.0
  %2988 = vmatprep.subr.mxu0 0.0
  %2989 = vmatpush1.msra.mxu0 0.0
  %2990 = vmatprep.subr.mxu0 0.0
  %2991 = vmatpush1.msra.mxu0 0.0
  %2992 = vmatprep.subr.mxu0 0.0
  %2993 = vmatpush1.msra.mxu0 0.0
  %2994 = vmatprep.subr.mxu0 0.0
  %2995 = vmatpush1.msra.mxu0 0.0
  %2996 = vmatprep.subr.mxu0 0.0
  %2997 = vmatpush1.msra.mxu0 0.0
  %2998 = vmatprep.subr.mxu0 0.0
  %2999 = vmatpush1.msra.mxu0 0.0
  %3000 = vmatprep.subr.mxu0 0.0
  %3001 = vmatpush1.msra.mxu0 0.0
  %3002 = vmatprep.subr.mxu0 0.0
  %3003 = vmatpush1.msra.mxu0 0.0
  %3004 = vmatprep.subr.mxu0 0.0
  %3005 = vmatpush1.msra.mxu0 0.0
  %3006 = vmatprep.subr.mxu0 0.0
  %3007 = vmatpush1.msra.mxu0 0.0
  %3008 = vmatprep.subr.mxu0 0.0
  %3009 = vmatpush1.msra.mxu0 0.0
  %3010 = vmatprep.subr.mxu0 0.0
  %3011 = vmatpush1.msra.mxu0 0.0
  %3012 = vmatprep.subr.mxu0 0.0
  %3013 = vmatpush1.msra.mxu0 0.0
  %3014 = vmatprep.subr.mxu0 0.0
  %3015 = vmatpush1.msra.mxu0 0.0
  %3016 = vmatprep.subr.mxu0 0.0
  %3017 = vmatpush1.msra.mxu0 0.0
  %3018 = vmatprep.subr.mxu0 0.0
  %3019 = vmatpush1.msra.mxu0 0.0
  %3020 = vmatprep.subr.mxu0 0.0
  %3021 = vmatpush1.msra.mxu0 0.0
  %3022 = vmatprep.subr.mxu0 0.0
  %3023 = vmatpush1.msra.mxu0 0.0
  %3024 = vmatprep.subr.mxu0 0.0
  %3025 = vmatpush1.msra.mxu0 0.0
  %3026 = vmatprep.subr.mxu0 0.0
  %3027 = vmatpush1.msra.mxu0 0.0
  %3028 = vmatprep.mubr.f32.mxu0 0.0
  %3029 = vmatmul.mubr.f32.gmra.mrb[0].mxu0 %v2802
  %v3030 = vpop.f32.mrb[0].mxu0
  %v3031 = vadd.f32 %v1006, %v3030
  %v3032 = vpop.f32.mrb[0].mxu0
  %3033 = vdwg.mxu0
  %v3035 = vrot.slane %v3031, 2
  %v3037 = vmul.f32 %v2883, %v3035
  %v3038 = vadd.f32 %v561, %v3037
  %v3039 = vtanh.pop %v3038
  %v3040 = vsub.f32 1.0, %v2963
  %v3041 = vmul.f32 %v3040, %v3039
  %v3042 = vrot.slane %v2562, 2
  %v3044 = vmul.f32 %v2963, %v3042
  %v3045 = vadd.f32 %v3041, %v3044
  %3046 = vst.msk [vmem:[#allocation2 + $0x8] sm:$0x3] %vm1088, %v2800
  %3047 = vst.msk [vmem:[#allocation3] sm:$0xc0] %vm1090, %v3045
  %v3049 = vsel %vm47, %v2800, 0
  %3051 = vmatprep.subr.mxu0 0.0
  %3052 = vmatpush1.msra.mxu0 %v569
  %3053 = vmatprep.subr.mxu0 0.0
  %3054 = vmatpush1.msra.mxu0 %v570
  %3055 = vmatprep.subr.mxu0 0.0
  %3056 = vmatpush1.msra.mxu0 %v571
  %3057 = vmatprep.subr.mxu0 0.0
  %3058 = vmatpush1.msra.mxu0 %v572
  %3059 = vmatprep.subr.mxu0 0.0
  %3060 = vmatpush1.msra.mxu0 0.0
  %3061 = vmatprep.subr.mxu0 0.0
  %3062 = vmatpush1.msra.mxu0 0.0
  %3063 = vmatprep.subr.mxu0 0.0
  %3064 = vmatpush1.msra.mxu0 0.0
  %3065 = vmatprep.subr.mxu0 0.0
  %3066 = vmatpush1.msra.mxu0 0.0
  %3067 = vmatprep.subr.mxu0 0.0
  %3068 = vmatpush1.msra.mxu0 0.0
  %3069 = vmatprep.subr.mxu0 0.0
  %3070 = vmatpush1.msra.mxu0 0.0
  %3071 = vmatprep.subr.mxu0 0.0
  %3072 = vmatpush1.msra.mxu0 0.0
  %3073 = vmatprep.subr.mxu0 0.0
  %3074 = vmatpush1.msra.mxu0 0.0
  %3075 = vmatprep.subr.mxu0 0.0
  %3076 = vmatpush1.msra.mxu0 0.0
  %3077 = vmatprep.subr.mxu0 0.0
  %3078 = vmatpush1.msra.mxu0 0.0
  %3079 = vmatprep.subr.mxu0 0.0
  %3080 = vmatpush1.msra.mxu0 0.0
  %3081 = vmatprep.subr.mxu0 0.0
  %3082 = vmatpush1.msra.mxu0 0.0
  %3083 = vmatprep.subr.mxu0 0.0
  %3084 = vmatpush1.msra.mxu0 0.0
  %3085 = vmatprep.subr.mxu0 0.0
  %3086 = vmatpush1.msra.mxu0 0.0
  %3087 = vmatprep.subr.mxu0 0.0
  %3088 = vmatpush1.msra.mxu0 0.0
  %3089 = vmatprep.subr.mxu0 0.0
  %3090 = vmatpush1.msra.mxu0 0.0
  %3091 = vmatprep.subr.mxu0 0.0
  %3092 = vmatpush1.msra.mxu0 0.0
  %3093 = vmatprep.subr.mxu0 0.0
  %3094 = vmatpush1.msra.mxu0 0.0
  %3095 = vmatprep.subr.mxu0 0.0
  %3096 = vmatpush1.msra.mxu0 0.0
  %3097 = vmatprep.subr.mxu0 0.0
  %3098 = vmatpush1.msra.mxu0 0.0
  %3099 = vmatprep.subr.mxu0 0.0
  %3100 = vmatpush1.msra.mxu0 0.0
  %3101 = vmatprep.subr.mxu0 0.0
  %3102 = vmatpush1.msra.mxu0 0.0
  %3103 = vmatprep.subr.mxu0 0.0
  %3104 = vmatpush1.msra.mxu0 0.0
  %3105 = vmatprep.subr.mxu0 0.0
  %3106 = vmatpush1.msra.mxu0 0.0
  %3107 = vmatprep.subr.mxu0 0.0
  %3108 = vmatpush1.msra.mxu0 0.0
  %3109 = vmatprep.subr.mxu0 0.0
  %3110 = vmatpush1.msra.mxu0 0.0
  %3111 = vmatprep.subr.mxu0 0.0
  %3112 = vmatpush1.msra.mxu0 0.0
  %3113 = vmatprep.subr.mxu0 0.0
  %3114 = vmatpush1.msra.mxu0 0.0
  %3115 = vmatprep.mubr.f32.mxu0 0.0
  %3116 = vmatmul.mubr.f32.gmra.mrb[0].mxu0 %v3049
  %v3117 = vpop.f32.mrb[0].mxu0
  %v3118 = vadd.f32 0.0, %v3117
  %v3119 = vpop.f32.mrb[0].mxu0
  %3120 = vdwg.mxu0
  %v3122 = vrot.slane %v3118, 6
  %v3124 = vadd.f32 %v126, %v3122
  %v3125 = vxor.u32 %v3124, 2147483648
  %v3126 = vmul.f32 %v3125, 1.442695
  %v3127 = vpow.pop %v3126
  %v3128 = vadd.f32 %v3127, 1.0
  %v3129 = vrcp.pop %v3128
  %v3130 = vmul.f32 1.0, %v3129
  %3131 = vmatprep.subr.mxu0 0.0
  %3132 = vmatpush1.msra.mxu0 %v574
  %3133 = vmatprep.subr.mxu0 0.0
  %3134 = vmatpush1.msra.mxu0 %v575
  %3135 = vmatprep.subr.mxu0 0.0
  %3136 = vmatpush1.msra.mxu0 %v576
  %3137 = vmatprep.subr.mxu0 0.0
  %3138 = vmatpush1.msra.mxu0 %v577
  %3139 = vmatprep.subr.mxu0 0.0
  %3140 = vmatpush1.msra.mxu0 0.0
  %3141 = vmatprep.subr.mxu0 0.0
  %3142 = vmatpush1.msra.mxu0 0.0
  %3143 = vmatprep.subr.mxu0 0.0
  %3144 = vmatpush1.msra.mxu0 0.0
  %3145 = vmatprep.subr.mxu0 0.0
  %3146 = vmatpush1.msra.mxu0 0.0
  %3147 = vmatprep.subr.mxu0 0.0
  %3148 = vmatpush1.msra.mxu0 0.0
  %3149 = vmatprep.subr.mxu0 0.0
  %3150 = vmatpush1.msra.mxu0 0.0
  %3151 = vmatprep.subr.mxu0 0.0
  %3152 = vmatpush1.msra.mxu0 0.0
  %3153 = vmatprep.subr.mxu0 0.0
  %3154 = vmatpush1.msra.mxu0 0.0
  %3155 = vmatprep.subr.mxu0 0.0
  %3156 = vmatpush1.msra.mxu0 0.0
  %3157 = vmatprep.subr.mxu0 0.0
  %3158 = vmatpush1.msra.mxu0 0.0
  %3159 = vmatprep.subr.mxu0 0.0
  %3160 = vmatpush1.msra.mxu0 0.0
  %3161 = vmatprep.subr.mxu0 0.0
  %3162 = vmatpush1.msra.mxu0 0.0
  %3163 = vmatprep.subr.mxu0 0.0
  %3164 = vmatpush1.msra.mxu0 0.0
  %3165 = vmatprep.subr.mxu0 0.0
  %3166 = vmatpush1.msra.mxu0 0.0
  %3167 = vmatprep.subr.mxu0 0.0
  %3168 = vmatpush1.msra.mxu0 0.0
  %3169 = vmatprep.subr.mxu0 0.0
  %3170 = vmatpush1.msra.mxu0 0.0
  %3171 = vmatprep.subr.mxu0 0.0
  %3172 = vmatpush1.msra.mxu0 0.0
  %3173 = vmatprep.subr.mxu0 0.0
  %3174 = vmatpush1.msra.mxu0 0.0
  %3175 = vmatprep.subr.mxu0 0.0
  %3176 = vmatpush1.msra.mxu0 0.0
  %3177 = vmatprep.subr.mxu0 0.0
  %3178 = vmatpush1.msra.mxu0 0.0
  %3179 = vmatprep.subr.mxu0 0.0
  %3180 = vmatpush1.msra.mxu0 0.0
  %3181 = vmatprep.subr.mxu0 0.0
  %3182 = vmatpush1.msra.mxu0 0.0
  %3183 = vmatprep.subr.mxu0 0.0
  %3184 = vmatpush1.msra.mxu0 0.0
  %3185 = vmatprep.subr.mxu0 0.0
  %3186 = vmatpush1.msra.mxu0 0.0
  %3187 = vmatprep.subr.mxu0 0.0
  %3188 = vmatpush1.msra.mxu0 0.0
  %3189 = vmatprep.subr.mxu0 0.0
  %3190 = vmatpush1.msra.mxu0 0.0
  %3191 = vmatprep.subr.mxu0 0.0
  %3192 = vmatpush1.msra.mxu0 0.0
  %3193 = vmatprep.subr.mxu0 0.0
  %3194 = vmatpush1.msra.mxu0 0.0
  %3195 = vmatprep.mubr.f32.mxu0 0.0
  %3196 = vmatmul.mubr.f32.gmra.mrb[0].mxu0 %v3049
  %v3197 = vpop.f32.mrb[0].mxu0
  %v3198 = vadd.f32 0.0, %v3197
  %v3199 = vpop.f32.mrb[0].mxu0
  %3200 = vdwg.mxu0
  %v3202 = vrot.slane %v3198, 6
  %v3204 = vadd.f32 %v214, %v3202
  %v3205 = vxor.u32 %v3204, 2147483648
  %v3206 = vmul.f32 %v3205, 1.442695
  %v3207 = vpow.pop %v3206
  %v3208 = vadd.f32 %v3207, 1.0
  %v3209 = vrcp.pop %v3208
  %v3210 = vmul.f32 1.0, %v3209
  %3211 = vmatprep.subr.mxu0 0.0
  %3212 = vmatpush1.msra.mxu0 %v579
  %3213 = vmatprep.subr.mxu0 0.0
  %3214 = vmatpush1.msra.mxu0 %v580
  %3215 = vmatprep.subr.mxu0 0.0
  %3216 = vmatpush1.msra.mxu0 %v581
  %3217 = vmatprep.subr.mxu0 0.0
  %3218 = vmatpush1.msra.mxu0 %v582
  %3219 = vmatprep.subr.mxu0 0.0
  %3220 = vmatpush1.msra.mxu0 0.0
  %3221 = vmatprep.subr.mxu0 0.0
  %3222 = vmatpush1.msra.mxu0 0.0
  %3223 = vmatprep.subr.mxu0 0.0
  %3224 = vmatpush1.msra.mxu0 0.0
  %3225 = vmatprep.subr.mxu0 0.0
  %3226 = vmatpush1.msra.mxu0 0.0
  %3227 = vmatprep.subr.mxu0 0.0
  %3228 = vmatpush1.msra.mxu0 0.0
  %3229 = vmatprep.subr.mxu0 0.0
  %3230 = vmatpush1.msra.mxu0 0.0
  %3231 = vmatprep.subr.mxu0 0.0
  %3232 = vmatpush1.msra.mxu0 0.0
  %3233 = vmatprep.subr.mxu0 0.0
  %3234 = vmatpush1.msra.mxu0 0.0
  %3235 = vmatprep.subr.mxu0 0.0
  %3236 = vmatpush1.msra.mxu0 0.0
  %3237 = vmatprep.subr.mxu0 0.0
  %3238 = vmatpush1.msra.mxu0 0.0
  %3239 = vmatprep.subr.mxu0 0.0
  %3240 = vmatpush1.msra.mxu0 0.0
  %3241 = vmatprep.subr.mxu0 0.0
  %3242 = vmatpush1.msra.mxu0 0.0
  %3243 = vmatprep.subr.mxu0 0.0
  %3244 = vmatpush1.msra.mxu0 0.0
  %3245 = vmatprep.subr.mxu0 0.0
  %3246 = vmatpush1.msra.mxu0 0.0
  %3247 = vmatprep.subr.mxu0 0.0
  %3248 = vmatpush1.msra.mxu0 0.0
  %3249 = vmatprep.subr.mxu0 0.0
  %3250 = vmatpush1.msra.mxu0 0.0
  %3251 = vmatprep.subr.mxu0 0.0
  %3252 = vmatpush1.msra.mxu0 0.0
  %3253 = vmatprep.subr.mxu0 0.0
  %3254 = vmatpush1.msra.mxu0 0.0
  %3255 = vmatprep.subr.mxu0 0.0
  %3256 = vmatpush1.msra.mxu0 0.0
  %3257 = vmatprep.subr.mxu0 0.0
  %3258 = vmatpush1.msra.mxu0 0.0
  %3259 = vmatprep.subr.mxu0 0.0
  %3260 = vmatpush1.msra.mxu0 0.0
  %3261 = vmatprep.subr.mxu0 0.0
  %3262 = vmatpush1.msra.mxu0 0.0
  %3263 = vmatprep.subr.mxu0 0.0
  %3264 = vmatpush1.msra.mxu0 0.0
  %3265 = vmatprep.subr.mxu0 0.0
  %3266 = vmatpush1.msra.mxu0 0.0
  %3267 = vmatprep.subr.mxu0 0.0
  %3268 = vmatpush1.msra.mxu0 0.0
  %3269 = vmatprep.subr.mxu0 0.0
  %3270 = vmatpush1.msra.mxu0 0.0
  %3271 = vmatprep.subr.mxu0 0.0
  %3272 = vmatpush1.msra.mxu0 0.0
  %3273 = vmatprep.subr.mxu0 0.0
  %3274 = vmatpush1.msra.mxu0 0.0
  %3275 = vmatprep.mubr.f32.mxu0 0.0
  %3276 = vmatmul.mubr.f32.gmra.mrb[0].mxu0 %v3049
  %v3277 = vpop.f32.mrb[0].mxu0
  %v3278 = vadd.f32 %v763, %v3277
  %v3279 = vpop.f32.mrb[0].mxu0
  %3280 = vdwg.mxu0
  %v3282 = vrot.slane %v3278, 6
  %v3284 = vmul.f32 %v3130, %v3282
  %v3285 = vadd.f32 %v302, %v3284
  %v3286 = vtanh.pop %v3285
  %v3287 = vsub.f32 1.0, %v3210
  %v3288 = vmul.f32 %v3287, %v3286
  %v3289 = vrot.slane %v2800, 6
  %v3291 = vmul.f32 %v3210, %v3289
  %v3292 = vadd.f32 %v3288, %v3291
  %v3294 = vrot.slane %v3045, 6
  %v3295 = vsel %vm47, %v3294, 0
  %3297 = vmatprep.subr.mxu0 0.0
  %3298 = vmatpush1.msra.mxu0 %v584
  %3299 = vmatprep.subr.mxu0 0.0
  %3300 = vmatpush1.msra.mxu0 %v585
  %3301 = vmatprep.subr.mxu0 0.0
  %3302 = vmatpush1.msra.mxu0 %v586
  %3303 = vmatprep.subr.mxu0 0.0
  %3304 = vmatpush1.msra.mxu0 %v587
  %3305 = vmatprep.subr.mxu0 0.0
  %3306 = vmatpush1.msra.mxu0 0.0
  %3307 = vmatprep.subr.mxu0 0.0
  %3308 = vmatpush1.msra.mxu0 0.0
  %3309 = vmatprep.subr.mxu0 0.0
  %3310 = vmatpush1.msra.mxu0 0.0
  %3311 = vmatprep.subr.mxu0 0.0
  %3312 = vmatpush1.msra.mxu0 0.0
  %3313 = vmatprep.subr.mxu0 0.0
  %3314 = vmatpush1.msra.mxu0 0.0
  %3315 = vmatprep.subr.mxu0 0.0
  %3316 = vmatpush1.msra.mxu0 0.0
  %3317 = vmatprep.subr.mxu0 0.0
  %3318 = vmatpush1.msra.mxu0 0.0
  %3319 = vmatprep.subr.mxu0 0.0
  %3320 = vmatpush1.msra.mxu0 0.0
  %3321 = vmatprep.subr.mxu0 0.0
  %3322 = vmatpush1.msra.mxu0 0.0
  %3323 = vmatprep.subr.mxu0 0.0
  %3324 = vmatpush1.msra.mxu0 0.0
  %3325 = vmatprep.subr.mxu0 0.0
  %3326 = vmatpush1.msra.mxu0 0.0
  %3327 = vmatprep.subr.mxu0 0.0
  %3328 = vmatpush1.msra.mxu0 0.0
  %3329 = vmatprep.subr.mxu0 0.0
  %3330 = vmatpush1.msra.mxu0 0.0
  %3331 = vmatprep.subr.mxu0 0.0
  %3332 = vmatpush1.msra.mxu0 0.0
  %3333 = vmatprep.subr.mxu0 0.0
  %3334 = vmatpush1.msra.mxu0 0.0
  %3335 = vmatprep.subr.mxu0 0.0
  %3336 = vmatpush1.msra.mxu0 0.0
  %3337 = vmatprep.subr.mxu0 0.0
  %3338 = vmatpush1.msra.mxu0 0.0
  %3339 = vmatprep.subr.mxu0 0.0
  %3340 = vmatpush1.msra.mxu0 0.0
  %3341 = vmatprep.subr.mxu0 0.0
  %3342 = vmatpush1.msra.mxu0 0.0
  %3343 = vmatprep.subr.mxu0 0.0
  %3344 = vmatpush1.msra.mxu0 0.0
  %3345 = vmatprep.subr.mxu0 0.0
  %3346 = vmatpush1.msra.mxu0 0.0
  %3347 = vmatprep.subr.mxu0 0.0
  %3348 = vmatpush1.msra.mxu0 0.0
  %3349 = vmatprep.subr.mxu0 0.0
  %3350 = vmatpush1.msra.mxu0 0.0
  %3351 = vmatprep.subr.mxu0 0.0
  %3352 = vmatpush1.msra.mxu0 0.0
  %3353 = vmatprep.subr.mxu0 0.0
  %3354 = vmatpush1.msra.mxu0 0.0
  %3355 = vmatprep.subr.mxu0 0.0
  %3356 = vmatpush1.msra.mxu0 0.0
  %3357 = vmatprep.subr.mxu0 0.0
  %3358 = vmatpush1.msra.mxu0 0.0
  %3359 = vmatprep.subr.mxu0 0.0
  %3360 = vmatpush1.msra.mxu0 0.0
  %3361 = vmatprep.mubr.f32.mxu0 0.0
  %3362 = vmatmul.mubr.f32.gmra.mrb[0].mxu0 %v3295
  %v3363 = vpop.f32.mrb[0].mxu0
  %v3364 = vadd.f32 0.0, %v3363
  %v3365 = vpop.f32.mrb[0].mxu0
  %3366 = vdwg.mxu0
  %v3368 = vrot.slane %v3364, 4
  %v3370 = vadd.f32 %v385, %v3368
  %v3371 = vxor.u32 %v3370, 2147483648
  %v3372 = vmul.f32 %v3371, 1.442695
  %v3373 = vpow.pop %v3372
  %v3374 = vadd.f32 %v3373, 1.0
  %v3375 = vrcp.pop %v3374
  %v3376 = vmul.f32 1.0, %v3375
  %3377 = vmatprep.subr.mxu0 0.0
  %3378 = vmatpush1.msra.mxu0 %v589
  %3379 = vmatprep.subr.mxu0 0.0
  %3380 = vmatpush1.msra.mxu0 %v590
  %3381 = vmatprep.subr.mxu0 0.0
  %3382 = vmatpush1.msra.mxu0 %v591
  %3383 = vmatprep.subr.mxu0 0.0
  %3384 = vmatpush1.msra.mxu0 %v592
  %3385 = vmatprep.subr.mxu0 0.0
  %3386 = vmatpush1.msra.mxu0 0.0
  %3387 = vmatprep.subr.mxu0 0.0
  %3388 = vmatpush1.msra.mxu0 0.0
  %3389 = vmatprep.subr.mxu0 0.0
  %3390 = vmatpush1.msra.mxu0 0.0
  %3391 = vmatprep.subr.mxu0 0.0
  %3392 = vmatpush1.msra.mxu0 0.0
  %3393 = vmatprep.subr.mxu0 0.0
  %3394 = vmatpush1.msra.mxu0 0.0
  %3395 = vmatprep.subr.mxu0 0.0
  %3396 = vmatpush1.msra.mxu0 0.0
  %3397 = vmatprep.subr.mxu0 0.0
  %3398 = vmatpush1.msra.mxu0 0.0
  %3399 = vmatprep.subr.mxu0 0.0
  %3400 = vmatpush1.msra.mxu0 0.0
  %3401 = vmatprep.subr.mxu0 0.0
  %3402 = vmatpush1.msra.mxu0 0.0
  %3403 = vmatprep.subr.mxu0 0.0
  %3404 = vmatpush1.msra.mxu0 0.0
  %3405 = vmatprep.subr.mxu0 0.0
  %3406 = vmatpush1.msra.mxu0 0.0
  %3407 = vmatprep.subr.mxu0 0.0
  %3408 = vmatpush1.msra.mxu0 0.0
  %3409 = vmatprep.subr.mxu0 0.0
  %3410 = vmatpush1.msra.mxu0 0.0
  %3411 = vmatprep.subr.mxu0 0.0
  %3412 = vmatpush1.msra.mxu0 0.0
  %3413 = vmatprep.subr.mxu0 0.0
  %3414 = vmatpush1.msra.mxu0 0.0
  %3415 = vmatprep.subr.mxu0 0.0
  %3416 = vmatpush1.msra.mxu0 0.0
  %3417 = vmatprep.subr.mxu0 0.0
  %3418 = vmatpush1.msra.mxu0 0.0
  %3419 = vmatprep.subr.mxu0 0.0
  %3420 = vmatpush1.msra.mxu0 0.0
  %3421 = vmatprep.subr.mxu0 0.0
  %3422 = vmatpush1.msra.mxu0 0.0
  %3423 = vmatprep.subr.mxu0 0.0
  %3424 = vmatpush1.msra.mxu0 0.0
  %3425 = vmatprep.subr.mxu0 0.0
  %3426 = vmatpush1.msra.mxu0 0.0
  %3427 = vmatprep.subr.mxu0 0.0
  %3428 = vmatpush1.msra.mxu0 0.0
  %3429 = vmatprep.subr.mxu0 0.0
  %3430 = vmatpush1.msra.mxu0 0.0
  %3431 = vmatprep.subr.mxu0 0.0
  %3432 = vmatpush1.msra.mxu0 0.0
  %3433 = vmatprep.subr.mxu0 0.0
  %3434 = vmatpush1.msra.mxu0 0.0
  %3435 = vmatprep.subr.mxu0 0.0
  %3436 = vmatpush1.msra.mxu0 0.0
  %3437 = vmatprep.subr.mxu0 0.0
  %3438 = vmatpush1.msra.mxu0 0.0
  %3439 = vmatprep.subr.mxu0 0.0
  %3440 = vmatpush1.msra.mxu0 0.0
  %3441 = vmatprep.mubr.f32.mxu0 0.0
  %3442 = vmatmul.mubr.f32.gmra.mrb[0].mxu0 %v3295
  %v3443 = vpop.f32.mrb[0].mxu0
  %v3444 = vadd.f32 0.0, %v3443
  %v3445 = vpop.f32.mrb[0].mxu0
  %3446 = vdwg.mxu0
  %v3448 = vrot.slane %v3444, 4
  %v3450 = vadd.f32 %v473, %v3448
  %v3451 = vxor.u32 %v3450, 2147483648
  %v3452 = vmul.f32 %v3451, 1.442695
  %v3453 = vpow.pop %v3452
  %v3454 = vadd.f32 %v3453, 1.0
  %v3455 = vrcp.pop %v3454
  %v3456 = vmul.f32 1.0, %v3455
  %3457 = vmatprep.subr.mxu0 0.0
  %3458 = vmatpush1.msra.mxu0 %v594
  %3459 = vmatprep.subr.mxu0 0.0
  %3460 = vmatpush1.msra.mxu0 %v595
  %3461 = vmatprep.subr.mxu0 0.0
  %3462 = vmatpush1.msra.mxu0 %v596
  %3463 = vmatprep.subr.mxu0 0.0
  %3464 = vmatpush1.msra.mxu0 %v597
  %3465 = vmatprep.subr.mxu0 0.0
  %3466 = vmatpush1.msra.mxu0 0.0
  %3467 = vmatprep.subr.mxu0 0.0
  %3468 = vmatpush1.msra.mxu0 0.0
  %3469 = vmatprep.subr.mxu0 0.0
  %3470 = vmatpush1.msra.mxu0 0.0
  %3471 = vmatprep.subr.mxu0 0.0
  %3472 = vmatpush1.msra.mxu0 0.0
  %3473 = vmatprep.subr.mxu0 0.0
  %3474 = vmatpush1.msra.mxu0 0.0
  %3475 = vmatprep.subr.mxu0 0.0
  %3476 = vmatpush1.msra.mxu0 0.0
  %3477 = vmatprep.subr.mxu0 0.0
  %3478 = vmatpush1.msra.mxu0 0.0
  %3479 = vmatprep.subr.mxu0 0.0
  %3480 = vmatpush1.msra.mxu0 0.0
  %3481 = vmatprep.subr.mxu0 0.0
  %3482 = vmatpush1.msra.mxu0 0.0
  %3483 = vmatprep.subr.mxu0 0.0
  %3484 = vmatpush1.msra.mxu0 0.0
  %3485 = vmatprep.subr.mxu0 0.0
  %3486 = vmatpush1.msra.mxu0 0.0
  %3487 = vmatprep.subr.mxu0 0.0
  %3488 = vmatpush1.msra.mxu0 0.0
  %3489 = vmatprep.subr.mxu0 0.0
  %3490 = vmatpush1.msra.mxu0 0.0
  %3491 = vmatprep.subr.mxu0 0.0
  %3492 = vmatpush1.msra.mxu0 0.0
  %3493 = vmatprep.subr.mxu0 0.0
  %3494 = vmatpush1.msra.mxu0 0.0
  %3495 = vmatprep.subr.mxu0 0.0
  %3496 = vmatpush1.msra.mxu0 0.0
  %3497 = vmatprep.subr.mxu0 0.0
  %3498 = vmatpush1.msra.mxu0 0.0
  %3499 = vmatprep.subr.mxu0 0.0
  %3500 = vmatpush1.msra.mxu0 0.0
  %3501 = vmatprep.subr.mxu0 0.0
  %3502 = vmatpush1.msra.mxu0 0.0
  %3503 = vmatprep.subr.mxu0 0.0
  %3504 = vmatpush1.msra.mxu0 0.0
  %3505 = vmatprep.subr.mxu0 0.0
  %3506 = vmatpush1.msra.mxu0 0.0
  %3507 = vmatprep.subr.mxu0 0.0
  %3508 = vmatpush1.msra.mxu0 0.0
  %3509 = vmatprep.subr.mxu0 0.0
  %3510 = vmatpush1.msra.mxu0 0.0
  %3511 = vmatprep.subr.mxu0 0.0
  %3512 = vmatpush1.msra.mxu0 0.0
  %3513 = vmatprep.subr.mxu0 0.0
  %3514 = vmatpush1.msra.mxu0 0.0
  %3515 = vmatprep.subr.mxu0 0.0
  %3516 = vmatpush1.msra.mxu0 0.0
  %3517 = vmatprep.subr.mxu0 0.0
  %3518 = vmatpush1.msra.mxu0 0.0
  %3519 = vmatprep.subr.mxu0 0.0
  %3520 = vmatpush1.msra.mxu0 0.0
  %3521 = vmatprep.mubr.f32.mxu0 0.0
  %3522 = vmatmul.mubr.f32.gmra.mrb[0].mxu0 %v3295
  %v3523 = vpop.f32.mrb[0].mxu0
  %v3524 = vadd.f32 %v1006, %v3523
  %v3525 = vpop.f32.mrb[0].mxu0
  %3526 = vdwg.mxu0
  %v3528 = vrot.slane %v3524, 4
  %v3530 = vmul.f32 %v3376, %v3528
  %v3531 = vadd.f32 %v561, %v3530
  %v3532 = vtanh.pop %v3531
  %v3533 = vsub.f32 1.0, %v3456
  %v3534 = vmul.f32 %v3533, %v3532
  %v3535 = vrot.slane %v3045, 2
  %v3537 = vmul.f32 %v3456, %v3535
  %v3538 = vadd.f32 %v3534, %v3537
  %3539 = vst.msk [vmem:[#allocation2 + $0x8] sm:$0xc] %vm1583, %v3292
  %3540 = vst.msk [vmem:[#allocation3] sm:$0x30] %vm1585, %v3538
  %v3542 = vrot.slane %v3292, 2
  %v3543 = vsel %vm47, %v3542, 0
  %3545 = vmatprep.subr.mxu0 0.0
  %3546 = vmatpush1.msra.mxu0 %v569
  %3547 = vmatprep.subr.mxu0 0.0
  %3548 = vmatpush1.msra.mxu0 %v570
  %3549 = vmatprep.subr.mxu0 0.0
  %3550 = vmatpush1.msra.mxu0 %v571
  %3551 = vmatprep.subr.mxu0 0.0
  %3552 = vmatpush1.msra.mxu0 %v572
  %3553 = vmatprep.subr.mxu0 0.0
  %3554 = vmatpush1.msra.mxu0 0.0
  %3555 = vmatprep.subr.mxu0 0.0
  %3556 = vmatpush1.msra.mxu0 0.0
  %3557 = vmatprep.subr.mxu0 0.0
  %3558 = vmatpush1.msra.mxu0 0.0
  %3559 = vmatprep.subr.mxu0 0.0
  %3560 = vmatpush1.msra.mxu0 0.0
  %3561 = vmatprep.subr.mxu0 0.0
  %3562 = vmatpush1.msra.mxu0 0.0
  %3563 = vmatprep.subr.mxu0 0.0
  %3564 = vmatpush1.msra.mxu0 0.0
  %3565 = vmatprep.subr.mxu0 0.0
  %3566 = vmatpush1.msra.mxu0 0.0
  %3567 = vmatprep.subr.mxu0 0.0
  %3568 = vmatpush1.msra.mxu0 0.0
  %3569 = vmatprep.subr.mxu0 0.0
  %3570 = vmatpush1.msra.mxu0 0.0
  %3571 = vmatprep.subr.mxu0 0.0
  %3572 = vmatpush1.msra.mxu0 0.0
  %3573 = vmatprep.subr.mxu0 0.0
  %3574 = vmatpush1.msra.mxu0 0.0
  %3575 = vmatprep.subr.mxu0 0.0
  %3576 = vmatpush1.msra.mxu0 0.0
  %3577 = vmatprep.subr.mxu0 0.0
  %3578 = vmatpush1.msra.mxu0 0.0
  %3579 = vmatprep.subr.mxu0 0.0
  %3580 = vmatpush1.msra.mxu0 0.0
  %3581 = vmatprep.subr.mxu0 0.0
  %3582 = vmatpush1.msra.mxu0 0.0
  %3583 = vmatprep.subr.mxu0 0.0
  %3584 = vmatpush1.msra.mxu0 0.0
  %3585 = vmatprep.subr.mxu0 0.0
  %3586 = vmatpush1.msra.mxu0 0.0
  %3587 = vmatprep.subr.mxu0 0.0
  %3588 = vmatpush1.msra.mxu0 0.0
  %3589 = vmatprep.subr.mxu0 0.0
  %3590 = vmatpush1.msra.mxu0 0.0
  %3591 = vmatprep.subr.mxu0 0.0
  %3592 = vmatpush1.msra.mxu0 0.0
  %3593 = vmatprep.subr.mxu0 0.0
  %3594 = vmatpush1.msra.mxu0 0.0
  %3595 = vmatprep.subr.mxu0 0.0
  %3596 = vmatpush1.msra.mxu0 0.0
  %3597 = vmatprep.subr.mxu0 0.0
  %3598 = vmatpush1.msra.mxu0 0.0
  %3599 = vmatprep.subr.mxu0 0.0
  %3600 = vmatpush1.msra.mxu0 0.0
  %3601 = vmatprep.subr.mxu0 0.0
  %3602 = vmatpush1.msra.mxu0 0.0
  %3603 = vmatprep.subr.mxu0 0.0
  %3604 = vmatpush1.msra.mxu0 0.0
  %3605 = vmatprep.subr.mxu0 0.0
  %3606 = vmatpush1.msra.mxu0 0.0
  %3607 = vmatprep.subr.mxu0 0.0
  %3608 = vmatpush1.msra.mxu0 0.0
  %3609 = vmatprep.mubr.f32.mxu0 0.0
  %3610 = vmatmul.mubr.f32.gmra.mrb[0].mxu0 %v3543
  %v3611 = vpop.f32.mrb[0].mxu0
  %v3612 = vadd.f32 0.0, %v3611
  %v3613 = vpop.f32.mrb[0].mxu0
  %3614 = vdwg.mxu0
  %v3616 = vrot.slane %v3612, 4
  %v3618 = vadd.f32 %v126, %v3616
  %v3619 = vxor.u32 %v3618, 2147483648
  %v3620 = vmul.f32 %v3619, 1.442695
  %v3621 = vpow.pop %v3620
  %v3622 = vadd.f32 %v3621, 1.0
  %v3623 = vrcp.pop %v3622
  %v3624 = vmul.f32 1.0, %v3623
  %3625 = vmatprep.subr.mxu0 0.0
  %3626 = vmatpush1.msra.mxu0 %v574
  %3627 = vmatprep.subr.mxu0 0.0
  %3628 = vmatpush1.msra.mxu0 %v575
  %3629 = vmatprep.subr.mxu0 0.0
  %3630 = vmatpush1.msra.mxu0 %v576
  %3631 = vmatprep.subr.mxu0 0.0
  %3632 = vmatpush1.msra.mxu0 %v577
  %3633 = vmatprep.subr.mxu0 0.0
  %3634 = vmatpush1.msra.mxu0 0.0
  %3635 = vmatprep.subr.mxu0 0.0
  %3636 = vmatpush1.msra.mxu0 0.0
  %3637 = vmatprep.subr.mxu0 0.0
  %3638 = vmatpush1.msra.mxu0 0.0
  %3639 = vmatprep.subr.mxu0 0.0
  %3640 = vmatpush1.msra.mxu0 0.0
  %3641 = vmatprep.subr.mxu0 0.0
  %3642 = vmatpush1.msra.mxu0 0.0
  %3643 = vmatprep.subr.mxu0 0.0
  %3644 = vmatpush1.msra.mxu0 0.0
  %3645 = vmatprep.subr.mxu0 0.0
  %3646 = vmatpush1.msra.mxu0 0.0
  %3647 = vmatprep.subr.mxu0 0.0
  %3648 = vmatpush1.msra.mxu0 0.0
  %3649 = vmatprep.subr.mxu0 0.0
  %3650 = vmatpush1.msra.mxu0 0.0
  %3651 = vmatprep.subr.mxu0 0.0
  %3652 = vmatpush1.msra.mxu0 0.0
  %3653 = vmatprep.subr.mxu0 0.0
  %3654 = vmatpush1.msra.mxu0 0.0
  %3655 = vmatprep.subr.mxu0 0.0
  %3656 = vmatpush1.msra.mxu0 0.0
  %3657 = vmatprep.subr.mxu0 0.0
  %3658 = vmatpush1.msra.mxu0 0.0
  %3659 = vmatprep.subr.mxu0 0.0
  %3660 = vmatpush1.msra.mxu0 0.0
  %3661 = vmatprep.subr.mxu0 0.0
  %3662 = vmatpush1.msra.mxu0 0.0
  %3663 = vmatprep.subr.mxu0 0.0
  %3664 = vmatpush1.msra.mxu0 0.0
  %3665 = vmatprep.subr.mxu0 0.0
  %3666 = vmatpush1.msra.mxu0 0.0
  %3667 = vmatprep.subr.mxu0 0.0
  %3668 = vmatpush1.msra.mxu0 0.0
  %3669 = vmatprep.subr.mxu0 0.0
  %3670 = vmatpush1.msra.mxu0 0.0
  %3671 = vmatprep.subr.mxu0 0.0
  %3672 = vmatpush1.msra.mxu0 0.0
  %3673 = vmatprep.subr.mxu0 0.0
  %3674 = vmatpush1.msra.mxu0 0.0
  %3675 = vmatprep.subr.mxu0 0.0
  %3676 = vmatpush1.msra.mxu0 0.0
  %3677 = vmatprep.subr.mxu0 0.0
  %3678 = vmatpush1.msra.mxu0 0.0
  %3679 = vmatprep.subr.mxu0 0.0
  %3680 = vmatpush1.msra.mxu0 0.0
  %3681 = vmatprep.subr.mxu0 0.0
  %3682 = vmatpush1.msra.mxu0 0.0
  %3683 = vmatprep.subr.mxu0 0.0
  %3684 = vmatpush1.msra.mxu0 0.0
  %3685 = vmatprep.subr.mxu0 0.0
  %3686 = vmatpush1.msra.mxu0 0.0
  %3687 = vmatprep.subr.mxu0 0.0
  %3688 = vmatpush1.msra.mxu0 0.0
  %3689 = vmatprep.mubr.f32.mxu0 0.0
  %3690 = vmatmul.mubr.f32.gmra.mrb[0].mxu0 %v3543
  %v3691 = vpop.f32.mrb[0].mxu0
  %v3692 = vadd.f32 0.0, %v3691
  %v3693 = vpop.f32.mrb[0].mxu0
  %3694 = vdwg.mxu0
  %v3696 = vrot.slane %v3692, 4
  %v3698 = vadd.f32 %v214, %v3696
  %v3699 = vxor.u32 %v3698, 2147483648
  %v3700 = vmul.f32 %v3699, 1.442695
  %v3701 = vpow.pop %v3700
  %v3702 = vadd.f32 %v3701, 1.0
  %v3703 = vrcp.pop %v3702
  %v3704 = vmul.f32 1.0, %v3703
  %3705 = vmatprep.subr.mxu0 0.0
  %3706 = vmatpush1.msra.mxu0 %v579
  %3707 = vmatprep.subr.mxu0 0.0
  %3708 = vmatpush1.msra.mxu0 %v580
  %3709 = vmatprep.subr.mxu0 0.0
  %3710 = vmatpush1.msra.mxu0 %v581
  %3711 = vmatprep.subr.mxu0 0.0
  %3712 = vmatpush1.msra.mxu0 %v582
  %3713 = vmatprep.subr.mxu0 0.0
  %3714 = vmatpush1.msra.mxu0 0.0
  %3715 = vmatprep.subr.mxu0 0.0
  %3716 = vmatpush1.msra.mxu0 0.0
  %3717 = vmatprep.subr.mxu0 0.0
  %3718 = vmatpush1.msra.mxu0 0.0
  %3719 = vmatprep.subr.mxu0 0.0
  %3720 = vmatpush1.msra.mxu0 0.0
  %3721 = vmatprep.subr.mxu0 0.0
  %3722 = vmatpush1.msra.mxu0 0.0
  %3723 = vmatprep.subr.mxu0 0.0
  %3724 = vmatpush1.msra.mxu0 0.0
  %3725 = vmatprep.subr.mxu0 0.0
  %3726 = vmatpush1.msra.mxu0 0.0
  %3727 = vmatprep.subr.mxu0 0.0
  %3728 = vmatpush1.msra.mxu0 0.0
  %3729 = vmatprep.subr.mxu0 0.0
  %3730 = vmatpush1.msra.mxu0 0.0
  %3731 = vmatprep.subr.mxu0 0.0
  %3732 = vmatpush1.msra.mxu0 0.0
  %3733 = vmatprep.subr.mxu0 0.0
  %3734 = vmatpush1.msra.mxu0 0.0
  %3735 = vmatprep.subr.mxu0 0.0
  %3736 = vmatpush1.msra.mxu0 0.0
  %3737 = vmatprep.subr.mxu0 0.0
  %3738 = vmatpush1.msra.mxu0 0.0
  %3739 = vmatprep.subr.mxu0 0.0
  %3740 = vmatpush1.msra.mxu0 0.0
  %3741 = vmatprep.subr.mxu0 0.0
  %3742 = vmatpush1.msra.mxu0 0.0
  %3743 = vmatprep.subr.mxu0 0.0
  %3744 = vmatpush1.msra.mxu0 0.0
  %3745 = vmatprep.subr.mxu0 0.0
  %3746 = vmatpush1.msra.mxu0 0.0
  %3747 = vmatprep.subr.mxu0 0.0
  %3748 = vmatpush1.msra.mxu0 0.0
  %3749 = vmatprep.subr.mxu0 0.0
  %3750 = vmatpush1.msra.mxu0 0.0
  %3751 = vmatprep.subr.mxu0 0.0
  %3752 = vmatpush1.msra.mxu0 0.0
  %3753 = vmatprep.subr.mxu0 0.0
  %3754 = vmatpush1.msra.mxu0 0.0
  %3755 = vmatprep.subr.mxu0 0.0
  %3756 = vmatpush1.msra.mxu0 0.0
  %3757 = vmatprep.subr.mxu0 0.0
  %3758 = vmatpush1.msra.mxu0 0.0
  %3759 = vmatprep.subr.mxu0 0.0
  %3760 = vmatpush1.msra.mxu0 0.0
  %3761 = vmatprep.subr.mxu0 0.0
  %3762 = vmatpush1.msra.mxu0 0.0
  %3763 = vmatprep.subr.mxu0 0.0
  %3764 = vmatpush1.msra.mxu0 0.0
  %3765 = vmatprep.subr.mxu0 0.0
  %3766 = vmatpush1.msra.mxu0 0.0
  %3767 = vmatprep.subr.mxu0 0.0
  %3768 = vmatpush1.msra.mxu0 0.0
  %3769 = vmatprep.mubr.f32.mxu0 0.0
  %3770 = vmatmul.mubr.f32.gmra.mrb[0].mxu0 %v3543
  %v3771 = vpop.f32.mrb[0].mxu0
  %v3772 = vadd.f32 %v763, %v3771
  %v3773 = vpop.f32.mrb[0].mxu0
  %3774 = vdwg.mxu0
  %v3776 = vrot.slane %v3772, 4
  %v3778 = vmul.f32 %v3624, %v3776
  %v3779 = vadd.f32 %v302, %v3778
  %v3780 = vtanh.pop %v3779
  %v3781 = vsub.f32 1.0, %v3704
  %v3782 = vmul.f32 %v3781, %v3780
  %v3783 = vrot.slane %v3292, 6
  %v3785 = vmul.f32 %v3704, %v3783
  %v3786 = vadd.f32 %v3782, %v3785
  %v3788 = vrot.slane %v3538, 4
  %v3789 = vsel %vm47, %v3788, 0
  %3791 = vmatprep.subr.mxu0 0.0
  %3792 = vmatpush1.msra.mxu0 %v584
  %3793 = vmatprep.subr.mxu0 0.0
  %3794 = vmatpush1.msra.mxu0 %v585
  %3795 = vmatprep.subr.mxu0 0.0
  %3796 = vmatpush1.msra.mxu0 %v586
  %3797 = vmatprep.subr.mxu0 0.0
  %3798 = vmatpush1.msra.mxu0 %v587
  %3799 = vmatprep.subr.mxu0 0.0
  %3800 = vmatpush1.msra.mxu0 0.0
  %3801 = vmatprep.subr.mxu0 0.0
  %3802 = vmatpush1.msra.mxu0 0.0
  %3803 = vmatprep.subr.mxu0 0.0
  %3804 = vmatpush1.msra.mxu0 0.0
  %3805 = vmatprep.subr.mxu0 0.0
  %3806 = vmatpush1.msra.mxu0 0.0
  %3807 = vmatprep.subr.mxu0 0.0
  %3808 = vmatpush1.msra.mxu0 0.0
  %3809 = vmatprep.subr.mxu0 0.0
  %3810 = vmatpush1.msra.mxu0 0.0
  %3811 = vmatprep.subr.mxu0 0.0
  %3812 = vmatpush1.msra.mxu0 0.0
  %3813 = vmatprep.subr.mxu0 0.0
  %3814 = vmatpush1.msra.mxu0 0.0
  %3815 = vmatprep.subr.mxu0 0.0
  %3816 = vmatpush1.msra.mxu0 0.0
  %3817 = vmatprep.subr.mxu0 0.0
  %3818 = vmatpush1.msra.mxu0 0.0
  %3819 = vmatprep.subr.mxu0 0.0
  %3820 = vmatpush1.msra.mxu0 0.0
  %3821 = vmatprep.subr.mxu0 0.0
  %3822 = vmatpush1.msra.mxu0 0.0
  %3823 = vmatprep.subr.mxu0 0.0
  %3824 = vmatpush1.msra.mxu0 0.0
  %3825 = vmatprep.subr.mxu0 0.0
  %3826 = vmatpush1.msra.mxu0 0.0
  %3827 = vmatprep.subr.mxu0 0.0
  %3828 = vmatpush1.msra.mxu0 0.0
  %3829 = vmatprep.subr.mxu0 0.0
  %3830 = vmatpush1.msra.mxu0 0.0
  %3831 = vmatprep.subr.mxu0 0.0
  %3832 = vmatpush1.msra.mxu0 0.0
  %3833 = vmatprep.subr.mxu0 0.0
  %3834 = vmatpush1.msra.mxu0 0.0
  %3835 = vmatprep.subr.mxu0 0.0
  %3836 = vmatpush1.msra.mxu0 0.0
  %3837 = vmatprep.subr.mxu0 0.0
  %3838 = vmatpush1.msra.mxu0 0.0
  %3839 = vmatprep.subr.mxu0 0.0
  %3840 = vmatpush1.msra.mxu0 0.0
  %3841 = vmatprep.subr.mxu0 0.0
  %3842 = vmatpush1.msra.mxu0 0.0
  %3843 = vmatprep.subr.mxu0 0.0
  %3844 = vmatpush1.msra.mxu0 0.0
  %3845 = vmatprep.subr.mxu0 0.0
  %3846 = vmatpush1.msra.mxu0 0.0
  %3847 = vmatprep.subr.mxu0 0.0
  %3848 = vmatpush1.msra.mxu0 0.0
  %3849 = vmatprep.subr.mxu0 0.0
  %3850 = vmatpush1.msra.mxu0 0.0
  %3851 = vmatprep.subr.mxu0 0.0
  %3852 = vmatpush1.msra.mxu0 0.0
  %3853 = vmatprep.subr.mxu0 0.0
  %3854 = vmatpush1.msra.mxu0 0.0
  %3855 = vmatprep.mubr.f32.mxu0 0.0
  %3856 = vmatmul.mubr.f32.gmra.mrb[0].mxu0 %v3789
  %v3857 = vpop.f32.mrb[0].mxu0
  %v3858 = vadd.f32 0.0, %v3857
  %v3859 = vpop.f32.mrb[0].mxu0
  %3860 = vdwg.mxu0
  %v3862 = vrot.slane %v3858, 6
  %v3864 = vadd.f32 %v385, %v3862
  %v3865 = vxor.u32 %v3864, 2147483648
  %v3866 = vmul.f32 %v3865, 1.442695
  %v3867 = vpow.pop %v3866
  %v3868 = vadd.f32 %v3867, 1.0
  %v3869 = vrcp.pop %v3868
  %v3870 = vmul.f32 1.0, %v3869
  %3871 = vmatprep.subr.mxu0 0.0
  %3872 = vmatpush1.msra.mxu0 %v589
  %3873 = vmatprep.subr.mxu0 0.0
  %3874 = vmatpush1.msra.mxu0 %v590
  %3875 = vmatprep.subr.mxu0 0.0
  %3876 = vmatpush1.msra.mxu0 %v591
  %3877 = vmatprep.subr.mxu0 0.0
  %3878 = vmatpush1.msra.mxu0 %v592
  %3879 = vmatprep.subr.mxu0 0.0
  %3880 = vmatpush1.msra.mxu0 0.0
  %3881 = vmatprep.subr.mxu0 0.0
  %3882 = vmatpush1.msra.mxu0 0.0
  %3883 = vmatprep.subr.mxu0 0.0
  %3884 = vmatpush1.msra.mxu0 0.0
  %3885 = vmatprep.subr.mxu0 0.0
  %3886 = vmatpush1.msra.mxu0 0.0
  %3887 = vmatprep.subr.mxu0 0.0
  %3888 = vmatpush1.msra.mxu0 0.0
  %3889 = vmatprep.subr.mxu0 0.0
  %3890 = vmatpush1.msra.mxu0 0.0
  %3891 = vmatprep.subr.mxu0 0.0
  %3892 = vmatpush1.msra.mxu0 0.0
  %3893 = vmatprep.subr.mxu0 0.0
  %3894 = vmatpush1.msra.mxu0 0.0
  %3895 = vmatprep.subr.mxu0 0.0
  %3896 = vmatpush1.msra.mxu0 0.0
  %3897 = vmatprep.subr.mxu0 0.0
  %3898 = vmatpush1.msra.mxu0 0.0
  %3899 = vmatprep.subr.mxu0 0.0
  %3900 = vmatpush1.msra.mxu0 0.0
  %3901 = vmatprep.subr.mxu0 0.0
  %3902 = vmatpush1.msra.mxu0 0.0
  %3903 = vmatprep.subr.mxu0 0.0
  %3904 = vmatpush1.msra.mxu0 0.0
  %3905 = vmatprep.subr.mxu0 0.0
  %3906 = vmatpush1.msra.mxu0 0.0
  %3907 = vmatprep.subr.mxu0 0.0
  %3908 = vmatpush1.msra.mxu0 0.0
  %3909 = vmatprep.subr.mxu0 0.0
  %3910 = vmatpush1.msra.mxu0 0.0
  %3911 = vmatprep.subr.mxu0 0.0
  %3912 = vmatpush1.msra.mxu0 0.0
  %3913 = vmatprep.subr.mxu0 0.0
  %3914 = vmatpush1.msra.mxu0 0.0
  %3915 = vmatprep.subr.mxu0 0.0
  %3916 = vmatpush1.msra.mxu0 0.0
  %3917 = vmatprep.subr.mxu0 0.0
  %3918 = vmatpush1.msra.mxu0 0.0
  %3919 = vmatprep.subr.mxu0 0.0
  %3920 = vmatpush1.msra.mxu0 0.0
  %3921 = vmatprep.subr.mxu0 0.0
  %3922 = vmatpush1.msra.mxu0 0.0
  %3923 = vmatprep.subr.mxu0 0.0
  %3924 = vmatpush1.msra.mxu0 0.0
  %3925 = vmatprep.subr.mxu0 0.0
  %3926 = vmatpush1.msra.mxu0 0.0
  %3927 = vmatprep.subr.mxu0 0.0
  %3928 = vmatpush1.msra.mxu0 0.0
  %3929 = vmatprep.subr.mxu0 0.0
  %3930 = vmatpush1.msra.mxu0 0.0
  %3931 = vmatprep.subr.mxu0 0.0
  %3932 = vmatpush1.msra.mxu0 0.0
  %3933 = vmatprep.subr.mxu0 0.0
  %3934 = vmatpush1.msra.mxu0 0.0
  %3935 = vmatprep.mubr.f32.mxu0 0.0
  %3936 = vmatmul.mubr.f32.gmra.mrb[0].mxu0 %v3789
  %v3937 = vpop.f32.mrb[0].mxu0
  %v3938 = vadd.f32 0.0, %v3937
  %v3939 = vpop.f32.mrb[0].mxu0
  %3940 = vdwg.mxu0
  %v3942 = vrot.slane %v3938, 6
  %v3944 = vadd.f32 %v473, %v3942
  %v3945 = vxor.u32 %v3944, 2147483648
  %v3946 = vmul.f32 %v3945, 1.442695
  %v3947 = vpow.pop %v3946
  %v3948 = vadd.f32 %v3947, 1.0
  %v3949 = vrcp.pop %v3948
  %v3950 = vmul.f32 1.0, %v3949
  %3951 = vmatprep.subr.mxu0 0.0
  %3952 = vmatpush1.msra.mxu0 %v594
  %3953 = vmatprep.subr.mxu0 0.0
  %3954 = vmatpush1.msra.mxu0 %v595
  %3955 = vmatprep.subr.mxu0 0.0
  %3956 = vmatpush1.msra.mxu0 %v596
  %3957 = vmatprep.subr.mxu0 0.0
  %3958 = vmatpush1.msra.mxu0 %v597
  %3959 = vmatprep.subr.mxu0 0.0
  %3960 = vmatpush1.msra.mxu0 0.0
  %3961 = vmatprep.subr.mxu0 0.0
  %3962 = vmatpush1.msra.mxu0 0.0
  %3963 = vmatprep.subr.mxu0 0.0
  %3964 = vmatpush1.msra.mxu0 0.0
  %3965 = vmatprep.subr.mxu0 0.0
  %3966 = vmatpush1.msra.mxu0 0.0
  %3967 = vmatprep.subr.mxu0 0.0
  %3968 = vmatpush1.msra.mxu0 0.0
  %3969 = vmatprep.subr.mxu0 0.0
  %3970 = vmatpush1.msra.mxu0 0.0
  %3971 = vmatprep.subr.mxu0 0.0
  %3972 = vmatpush1.msra.mxu0 0.0
  %3973 = vmatprep.subr.mxu0 0.0
  %3974 = vmatpush1.msra.mxu0 0.0
  %3975 = vmatprep.subr.mxu0 0.0
  %3976 = vmatpush1.msra.mxu0 0.0
  %3977 = vmatprep.subr.mxu0 0.0
  %3978 = vmatpush1.msra.mxu0 0.0
  %3979 = vmatprep.subr.mxu0 0.0
  %3980 = vmatpush1.msra.mxu0 0.0
  %3981 = vmatprep.subr.mxu0 0.0
  %3982 = vmatpush1.msra.mxu0 0.0
  %3983 = vmatprep.subr.mxu0 0.0
  %3984 = vmatpush1.msra.mxu0 0.0
  %3985 = vmatprep.subr.mxu0 0.0
  %3986 = vmatpush1.msra.mxu0 0.0
  %3987 = vmatprep.subr.mxu0 0.0
  %3988 = vmatpush1.msra.mxu0 0.0
  %3989 = vmatprep.subr.mxu0 0.0
  %3990 = vmatpush1.msra.mxu0 0.0
  %3991 = vmatprep.subr.mxu0 0.0
  %3992 = vmatpush1.msra.mxu0 0.0
  %3993 = vmatprep.subr.mxu0 0.0
  %3994 = vmatpush1.msra.mxu0 0.0
  %3995 = vmatprep.subr.mxu0 0.0
  %3996 = vmatpush1.msra.mxu0 0.0
  %3997 = vmatprep.subr.mxu0 0.0
  %3998 = vmatpush1.msra.mxu0 0.0
  %3999 = vmatprep.subr.mxu0 0.0
  %4000 = vmatpush1.msra.mxu0 0.0
  %4001 = vmatprep.subr.mxu0 0.0
  %4002 = vmatpush1.msra.mxu0 0.0
  %4003 = vmatprep.subr.mxu0 0.0
  %4004 = vmatpush1.msra.mxu0 0.0
  %4005 = vmatprep.subr.mxu0 0.0
  %4006 = vmatpush1.msra.mxu0 0.0
  %4007 = vmatprep.subr.mxu0 0.0
  %4008 = vmatpush1.msra.mxu0 0.0
  %4009 = vmatprep.subr.mxu0 0.0
  %4010 = vmatpush1.msra.mxu0 0.0
  %4011 = vmatprep.subr.mxu0 0.0
  %4012 = vmatpush1.msra.mxu0 0.0
  %4013 = vmatprep.subr.mxu0 0.0
  %4014 = vmatpush1.msra.mxu0 0.0
  %4015 = vmatprep.mubr.f32.mxu0 0.0
  %4016 = vmatmul.mubr.f32.gmra.mrb[0].mxu0 %v3789
  %v4017 = vpop.f32.mrb[0].mxu0
  %v4018 = vadd.f32 %v1006, %v4017
  %v4019 = vpop.f32.mrb[0].mxu0
  %4020 = vdwg.mxu0
  %v4022 = vrot.slane %v4018, 6
  %v4024 = vmul.f32 %v3870, %v4022
  %v4025 = vadd.f32 %v561, %v4024
  %v4026 = vtanh.pop %v4025
  %v4027 = vsub.f32 1.0, %v3950
  %v4028 = vmul.f32 %v4027, %v4026
  %v4029 = vrot.slane %v3538, 2
  %v4031 = vmul.f32 %v3950, %v4029
  %v4032 = vadd.f32 %v4028, %v4031
  %4033 = vst.msk [vmem:[#allocation2 + $0x8] sm:$0x30] %vm1585, %v3786
  %4034 = vst.msk [vmem:[#allocation3] sm:$0xc] %vm1583, %v4032
  %v4036 = vrot.slane %v3786, 4
  %v4037 = vsel %vm47, %v4036, 0
  %4039 = vmatprep.subr.mxu0 0.0
  %4040 = vmatpush1.msra.mxu0 %v569
  %4041 = vmatprep.subr.mxu0 0.0
  %4042 = vmatpush1.msra.mxu0 %v570
  %4043 = vmatprep.subr.mxu0 0.0
  %4044 = vmatpush1.msra.mxu0 %v571
  %4045 = vmatprep.subr.mxu0 0.0
  %4046 = vmatpush1.msra.mxu0 %v572
  %4047 = vmatprep.subr.mxu0 0.0
  %4048 = vmatpush1.msra.mxu0 0.0
  %4049 = vmatprep.subr.mxu0 0.0
  %4050 = vmatpush1.msra.mxu0 0.0
  %4051 = vmatprep.subr.mxu0 0.0
  %4052 = vmatpush1.msra.mxu0 0.0
  %4053 = vmatprep.subr.mxu0 0.0
  %4054 = vmatpush1.msra.mxu0 0.0
  %4055 = vmatprep.subr.mxu0 0.0
  %4056 = vmatpush1.msra.mxu0 0.0
  %4057 = vmatprep.subr.mxu0 0.0
  %4058 = vmatpush1.msra.mxu0 0.0
  %4059 = vmatprep.subr.mxu0 0.0
  %4060 = vmatpush1.msra.mxu0 0.0
  %4061 = vmatprep.subr.mxu0 0.0
  %4062 = vmatpush1.msra.mxu0 0.0
  %4063 = vmatprep.subr.mxu0 0.0
  %4064 = vmatpush1.msra.mxu0 0.0
  %4065 = vmatprep.subr.mxu0 0.0
  %4066 = vmatpush1.msra.mxu0 0.0
  %4067 = vmatprep.subr.mxu0 0.0
  %4068 = vmatpush1.msra.mxu0 0.0
  %4069 = vmatprep.subr.mxu0 0.0
  %4070 = vmatpush1.msra.mxu0 0.0
  %4071 = vmatprep.subr.mxu0 0.0
  %4072 = vmatpush1.msra.mxu0 0.0
  %4073 = vmatprep.subr.mxu0 0.0
  %4074 = vmatpush1.msra.mxu0 0.0
  %4075 = vmatprep.subr.mxu0 0.0
  %4076 = vmatpush1.msra.mxu0 0.0
  %4077 = vmatprep.subr.mxu0 0.0
  %4078 = vmatpush1.msra.mxu0 0.0
  %4079 = vmatprep.subr.mxu0 0.0
  %4080 = vmatpush1.msra.mxu0 0.0
  %4081 = vmatprep.subr.mxu0 0.0
  %4082 = vmatpush1.msra.mxu0 0.0
  %4083 = vmatprep.subr.mxu0 0.0
  %4084 = vmatpush1.msra.mxu0 0.0
  %4085 = vmatprep.subr.mxu0 0.0
  %4086 = vmatpush1.msra.mxu0 0.0
  %4087 = vmatprep.subr.mxu0 0.0
  %4088 = vmatpush1.msra.mxu0 0.0
  %4089 = vmatprep.subr.mxu0 0.0
  %4090 = vmatpush1.msra.mxu0 0.0
  %4091 = vmatprep.subr.mxu0 0.0
  %4092 = vmatpush1.msra.mxu0 0.0
  %4093 = vmatprep.subr.mxu0 0.0
  %4094 = vmatpush1.msra.mxu0 0.0
  %4095 = vmatprep.subr.mxu0 0.0
  %4096 = vmatpush1.msra.mxu0 0.0
  %4097 = vmatprep.subr.mxu0 0.0
  %4098 = vmatpush1.msra.mxu0 0.0
  %4099 = vmatprep.subr.mxu0 0.0
  %4100 = vmatpush1.msra.mxu0 0.0
  %4101 = vmatprep.subr.mxu0 0.0
  %4102 = vmatpush1.msra.mxu0 0.0
  %4103 = vmatprep.mubr.f32.mxu0 0.0
  %4104 = vmatmul.mubr.f32.gmra.mrb[0].mxu0 %v4037
  %v4105 = vpop.f32.mrb[0].mxu0
  %v4106 = vadd.f32 0.0, %v4105
  %v4107 = vpop.f32.mrb[0].mxu0
  %4108 = vdwg.mxu0
  %v4110 = vrot.slane %v4106, 2
  %v4112 = vadd.f32 %v126, %v4110
  %v4113 = vxor.u32 %v4112, 2147483648
  %v4114 = vmul.f32 %v4113, 1.442695
  %v4115 = vpow.pop %v4114
  %v4116 = vadd.f32 %v4115, 1.0
  %v4117 = vrcp.pop %v4116
  %v4118 = vmul.f32 1.0, %v4117
  %4119 = vmatprep.subr.mxu0 0.0
  %4120 = vmatpush1.msra.mxu0 %v574
  %4121 = vmatprep.subr.mxu0 0.0
  %4122 = vmatpush1.msra.mxu0 %v575
  %4123 = vmatprep.subr.mxu0 0.0
  %4124 = vmatpush1.msra.mxu0 %v576
  %4125 = vmatprep.subr.mxu0 0.0
  %4126 = vmatpush1.msra.mxu0 %v577
  %4127 = vmatprep.subr.mxu0 0.0
  %4128 = vmatpush1.msra.mxu0 0.0
  %4129 = vmatprep.subr.mxu0 0.0
  %4130 = vmatpush1.msra.mxu0 0.0
  %4131 = vmatprep.subr.mxu0 0.0
  %4132 = vmatpush1.msra.mxu0 0.0
  %4133 = vmatprep.subr.mxu0 0.0
  %4134 = vmatpush1.msra.mxu0 0.0
  %4135 = vmatprep.subr.mxu0 0.0
  %4136 = vmatpush1.msra.mxu0 0.0
  %4137 = vmatprep.subr.mxu0 0.0
  %4138 = vmatpush1.msra.mxu0 0.0
  %4139 = vmatprep.subr.mxu0 0.0
  %4140 = vmatpush1.msra.mxu0 0.0
  %4141 = vmatprep.subr.mxu0 0.0
  %4142 = vmatpush1.msra.mxu0 0.0
  %4143 = vmatprep.subr.mxu0 0.0
  %4144 = vmatpush1.msra.mxu0 0.0
  %4145 = vmatprep.subr.mxu0 0.0
  %4146 = vmatpush1.msra.mxu0 0.0
  %4147 = vmatprep.subr.mxu0 0.0
  %4148 = vmatpush1.msra.mxu0 0.0
  %4149 = vmatprep.subr.mxu0 0.0
  %4150 = vmatpush1.msra.mxu0 0.0
  %4151 = vmatprep.subr.mxu0 0.0
  %4152 = vmatpush1.msra.mxu0 0.0
  %4153 = vmatprep.subr.mxu0 0.0
  %4154 = vmatpush1.msra.mxu0 0.0
  %4155 = vmatprep.subr.mxu0 0.0
  %4156 = vmatpush1.msra.mxu0 0.0
  %4157 = vmatprep.subr.mxu0 0.0
  %4158 = vmatpush1.msra.mxu0 0.0
  %4159 = vmatprep.subr.mxu0 0.0
  %4160 = vmatpush1.msra.mxu0 0.0
  %4161 = vmatprep.subr.mxu0 0.0
  %4162 = vmatpush1.msra.mxu0 0.0
  %4163 = vmatprep.subr.mxu0 0.0
  %4164 = vmatpush1.msra.mxu0 0.0
  %4165 = vmatprep.subr.mxu0 0.0
  %4166 = vmatpush1.msra.mxu0 0.0
  %4167 = vmatprep.subr.mxu0 0.0
  %4168 = vmatpush1.msra.mxu0 0.0
  %4169 = vmatprep.subr.mxu0 0.0
  %4170 = vmatpush1.msra.mxu0 0.0
  %4171 = vmatprep.subr.mxu0 0.0
  %4172 = vmatpush1.msra.mxu0 0.0
  %4173 = vmatprep.subr.mxu0 0.0
  %4174 = vmatpush1.msra.mxu0 0.0
  %4175 = vmatprep.subr.mxu0 0.0
  %4176 = vmatpush1.msra.mxu0 0.0
  %4177 = vmatprep.subr.mxu0 0.0
  %4178 = vmatpush1.msra.mxu0 0.0
  %4179 = vmatprep.subr.mxu0 0.0
  %4180 = vmatpush1.msra.mxu0 0.0
  %4181 = vmatprep.subr.mxu0 0.0
  %4182 = vmatpush1.msra.mxu0 0.0
  %4183 = vmatprep.mubr.f32.mxu0 0.0
  %4184 = vmatmul.mubr.f32.gmra.mrb[0].mxu0 %v4037
  %v4185 = vpop.f32.mrb[0].mxu0
  %v4186 = vadd.f32 0.0, %v4185
  %v4187 = vpop.f32.mrb[0].mxu0
  %4188 = vdwg.mxu0
  %v4190 = vrot.slane %v4186, 2
  %v4192 = vadd.f32 %v214, %v4190
  %v4193 = vxor.u32 %v4192, 2147483648
  %v4194 = vmul.f32 %v4193, 1.442695
  %v4195 = vpow.pop %v4194
  %v4196 = vadd.f32 %v4195, 1.0
  %v4197 = vrcp.pop %v4196
  %v4198 = vmul.f32 1.0, %v4197
  %4199 = vmatprep.subr.mxu0 0.0
  %4200 = vmatpush1.msra.mxu0 %v579
  %4201 = vmatprep.subr.mxu0 0.0
  %4202 = vmatpush1.msra.mxu0 %v580
  %4203 = vmatprep.subr.mxu0 0.0
  %4204 = vmatpush1.msra.mxu0 %v581
  %4205 = vmatprep.subr.mxu0 0.0
  %4206 = vmatpush1.msra.mxu0 %v582
  %4207 = vmatprep.subr.mxu0 0.0
  %4208 = vmatpush1.msra.mxu0 0.0
  %4209 = vmatprep.subr.mxu0 0.0
  %4210 = vmatpush1.msra.mxu0 0.0
  %4211 = vmatprep.subr.mxu0 0.0
  %4212 = vmatpush1.msra.mxu0 0.0
  %4213 = vmatprep.subr.mxu0 0.0
  %4214 = vmatpush1.msra.mxu0 0.0
  %4215 = vmatprep.subr.mxu0 0.0
  %4216 = vmatpush1.msra.mxu0 0.0
  %4217 = vmatprep.subr.mxu0 0.0
  %4218 = vmatpush1.msra.mxu0 0.0
  %4219 = vmatprep.subr.mxu0 0.0
  %4220 = vmatpush1.msra.mxu0 0.0
  %4221 = vmatprep.subr.mxu0 0.0
  %4222 = vmatpush1.msra.mxu0 0.0
  %4223 = vmatprep.subr.mxu0 0.0
  %4224 = vmatpush1.msra.mxu0 0.0
  %4225 = vmatprep.subr.mxu0 0.0
  %4226 = vmatpush1.msra.mxu0 0.0
  %4227 = vmatprep.subr.mxu0 0.0
  %4228 = vmatpush1.msra.mxu0 0.0
  %4229 = vmatprep.subr.mxu0 0.0
  %4230 = vmatpush1.msra.mxu0 0.0
  %4231 = vmatprep.subr.mxu0 0.0
  %4232 = vmatpush1.msra.mxu0 0.0
  %4233 = vmatprep.subr.mxu0 0.0
  %4234 = vmatpush1.msra.mxu0 0.0
  %4235 = vmatprep.subr.mxu0 0.0
  %4236 = vmatpush1.msra.mxu0 0.0
  %4237 = vmatprep.subr.mxu0 0.0
  %4238 = vmatpush1.msra.mxu0 0.0
  %4239 = vmatprep.subr.mxu0 0.0
  %4240 = vmatpush1.msra.mxu0 0.0
  %4241 = vmatprep.subr.mxu0 0.0
  %4242 = vmatpush1.msra.mxu0 0.0
  %4243 = vmatprep.subr.mxu0 0.0
  %4244 = vmatpush1.msra.mxu0 0.0
  %4245 = vmatprep.subr.mxu0 0.0
  %4246 = vmatpush1.msra.mxu0 0.0
  %4247 = vmatprep.subr.mxu0 0.0
  %4248 = vmatpush1.msra.mxu0 0.0
  %4249 = vmatprep.subr.mxu0 0.0
  %4250 = vmatpush1.msra.mxu0 0.0
  %4251 = vmatprep.subr.mxu0 0.0
  %4252 = vmatpush1.msra.mxu0 0.0
  %4253 = vmatprep.subr.mxu0 0.0
  %4254 = vmatpush1.msra.mxu0 0.0
  %4255 = vmatprep.subr.mxu0 0.0
  %4256 = vmatpush1.msra.mxu0 0.0
  %4257 = vmatprep.subr.mxu0 0.0
  %4258 = vmatpush1.msra.mxu0 0.0
  %4259 = vmatprep.subr.mxu0 0.0
  %4260 = vmatpush1.msra.mxu0 0.0
  %4261 = vmatprep.subr.mxu0 0.0
  %4262 = vmatpush1.msra.mxu0 0.0
  %4263 = vmatprep.mubr.f32.mxu0 0.0
  %4264 = vmatmul.mubr.f32.gmra.mrb[0].mxu0 %v4037
  %v4265 = vpop.f32.mrb[0].mxu0
  %v4266 = vadd.f32 %v763, %v4265
  %v4267 = vpop.f32.mrb[0].mxu0
  %4268 = vdwg.mxu0
  %v4270 = vrot.slane %v4266, 2
  %v4272 = vmul.f32 %v4118, %v4270
  %v4273 = vadd.f32 %v302, %v4272
  %v4274 = vtanh.pop %v4273
  %v4275 = vsub.f32 1.0, %v4198
  %v4276 = vmul.f32 %v4275, %v4274
  %v4277 = vrot.slane %v3786, 6
  %v4279 = vmul.f32 %v4198, %v4277
  %v4280 = vadd.f32 %v4276, %v4279
  %v4282 = vrot.slane %v4032, 2
  %v4283 = vsel %vm47, %v4282, 0
  %4285 = vmatprep.subr.mxu0 0.0
  %4286 = vmatpush1.msra.mxu0 %v584
  %4287 = vmatprep.subr.mxu0 0.0
  %4288 = vmatpush1.msra.mxu0 %v585
  %4289 = vmatprep.subr.mxu0 0.0
  %4290 = vmatpush1.msra.mxu0 %v586
  %4291 = vmatprep.subr.mxu0 0.0
  %4292 = vmatpush1.msra.mxu0 %v587
  %4293 = vmatprep.subr.mxu0 0.0
  %4294 = vmatpush1.msra.mxu0 0.0
  %4295 = vmatprep.subr.mxu0 0.0
  %4296 = vmatpush1.msra.mxu0 0.0
  %4297 = vmatprep.subr.mxu0 0.0
  %4298 = vmatpush1.msra.mxu0 0.0
  %4299 = vmatprep.subr.mxu0 0.0
  %4300 = vmatpush1.msra.mxu0 0.0
  %4301 = vmatprep.subr.mxu0 0.0
  %4302 = vmatpush1.msra.mxu0 0.0
  %4303 = vmatprep.subr.mxu0 0.0
  %4304 = vmatpush1.msra.mxu0 0.0
  %4305 = vmatprep.subr.mxu0 0.0
  %4306 = vmatpush1.msra.mxu0 0.0
  %4307 = vmatprep.subr.mxu0 0.0
  %4308 = vmatpush1.msra.mxu0 0.0
  %4309 = vmatprep.subr.mxu0 0.0
  %4310 = vmatpush1.msra.mxu0 0.0
  %4311 = vmatprep.subr.mxu0 0.0
  %4312 = vmatpush1.msra.mxu0 0.0
  %4313 = vmatprep.subr.mxu0 0.0
  %4314 = vmatpush1.msra.mxu0 0.0
  %4315 = vmatprep.subr.mxu0 0.0
  %4316 = vmatpush1.msra.mxu0 0.0
  %4317 = vmatprep.subr.mxu0 0.0
  %4318 = vmatpush1.msra.mxu0 0.0
  %4319 = vmatprep.subr.mxu0 0.0
  %4320 = vmatpush1.msra.mxu0 0.0
  %4321 = vmatprep.subr.mxu0 0.0
  %4322 = vmatpush1.msra.mxu0 0.0
  %4323 = vmatprep.subr.mxu0 0.0
  %4324 = vmatpush1.msra.mxu0 0.0
  %4325 = vmatprep.subr.mxu0 0.0
  %4326 = vmatpush1.msra.mxu0 0.0
  %4327 = vmatprep.subr.mxu0 0.0
  %4328 = vmatpush1.msra.mxu0 0.0
  %4329 = vmatprep.subr.mxu0 0.0
  %4330 = vmatpush1.msra.mxu0 0.0
  %4331 = vmatprep.subr.mxu0 0.0
  %4332 = vmatpush1.msra.mxu0 0.0
  %4333 = vmatprep.subr.mxu0 0.0
  %4334 = vmatpush1.msra.mxu0 0.0
  %4335 = vmatprep.subr.mxu0 0.0
  %4336 = vmatpush1.msra.mxu0 0.0
  %4337 = vmatprep.subr.mxu0 0.0
  %4338 = vmatpush1.msra.mxu0 0.0
  %4339 = vmatprep.subr.mxu0 0.0
  %4340 = vmatpush1.msra.mxu0 0.0
  %4341 = vmatprep.subr.mxu0 0.0
  %4342 = vmatpush1.msra.mxu0 0.0
  %4343 = vmatprep.subr.mxu0 0.0
  %4344 = vmatpush1.msra.mxu0 0.0
  %4345 = vmatprep.subr.mxu0 0.0
  %4346 = vmatpush1.msra.mxu0 0.0
  %4347 = vmatprep.subr.mxu0 0.0
  %4348 = vmatpush1.msra.mxu0 0.0
  %4349 = vmatprep.mubr.f32.mxu0 0.0
  %4350 = vmatmul.mubr.f32.gmra.mrb[0].mxu0 %v4283
  %v4351 = vpop.f32.mrb[0].mxu0
  %v4352 = vadd.f32 0.0, %v4351
  %v4353 = vpop.f32.mrb[0].mxu0
  %4354 = vdwg.mxu0
  %v4355 = vadd.f32 %v385, %v4352
  %v4356 = vxor.u32 %v4355, 2147483648
  %v4357 = vmul.f32 %v4356, 1.442695
  %v4358 = vpow.pop %v4357
  %v4359 = vadd.f32 %v4358, 1.0
  %v4360 = vrcp.pop %v4359
  %v4361 = vmul.f32 1.0, %v4360
  %4362 = vmatprep.subr.mxu0 0.0
  %4363 = vmatpush1.msra.mxu0 %v589
  %4364 = vmatprep.subr.mxu0 0.0
  %4365 = vmatpush1.msra.mxu0 %v590
  %4366 = vmatprep.subr.mxu0 0.0
  %4367 = vmatpush1.msra.mxu0 %v591
  %4368 = vmatprep.subr.mxu0 0.0
  %4369 = vmatpush1.msra.mxu0 %v592
  %4370 = vmatprep.subr.mxu0 0.0
  %4371 = vmatpush1.msra.mxu0 0.0
  %4372 = vmatprep.subr.mxu0 0.0
  %4373 = vmatpush1.msra.mxu0 0.0
  %4374 = vmatprep.subr.mxu0 0.0
  %4375 = vmatpush1.msra.mxu0 0.0
  %4376 = vmatprep.subr.mxu0 0.0
  %4377 = vmatpush1.msra.mxu0 0.0
  %4378 = vmatprep.subr.mxu0 0.0
  %4379 = vmatpush1.msra.mxu0 0.0
  %4380 = vmatprep.subr.mxu0 0.0
  %4381 = vmatpush1.msra.mxu0 0.0
  %4382 = vmatprep.subr.mxu0 0.0
  %4383 = vmatpush1.msra.mxu0 0.0
  %4384 = vmatprep.subr.mxu0 0.0
  %4385 = vmatpush1.msra.mxu0 0.0
  %4386 = vmatprep.subr.mxu0 0.0
  %4387 = vmatpush1.msra.mxu0 0.0
  %4388 = vmatprep.subr.mxu0 0.0
  %4389 = vmatpush1.msra.mxu0 0.0
  %4390 = vmatprep.subr.mxu0 0.0
  %4391 = vmatpush1.msra.mxu0 0.0
  %4392 = vmatprep.subr.mxu0 0.0
  %4393 = vmatpush1.msra.mxu0 0.0
  %4394 = vmatprep.subr.mxu0 0.0
  %4395 = vmatpush1.msra.mxu0 0.0
  %4396 = vmatprep.subr.mxu0 0.0
  %4397 = vmatpush1.msra.mxu0 0.0
  %4398 = vmatprep.subr.mxu0 0.0
  %4399 = vmatpush1.msra.mxu0 0.0
  %4400 = vmatprep.subr.mxu0 0.0
  %4401 = vmatpush1.msra.mxu0 0.0
  %4402 = vmatprep.subr.mxu0 0.0
  %4403 = vmatpush1.msra.mxu0 0.0
  %4404 = vmatprep.subr.mxu0 0.0
  %4405 = vmatpush1.msra.mxu0 0.0
  %4406 = vmatprep.subr.mxu0 0.0
  %4407 = vmatpush1.msra.mxu0 0.0
  %4408 = vmatprep.subr.mxu0 0.0
  %4409 = vmatpush1.msra.mxu0 0.0
  %4410 = vmatprep.subr.mxu0 0.0
  %4411 = vmatpush1.msra.mxu0 0.0
  %4412 = vmatprep.subr.mxu0 0.0
  %4413 = vmatpush1.msra.mxu0 0.0
  %4414 = vmatprep.subr.mxu0 0.0
  %4415 = vmatpush1.msra.mxu0 0.0
  %4416 = vmatprep.subr.mxu0 0.0
  %4417 = vmatpush1.msra.mxu0 0.0
  %4418 = vmatprep.subr.mxu0 0.0
  %4419 = vmatpush1.msra.mxu0 0.0
  %4420 = vmatprep.subr.mxu0 0.0
  %4421 = vmatpush1.msra.mxu0 0.0
  %4422 = vmatprep.subr.mxu0 0.0
  %4423 = vmatpush1.msra.mxu0 0.0
  %4424 = vmatprep.subr.mxu0 0.0
  %4425 = vmatpush1.msra.mxu0 0.0
  %4426 = vmatprep.mubr.f32.mxu0 0.0
  %4427 = vmatmul.mubr.f32.gmra.mrb[0].mxu0 %v4283
  %v4428 = vpop.f32.mrb[0].mxu0
  %v4429 = vadd.f32 0.0, %v4428
  %v4430 = vpop.f32.mrb[0].mxu0
  %4431 = vdwg.mxu0
  %v4432 = vadd.f32 %v473, %v4429
  %v4433 = vxor.u32 %v4432, 2147483648
  %v4434 = vmul.f32 %v4433, 1.442695
  %v4435 = vpow.pop %v4434
  %v4436 = vadd.f32 %v4435, 1.0
  %v4437 = vrcp.pop %v4436
  %v4438 = vmul.f32 1.0, %v4437
  %4439 = vmatprep.subr.mxu0 0.0
  %4440 = vmatpush1.msra.mxu0 %v594
  %4441 = vmatprep.subr.mxu0 0.0
  %4442 = vmatpush1.msra.mxu0 %v595
  %4443 = vmatprep.subr.mxu0 0.0
  %4444 = vmatpush1.msra.mxu0 %v596
  %4445 = vmatprep.subr.mxu0 0.0
  %4446 = vmatpush1.msra.mxu0 %v597
  %4447 = vmatprep.subr.mxu0 0.0
  %4448 = vmatpush1.msra.mxu0 0.0
  %4449 = vmatprep.subr.mxu0 0.0
  %4450 = vmatpush1.msra.mxu0 0.0
  %4451 = vmatprep.subr.mxu0 0.0
  %4452 = vmatpush1.msra.mxu0 0.0
  %4453 = vmatprep.subr.mxu0 0.0
  %4454 = vmatpush1.msra.mxu0 0.0
  %4455 = vmatprep.subr.mxu0 0.0
  %4456 = vmatpush1.msra.mxu0 0.0
  %4457 = vmatprep.subr.mxu0 0.0
  %4458 = vmatpush1.msra.mxu0 0.0
  %4459 = vmatprep.subr.mxu0 0.0
  %4460 = vmatpush1.msra.mxu0 0.0
  %4461 = vmatprep.subr.mxu0 0.0
  %4462 = vmatpush1.msra.mxu0 0.0
  %4463 = vmatprep.subr.mxu0 0.0
  %4464 = vmatpush1.msra.mxu0 0.0
  %4465 = vmatprep.subr.mxu0 0.0
  %4466 = vmatpush1.msra.mxu0 0.0
  %4467 = vmatprep.subr.mxu0 0.0
  %4468 = vmatpush1.msra.mxu0 0.0
  %4469 = vmatprep.subr.mxu0 0.0
  %4470 = vmatpush1.msra.mxu0 0.0
  %4471 = vmatprep.subr.mxu0 0.0
  %4472 = vmatpush1.msra.mxu0 0.0
  %4473 = vmatprep.subr.mxu0 0.0
  %4474 = vmatpush1.msra.mxu0 0.0
  %4475 = vmatprep.subr.mxu0 0.0
  %4476 = vmatpush1.msra.mxu0 0.0
  %4477 = vmatprep.subr.mxu0 0.0
  %4478 = vmatpush1.msra.mxu0 0.0
  %4479 = vmatprep.subr.mxu0 0.0
  %4480 = vmatpush1.msra.mxu0 0.0
  %4481 = vmatprep.subr.mxu0 0.0
  %4482 = vmatpush1.msra.mxu0 0.0
  %4483 = vmatprep.subr.mxu0 0.0
  %4484 = vmatpush1.msra.mxu0 0.0
  %4485 = vmatprep.subr.mxu0 0.0
  %4486 = vmatpush1.msra.mxu0 0.0
  %4487 = vmatprep.subr.mxu0 0.0
  %4488 = vmatpush1.msra.mxu0 0.0
  %4489 = vmatprep.subr.mxu0 0.0
  %4490 = vmatpush1.msra.mxu0 0.0
  %4491 = vmatprep.subr.mxu0 0.0
  %4492 = vmatpush1.msra.mxu0 0.0
  %4493 = vmatprep.subr.mxu0 0.0
  %4494 = vmatpush1.msra.mxu0 0.0
  %4495 = vmatprep.subr.mxu0 0.0
  %4496 = vmatpush1.msra.mxu0 0.0
  %4497 = vmatprep.subr.mxu0 0.0
  %4498 = vmatpush1.msra.mxu0 0.0
  %4499 = vmatprep.subr.mxu0 0.0
  %4500 = vmatpush1.msra.mxu0 0.0
  %4501 = vmatprep.subr.mxu0 0.0
  %4502 = vmatpush1.msra.mxu0 0.0
  %4503 = vmatprep.mubr.f32.mxu0 0.0
  %4504 = vmatmul.mubr.f32.gmra.mrb[0].mxu0 %v4283
  %v4505 = vpop.f32.mrb[0].mxu0
  %v4506 = vadd.f32 %v1006, %v4505
  %v4507 = vpop.f32.mrb[0].mxu0
  %4508 = vdwg.mxu0
  %v4509 = vmul.f32 %v4361, %v4506
  %v4510 = vadd.f32 %v561, %v4509
  %v4511 = vtanh.pop %v4510
  %v4512 = vsub.f32 1.0, %v4438
  %v4513 = vmul.f32 %v4512, %v4511
  %v4515 = vmul.f32 %v4438, %v4282
  %v4516 = vadd.f32 %v4513, %v4515
  %4517 = vst.msk [vmem:[#allocation2 + $0x8] sm:$0xc0] %vm1090, %v4280
  %4518 = vst.msk [vmem:[#allocation3] sm:$0x3] %vm1088, %v4516
  %v4519 = vld [vmem:[#allocation2] sm:$0xff]
  %v4520 = vld [vmem:[#allocation2 + $0x8] sm:$0xff]
  %v4521 = vld [vmem:[#allocation3] sm:$0xff]
  %v4522 = vld [vmem:[#allocation3 + $0x8] sm:$0xff]
  %v4523 = vld [vmem:[%s3] sm:$0xff]
  %v4524 = vld [vmem:[%s3 + $0x8] sm:$0xff]
  %v4525 = vld [vmem:[%s3 + $0x10] sm:$0xff]
  %v4526 = vld [vmem:[%s3 + $0x18] sm:$0xff]
  %s4527 = scalar_lea.vmem %s3, 32
  %v4528 = vld [vmem:[%s4527] sm:$0xff]
  %v4529 = vld [vmem:[%s4527 + $0x8] sm:$0xff]
  %v4530 = vld [vmem:[%s4527 + $0x10] sm:$0xff]
  %v4531 = vld [vmem:[%s4527 + $0x18] sm:$0xff]
  %v4533 = vsel %vm47, %v4521, 0
  %v4536 = vsel %vm47, %v4522, 0
  %4538 = vmatprep.subr.mxu0 0.0
  %4539 = vmatpush1.msra.mxu0 %v4528
  %4540 = vmatprep.subr.mxu0 0.0
  %4541 = vmatpush1.msra.mxu0 %v4529
  %4542 = vmatprep.subr.mxu0 0.0
  %4543 = vmatpush1.msra.mxu0 %v4530
  %4544 = vmatprep.subr.mxu0 0.0
  %4545 = vmatpush1.msra.mxu0 %v4531
  %4546 = vmatprep.subr.mxu0 0.0
  %4547 = vmatpush1.msra.mxu0 0.0
  %4548 = vmatprep.subr.mxu0 0.0
  %4549 = vmatpush1.msra.mxu0 0.0
  %4550 = vmatprep.subr.mxu0 0.0
  %4551 = vmatpush1.msra.mxu0 0.0
  %4552 = vmatprep.subr.mxu0 0.0
  %4553 = vmatpush1.msra.mxu0 0.0
  %4554 = vmatprep.subr.mxu0 0.0
  %4555 = vmatpush1.msra.mxu0 0.0
  %4556 = vmatprep.subr.mxu0 0.0
  %4557 = vmatpush1.msra.mxu0 0.0
  %4558 = vmatprep.subr.mxu0 0.0
  %4559 = vmatpush1.msra.mxu0 0.0
  %4560 = vmatprep.subr.mxu0 0.0
  %4561 = vmatpush1.msra.mxu0 0.0
  %4562 = vmatprep.subr.mxu0 0.0
  %4563 = vmatpush1.msra.mxu0 0.0
  %4564 = vmatprep.subr.mxu0 0.0
  %4565 = vmatpush1.msra.mxu0 0.0
  %4566 = vmatprep.subr.mxu0 0.0
  %4567 = vmatpush1.msra.mxu0 0.0
  %4568 = vmatprep.subr.mxu0 0.0
  %4569 = vmatpush1.msra.mxu0 0.0
  %4570 = vmatprep.subr.mxu0 0.0
  %4571 = vmatpush1.msra.mxu0 0.0
  %4572 = vmatprep.subr.mxu0 0.0
  %4573 = vmatpush1.msra.mxu0 0.0
  %4574 = vmatprep.subr.mxu0 0.0
  %4575 = vmatpush1.msra.mxu0 0.0
  %4576 = vmatprep.subr.mxu0 0.0
  %4577 = vmatpush1.msra.mxu0 0.0
  %4578 = vmatprep.subr.mxu0 0.0
  %4579 = vmatpush1.msra.mxu0 0.0
  %4580 = vmatprep.subr.mxu0 0.0
  %4581 = vmatpush1.msra.mxu0 0.0
  %4582 = vmatprep.subr.mxu0 0.0
  %4583 = vmatpush1.msra.mxu0 0.0
  %4584 = vmatprep.subr.mxu0 0.0
  %4585 = vmatpush1.msra.mxu0 0.0
  %4586 = vmatprep.subr.mxu0 0.0
  %4587 = vmatpush1.msra.mxu0 0.0
  %4588 = vmatprep.subr.mxu0 0.0
  %4589 = vmatpush1.msra.mxu0 0.0
  %4590 = vmatprep.subr.mxu0 0.0
  %4591 = vmatpush1.msra.mxu0 0.0
  %4592 = vmatprep.subr.mxu0 0.0
  %4593 = vmatpush1.msra.mxu0 0.0
  %4594 = vmatprep.subr.mxu0 0.0
  %4595 = vmatpush1.msra.mxu0 0.0
  %4596 = vmatprep.subr.mxu0 0.0
  %4597 = vmatpush1.msra.mxu0 0.0
  %4598 = vmatprep.subr.mxu0 0.0
  %4599 = vmatpush1.msra.mxu0 0.0
  %4600 = vmatprep.subr.mxu0 0.0
  %4601 = vmatpush1.msra.mxu0 0.0
  %4602 = vmatprep.mubr.f32.mxu0 0.0
  %4603 = vmatmul.mubr.f32.gmra.mrb[0].mxu0 %v4533
  %v4604 = vpop.f32.mrb[0].mxu0
  %v4605 = vadd.f32 0.0, %v4604
  %v4606 = vpop.f32.mrb[0].mxu0
  %4607 = vmatprep.mubr.f32.mxu0 0.0
  %4608 = vmatmul.mubr.f32.gmra.mrb[0].mxu0 %v4536
  %v4609 = vpop.f32.mrb[0].mxu0
  %v4610 = vadd.f32 0.0, %v4609
  %v4611 = vpop.f32.mrb[0].mxu0
  %4612 = vdwg.mxu0
  %v4614 = vsel %vm47, %v4519, 0
  %v4617 = vsel %vm47, %v4520, 0
  %4619 = vmatprep.subr.mxu0 0.0
  %4620 = vmatpush1.msra.mxu0 %v4523
  %4621 = vmatprep.subr.mxu0 0.0
  %4622 = vmatpush1.msra.mxu0 %v4524
  %4623 = vmatprep.subr.mxu0 0.0
  %4624 = vmatpush1.msra.mxu0 %v4525
  %4625 = vmatprep.subr.mxu0 0.0
  %4626 = vmatpush1.msra.mxu0 %v4526
  %4627 = vmatprep.subr.mxu0 0.0
  %4628 = vmatpush1.msra.mxu0 0.0
  %4629 = vmatprep.subr.mxu0 0.0
  %4630 = vmatpush1.msra.mxu0 0.0
  %4631 = vmatprep.subr.mxu0 0.0
  %4632 = vmatpush1.msra.mxu0 0.0
  %4633 = vmatprep.subr.mxu0 0.0
  %4634 = vmatpush1.msra.mxu0 0.0
  %4635 = vmatprep.subr.mxu0 0.0
  %4636 = vmatpush1.msra.mxu0 0.0
  %4637 = vmatprep.subr.mxu0 0.0
  %4638 = vmatpush1.msra.mxu0 0.0
  %4639 = vmatprep.subr.mxu0 0.0
  %4640 = vmatpush1.msra.mxu0 0.0
  %4641 = vmatprep.subr.mxu0 0.0
  %4642 = vmatpush1.msra.mxu0 0.0
  %4643 = vmatprep.subr.mxu0 0.0
  %4644 = vmatpush1.msra.mxu0 0.0
  %4645 = vmatprep.subr.mxu0 0.0
  %4646 = vmatpush1.msra.mxu0 0.0
  %4647 = vmatprep.subr.mxu0 0.0
  %4648 = vmatpush1.msra.mxu0 0.0
  %4649 = vmatprep.subr.mxu0 0.0
  %4650 = vmatpush1.msra.mxu0 0.0
  %4651 = vmatprep.subr.mxu0 0.0
  %4652 = vmatpush1.msra.mxu0 0.0
  %4653 = vmatprep.subr.mxu0 0.0
  %4654 = vmatpush1.msra.mxu0 0.0
  %4655 = vmatprep.subr.mxu0 0.0
  %4656 = vmatpush1.msra.mxu0 0.0
  %4657 = vmatprep.subr.mxu0 0.0
  %4658 = vmatpush1.msra.mxu0 0.0
  %4659 = vmatprep.subr.mxu0 0.0
  %4660 = vmatpush1.msra.mxu0 0.0
  %4661 = vmatprep.subr.mxu0 0.0
  %4662 = vmatpush1.msra.mxu0 0.0
  %4663 = vmatprep.subr.mxu0 0.0
  %4664 = vmatpush1.msra.mxu0 0.0
  %4665 = vmatprep.subr.mxu0 0.0
  %4666 = vmatpush1.msra.mxu0 0.0
  %4667 = vmatprep.subr.mxu0 0.0
  %4668 = vmatpush1.msra.mxu0 0.0
  %4669 = vmatprep.subr.mxu0 0.0
  %4670 = vmatpush1.msra.mxu0 0.0
  %4671 = vmatprep.subr.mxu0 0.0
  %4672 = vmatpush1.msra.mxu0 0.0
  %4673 = vmatprep.subr.mxu0 0.0
  %4674 = vmatpush1.msra.mxu0 0.0
  %4675 = vmatprep.subr.mxu0 0.0
  %4676 = vmatpush1.msra.mxu0 0.0
  %4677 = vmatprep.subr.mxu0 0.0
  %4678 = vmatpush1.msra.mxu0 0.0
  %4679 = vmatprep.subr.mxu0 0.0
  %4680 = vmatpush1.msra.mxu0 0.0
  %4681 = vmatprep.subr.mxu0 0.0
  %4682 = vmatpush1.msra.mxu0 0.0
  %4683 = vmatprep.mubr.f32.mxu0 0.0
  %4684 = vmatmul.mubr.f32.gmra.mrb[0].mxu0 %v4614
  %v4685 = vpop.f32.mrb[0].mxu0
  %v4686 = vadd.f32 %v4605, %v4685
  %v4687 = vpop.f32.mrb[0].mxu0
  %4688 = vmatprep.mubr.f32.mxu0 0.0
  %4689 = vmatmul.mubr.f32.gmra.mrb[0].mxu0 %v4617
  %v4690 = vpop.f32.mrb[0].mxu0
  %v4691 = vadd.f32 %v4610, %v4690
  %v4692 = vpop.f32.mrb[0].mxu0
  %4693 = vdwg.mxu0
  %s4694 = scalar_lea.vmem %s4, 8
  %v4695 = vld [vmem:[%s4694] sm:$0x1]
  %v4697 = vlaneseq
  %v4698 = vshrl.u32 %v4697, 7
  %v4699 = vsub.s32 0, %v4698
  %v4700 = vrot.slane %v4695, %v4699
  %v4702 = vadd.f32 %v4686, %v4700
  %v4703 = vadd.f32 %v4691, %v4700
  %s4704 = scalar_lea.vmem %s3, 64
  %v4705 = vld [vmem:[%s4704] sm:$0xff]
  %v4706 = vld [vmem:[%s4704 + $0x8] sm:$0xff]
  %v4707 = vld [vmem:[%s4704 + $0x10] sm:$0xff]
  %v4708 = vld [vmem:[%s4704 + $0x18] sm:$0xff]
  %s4709 = scalar_lea.vmem %s3, 96
  %v4710 = vld [vmem:[%s4709] sm:$0xff]
  %v4711 = vld [vmem:[%s4709 + $0x8] sm:$0xff]
  %v4712 = vld [vmem:[%s4709 + $0x10] sm:$0xff]
  %v4713 = vld [vmem:[%s4709 + $0x18] sm:$0xff]
  %4714 = vmatprep.subr.mxu0 0.0
  %4715 = vmatpush1.msra.mxu0 %v4710
  %4716 = vmatprep.subr.mxu0 0.0
  %4717 = vmatpush1.msra.mxu0 %v4711
  %4718 = vmatprep.subr.mxu0 0.0
  %4719 = vmatpush1.msra.mxu0 %v4712
  %4720 = vmatprep.subr.mxu0 0.0
  %4721 = vmatpush1.msra.mxu0 %v4713
  %4722 = vmatprep.subr.mxu0 0.0
  %4723 = vmatpush1.msra.mxu0 0.0
  %4724 = vmatprep.subr.mxu0 0.0
  %4725 = vmatpush1.msra.mxu0 0.0
  %4726 = vmatprep.subr.mxu0 0.0
  %4727 = vmatpush1.msra.mxu0 0.0
  %4728 = vmatprep.subr.mxu0 0.0
  %4729 = vmatpush1.msra.mxu0 0.0
  %4730 = vmatprep.subr.mxu0 0.0
  %4731 = vmatpush1.msra.mxu0 0.0
  %4732 = vmatprep.subr.mxu0 0.0
  %4733 = vmatpush1.msra.mxu0 0.0
  %4734 = vmatprep.subr.mxu0 0.0
  %4735 = vmatpush1.msra.mxu0 0.0
  %4736 = vmatprep.subr.mxu0 0.0
  %4737 = vmatpush1.msra.mxu0 0.0
  %4738 = vmatprep.subr.mxu0 0.0
  %4739 = vmatpush1.msra.mxu0 0.0
  %4740 = vmatprep.subr.mxu0 0.0
  %4741 = vmatpush1.msra.mxu0 0.0
  %4742 = vmatprep.subr.mxu0 0.0
  %4743 = vmatpush1.msra.mxu0 0.0
  %4744 = vmatprep.subr.mxu0 0.0
  %4745 = vmatpush1.msra.mxu0 0.0
  %4746 = vmatprep.subr.mxu0 0.0
  %4747 = vmatpush1.msra.mxu0 0.0
  %4748 = vmatprep.subr.mxu0 0.0
  %4749 = vmatpush1.msra.mxu0 0.0
  %4750 = vmatprep.subr.mxu0 0.0
  %4751 = vmatpush1.msra.mxu0 0.0
  %4752 = vmatprep.subr.mxu0 0.0
  %4753 = vmatpush1.msra.mxu0 0.0
  %4754 = vmatprep.subr.mxu0 0.0
  %4755 = vmatpush1.msra.mxu0 0.0
  %4756 = vmatprep.subr.mxu0 0.0
  %4757 = vmatpush1.msra.mxu0 0.0
  %4758 = vmatprep.subr.mxu0 0.0
  %4759 = vmatpush1.msra.mxu0 0.0
  %4760 = vmatprep.subr.mxu0 0.0
  %4761 = vmatpush1.msra.mxu0 0.0
  %4762 = vmatprep.subr.mxu0 0.0
  %4763 = vmatpush1.msra.mxu0 0.0
  %4764 = vmatprep.subr.mxu0 0.0
  %4765 = vmatpush1.msra.mxu0 0.0
  %4766 = vmatprep.subr.mxu0 0.0
  %4767 = vmatpush1.msra.mxu0 0.0
  %4768 = vmatprep.subr.mxu0 0.0
  %4769 = vmatpush1.msra.mxu0 0.0
  %4770 = vmatprep.subr.mxu0 0.0
  %4771 = vmatpush1.msra.mxu0 0.0
  %4772 = vmatprep.subr.mxu0 0.0
  %4773 = vmatpush1.msra.mxu0 0.0
  %4774 = vmatprep.subr.mxu0 0.0
  %4775 = vmatpush1.msra.mxu0 0.0
  %4776 = vmatprep.subr.mxu0 0.0
  %4777 = vmatpush1.msra.mxu0 0.0
  %4778 = vmatprep.mubr.f32.mxu0 0.0
  %4779 = vmatmul.mubr.f32.gmra.mrb[0].mxu0 %v4533
  %v4780 = vpop.f32.mrb[0].mxu0
  %v4781 = vadd.f32 0.0, %v4780
  %v4782 = vpop.f32.mrb[0].mxu0
  %4783 = vmatprep.mubr.f32.mxu0 0.0
  %4784 = vmatmul.mubr.f32.gmra.mrb[0].mxu0 %v4536
  %v4785 = vpop.f32.mrb[0].mxu0
  %v4786 = vadd.f32 0.0, %v4785
  %v4787 = vpop.f32.mrb[0].mxu0
  %4788 = vdwg.mxu0
  %4789 = vmatprep.subr.mxu0 0.0
  %4790 = vmatpush1.msra.mxu0 %v4705
  %4791 = vmatprep.subr.mxu0 0.0
  %4792 = vmatpush1.msra.mxu0 %v4706
  %4793 = vmatprep.subr.mxu0 0.0
  %4794 = vmatpush1.msra.mxu0 %v4707
  %4795 = vmatprep.subr.mxu0 0.0
  %4796 = vmatpush1.msra.mxu0 %v4708
  %4797 = vmatprep.subr.mxu0 0.0
  %4798 = vmatpush1.msra.mxu0 0.0
  %4799 = vmatprep.subr.mxu0 0.0
  %4800 = vmatpush1.msra.mxu0 0.0
  %4801 = vmatprep.subr.mxu0 0.0
  %4802 = vmatpush1.msra.mxu0 0.0
  %4803 = vmatprep.subr.mxu0 0.0
  %4804 = vmatpush1.msra.mxu0 0.0
  %4805 = vmatprep.subr.mxu0 0.0
  %4806 = vmatpush1.msra.mxu0 0.0
  %4807 = vmatprep.subr.mxu0 0.0
  %4808 = vmatpush1.msra.mxu0 0.0
  %4809 = vmatprep.subr.mxu0 0.0
  %4810 = vmatpush1.msra.mxu0 0.0
  %4811 = vmatprep.subr.mxu0 0.0
  %4812 = vmatpush1.msra.mxu0 0.0
  %4813 = vmatprep.subr.mxu0 0.0
  %4814 = vmatpush1.msra.mxu0 0.0
  %4815 = vmatprep.subr.mxu0 0.0
  %4816 = vmatpush1.msra.mxu0 0.0
  %4817 = vmatprep.subr.mxu0 0.0
  %4818 = vmatpush1.msra.mxu0 0.0
  %4819 = vmatprep.subr.mxu0 0.0
  %4820 = vmatpush1.msra.mxu0 0.0
  %4821 = vmatprep.subr.mxu0 0.0
  %4822 = vmatpush1.msra.mxu0 0.0
  %4823 = vmatprep.subr.mxu0 0.0
  %4824 = vmatpush1.msra.mxu0 0.0
  %4825 = vmatprep.subr.mxu0 0.0
  %4826 = vmatpush1.msra.mxu0 0.0
  %4827 = vmatprep.subr.mxu0 0.0
  %4828 = vmatpush1.msra.mxu0 0.0
  %4829 = vmatprep.subr.mxu0 0.0
  %4830 = vmatpush1.msra.mxu0 0.0
  %4831 = vmatprep.subr.mxu0 0.0
  %4832 = vmatpush1.msra.mxu0 0.0
  %4833 = vmatprep.subr.mxu0 0.0
  %4834 = vmatpush1.msra.mxu0 0.0
  %4835 = vmatprep.subr.mxu0 0.0
  %4836 = vmatpush1.msra.mxu0 0.0
  %4837 = vmatprep.subr.mxu0 0.0
  %4838 = vmatpush1.msra.mxu0 0.0
  %4839 = vmatprep.subr.mxu0 0.0
  %4840 = vmatpush1.msra.mxu0 0.0
  %4841 = vmatprep.subr.mxu0 0.0
  %4842 = vmatpush1.msra.mxu0 0.0
  %4843 = vmatprep.subr.mxu0 0.0
  %4844 = vmatpush1.msra.mxu0 0.0
  %4845 = vmatprep.subr.mxu0 0.0
  %4846 = vmatpush1.msra.mxu0 0.0
  %4847 = vmatprep.subr.mxu0 0.0
  %4848 = vmatpush1.msra.mxu0 0.0
  %4849 = vmatprep.subr.mxu0 0.0
  %4850 = vmatpush1.msra.mxu0 0.0
  %4851 = vmatprep.subr.mxu0 0.0
  %4852 = vmatpush1.msra.mxu0 0.0
  %4853 = vmatprep.mubr.f32.mxu0 0.0
  %4854 = vmatmul.mubr.f32.gmra.mrb[0].mxu0 %v4614
  %v4855 = vpop.f32.mrb[0].mxu0
  %v4856 = vadd.f32 %v4781, %v4855
  %v4857 = vpop.f32.mrb[0].mxu0
  %4858 = vmatprep.mubr.f32.mxu0 0.0
  %4859 = vmatmul.mubr.f32.gmra.mrb[0].mxu0 %v4617
  %v4860 = vpop.f32.mrb[0].mxu0
  %v4861 = vadd.f32 %v4786, %v4860
  %v4862 = vpop.f32.mrb[0].mxu0
  %4863 = vdwg.mxu0
  %s4864 = scalar_lea.vmem %s4, 9
  %v4865 = vld [vmem:[%s4864] sm:$0x1]
  %v4867 = vlaneseq
  %v4868 = vshrl.u32 %v4867, 7
  %v4869 = vsub.s32 0, %v4868
  %v4870 = vrot.slane %v4865, %v4869
  %v4872 = vadd.f32 %v4856, %v4870
  %v4873 = vadd.f32 %v4861, %v4870
  %s4874 = scalar_lea.vmem %s3, 128
  %v4875 = vld [vmem:[%s4874] sm:$0xff]
  %v4876 = vld [vmem:[%s4874 + $0x8] sm:$0xff]
  %v4877 = vld [vmem:[%s4874 + $0x10] sm:$0xff]
  %v4878 = vld [vmem:[%s4874 + $0x18] sm:$0xff]
  %s4879 = scalar_lea.vmem %s3, 160
  %v4880 = vld [vmem:[%s4879] sm:$0xff]
  %v4881 = vld [vmem:[%s4879 + $0x8] sm:$0xff]
  %v4882 = vld [vmem:[%s4879 + $0x10] sm:$0xff]
  %v4883 = vld [vmem:[%s4879 + $0x18] sm:$0xff]
  %4884 = vmatprep.subr.mxu0 0.0
  %4885 = vmatpush1.msra.mxu0 %v4880
  %4886 = vmatprep.subr.mxu0 0.0
  %4887 = vmatpush1.msra.mxu0 %v4881
  %4888 = vmatprep.subr.mxu0 0.0
  %4889 = vmatpush1.msra.mxu0 %v4882
  %4890 = vmatprep.subr.mxu0 0.0
  %4891 = vmatpush1.msra.mxu0 %v4883
  %4892 = vmatprep.subr.mxu0 0.0
  %4893 = vmatpush1.msra.mxu0 0.0
  %4894 = vmatprep.subr.mxu0 0.0
  %4895 = vmatpush1.msra.mxu0 0.0
  %4896 = vmatprep.subr.mxu0 0.0
  %4897 = vmatpush1.msra.mxu0 0.0
  %4898 = vmatprep.subr.mxu0 0.0
  %4899 = vmatpush1.msra.mxu0 0.0
  %4900 = vmatprep.subr.mxu0 0.0
  %4901 = vmatpush1.msra.mxu0 0.0
  %4902 = vmatprep.subr.mxu0 0.0
  %4903 = vmatpush1.msra.mxu0 0.0
  %4904 = vmatprep.subr.mxu0 0.0
  %4905 = vmatpush1.msra.mxu0 0.0
  %4906 = vmatprep.subr.mxu0 0.0
  %4907 = vmatpush1.msra.mxu0 0.0
  %4908 = vmatprep.subr.mxu0 0.0
  %4909 = vmatpush1.msra.mxu0 0.0
  %4910 = vmatprep.subr.mxu0 0.0
  %4911 = vmatpush1.msra.mxu0 0.0
  %4912 = vmatprep.subr.mxu0 0.0
  %4913 = vmatpush1.msra.mxu0 0.0
  %4914 = vmatprep.subr.mxu0 0.0
  %4915 = vmatpush1.msra.mxu0 0.0
  %4916 = vmatprep.subr.mxu0 0.0
  %4917 = vmatpush1.msra.mxu0 0.0
  %4918 = vmatprep.subr.mxu0 0.0
  %4919 = vmatpush1.msra.mxu0 0.0
  %4920 = vmatprep.subr.mxu0 0.0
  %4921 = vmatpush1.msra.mxu0 0.0
  %4922 = vmatprep.subr.mxu0 0.0
  %4923 = vmatpush1.msra.mxu0 0.0
  %4924 = vmatprep.subr.mxu0 0.0
  %4925 = vmatpush1.msra.mxu0 0.0
  %4926 = vmatprep.subr.mxu0 0.0
  %4927 = vmatpush1.msra.mxu0 0.0
  %4928 = vmatprep.subr.mxu0 0.0
  %4929 = vmatpush1.msra.mxu0 0.0
  %4930 = vmatprep.subr.mxu0 0.0
  %4931 = vmatpush1.msra.mxu0 0.0
  %4932 = vmatprep.subr.mxu0 0.0
  %4933 = vmatpush1.msra.mxu0 0.0
  %4934 = vmatprep.subr.mxu0 0.0
  %4935 = vmatpush1.msra.mxu0 0.0
  %4936 = vmatprep.subr.mxu0 0.0
  %4937 = vmatpush1.msra.mxu0 0.0
  %4938 = vmatprep.subr.mxu0 0.0
  %4939 = vmatpush1.msra.mxu0 0.0
  %4940 = vmatprep.subr.mxu0 0.0
  %4941 = vmatpush1.msra.mxu0 0.0
  %4942 = vmatprep.subr.mxu0 0.0
  %4943 = vmatpush1.msra.mxu0 0.0
  %4944 = vmatprep.subr.mxu0 0.0
  %4945 = vmatpush1.msra.mxu0 0.0
  %4946 = vmatprep.subr.mxu0 0.0
  %4947 = vmatpush1.msra.mxu0 0.0
  %4948 = vmatprep.mubr.f32.mxu0 0.0
  %4949 = vmatmul.mubr.f32.gmra.mrb[0].mxu0 %v4533
  %v4950 = vpop.f32.mrb[0].mxu0
  %v4951 = vadd.f32 0.0, %v4950
  %v4952 = vpop.f32.mrb[0].mxu0
  %4953 = vmatprep.mubr.f32.mxu0 0.0
  %4954 = vmatmul.mubr.f32.gmra.mrb[0].mxu0 %v4536
  %v4955 = vpop.f32.mrb[0].mxu0
  %v4956 = vadd.f32 0.0, %v4955
  %v4957 = vpop.f32.mrb[0].mxu0
  %4958 = vdwg.mxu0
  %4959 = vmatprep.subr.mxu0 0.0
  %4960 = vmatpush1.msra.mxu0 %v4875
  %4961 = vmatprep.subr.mxu0 0.0
  %4962 = vmatpush1.msra.mxu0 %v4876
  %4963 = vmatprep.subr.mxu0 0.0
  %4964 = vmatpush1.msra.mxu0 %v4877
  %4965 = vmatprep.subr.mxu0 0.0
  %4966 = vmatpush1.msra.mxu0 %v4878
  %4967 = vmatprep.subr.mxu0 0.0
  %4968 = vmatpush1.msra.mxu0 0.0
  %4969 = vmatprep.subr.mxu0 0.0
  %4970 = vmatpush1.msra.mxu0 0.0
  %4971 = vmatprep.subr.mxu0 0.0
  %4972 = vmatpush1.msra.mxu0 0.0
  %4973 = vmatprep.subr.mxu0 0.0
  %4974 = vmatpush1.msra.mxu0 0.0
  %4975 = vmatprep.subr.mxu0 0.0
  %4976 = vmatpush1.msra.mxu0 0.0
  %4977 = vmatprep.subr.mxu0 0.0
  %4978 = vmatpush1.msra.mxu0 0.0
  %4979 = vmatprep.subr.mxu0 0.0
  %4980 = vmatpush1.msra.mxu0 0.0
  %4981 = vmatprep.subr.mxu0 0.0
  %4982 = vmatpush1.msra.mxu0 0.0
  %4983 = vmatprep.subr.mxu0 0.0
  %4984 = vmatpush1.msra.mxu0 0.0
  %4985 = vmatprep.subr.mxu0 0.0
  %4986 = vmatpush1.msra.mxu0 0.0
  %4987 = vmatprep.subr.mxu0 0.0
  %4988 = vmatpush1.msra.mxu0 0.0
  %4989 = vmatprep.subr.mxu0 0.0
  %4990 = vmatpush1.msra.mxu0 0.0
  %4991 = vmatprep.subr.mxu0 0.0
  %4992 = vmatpush1.msra.mxu0 0.0
  %4993 = vmatprep.subr.mxu0 0.0
  %4994 = vmatpush1.msra.mxu0 0.0
  %4995 = vmatprep.subr.mxu0 0.0
  %4996 = vmatpush1.msra.mxu0 0.0
  %4997 = vmatprep.subr.mxu0 0.0
  %4998 = vmatpush1.msra.mxu0 0.0
  %4999 = vmatprep.subr.mxu0 0.0
  %5000 = vmatpush1.msra.mxu0 0.0
  %5001 = vmatprep.subr.mxu0 0.0
  %5002 = vmatpush1.msra.mxu0 0.0
  %5003 = vmatprep.subr.mxu0 0.0
  %5004 = vmatpush1.msra.mxu0 0.0
  %5005 = vmatprep.subr.mxu0 0.0
  %5006 = vmatpush1.msra.mxu0 0.0
  %5007 = vmatprep.subr.mxu0 0.0
  %5008 = vmatpush1.msra.mxu0 0.0
  %5009 = vmatprep.subr.mxu0 0.0
  %5010 = vmatpush1.msra.mxu0 0.0
  %5011 = vmatprep.subr.mxu0 0.0
  %5012 = vmatpush1.msra.mxu0 0.0
  %5013 = vmatprep.subr.mxu0 0.0
  %5014 = vmatpush1.msra.mxu0 0.0
  %5015 = vmatprep.subr.mxu0 0.0
  %5016 = vmatpush1.msra.mxu0 0.0
  %5017 = vmatprep.subr.mxu0 0.0
  %5018 = vmatpush1.msra.mxu0 0.0
  %5019 = vmatprep.subr.mxu0 0.0
  %5020 = vmatpush1.msra.mxu0 0.0
  %5021 = vmatprep.subr.mxu0 0.0
  %5022 = vmatpush1.msra.mxu0 0.0
  %5023 = vmatprep.mubr.f32.mxu0 0.0
  %5024 = vmatmul.mubr.f32.gmra.mrb[0].mxu0 %v4614
  %v5025 = vpop.f32.mrb[0].mxu0
  %v5026 = vadd.f32 %v4951, %v5025
  %v5027 = vpop.f32.mrb[0].mxu0
  %5028 = vmatprep.mubr.f32.mxu0 0.0
  %5029 = vmatmul.mubr.f32.gmra.mrb[0].mxu0 %v4617
  %v5030 = vpop.f32.mrb[0].mxu0
  %v5031 = vadd.f32 %v4956, %v5030
  %v5032 = vpop.f32.mrb[0].mxu0
  %5033 = vdwg.mxu0
  %s5034 = scalar_lea.vmem %s4, 10
  %v5035 = vld [vmem:[%s5034] sm:$0x1]
  %v5037 = vlaneseq
  %v5038 = vshrl.u32 %v5037, 7
  %v5039 = vsub.s32 0, %v5038
  %v5040 = vrot.slane %v5035, %v5039
  %v5042 = vadd.f32 %v5026, %v5040
  %v5043 = vadd.f32 %v5031, %v5040
  %s5044 = scalar_lea.vmem %s3, 192
  %v5045 = vld [vmem:[%s5044] sm:$0xff]
  %v5046 = vld [vmem:[%s5044 + $0x8] sm:$0xff]
  %v5047 = vld [vmem:[%s5044 + $0x10] sm:$0xff]
  %v5048 = vld [vmem:[%s5044 + $0x18] sm:$0xff]
  %s5049 = scalar_lea.vmem %s3, 224
  %v5050 = vld [vmem:[%s5049] sm:$0xff]
  %v5051 = vld [vmem:[%s5049 + $0x8] sm:$0xff]
  %v5052 = vld [vmem:[%s5049 + $0x10] sm:$0xff]
  %v5053 = vld [vmem:[%s5049 + $0x18] sm:$0xff]
  %5054 = vmatprep.subr.mxu0 0.0
  %5055 = vmatpush1.msra.mxu0 %v5050
  %5056 = vmatprep.subr.mxu0 0.0
  %5057 = vmatpush1.msra.mxu0 %v5051
  %5058 = vmatprep.subr.mxu0 0.0
  %5059 = vmatpush1.msra.mxu0 %v5052
  %5060 = vmatprep.subr.mxu0 0.0
  %5061 = vmatpush1.msra.mxu0 %v5053
  %5062 = vmatprep.subr.mxu0 0.0
  %5063 = vmatpush1.msra.mxu0 0.0
  %5064 = vmatprep.subr.mxu0 0.0
  %5065 = vmatpush1.msra.mxu0 0.0
  %5066 = vmatprep.subr.mxu0 0.0
  %5067 = vmatpush1.msra.mxu0 0.0
  %5068 = vmatprep.subr.mxu0 0.0
  %5069 = vmatpush1.msra.mxu0 0.0
  %5070 = vmatprep.subr.mxu0 0.0
  %5071 = vmatpush1.msra.mxu0 0.0
  %5072 = vmatprep.subr.mxu0 0.0
  %5073 = vmatpush1.msra.mxu0 0.0
  %5074 = vmatprep.subr.mxu0 0.0
  %5075 = vmatpush1.msra.mxu0 0.0
  %5076 = vmatprep.subr.mxu0 0.0
  %5077 = vmatpush1.msra.mxu0 0.0
  %5078 = vmatprep.subr.mxu0 0.0
  %5079 = vmatpush1.msra.mxu0 0.0
  %5080 = vmatprep.subr.mxu0 0.0
  %5081 = vmatpush1.msra.mxu0 0.0
  %5082 = vmatprep.subr.mxu0 0.0
  %5083 = vmatpush1.msra.mxu0 0.0
  %5084 = vmatprep.subr.mxu0 0.0
  %5085 = vmatpush1.msra.mxu0 0.0
  %5086 = vmatprep.subr.mxu0 0.0
  %5087 = vmatpush1.msra.mxu0 0.0
  %5088 = vmatprep.subr.mxu0 0.0
  %5089 = vmatpush1.msra.mxu0 0.0
  %5090 = vmatprep.subr.mxu0 0.0
  %5091 = vmatpush1.msra.mxu0 0.0
  %5092 = vmatprep.subr.mxu0 0.0
  %5093 = vmatpush1.msra.mxu0 0.0
  %5094 = vmatprep.subr.mxu0 0.0
  %5095 = vmatpush1.msra.mxu0 0.0
  %5096 = vmatprep.subr.mxu0 0.0
  %5097 = vmatpush1.msra.mxu0 0.0
  %5098 = vmatprep.subr.mxu0 0.0
  %5099 = vmatpush1.msra.mxu0 0.0
  %5100 = vmatprep.subr.mxu0 0.0
  %5101 = vmatpush1.msra.mxu0 0.0
  %5102 = vmatprep.subr.mxu0 0.0
  %5103 = vmatpush1.msra.mxu0 0.0
  %5104 = vmatprep.subr.mxu0 0.0
  %5105 = vmatpush1.msra.mxu0 0.0
  %5106 = vmatprep.subr.mxu0 0.0
  %5107 = vmatpush1.msra.mxu0 0.0
  %5108 = vmatprep.subr.mxu0 0.0
  %5109 = vmatpush1.msra.mxu0 0.0
  %5110 = vmatprep.subr.mxu0 0.0
  %5111 = vmatpush1.msra.mxu0 0.0
  %5112 = vmatprep.subr.mxu0 0.0
  %5113 = vmatpush1.msra.mxu0 0.0
  %5114 = vmatprep.subr.mxu0 0.0
  %5115 = vmatpush1.msra.mxu0 0.0
  %5116 = vmatprep.subr.mxu0 0.0
  %5117 = vmatpush1.msra.mxu0 0.0
  %5118 = vmatprep.mubr.f32.mxu0 0.0
  %5119 = vmatmul.mubr.f32.gmra.mrb[0].mxu0 %v4533
  %v5120 = vpop.f32.mrb[0].mxu0
  %v5121 = vadd.f32 0.0, %v5120
  %v5122 = vpop.f32.mrb[0].mxu0
  %5123 = vmatprep.mubr.f32.mxu0 0.0
  %5124 = vmatmul.mubr.f32.gmra.mrb[0].mxu0 %v4536
  %v5125 = vpop.f32.mrb[0].mxu0
  %v5126 = vadd.f32 0.0, %v5125
  %v5127 = vpop.f32.mrb[0].mxu0
  %5128 = vdwg.mxu0
  %5129 = vmatprep.subr.mxu0 0.0
  %5130 = vmatpush1.msra.mxu0 %v5045
  %5131 = vmatprep.subr.mxu0 0.0
  %5132 = vmatpush1.msra.mxu0 %v5046
  %5133 = vmatprep.subr.mxu0 0.0
  %5134 = vmatpush1.msra.mxu0 %v5047
  %5135 = vmatprep.subr.mxu0 0.0
  %5136 = vmatpush1.msra.mxu0 %v5048
  %5137 = vmatprep.subr.mxu0 0.0
  %5138 = vmatpush1.msra.mxu0 0.0
  %5139 = vmatprep.subr.mxu0 0.0
  %5140 = vmatpush1.msra.mxu0 0.0
  %5141 = vmatprep.subr.mxu0 0.0
  %5142 = vmatpush1.msra.mxu0 0.0
  %5143 = vmatprep.subr.mxu0 0.0
  %5144 = vmatpush1.msra.mxu0 0.0
  %5145 = vmatprep.subr.mxu0 0.0
  %5146 = vmatpush1.msra.mxu0 0.0
  %5147 = vmatprep.subr.mxu0 0.0
  %5148 = vmatpush1.msra.mxu0 0.0
  %5149 = vmatprep.subr.mxu0 0.0
  %5150 = vmatpush1.msra.mxu0 0.0
  %5151 = vmatprep.subr.mxu0 0.0
  %5152 = vmatpush1.msra.mxu0 0.0
  %5153 = vmatprep.subr.mxu0 0.0
  %5154 = vmatpush1.msra.mxu0 0.0
  %5155 = vmatprep.subr.mxu0 0.0
  %5156 = vmatpush1.msra.mxu0 0.0
  %5157 = vmatprep.subr.mxu0 0.0
  %5158 = vmatpush1.msra.mxu0 0.0
  %5159 = vmatprep.subr.mxu0 0.0
  %5160 = vmatpush1.msra.mxu0 0.0
  %5161 = vmatprep.subr.mxu0 0.0
  %5162 = vmatpush1.msra.mxu0 0.0
  %5163 = vmatprep.subr.mxu0 0.0
  %5164 = vmatpush1.msra.mxu0 0.0
  %5165 = vmatprep.subr.mxu0 0.0
  %5166 = vmatpush1.msra.mxu0 0.0
  %5167 = vmatprep.subr.mxu0 0.0
  %5168 = vmatpush1.msra.mxu0 0.0
  %5169 = vmatprep.subr.mxu0 0.0
  %5170 = vmatpush1.msra.mxu0 0.0
  %5171 = vmatprep.subr.mxu0 0.0
  %5172 = vmatpush1.msra.mxu0 0.0
  %5173 = vmatprep.subr.mxu0 0.0
  %5174 = vmatpush1.msra.mxu0 0.0
  %5175 = vmatprep.subr.mxu0 0.0
  %5176 = vmatpush1.msra.mxu0 0.0
  %5177 = vmatprep.subr.mxu0 0.0
  %5178 = vmatpush1.msra.mxu0 0.0
  %5179 = vmatprep.subr.mxu0 0.0
  %5180 = vmatpush1.msra.mxu0 0.0
  %5181 = vmatprep.subr.mxu0 0.0
  %5182 = vmatpush1.msra.mxu0 0.0
  %5183 = vmatprep.subr.mxu0 0.0
  %5184 = vmatpush1.msra.mxu0 0.0
  %5185 = vmatprep.subr.mxu0 0.0
  %5186 = vmatpush1.msra.mxu0 0.0
  %5187 = vmatprep.subr.mxu0 0.0
  %5188 = vmatpush1.msra.mxu0 0.0
  %5189 = vmatprep.subr.mxu0 0.0
  %5190 = vmatpush1.msra.mxu0 0.0
  %5191 = vmatprep.subr.mxu0 0.0
  %5192 = vmatpush1.msra.mxu0 0.0
  %5193 = vmatprep.mubr.f32.mxu0 0.0
  %5194 = vmatmul.mubr.f32.gmra.mrb[0].mxu0 %v4614
  %v5195 = vpop.f32.mrb[0].mxu0
  %v5196 = vadd.f32 %v5121, %v5195
  %v5197 = vpop.f32.mrb[0].mxu0
  %5198 = vmatprep.mubr.f32.mxu0 0.0
  %5199 = vmatmul.mubr.f32.gmra.mrb[0].mxu0 %v4617
  %v5200 = vpop.f32.mrb[0].mxu0
  %v5201 = vadd.f32 %v5126, %v5200
  %v5202 = vpop.f32.mrb[0].mxu0
  %5203 = vdwg.mxu0
  %s5204 = scalar_lea.vmem %s4, 12
  %v5205 = vld [vmem:[%s5204] sm:$0x1]
  %v5207 = vlaneseq
  %v5208 = vshrl.u32 %v5207, 7
  %v5209 = vsub.s32 0, %v5208
  %v5210 = vrot.slane %v5205, %v5209
  %v5212 = vadd.f32 %v5196, %v5210
  %v5213 = vadd.f32 %v5201, %v5210
  %s5214 = scalar_lea.vmem %s3, 256
  %v5215 = vld [vmem:[%s5214] sm:$0xff]
  %v5216 = vld [vmem:[%s5214 + $0x8] sm:$0xff]
  %v5217 = vld [vmem:[%s5214 + $0x10] sm:$0xff]
  %v5218 = vld [vmem:[%s5214 + $0x18] sm:$0xff]
  %s5219 = scalar_lea.vmem %s3, 288
  %v5220 = vld [vmem:[%s5219] sm:$0xff]
  %v5221 = vld [vmem:[%s5219 + $0x8] sm:$0xff]
  %v5222 = vld [vmem:[%s5219 + $0x10] sm:$0xff]
  %v5223 = vld [vmem:[%s5219 + $0x18] sm:$0xff]
  %5224 = vmatprep.subr.mxu0 0.0
  %5225 = vmatpush1.msra.mxu0 %v5220
  %5226 = vmatprep.subr.mxu0 0.0
  %5227 = vmatpush1.msra.mxu0 %v5221
  %5228 = vmatprep.subr.mxu0 0.0
  %5229 = vmatpush1.msra.mxu0 %v5222
  %5230 = vmatprep.subr.mxu0 0.0
  %5231 = vmatpush1.msra.mxu0 %v5223
  %5232 = vmatprep.subr.mxu0 0.0
  %5233 = vmatpush1.msra.mxu0 0.0
  %5234 = vmatprep.subr.mxu0 0.0
  %5235 = vmatpush1.msra.mxu0 0.0
  %5236 = vmatprep.subr.mxu0 0.0
  %5237 = vmatpush1.msra.mxu0 0.0
  %5238 = vmatprep.subr.mxu0 0.0
  %5239 = vmatpush1.msra.mxu0 0.0
  %5240 = vmatprep.subr.mxu0 0.0
  %5241 = vmatpush1.msra.mxu0 0.0
  %5242 = vmatprep.subr.mxu0 0.0
  %5243 = vmatpush1.msra.mxu0 0.0
  %5244 = vmatprep.subr.mxu0 0.0
  %5245 = vmatpush1.msra.mxu0 0.0
  %5246 = vmatprep.subr.mxu0 0.0
  %5247 = vmatpush1.msra.mxu0 0.0
  %5248 = vmatprep.subr.mxu0 0.0
  %5249 = vmatpush1.msra.mxu0 0.0
  %5250 = vmatprep.subr.mxu0 0.0
  %5251 = vmatpush1.msra.mxu0 0.0
  %5252 = vmatprep.subr.mxu0 0.0
  %5253 = vmatpush1.msra.mxu0 0.0
  %5254 = vmatprep.subr.mxu0 0.0
  %5255 = vmatpush1.msra.mxu0 0.0
  %5256 = vmatprep.subr.mxu0 0.0
  %5257 = vmatpush1.msra.mxu0 0.0
  %5258 = vmatprep.subr.mxu0 0.0
  %5259 = vmatpush1.msra.mxu0 0.0
  %5260 = vmatprep.subr.mxu0 0.0
  %5261 = vmatpush1.msra.mxu0 0.0
  %5262 = vmatprep.subr.mxu0 0.0
  %5263 = vmatpush1.msra.mxu0 0.0
  %5264 = vmatprep.subr.mxu0 0.0
  %5265 = vmatpush1.msra.mxu0 0.0
  %5266 = vmatprep.subr.mxu0 0.0
  %5267 = vmatpush1.msra.mxu0 0.0
  %5268 = vmatprep.subr.mxu0 0.0
  %5269 = vmatpush1.msra.mxu0 0.0
  %5270 = vmatprep.subr.mxu0 0.0
  %5271 = vmatpush1.msra.mxu0 0.0
  %5272 = vmatprep.subr.mxu0 0.0
  %5273 = vmatpush1.msra.mxu0 0.0
  %5274 = vmatprep.subr.mxu0 0.0
  %5275 = vmatpush1.msra.mxu0 0.0
  %5276 = vmatprep.subr.mxu0 0.0
  %5277 = vmatpush1.msra.mxu0 0.0
  %5278 = vmatprep.subr.mxu0 0.0
  %5279 = vmatpush1.msra.mxu0 0.0
  %5280 = vmatprep.subr.mxu0 0.0
  %5281 = vmatpush1.msra.mxu0 0.0
  %5282 = vmatprep.subr.mxu0 0.0
  %5283 = vmatpush1.msra.mxu0 0.0
  %5284 = vmatprep.subr.mxu0 0.0
  %5285 = vmatpush1.msra.mxu0 0.0
  %5286 = vmatprep.subr.mxu0 0.0
  %5287 = vmatpush1.msra.mxu0 0.0
  %5288 = vmatprep.mubr.f32.mxu0 0.0
  %5289 = vmatmul.mubr.f32.gmra.mrb[0].mxu0 %v4533
  %v5290 = vpop.f32.mrb[0].mxu0
  %v5291 = vadd.f32 0.0, %v5290
  %v5292 = vpop.f32.mrb[0].mxu0
  %5293 = vmatprep.mubr.f32.mxu0 0.0
  %5294 = vmatmul.mubr.f32.gmra.mrb[0].mxu0 %v4536
  %v5295 = vpop.f32.mrb[0].mxu0
  %v5296 = vadd.f32 0.0, %v5295
  %v5297 = vpop.f32.mrb[0].mxu0
  %5298 = vdwg.mxu0
  %5299 = vmatprep.subr.mxu0 0.0
  %5300 = vmatpush1.msra.mxu0 %v5215
  %5301 = vmatprep.subr.mxu0 0.0
  %5302 = vmatpush1.msra.mxu0 %v5216
  %5303 = vmatprep.subr.mxu0 0.0
  %5304 = vmatpush1.msra.mxu0 %v5217
  %5305 = vmatprep.subr.mxu0 0.0
  %5306 = vmatpush1.msra.mxu0 %v5218
  %5307 = vmatprep.subr.mxu0 0.0
  %5308 = vmatpush1.msra.mxu0 0.0
  %5309 = vmatprep.subr.mxu0 0.0
  %5310 = vmatpush1.msra.mxu0 0.0
  %5311 = vmatprep.subr.mxu0 0.0
  %5312 = vmatpush1.msra.mxu0 0.0
  %5313 = vmatprep.subr.mxu0 0.0
  %5314 = vmatpush1.msra.mxu0 0.0
  %5315 = vmatprep.subr.mxu0 0.0
  %5316 = vmatpush1.msra.mxu0 0.0
  %5317 = vmatprep.subr.mxu0 0.0
  %5318 = vmatpush1.msra.mxu0 0.0
  %5319 = vmatprep.subr.mxu0 0.0
  %5320 = vmatpush1.msra.mxu0 0.0
  %5321 = vmatprep.subr.mxu0 0.0
  %5322 = vmatpush1.msra.mxu0 0.0
  %5323 = vmatprep.subr.mxu0 0.0
  %5324 = vmatpush1.msra.mxu0 0.0
  %5325 = vmatprep.subr.mxu0 0.0
  %5326 = vmatpush1.msra.mxu0 0.0
  %5327 = vmatprep.subr.mxu0 0.0
  %5328 = vmatpush1.msra.mxu0 0.0
  %5329 = vmatprep.subr.mxu0 0.0
  %5330 = vmatpush1.msra.mxu0 0.0
  %5331 = vmatprep.subr.mxu0 0.0
  %5332 = vmatpush1.msra.mxu0 0.0
  %5333 = vmatprep.subr.mxu0 0.0
  %5334 = vmatpush1.msra.mxu0 0.0
  %5335 = vmatprep.subr.mxu0 0.0
  %5336 = vmatpush1.msra.mxu0 0.0
  %5337 = vmatprep.subr.mxu0 0.0
  %5338 = vmatpush1.msra.mxu0 0.0
  %5339 = vmatprep.subr.mxu0 0.0
  %5340 = vmatpush1.msra.mxu0 0.0
  %5341 = vmatprep.subr.mxu0 0.0
  %5342 = vmatpush1.msra.mxu0 0.0
  %5343 = vmatprep.subr.mxu0 0.0
  %5344 = vmatpush1.msra.mxu0 0.0
  %5345 = vmatprep.subr.mxu0 0.0
  %5346 = vmatpush1.msra.mxu0 0.0
  %5347 = vmatprep.subr.mxu0 0.0
  %5348 = vmatpush1.msra.mxu0 0.0
  %5349 = vmatprep.subr.mxu0 0.0
  %5350 = vmatpush1.msra.mxu0 0.0
  %5351 = vmatprep.subr.mxu0 0.0
  %5352 = vmatpush1.msra.mxu0 0.0
  %5353 = vmatprep.subr.mxu0 0.0
  %5354 = vmatpush1.msra.mxu0 0.0
  %5355 = vmatprep.subr.mxu0 0.0
  %5356 = vmatpush1.msra.mxu0 0.0
  %5357 = vmatprep.subr.mxu0 0.0
  %5358 = vmatpush1.msra.mxu0 0.0
  %5359 = vmatprep.subr.mxu0 0.0
  %5360 = vmatpush1.msra.mxu0 0.0
  %5361 = vmatprep.subr.mxu0 0.0
  %5362 = vmatpush1.msra.mxu0 0.0
  %5363 = vmatprep.mubr.f32.mxu0 0.0
  %5364 = vmatmul.mubr.f32.gmra.mrb[0].mxu0 %v4614
  %v5365 = vpop.f32.mrb[0].mxu0
  %v5366 = vadd.f32 %v5291, %v5365
  %v5367 = vpop.f32.mrb[0].mxu0
  %5368 = vmatprep.mubr.f32.mxu0 0.0
  %5369 = vmatmul.mubr.f32.gmra.mrb[0].mxu0 %v4617
  %v5370 = vpop.f32.mrb[0].mxu0
  %v5371 = vadd.f32 %v5296, %v5370
  %v5372 = vpop.f32.mrb[0].mxu0
  %5373 = vdwg.mxu0
  %s5374 = scalar_lea.vmem %s4, 13
  %v5375 = vld [vmem:[%s5374] sm:$0x1]
  %v5377 = vlaneseq
  %v5378 = vshrl.u32 %v5377, 7
  %v5379 = vsub.s32 0, %v5378
  %v5380 = vrot.slane %v5375, %v5379
  %v5382 = vadd.f32 %v5366, %v5380
  %v5383 = vadd.f32 %v5371, %v5380
  %s5384 = scalar_lea.vmem %s3, 320
  %v5385 = vld [vmem:[%s5384] sm:$0xff]
  %v5386 = vld [vmem:[%s5384 + $0x8] sm:$0xff]
  %v5387 = vld [vmem:[%s5384 + $0x10] sm:$0xff]
  %v5388 = vld [vmem:[%s5384 + $0x18] sm:$0xff]
  %s5389 = scalar_lea.vmem %s3, 352
  %v5390 = vld [vmem:[%s5389] sm:$0xff]
  %v5391 = vld [vmem:[%s5389 + $0x8] sm:$0xff]
  %v5392 = vld [vmem:[%s5389 + $0x10] sm:$0xff]
  %v5393 = vld [vmem:[%s5389 + $0x18] sm:$0xff]
  %5394 = vmatprep.subr.mxu0 0.0
  %5395 = vmatpush1.msra.mxu0 %v5390
  %5396 = vmatprep.subr.mxu0 0.0
  %5397 = vmatpush1.msra.mxu0 %v5391
  %5398 = vmatprep.subr.mxu0 0.0
  %5399 = vmatpush1.msra.mxu0 %v5392
  %5400 = vmatprep.subr.mxu0 0.0
  %5401 = vmatpush1.msra.mxu0 %v5393
  %5402 = vmatprep.subr.mxu0 0.0
  %5403 = vmatpush1.msra.mxu0 0.0
  %5404 = vmatprep.subr.mxu0 0.0
  %5405 = vmatpush1.msra.mxu0 0.0
  %5406 = vmatprep.subr.mxu0 0.0
  %5407 = vmatpush1.msra.mxu0 0.0
  %5408 = vmatprep.subr.mxu0 0.0
  %5409 = vmatpush1.msra.mxu0 0.0
  %5410 = vmatprep.subr.mxu0 0.0
  %5411 = vmatpush1.msra.mxu0 0.0
  %5412 = vmatprep.subr.mxu0 0.0
  %5413 = vmatpush1.msra.mxu0 0.0
  %5414 = vmatprep.subr.mxu0 0.0
  %5415 = vmatpush1.msra.mxu0 0.0
  %5416 = vmatprep.subr.mxu0 0.0
  %5417 = vmatpush1.msra.mxu0 0.0
  %5418 = vmatprep.subr.mxu0 0.0
  %5419 = vmatpush1.msra.mxu0 0.0
  %5420 = vmatprep.subr.mxu0 0.0
  %5421 = vmatpush1.msra.mxu0 0.0
  %5422 = vmatprep.subr.mxu0 0.0
  %5423 = vmatpush1.msra.mxu0 0.0
  %5424 = vmatprep.subr.mxu0 0.0
  %5425 = vmatpush1.msra.mxu0 0.0
  %5426 = vmatprep.subr.mxu0 0.0
  %5427 = vmatpush1.msra.mxu0 0.0
  %5428 = vmatprep.subr.mxu0 0.0
  %5429 = vmatpush1.msra.mxu0 0.0
  %5430 = vmatprep.subr.mxu0 0.0
  %5431 = vmatpush1.msra.mxu0 0.0
  %5432 = vmatprep.subr.mxu0 0.0
  %5433 = vmatpush1.msra.mxu0 0.0
  %5434 = vmatprep.subr.mxu0 0.0
  %5435 = vmatpush1.msra.mxu0 0.0
  %5436 = vmatprep.subr.mxu0 0.0
  %5437 = vmatpush1.msra.mxu0 0.0
  %5438 = vmatprep.subr.mxu0 0.0
  %5439 = vmatpush1.msra.mxu0 0.0
  %5440 = vmatprep.subr.mxu0 0.0
  %5441 = vmatpush1.msra.mxu0 0.0
  %5442 = vmatprep.subr.mxu0 0.0
  %5443 = vmatpush1.msra.mxu0 0.0
  %5444 = vmatprep.subr.mxu0 0.0
  %5445 = vmatpush1.msra.mxu0 0.0
  %5446 = vmatprep.subr.mxu0 0.0
  %5447 = vmatpush1.msra.mxu0 0.0
  %5448 = vmatprep.subr.mxu0 0.0
  %5449 = vmatpush1.msra.mxu0 0.0
  %5450 = vmatprep.subr.mxu0 0.0
  %5451 = vmatpush1.msra.mxu0 0.0
  %5452 = vmatprep.subr.mxu0 0.0
  %5453 = vmatpush1.msra.mxu0 0.0
  %5454 = vmatprep.subr.mxu0 0.0
  %5455 = vmatpush1.msra.mxu0 0.0
  %5456 = vmatprep.subr.mxu0 0.0
  %5457 = vmatpush1.msra.mxu0 0.0
  %5458 = vmatprep.mubr.f32.mxu0 0.0
  %5459 = vmatmul.mubr.f32.gmra.mrb[0].mxu0 %v4533
  %v5460 = vpop.f32.mrb[0].mxu0
  %v5461 = vadd.f32 0.0, %v5460
  %v5462 = vpop.f32.mrb[0].mxu0
  %5463 = vmatprep.mubr.f32.mxu0 0.0
  %5464 = vmatmul.mubr.f32.gmra.mrb[0].mxu0 %v4536
  %v5465 = vpop.f32.mrb[0].mxu0
  %v5466 = vadd.f32 0.0, %v5465
  %v5467 = vpop.f32.mrb[0].mxu0
  %5468 = vdwg.mxu0
  %5469 = vmatprep.subr.mxu0 0.0
  %5470 = vmatpush1.msra.mxu0 %v5385
  %5471 = vmatprep.subr.mxu0 0.0
  %5472 = vmatpush1.msra.mxu0 %v5386
  %5473 = vmatprep.subr.mxu0 0.0
  %5474 = vmatpush1.msra.mxu0 %v5387
  %5475 = vmatprep.subr.mxu0 0.0
  %5476 = vmatpush1.msra.mxu0 %v5388
  %5477 = vmatprep.subr.mxu0 0.0
  %5478 = vmatpush1.msra.mxu0 0.0
  %5479 = vmatprep.subr.mxu0 0.0
  %5480 = vmatpush1.msra.mxu0 0.0
  %5481 = vmatprep.subr.mxu0 0.0
  %5482 = vmatpush1.msra.mxu0 0.0
  %5483 = vmatprep.subr.mxu0 0.0
  %5484 = vmatpush1.msra.mxu0 0.0
  %5485 = vmatprep.subr.mxu0 0.0
  %5486 = vmatpush1.msra.mxu0 0.0
  %5487 = vmatprep.subr.mxu0 0.0
  %5488 = vmatpush1.msra.mxu0 0.0
  %5489 = vmatprep.subr.mxu0 0.0
  %5490 = vmatpush1.msra.mxu0 0.0
  %5491 = vmatprep.subr.mxu0 0.0
  %5492 = vmatpush1.msra.mxu0 0.0
  %5493 = vmatprep.subr.mxu0 0.0
  %5494 = vmatpush1.msra.mxu0 0.0
  %5495 = vmatprep.subr.mxu0 0.0
  %5496 = vmatpush1.msra.mxu0 0.0
  %5497 = vmatprep.subr.mxu0 0.0
  %5498 = vmatpush1.msra.mxu0 0.0
  %5499 = vmatprep.subr.mxu0 0.0
  %5500 = vmatpush1.msra.mxu0 0.0
  %5501 = vmatprep.subr.mxu0 0.0
  %5502 = vmatpush1.msra.mxu0 0.0
  %5503 = vmatprep.subr.mxu0 0.0
  %5504 = vmatpush1.msra.mxu0 0.0
  %5505 = vmatprep.subr.mxu0 0.0
  %5506 = vmatpush1.msra.mxu0 0.0
  %5507 = vmatprep.subr.mxu0 0.0
  %5508 = vmatpush1.msra.mxu0 0.0
  %5509 = vmatprep.subr.mxu0 0.0
  %5510 = vmatpush1.msra.mxu0 0.0
  %5511 = vmatprep.subr.mxu0 0.0
  %5512 = vmatpush1.msra.mxu0 0.0
  %5513 = vmatprep.subr.mxu0 0.0
  %5514 = vmatpush1.msra.mxu0 0.0
  %5515 = vmatprep.subr.mxu0 0.0
  %5516 = vmatpush1.msra.mxu0 0.0
  %5517 = vmatprep.subr.mxu0 0.0
  %5518 = vmatpush1.msra.mxu0 0.0
  %5519 = vmatprep.subr.mxu0 0.0
  %5520 = vmatpush1.msra.mxu0 0.0
  %5521 = vmatprep.subr.mxu0 0.0
  %5522 = vmatpush1.msra.mxu0 0.0
  %5523 = vmatprep.subr.mxu0 0.0
  %5524 = vmatpush1.msra.mxu0 0.0
  %5525 = vmatprep.subr.mxu0 0.0
  %5526 = vmatpush1.msra.mxu0 0.0
  %5527 = vmatprep.subr.mxu0 0.0
  %5528 = vmatpush1.msra.mxu0 0.0
  %5529 = vmatprep.subr.mxu0 0.0
  %5530 = vmatpush1.msra.mxu0 0.0
  %5531 = vmatprep.subr.mxu0 0.0
  %5532 = vmatpush1.msra.mxu0 0.0
  %5533 = vmatprep.mubr.f32.mxu0 0.0
  %5534 = vmatmul.mubr.f32.gmra.mrb[0].mxu0 %v4614
  %v5535 = vpop.f32.mrb[0].mxu0
  %v5536 = vadd.f32 %v5461, %v5535
  %v5537 = vpop.f32.mrb[0].mxu0
  %5538 = vmatprep.mubr.f32.mxu0 0.0
  %5539 = vmatmul.mubr.f32.gmra.mrb[0].mxu0 %v4617
  %v5540 = vpop.f32.mrb[0].mxu0
  %v5541 = vadd.f32 %v5466, %v5540
  %v5542 = vpop.f32.mrb[0].mxu0
  %5543 = vdwg.mxu0
  %s5544 = scalar_lea.vmem %s4, 14
  %v5545 = vld [vmem:[%s5544] sm:$0x1]
  %v5547 = vlaneseq
  %v5548 = vshrl.u32 %v5547, 7
  %v5549 = vsub.s32 0, %v5548
  %v5550 = vrot.slane %v5545, %v5549
  %v5552 = vadd.f32 %v5536, %v5550
  %v5553 = vadd.f32 %v5541, %v5550
  %s5554 = scalar_lea.vmem %s2, 192
  %v5555 = vld [vmem:[%s5554] sm:$0xff]
  %v5556 = vld [vmem:[%s5554 + $0x8] sm:$0xff]
  %v5557 = vld [vmem:[%s5554 + $0x10] sm:$0xff]
  %v5558 = vld [vmem:[%s5554 + $0x18] sm:$0xff]
  %s5559 = scalar_lea.vmem %s2, 224
  %v5560 = vld [vmem:[%s5559] sm:$0xff]
  %v5561 = vld [vmem:[%s5559 + $0x8] sm:$0xff]
  %v5562 = vld [vmem:[%s5559 + $0x10] sm:$0xff]
  %v5563 = vld [vmem:[%s5559 + $0x18] sm:$0xff]
  %s5564 = scalar_lea.vmem %s2, 256
  %v5565 = vld [vmem:[%s5564] sm:$0xff]
  %v5566 = vld [vmem:[%s5564 + $0x8] sm:$0xff]
  %v5567 = vld [vmem:[%s5564 + $0x10] sm:$0xff]
  %v5568 = vld [vmem:[%s5564 + $0x18] sm:$0xff]
  %s5569 = scalar_lea.vmem %s2, 288
  %v5570 = vld [vmem:[%s5569] sm:$0xff]
  %v5571 = vld [vmem:[%s5569 + $0x8] sm:$0xff]
  %v5572 = vld [vmem:[%s5569 + $0x10] sm:$0xff]
  %v5573 = vld [vmem:[%s5569 + $0x18] sm:$0xff]
  %s5574 = scalar_lea.vmem %s2, 320
  %v5575 = vld [vmem:[%s5574] sm:$0xff]
  %v5576 = vld [vmem:[%s5574 + $0x8] sm:$0xff]
  %v5577 = vld [vmem:[%s5574 + $0x10] sm:$0xff]
  %v5578 = vld [vmem:[%s5574 + $0x18] sm:$0xff]
  %s5579 = scalar_lea.vmem %s2, 352
  %v5580 = vld [vmem:[%s5579] sm:$0xff]
  %v5581 = vld [vmem:[%s5579 + $0x8] sm:$0xff]
  %v5582 = vld [vmem:[%s5579 + $0x10] sm:$0xff]
  %v5583 = vld [vmem:[%s5579 + $0x18] sm:$0xff]
  %s5584 = scalar_lea.vmem %s4, 11
  %v5585 = vld [vmem:[%s5584] sm:$0x1]
  %s5586 = scalar_lea.vmem %s4, 15
  %v5587 = vld [vmem:[%s5586] sm:$0x1]
  %5588 = vmatprep.subr.mxu0 0.0
  %5589 = vmatpush1.msra.mxu0 %v5555
  %5590 = vmatprep.subr.mxu0 0.0
  %5591 = vmatpush1.msra.mxu0 %v5556
  %5592 = vmatprep.subr.mxu0 0.0
  %5593 = vmatpush1.msra.mxu0 %v5557
  %5594 = vmatprep.subr.mxu0 0.0
  %5595 = vmatpush1.msra.mxu0 %v5558
  %5596 = vmatprep.subr.mxu0 0.0
  %5597 = vmatpush1.msra.mxu0 0.0
  %5598 = vmatprep.subr.mxu0 0.0
  %5599 = vmatpush1.msra.mxu0 0.0
  %5600 = vmatprep.subr.mxu0 0.0
  %5601 = vmatpush1.msra.mxu0 0.0
  %5602 = vmatprep.subr.mxu0 0.0
  %5603 = vmatpush1.msra.mxu0 0.0
  %5604 = vmatprep.subr.mxu0 0.0
  %5605 = vmatpush1.msra.mxu0 0.0
  %5606 = vmatprep.subr.mxu0 0.0
  %5607 = vmatpush1.msra.mxu0 0.0
  %5608 = vmatprep.subr.mxu0 0.0
  %5609 = vmatpush1.msra.mxu0 0.0
  %5610 = vmatprep.subr.mxu0 0.0
  %5611 = vmatpush1.msra.mxu0 0.0
  %5612 = vmatprep.subr.mxu0 0.0
  %5613 = vmatpush1.msra.mxu0 0.0
  %5614 = vmatprep.subr.mxu0 0.0
  %5615 = vmatpush1.msra.mxu0 0.0
  %5616 = vmatprep.subr.mxu0 0.0
  %5617 = vmatpush1.msra.mxu0 0.0
  %5618 = vmatprep.subr.mxu0 0.0
  %5619 = vmatpush1.msra.mxu0 0.0
  %5620 = vmatprep.subr.mxu0 0.0
  %5621 = vmatpush1.msra.mxu0 0.0
  %5622 = vmatprep.subr.mxu0 0.0
  %5623 = vmatpush1.msra.mxu0 0.0
  %5624 = vmatprep.subr.mxu0 0.0
  %5625 = vmatpush1.msra.mxu0 0.0
  %5626 = vmatprep.subr.mxu0 0.0
  %5627 = vmatpush1.msra.mxu0 0.0
  %5628 = vmatprep.subr.mxu0 0.0
  %5629 = vmatpush1.msra.mxu0 0.0
  %5630 = vmatprep.subr.mxu0 0.0
  %5631 = vmatpush1.msra.mxu0 0.0
  %5632 = vmatprep.subr.mxu0 0.0
  %5633 = vmatpush1.msra.mxu0 0.0
  %5634 = vmatprep.subr.mxu0 0.0
  %5635 = vmatpush1.msra.mxu0 0.0
  %5636 = vmatprep.subr.mxu0 0.0
  %5637 = vmatpush1.msra.mxu0 0.0
  %5638 = vmatprep.subr.mxu0 0.0
  %5639 = vmatpush1.msra.mxu0 0.0
  %5640 = vmatprep.subr.mxu0 0.0
  %5641 = vmatpush1.msra.mxu0 0.0
  %5642 = vmatprep.subr.mxu0 0.0
  %5643 = vmatpush1.msra.mxu0 0.0
  %5644 = vmatprep.subr.mxu0 0.0
  %5645 = vmatpush1.msra.mxu0 0.0
  %5646 = vmatprep.subr.mxu0 0.0
  %5647 = vmatpush1.msra.mxu0 0.0
  %5648 = vmatprep.subr.mxu0 0.0
  %5649 = vmatpush1.msra.mxu0 0.0
  %5650 = vmatprep.subr.mxu0 0.0
  %5651 = vmatpush1.msra.mxu0 0.0
  %5652 = vmatprep.mubr.f32.mxu0 0.0
  %5653 = vmatmul.mubr.f32.gmra.mrb[0].mxu0 %v603
  %v5654 = vpop.f32.mrb[0].mxu0
  %v5655 = vadd.f32 0.0, %v5654
  %v5656 = vpop.f32.mrb[0].mxu0
  %5657 = vdwg.mxu0
  %v5658 = vadd.f32 %v4702, %v5655
  %v5659 = vxor.u32 %v5658, 2147483648
  %v5660 = vmul.f32 %v5659, 1.442695
  %v5661 = vpow.pop %v5660
  %v5662 = vadd.f32 %v5661, 1.0
  %v5663 = vrcp.pop %v5662
  %v5664 = vmul.f32 1.0, %v5663
  %5665 = vmatprep.subr.mxu0 0.0
  %5666 = vmatpush1.msra.mxu0 %v5560
  %5667 = vmatprep.subr.mxu0 0.0
  %5668 = vmatpush1.msra.mxu0 %v5561
  %5669 = vmatprep.subr.mxu0 0.0
  %5670 = vmatpush1.msra.mxu0 %v5562
  %5671 = vmatprep.subr.mxu0 0.0
  %5672 = vmatpush1.msra.mxu0 %v5563
  %5673 = vmatprep.subr.mxu0 0.0
  %5674 = vmatpush1.msra.mxu0 0.0
  %5675 = vmatprep.subr.mxu0 0.0
  %5676 = vmatpush1.msra.mxu0 0.0
  %5677 = vmatprep.subr.mxu0 0.0
  %5678 = vmatpush1.msra.mxu0 0.0
  %5679 = vmatprep.subr.mxu0 0.0
  %5680 = vmatpush1.msra.mxu0 0.0
  %5681 = vmatprep.subr.mxu0 0.0
  %5682 = vmatpush1.msra.mxu0 0.0
  %5683 = vmatprep.subr.mxu0 0.0
  %5684 = vmatpush1.msra.mxu0 0.0
  %5685 = vmatprep.subr.mxu0 0.0
  %5686 = vmatpush1.msra.mxu0 0.0
  %5687 = vmatprep.subr.mxu0 0.0
  %5688 = vmatpush1.msra.mxu0 0.0
  %5689 = vmatprep.subr.mxu0 0.0
  %5690 = vmatpush1.msra.mxu0 0.0
  %5691 = vmatprep.subr.mxu0 0.0
  %5692 = vmatpush1.msra.mxu0 0.0
  %5693 = vmatprep.subr.mxu0 0.0
  %5694 = vmatpush1.msra.mxu0 0.0
  %5695 = vmatprep.subr.mxu0 0.0
  %5696 = vmatpush1.msra.mxu0 0.0
  %5697 = vmatprep.subr.mxu0 0.0
  %5698 = vmatpush1.msra.mxu0 0.0
  %5699 = vmatprep.subr.mxu0 0.0
  %5700 = vmatpush1.msra.mxu0 0.0
  %5701 = vmatprep.subr.mxu0 0.0
  %5702 = vmatpush1.msra.mxu0 0.0
  %5703 = vmatprep.subr.mxu0 0.0
  %5704 = vmatpush1.msra.mxu0 0.0
  %5705 = vmatprep.subr.mxu0 0.0
  %5706 = vmatpush1.msra.mxu0 0.0
  %5707 = vmatprep.subr.mxu0 0.0
  %5708 = vmatpush1.msra.mxu0 0.0
  %5709 = vmatprep.subr.mxu0 0.0
  %5710 = vmatpush1.msra.mxu0 0.0
  %5711 = vmatprep.subr.mxu0 0.0
  %5712 = vmatpush1.msra.mxu0 0.0
  %5713 = vmatprep.subr.mxu0 0.0
  %5714 = vmatpush1.msra.mxu0 0.0
  %5715 = vmatprep.subr.mxu0 0.0
  %5716 = vmatpush1.msra.mxu0 0.0
  %5717 = vmatprep.subr.mxu0 0.0
  %5718 = vmatpush1.msra.mxu0 0.0
  %5719 = vmatprep.subr.mxu0 0.0
  %5720 = vmatpush1.msra.mxu0 0.0
  %5721 = vmatprep.subr.mxu0 0.0
  %5722 = vmatpush1.msra.mxu0 0.0
  %5723 = vmatprep.subr.mxu0 0.0
  %5724 = vmatpush1.msra.mxu0 0.0
  %5725 = vmatprep.subr.mxu0 0.0
  %5726 = vmatpush1.msra.mxu0 0.0
  %5727 = vmatprep.subr.mxu0 0.0
  %5728 = vmatpush1.msra.mxu0 0.0
  %5729 = vmatprep.mubr.f32.mxu0 0.0
  %5730 = vmatmul.mubr.f32.gmra.mrb[0].mxu0 %v603
  %v5731 = vpop.f32.mrb[0].mxu0
  %v5732 = vadd.f32 0.0, %v5731
  %v5733 = vpop.f32.mrb[0].mxu0
  %5734 = vdwg.mxu0
  %v5735 = vadd.f32 %v4872, %v5732
  %v5736 = vxor.u32 %v5735, 2147483648
  %v5737 = vmul.f32 %v5736, 1.442695
  %v5738 = vpow.pop %v5737
  %v5739 = vadd.f32 %v5738, 1.0
  %v5740 = vrcp.pop %v5739
  %v5741 = vmul.f32 1.0, %v5740
  %v5743 = vlaneseq
  %v5744 = vshrl.u32 %v5743, 7
  %v5745 = vsub.s32 0, %v5744
  %v5746 = vrot.slane %v5585, %v5745
  %5748 = vmatprep.subr.mxu0 0.0
  %5749 = vmatpush1.msra.mxu0 %v5565
  %5750 = vmatprep.subr.mxu0 0.0
  %5751 = vmatpush1.msra.mxu0 %v5566
  %5752 = vmatprep.subr.mxu0 0.0
  %5753 = vmatpush1.msra.mxu0 %v5567
  %5754 = vmatprep.subr.mxu0 0.0
  %5755 = vmatpush1.msra.mxu0 %v5568
  %5756 = vmatprep.subr.mxu0 0.0
  %5757 = vmatpush1.msra.mxu0 0.0
  %5758 = vmatprep.subr.mxu0 0.0
  %5759 = vmatpush1.msra.mxu0 0.0
  %5760 = vmatprep.subr.mxu0 0.0
  %5761 = vmatpush1.msra.mxu0 0.0
  %5762 = vmatprep.subr.mxu0 0.0
  %5763 = vmatpush1.msra.mxu0 0.0
  %5764 = vmatprep.subr.mxu0 0.0
  %5765 = vmatpush1.msra.mxu0 0.0
  %5766 = vmatprep.subr.mxu0 0.0
  %5767 = vmatpush1.msra.mxu0 0.0
  %5768 = vmatprep.subr.mxu0 0.0
  %5769 = vmatpush1.msra.mxu0 0.0
  %5770 = vmatprep.subr.mxu0 0.0
  %5771 = vmatpush1.msra.mxu0 0.0
  %5772 = vmatprep.subr.mxu0 0.0
  %5773 = vmatpush1.msra.mxu0 0.0
  %5774 = vmatprep.subr.mxu0 0.0
  %5775 = vmatpush1.msra.mxu0 0.0
  %5776 = vmatprep.subr.mxu0 0.0
  %5777 = vmatpush1.msra.mxu0 0.0
  %5778 = vmatprep.subr.mxu0 0.0
  %5779 = vmatpush1.msra.mxu0 0.0
  %5780 = vmatprep.subr.mxu0 0.0
  %5781 = vmatpush1.msra.mxu0 0.0
  %5782 = vmatprep.subr.mxu0 0.0
  %5783 = vmatpush1.msra.mxu0 0.0
  %5784 = vmatprep.subr.mxu0 0.0
  %5785 = vmatpush1.msra.mxu0 0.0
  %5786 = vmatprep.subr.mxu0 0.0
  %5787 = vmatpush1.msra.mxu0 0.0
  %5788 = vmatprep.subr.mxu0 0.0
  %5789 = vmatpush1.msra.mxu0 0.0
  %5790 = vmatprep.subr.mxu0 0.0
  %5791 = vmatpush1.msra.mxu0 0.0
  %5792 = vmatprep.subr.mxu0 0.0
  %5793 = vmatpush1.msra.mxu0 0.0
  %5794 = vmatprep.subr.mxu0 0.0
  %5795 = vmatpush1.msra.mxu0 0.0
  %5796 = vmatprep.subr.mxu0 0.0
  %5797 = vmatpush1.msra.mxu0 0.0
  %5798 = vmatprep.subr.mxu0 0.0
  %5799 = vmatpush1.msra.mxu0 0.0
  %5800 = vmatprep.subr.mxu0 0.0
  %5801 = vmatpush1.msra.mxu0 0.0
  %5802 = vmatprep.subr.mxu0 0.0
  %5803 = vmatpush1.msra.mxu0 0.0
  %5804 = vmatprep.subr.mxu0 0.0
  %5805 = vmatpush1.msra.mxu0 0.0
  %5806 = vmatprep.subr.mxu0 0.0
  %5807 = vmatpush1.msra.mxu0 0.0
  %5808 = vmatprep.subr.mxu0 0.0
  %5809 = vmatpush1.msra.mxu0 0.0
  %5810 = vmatprep.subr.mxu0 0.0
  %5811 = vmatpush1.msra.mxu0 0.0
  %5812 = vmatprep.mubr.f32.mxu0 0.0
  %5813 = vmatmul.mubr.f32.gmra.mrb[0].mxu0 %v603
  %v5814 = vpop.f32.mrb[0].mxu0
  %v5815 = vadd.f32 %v5746, %v5814
  %v5816 = vpop.f32.mrb[0].mxu0
  %5817 = vdwg.mxu0
  %v5818 = vmul.f32 %v5664, %v5815
  %v5819 = vadd.f32 %v5042, %v5818
  %v5820 = vtanh.pop %v5819
  %v5821 = vsub.f32 1.0, %v5741
  %v5822 = vmul.f32 %v5821, %v5820
  %v5823 = vmul.f32 %v5741, 0.0
  %v5824 = vadd.f32 %v5822, %v5823
  %5825 = vmatprep.subr.mxu0 0.0
  %5826 = vmatpush1.msra.mxu0 %v5570
  %5827 = vmatprep.subr.mxu0 0.0
  %5828 = vmatpush1.msra.mxu0 %v5571
  %5829 = vmatprep.subr.mxu0 0.0
  %5830 = vmatpush1.msra.mxu0 %v5572
  %5831 = vmatprep.subr.mxu0 0.0
  %5832 = vmatpush1.msra.mxu0 %v5573
  %5833 = vmatprep.subr.mxu0 0.0
  %5834 = vmatpush1.msra.mxu0 0.0
  %5835 = vmatprep.subr.mxu0 0.0
  %5836 = vmatpush1.msra.mxu0 0.0
  %5837 = vmatprep.subr.mxu0 0.0
  %5838 = vmatpush1.msra.mxu0 0.0
  %5839 = vmatprep.subr.mxu0 0.0
  %5840 = vmatpush1.msra.mxu0 0.0
  %5841 = vmatprep.subr.mxu0 0.0
  %5842 = vmatpush1.msra.mxu0 0.0
  %5843 = vmatprep.subr.mxu0 0.0
  %5844 = vmatpush1.msra.mxu0 0.0
  %5845 = vmatprep.subr.mxu0 0.0
  %5846 = vmatpush1.msra.mxu0 0.0
  %5847 = vmatprep.subr.mxu0 0.0
  %5848 = vmatpush1.msra.mxu0 0.0
  %5849 = vmatprep.subr.mxu0 0.0
  %5850 = vmatpush1.msra.mxu0 0.0
  %5851 = vmatprep.subr.mxu0 0.0
  %5852 = vmatpush1.msra.mxu0 0.0
  %5853 = vmatprep.subr.mxu0 0.0
  %5854 = vmatpush1.msra.mxu0 0.0
  %5855 = vmatprep.subr.mxu0 0.0
  %5856 = vmatpush1.msra.mxu0 0.0
  %5857 = vmatprep.subr.mxu0 0.0
  %5858 = vmatpush1.msra.mxu0 0.0
  %5859 = vmatprep.subr.mxu0 0.0
  %5860 = vmatpush1.msra.mxu0 0.0
  %5861 = vmatprep.subr.mxu0 0.0
  %5862 = vmatpush1.msra.mxu0 0.0
  %5863 = vmatprep.subr.mxu0 0.0
  %5864 = vmatpush1.msra.mxu0 0.0
  %5865 = vmatprep.subr.mxu0 0.0
  %5866 = vmatpush1.msra.mxu0 0.0
  %5867 = vmatprep.subr.mxu0 0.0
  %5868 = vmatpush1.msra.mxu0 0.0
  %5869 = vmatprep.subr.mxu0 0.0
  %5870 = vmatpush1.msra.mxu0 0.0
  %5871 = vmatprep.subr.mxu0 0.0
  %5872 = vmatpush1.msra.mxu0 0.0
  %5873 = vmatprep.subr.mxu0 0.0
  %5874 = vmatpush1.msra.mxu0 0.0
  %5875 = vmatprep.subr.mxu0 0.0
  %5876 = vmatpush1.msra.mxu0 0.0
  %5877 = vmatprep.subr.mxu0 0.0
  %5878 = vmatpush1.msra.mxu0 0.0
  %5879 = vmatprep.subr.mxu0 0.0
  %5880 = vmatpush1.msra.mxu0 0.0
  %5881 = vmatprep.subr.mxu0 0.0
  %5882 = vmatpush1.msra.mxu0 0.0
  %5883 = vmatprep.subr.mxu0 0.0
  %5884 = vmatpush1.msra.mxu0 0.0
  %5885 = vmatprep.subr.mxu0 0.0
  %5886 = vmatpush1.msra.mxu0 0.0
  %5887 = vmatprep.subr.mxu0 0.0
  %5888 = vmatpush1.msra.mxu0 0.0
  %5889 = vmatprep.mubr.f32.mxu0 0.0
  %5890 = vmatmul.mubr.f32.gmra.mrb[0].mxu0 %v603
  %v5891 = vpop.f32.mrb[0].mxu0
  %v5892 = vadd.f32 0.0, %v5891
  %v5893 = vpop.f32.mrb[0].mxu0
  %5894 = vdwg.mxu0
  %v5896 = vrot.slane %v5892, 2
  %v5898 = vadd.f32 %v5213, %v5896
  %v5899 = vxor.u32 %v5898, 2147483648
  %v5900 = vmul.f32 %v5899, 1.442695
  %v5901 = vpow.pop %v5900
  %v5902 = vadd.f32 %v5901, 1.0
  %v5903 = vrcp.pop %v5902
  %v5904 = vmul.f32 1.0, %v5903
  %5905 = vmatprep.subr.mxu0 0.0
  %5906 = vmatpush1.msra.mxu0 %v5575
  %5907 = vmatprep.subr.mxu0 0.0
  %5908 = vmatpush1.msra.mxu0 %v5576
  %5909 = vmatprep.subr.mxu0 0.0
  %5910 = vmatpush1.msra.mxu0 %v5577
  %5911 = vmatprep.subr.mxu0 0.0
  %5912 = vmatpush1.msra.mxu0 %v5578
  %5913 = vmatprep.subr.mxu0 0.0
  %5914 = vmatpush1.msra.mxu0 0.0
  %5915 = vmatprep.subr.mxu0 0.0
  %5916 = vmatpush1.msra.mxu0 0.0
  %5917 = vmatprep.subr.mxu0 0.0
  %5918 = vmatpush1.msra.mxu0 0.0
  %5919 = vmatprep.subr.mxu0 0.0
  %5920 = vmatpush1.msra.mxu0 0.0
  %5921 = vmatprep.subr.mxu0 0.0
  %5922 = vmatpush1.msra.mxu0 0.0
  %5923 = vmatprep.subr.mxu0 0.0
  %5924 = vmatpush1.msra.mxu0 0.0
  %5925 = vmatprep.subr.mxu0 0.0
  %5926 = vmatpush1.msra.mxu0 0.0
  %5927 = vmatprep.subr.mxu0 0.0
  %5928 = vmatpush1.msra.mxu0 0.0
  %5929 = vmatprep.subr.mxu0 0.0
  %5930 = vmatpush1.msra.mxu0 0.0
  %5931 = vmatprep.subr.mxu0 0.0
  %5932 = vmatpush1.msra.mxu0 0.0
  %5933 = vmatprep.subr.mxu0 0.0
  %5934 = vmatpush1.msra.mxu0 0.0
  %5935 = vmatprep.subr.mxu0 0.0
  %5936 = vmatpush1.msra.mxu0 0.0
  %5937 = vmatprep.subr.mxu0 0.0
  %5938 = vmatpush1.msra.mxu0 0.0
  %5939 = vmatprep.subr.mxu0 0.0
  %5940 = vmatpush1.msra.mxu0 0.0
  %5941 = vmatprep.subr.mxu0 0.0
  %5942 = vmatpush1.msra.mxu0 0.0
  %5943 = vmatprep.subr.mxu0 0.0
  %5944 = vmatpush1.msra.mxu0 0.0
  %5945 = vmatprep.subr.mxu0 0.0
  %5946 = vmatpush1.msra.mxu0 0.0
  %5947 = vmatprep.subr.mxu0 0.0
  %5948 = vmatpush1.msra.mxu0 0.0
  %5949 = vmatprep.subr.mxu0 0.0
  %5950 = vmatpush1.msra.mxu0 0.0
  %5951 = vmatprep.subr.mxu0 0.0
  %5952 = vmatpush1.msra.mxu0 0.0
  %5953 = vmatprep.subr.mxu0 0.0
  %5954 = vmatpush1.msra.mxu0 0.0
  %5955 = vmatprep.subr.mxu0 0.0
  %5956 = vmatpush1.msra.mxu0 0.0
  %5957 = vmatprep.subr.mxu0 0.0
  %5958 = vmatpush1.msra.mxu0 0.0
  %5959 = vmatprep.subr.mxu0 0.0
  %5960 = vmatpush1.msra.mxu0 0.0
  %5961 = vmatprep.subr.mxu0 0.0
  %5962 = vmatpush1.msra.mxu0 0.0
  %5963 = vmatprep.subr.mxu0 0.0
  %5964 = vmatpush1.msra.mxu0 0.0
  %5965 = vmatprep.subr.mxu0 0.0
  %5966 = vmatpush1.msra.mxu0 0.0
  %5967 = vmatprep.subr.mxu0 0.0
  %5968 = vmatpush1.msra.mxu0 0.0
  %5969 = vmatprep.mubr.f32.mxu0 0.0
  %5970 = vmatmul.mubr.f32.gmra.mrb[0].mxu0 %v603
  %v5971 = vpop.f32.mrb[0].mxu0
  %v5972 = vadd.f32 0.0, %v5971
  %v5973 = vpop.f32.mrb[0].mxu0
  %5974 = vdwg.mxu0
  %v5976 = vrot.slane %v5972, 2
  %v5978 = vadd.f32 %v5383, %v5976
  %v5979 = vxor.u32 %v5978, 2147483648
  %v5980 = vmul.f32 %v5979, 1.442695
  %v5981 = vpow.pop %v5980
  %v5982 = vadd.f32 %v5981, 1.0
  %v5983 = vrcp.pop %v5982
  %v5984 = vmul.f32 1.0, %v5983
  %v5986 = vlaneseq
  %v5987 = vshrl.u32 %v5986, 7
  %v5988 = vsub.s32 0, %v5987
  %v5989 = vrot.slane %v5587, %v5988
  %5991 = vmatprep.subr.mxu0 0.0
  %5992 = vmatpush1.msra.mxu0 %v5580
  %5993 = vmatprep.subr.mxu0 0.0
  %5994 = vmatpush1.msra.mxu0 %v5581
  %5995 = vmatprep.subr.mxu0 0.0
  %5996 = vmatpush1.msra.mxu0 %v5582
  %5997 = vmatprep.subr.mxu0 0.0
  %5998 = vmatpush1.msra.mxu0 %v5583
  %5999 = vmatprep.subr.mxu0 0.0
  %6000 = vmatpush1.msra.mxu0 0.0
  %6001 = vmatprep.subr.mxu0 0.0
  %6002 = vmatpush1.msra.mxu0 0.0
  %6003 = vmatprep.subr.mxu0 0.0
  %6004 = vmatpush1.msra.mxu0 0.0
  %6005 = vmatprep.subr.mxu0 0.0
  %6006 = vmatpush1.msra.mxu0 0.0
  %6007 = vmatprep.subr.mxu0 0.0
  %6008 = vmatpush1.msra.mxu0 0.0
  %6009 = vmatprep.subr.mxu0 0.0
  %6010 = vmatpush1.msra.mxu0 0.0
  %6011 = vmatprep.subr.mxu0 0.0
  %6012 = vmatpush1.msra.mxu0 0.0
  %6013 = vmatprep.subr.mxu0 0.0
  %6014 = vmatpush1.msra.mxu0 0.0
  %6015 = vmatprep.subr.mxu0 0.0
  %6016 = vmatpush1.msra.mxu0 0.0
  %6017 = vmatprep.subr.mxu0 0.0
  %6018 = vmatpush1.msra.mxu0 0.0
  %6019 = vmatprep.subr.mxu0 0.0
  %6020 = vmatpush1.msra.mxu0 0.0
  %6021 = vmatprep.subr.mxu0 0.0
  %6022 = vmatpush1.msra.mxu0 0.0
  %6023 = vmatprep.subr.mxu0 0.0
  %6024 = vmatpush1.msra.mxu0 0.0
  %6025 = vmatprep.subr.mxu0 0.0
  %6026 = vmatpush1.msra.mxu0 0.0
  %6027 = vmatprep.subr.mxu0 0.0
  %6028 = vmatpush1.msra.mxu0 0.0
  %6029 = vmatprep.subr.mxu0 0.0
  %6030 = vmatpush1.msra.mxu0 0.0
  %6031 = vmatprep.subr.mxu0 0.0
  %6032 = vmatpush1.msra.mxu0 0.0
  %6033 = vmatprep.subr.mxu0 0.0
  %6034 = vmatpush1.msra.mxu0 0.0
  %6035 = vmatprep.subr.mxu0 0.0
  %6036 = vmatpush1.msra.mxu0 0.0
  %6037 = vmatprep.subr.mxu0 0.0
  %6038 = vmatpush1.msra.mxu0 0.0
  %6039 = vmatprep.subr.mxu0 0.0
  %6040 = vmatpush1.msra.mxu0 0.0
  %6041 = vmatprep.subr.mxu0 0.0
  %6042 = vmatpush1.msra.mxu0 0.0
  %6043 = vmatprep.subr.mxu0 0.0
  %6044 = vmatpush1.msra.mxu0 0.0
  %6045 = vmatprep.subr.mxu0 0.0
  %6046 = vmatpush1.msra.mxu0 0.0
  %6047 = vmatprep.subr.mxu0 0.0
  %6048 = vmatpush1.msra.mxu0 0.0
  %6049 = vmatprep.subr.mxu0 0.0
  %6050 = vmatpush1.msra.mxu0 0.0
  %6051 = vmatprep.subr.mxu0 0.0
  %6052 = vmatpush1.msra.mxu0 0.0
  %6053 = vmatprep.subr.mxu0 0.0
  %6054 = vmatpush1.msra.mxu0 0.0
  %6055 = vmatprep.mubr.f32.mxu0 0.0
  %6056 = vmatmul.mubr.f32.gmra.mrb[0].mxu0 %v603
  %v6057 = vpop.f32.mrb[0].mxu0
  %v6058 = vadd.f32 %v5989, %v6057
  %v6059 = vpop.f32.mrb[0].mxu0
  %6060 = vdwg.mxu0
  %v6062 = vrot.slane %v6058, 2
  %v6064 = vmul.f32 %v5904, %v6062
  %v6065 = vadd.f32 %v5553, %v6064
  %v6066 = vtanh.pop %v6065
  %v6067 = vsub.f32 1.0, %v5984
  %v6068 = vmul.f32 %v6067, %v6066
  %v6069 = vmul.f32 %v5984, 0.0
  %v6070 = vadd.f32 %v6068, %v6069
  %v6072 = vsel %vm47, %v5824, 0
  %6074 = vmatprep.subr.mxu0 0.0
  %6075 = vmatpush1.msra.mxu0 %v5555
  %6076 = vmatprep.subr.mxu0 0.0
  %6077 = vmatpush1.msra.mxu0 %v5556
  %6078 = vmatprep.subr.mxu0 0.0
  %6079 = vmatpush1.msra.mxu0 %v5557
  %6080 = vmatprep.subr.mxu0 0.0
  %6081 = vmatpush1.msra.mxu0 %v5558
  %6082 = vmatprep.subr.mxu0 0.0
  %6083 = vmatpush1.msra.mxu0 0.0
  %6084 = vmatprep.subr.mxu0 0.0
  %6085 = vmatpush1.msra.mxu0 0.0
  %6086 = vmatprep.subr.mxu0 0.0
  %6087 = vmatpush1.msra.mxu0 0.0
  %6088 = vmatprep.subr.mxu0 0.0
  %6089 = vmatpush1.msra.mxu0 0.0
  %6090 = vmatprep.subr.mxu0 0.0
  %6091 = vmatpush1.msra.mxu0 0.0
  %6092 = vmatprep.subr.mxu0 0.0
  %6093 = vmatpush1.msra.mxu0 0.0
  %6094 = vmatprep.subr.mxu0 0.0
  %6095 = vmatpush1.msra.mxu0 0.0
  %6096 = vmatprep.subr.mxu0 0.0
  %6097 = vmatpush1.msra.mxu0 0.0
  %6098 = vmatprep.subr.mxu0 0.0
  %6099 = vmatpush1.msra.mxu0 0.0
  %6100 = vmatprep.subr.mxu0 0.0
  %6101 = vmatpush1.msra.mxu0 0.0
  %6102 = vmatprep.subr.mxu0 0.0
  %6103 = vmatpush1.msra.mxu0 0.0
  %6104 = vmatprep.subr.mxu0 0.0
  %6105 = vmatpush1.msra.mxu0 0.0
  %6106 = vmatprep.subr.mxu0 0.0
  %6107 = vmatpush1.msra.mxu0 0.0
  %6108 = vmatprep.subr.mxu0 0.0
  %6109 = vmatpush1.msra.mxu0 0.0
  %6110 = vmatprep.subr.mxu0 0.0
  %6111 = vmatpush1.msra.mxu0 0.0
  %6112 = vmatprep.subr.mxu0 0.0
  %6113 = vmatpush1.msra.mxu0 0.0
  %6114 = vmatprep.subr.mxu0 0.0
  %6115 = vmatpush1.msra.mxu0 0.0
  %6116 = vmatprep.subr.mxu0 0.0
  %6117 = vmatpush1.msra.mxu0 0.0
  %6118 = vmatprep.subr.mxu0 0.0
  %6119 = vmatpush1.msra.mxu0 0.0
  %6120 = vmatprep.subr.mxu0 0.0
  %6121 = vmatpush1.msra.mxu0 0.0
  %6122 = vmatprep.subr.mxu0 0.0
  %6123 = vmatpush1.msra.mxu0 0.0
  %6124 = vmatprep.subr.mxu0 0.0
  %6125 = vmatpush1.msra.mxu0 0.0
  %6126 = vmatprep.subr.mxu0 0.0
  %6127 = vmatpush1.msra.mxu0 0.0
  %6128 = vmatprep.subr.mxu0 0.0
  %6129 = vmatpush1.msra.mxu0 0.0
  %6130 = vmatprep.subr.mxu0 0.0
  %6131 = vmatpush1.msra.mxu0 0.0
  %6132 = vmatprep.subr.mxu0 0.0
  %6133 = vmatpush1.msra.mxu0 0.0
  %6134 = vmatprep.subr.mxu0 0.0
  %6135 = vmatpush1.msra.mxu0 0.0
  %6136 = vmatprep.subr.mxu0 0.0
  %6137 = vmatpush1.msra.mxu0 0.0
  %6138 = vmatprep.mubr.f32.mxu0 0.0
  %6139 = vmatmul.mubr.f32.gmra.mrb[0].mxu0 %v6072
  %v6140 = vpop.f32.mrb[0].mxu0
  %v6141 = vadd.f32 0.0, %v6140
  %v6142 = vpop.f32.mrb[0].mxu0
  %6143 = vdwg.mxu0
  %v6145 = vrot.slane %v6141, 6
  %v6147 = vadd.f32 %v4702, %v6145
  %v6148 = vxor.u32 %v6147, 2147483648
  %v6149 = vmul.f32 %v6148, 1.442695
  %v6150 = vpow.pop %v6149
  %v6151 = vadd.f32 %v6150, 1.0
  %v6152 = vrcp.pop %v6151
  %v6153 = vmul.f32 1.0, %v6152
  %6154 = vmatprep.subr.mxu0 0.0
  %6155 = vmatpush1.msra.mxu0 %v5560
  %6156 = vmatprep.subr.mxu0 0.0
  %6157 = vmatpush1.msra.mxu0 %v5561
  %6158 = vmatprep.subr.mxu0 0.0
  %6159 = vmatpush1.msra.mxu0 %v5562
  %6160 = vmatprep.subr.mxu0 0.0
  %6161 = vmatpush1.msra.mxu0 %v5563
  %6162 = vmatprep.subr.mxu0 0.0
  %6163 = vmatpush1.msra.mxu0 0.0
  %6164 = vmatprep.subr.mxu0 0.0
  %6165 = vmatpush1.msra.mxu0 0.0
  %6166 = vmatprep.subr.mxu0 0.0
  %6167 = vmatpush1.msra.mxu0 0.0
  %6168 = vmatprep.subr.mxu0 0.0
  %6169 = vmatpush1.msra.mxu0 0.0
  %6170 = vmatprep.subr.mxu0 0.0
  %6171 = vmatpush1.msra.mxu0 0.0
  %6172 = vmatprep.subr.mxu0 0.0
  %6173 = vmatpush1.msra.mxu0 0.0
  %6174 = vmatprep.subr.mxu0 0.0
  %6175 = vmatpush1.msra.mxu0 0.0
  %6176 = vmatprep.subr.mxu0 0.0
  %6177 = vmatpush1.msra.mxu0 0.0
  %6178 = vmatprep.subr.mxu0 0.0
  %6179 = vmatpush1.msra.mxu0 0.0
  %6180 = vmatprep.subr.mxu0 0.0
  %6181 = vmatpush1.msra.mxu0 0.0
  %6182 = vmatprep.subr.mxu0 0.0
  %6183 = vmatpush1.msra.mxu0 0.0
  %6184 = vmatprep.subr.mxu0 0.0
  %6185 = vmatpush1.msra.mxu0 0.0
  %6186 = vmatprep.subr.mxu0 0.0
  %6187 = vmatpush1.msra.mxu0 0.0
  %6188 = vmatprep.subr.mxu0 0.0
  %6189 = vmatpush1.msra.mxu0 0.0
  %6190 = vmatprep.subr.mxu0 0.0
  %6191 = vmatpush1.msra.mxu0 0.0
  %6192 = vmatprep.subr.mxu0 0.0
  %6193 = vmatpush1.msra.mxu0 0.0
  %6194 = vmatprep.subr.mxu0 0.0
  %6195 = vmatpush1.msra.mxu0 0.0
  %6196 = vmatprep.subr.mxu0 0.0
  %6197 = vmatpush1.msra.mxu0 0.0
  %6198 = vmatprep.subr.mxu0 0.0
  %6199 = vmatpush1.msra.mxu0 0.0
  %6200 = vmatprep.subr.mxu0 0.0
  %6201 = vmatpush1.msra.mxu0 0.0
  %6202 = vmatprep.subr.mxu0 0.0
  %6203 = vmatpush1.msra.mxu0 0.0
  %6204 = vmatprep.subr.mxu0 0.0
  %6205 = vmatpush1.msra.mxu0 0.0
  %6206 = vmatprep.subr.mxu0 0.0
  %6207 = vmatpush1.msra.mxu0 0.0
  %6208 = vmatprep.subr.mxu0 0.0
  %6209 = vmatpush1.msra.mxu0 0.0
  %6210 = vmatprep.subr.mxu0 0.0
  %6211 = vmatpush1.msra.mxu0 0.0
  %6212 = vmatprep.subr.mxu0 0.0
  %6213 = vmatpush1.msra.mxu0 0.0
  %6214 = vmatprep.subr.mxu0 0.0
  %6215 = vmatpush1.msra.mxu0 0.0
  %6216 = vmatprep.subr.mxu0 0.0
  %6217 = vmatpush1.msra.mxu0 0.0
  %6218 = vmatprep.mubr.f32.mxu0 0.0
  %6219 = vmatmul.mubr.f32.gmra.mrb[0].mxu0 %v6072
  %v6220 = vpop.f32.mrb[0].mxu0
  %v6221 = vadd.f32 0.0, %v6220
  %v6222 = vpop.f32.mrb[0].mxu0
  %6223 = vdwg.mxu0
  %v6225 = vrot.slane %v6221, 6
  %v6227 = vadd.f32 %v4872, %v6225
  %v6228 = vxor.u32 %v6227, 2147483648
  %v6229 = vmul.f32 %v6228, 1.442695
  %v6230 = vpow.pop %v6229
  %v6231 = vadd.f32 %v6230, 1.0
  %v6232 = vrcp.pop %v6231
  %v6233 = vmul.f32 1.0, %v6232
  %6234 = vmatprep.subr.mxu0 0.0
  %6235 = vmatpush1.msra.mxu0 %v5565
  %6236 = vmatprep.subr.mxu0 0.0
  %6237 = vmatpush1.msra.mxu0 %v5566
  %6238 = vmatprep.subr.mxu0 0.0
  %6239 = vmatpush1.msra.mxu0 %v5567
  %6240 = vmatprep.subr.mxu0 0.0
  %6241 = vmatpush1.msra.mxu0 %v5568
  %6242 = vmatprep.subr.mxu0 0.0
  %6243 = vmatpush1.msra.mxu0 0.0
  %6244 = vmatprep.subr.mxu0 0.0
  %6245 = vmatpush1.msra.mxu0 0.0
  %6246 = vmatprep.subr.mxu0 0.0
  %6247 = vmatpush1.msra.mxu0 0.0
  %6248 = vmatprep.subr.mxu0 0.0
  %6249 = vmatpush1.msra.mxu0 0.0
  %6250 = vmatprep.subr.mxu0 0.0
  %6251 = vmatpush1.msra.mxu0 0.0
  %6252 = vmatprep.subr.mxu0 0.0
  %6253 = vmatpush1.msra.mxu0 0.0
  %6254 = vmatprep.subr.mxu0 0.0
  %6255 = vmatpush1.msra.mxu0 0.0
  %6256 = vmatprep.subr.mxu0 0.0
  %6257 = vmatpush1.msra.mxu0 0.0
  %6258 = vmatprep.subr.mxu0 0.0
  %6259 = vmatpush1.msra.mxu0 0.0
  %6260 = vmatprep.subr.mxu0 0.0
  %6261 = vmatpush1.msra.mxu0 0.0
  %6262 = vmatprep.subr.mxu0 0.0
  %6263 = vmatpush1.msra.mxu0 0.0
  %6264 = vmatprep.subr.mxu0 0.0
  %6265 = vmatpush1.msra.mxu0 0.0
  %6266 = vmatprep.subr.mxu0 0.0
  %6267 = vmatpush1.msra.mxu0 0.0
  %6268 = vmatprep.subr.mxu0 0.0
  %6269 = vmatpush1.msra.mxu0 0.0
  %6270 = vmatprep.subr.mxu0 0.0
  %6271 = vmatpush1.msra.mxu0 0.0
  %6272 = vmatprep.subr.mxu0 0.0
  %6273 = vmatpush1.msra.mxu0 0.0
  %6274 = vmatprep.subr.mxu0 0.0
  %6275 = vmatpush1.msra.mxu0 0.0
  %6276 = vmatprep.subr.mxu0 0.0
  %6277 = vmatpush1.msra.mxu0 0.0
  %6278 = vmatprep.subr.mxu0 0.0
  %6279 = vmatpush1.msra.mxu0 0.0
  %6280 = vmatprep.subr.mxu0 0.0
  %6281 = vmatpush1.msra.mxu0 0.0
  %6282 = vmatprep.subr.mxu0 0.0
  %6283 = vmatpush1.msra.mxu0 0.0
  %6284 = vmatprep.subr.mxu0 0.0
  %6285 = vmatpush1.msra.mxu0 0.0
  %6286 = vmatprep.subr.mxu0 0.0
  %6287 = vmatpush1.msra.mxu0 0.0
  %6288 = vmatprep.subr.mxu0 0.0
  %6289 = vmatpush1.msra.mxu0 0.0
  %6290 = vmatprep.subr.mxu0 0.0
  %6291 = vmatpush1.msra.mxu0 0.0
  %6292 = vmatprep.subr.mxu0 0.0
  %6293 = vmatpush1.msra.mxu0 0.0
  %6294 = vmatprep.subr.mxu0 0.0
  %6295 = vmatpush1.msra.mxu0 0.0
  %6296 = vmatprep.subr.mxu0 0.0
  %6297 = vmatpush1.msra.mxu0 0.0
  %6298 = vmatprep.mubr.f32.mxu0 0.0
  %6299 = vmatmul.mubr.f32.gmra.mrb[0].mxu0 %v6072
  %v6300 = vpop.f32.mrb[0].mxu0
  %v6301 = vadd.f32 %v5746, %v6300
  %v6302 = vpop.f32.mrb[0].mxu0
  %6303 = vdwg.mxu0
  %v6305 = vrot.slane %v6301, 6
  %v6307 = vmul.f32 %v6153, %v6305
  %v6308 = vadd.f32 %v5042, %v6307
  %v6309 = vtanh.pop %v6308
  %v6310 = vsub.f32 1.0, %v6233
  %v6311 = vmul.f32 %v6310, %v6309
  %v6312 = vrot.slane %v5824, 6
  %v6314 = vmul.f32 %v6233, %v6312
  %v6315 = vadd.f32 %v6311, %v6314
  %v6317 = vrot.slane %v6070, 6
  %v6318 = vsel %vm47, %v6317, 0
  %6320 = vmatprep.subr.mxu0 0.0
  %6321 = vmatpush1.msra.mxu0 %v5570
  %6322 = vmatprep.subr.mxu0 0.0
  %6323 = vmatpush1.msra.mxu0 %v5571
  %6324 = vmatprep.subr.mxu0 0.0
  %6325 = vmatpush1.msra.mxu0 %v5572
  %6326 = vmatprep.subr.mxu0 0.0
  %6327 = vmatpush1.msra.mxu0 %v5573
  %6328 = vmatprep.subr.mxu0 0.0
  %6329 = vmatpush1.msra.mxu0 0.0
  %6330 = vmatprep.subr.mxu0 0.0
  %6331 = vmatpush1.msra.mxu0 0.0
  %6332 = vmatprep.subr.mxu0 0.0
  %6333 = vmatpush1.msra.mxu0 0.0
  %6334 = vmatprep.subr.mxu0 0.0
  %6335 = vmatpush1.msra.mxu0 0.0
  %6336 = vmatprep.subr.mxu0 0.0
  %6337 = vmatpush1.msra.mxu0 0.0
  %6338 = vmatprep.subr.mxu0 0.0
  %6339 = vmatpush1.msra.mxu0 0.0
  %6340 = vmatprep.subr.mxu0 0.0
  %6341 = vmatpush1.msra.mxu0 0.0
  %6342 = vmatprep.subr.mxu0 0.0
  %6343 = vmatpush1.msra.mxu0 0.0
  %6344 = vmatprep.subr.mxu0 0.0
  %6345 = vmatpush1.msra.mxu0 0.0
  %6346 = vmatprep.subr.mxu0 0.0
  %6347 = vmatpush1.msra.mxu0 0.0
  %6348 = vmatprep.subr.mxu0 0.0
  %6349 = vmatpush1.msra.mxu0 0.0
  %6350 = vmatprep.subr.mxu0 0.0
  %6351 = vmatpush1.msra.mxu0 0.0
  %6352 = vmatprep.subr.mxu0 0.0
  %6353 = vmatpush1.msra.mxu0 0.0
  %6354 = vmatprep.subr.mxu0 0.0
  %6355 = vmatpush1.msra.mxu0 0.0
  %6356 = vmatprep.subr.mxu0 0.0
  %6357 = vmatpush1.msra.mxu0 0.0
  %6358 = vmatprep.subr.mxu0 0.0
  %6359 = vmatpush1.msra.mxu0 0.0
  %6360 = vmatprep.subr.mxu0 0.0
  %6361 = vmatpush1.msra.mxu0 0.0
  %6362 = vmatprep.subr.mxu0 0.0
  %6363 = vmatpush1.msra.mxu0 0.0
  %6364 = vmatprep.subr.mxu0 0.0
  %6365 = vmatpush1.msra.mxu0 0.0
  %6366 = vmatprep.subr.mxu0 0.0
  %6367 = vmatpush1.msra.mxu0 0.0
  %6368 = vmatprep.subr.mxu0 0.0
  %6369 = vmatpush1.msra.mxu0 0.0
  %6370 = vmatprep.subr.mxu0 0.0
  %6371 = vmatpush1.msra.mxu0 0.0
  %6372 = vmatprep.subr.mxu0 0.0
  %6373 = vmatpush1.msra.mxu0 0.0
  %6374 = vmatprep.subr.mxu0 0.0
  %6375 = vmatpush1.msra.mxu0 0.0
  %6376 = vmatprep.subr.mxu0 0.0
  %6377 = vmatpush1.msra.mxu0 0.0
  %6378 = vmatprep.subr.mxu0 0.0
  %6379 = vmatpush1.msra.mxu0 0.0
  %6380 = vmatprep.subr.mxu0 0.0
  %6381 = vmatpush1.msra.mxu0 0.0
  %6382 = vmatprep.subr.mxu0 0.0
  %6383 = vmatpush1.msra.mxu0 0.0
  %6384 = vmatprep.mubr.f32.mxu0 0.0
  %6385 = vmatmul.mubr.f32.gmra.mrb[0].mxu0 %v6318
  %v6386 = vpop.f32.mrb[0].mxu0
  %v6387 = vadd.f32 0.0, %v6386
  %v6388 = vpop.f32.mrb[0].mxu0
  %6389 = vdwg.mxu0
  %v6391 = vrot.slane %v6387, 4
  %v6393 = vadd.f32 %v5213, %v6391
  %v6394 = vxor.u32 %v6393, 2147483648
  %v6395 = vmul.f32 %v6394, 1.442695
  %v6396 = vpow.pop %v6395
  %v6397 = vadd.f32 %v6396, 1.0
  %v6398 = vrcp.pop %v6397
  %v6399 = vmul.f32 1.0, %v6398
  %6400 = vmatprep.subr.mxu0 0.0
  %6401 = vmatpush1.msra.mxu0 %v5575
  %6402 = vmatprep.subr.mxu0 0.0
  %6403 = vmatpush1.msra.mxu0 %v5576
  %6404 = vmatprep.subr.mxu0 0.0
  %6405 = vmatpush1.msra.mxu0 %v5577
  %6406 = vmatprep.subr.mxu0 0.0
  %6407 = vmatpush1.msra.mxu0 %v5578
  %6408 = vmatprep.subr.mxu0 0.0
  %6409 = vmatpush1.msra.mxu0 0.0
  %6410 = vmatprep.subr.mxu0 0.0
  %6411 = vmatpush1.msra.mxu0 0.0
  %6412 = vmatprep.subr.mxu0 0.0
  %6413 = vmatpush1.msra.mxu0 0.0
  %6414 = vmatprep.subr.mxu0 0.0
  %6415 = vmatpush1.msra.mxu0 0.0
  %6416 = vmatprep.subr.mxu0 0.0
  %6417 = vmatpush1.msra.mxu0 0.0
  %6418 = vmatprep.subr.mxu0 0.0
  %6419 = vmatpush1.msra.mxu0 0.0
  %6420 = vmatprep.subr.mxu0 0.0
  %6421 = vmatpush1.msra.mxu0 0.0
  %6422 = vmatprep.subr.mxu0 0.0
  %6423 = vmatpush1.msra.mxu0 0.0
  %6424 = vmatprep.subr.mxu0 0.0
  %6425 = vmatpush1.msra.mxu0 0.0
  %6426 = vmatprep.subr.mxu0 0.0
  %6427 = vmatpush1.msra.mxu0 0.0
  %6428 = vmatprep.subr.mxu0 0.0
  %6429 = vmatpush1.msra.mxu0 0.0
  %6430 = vmatprep.subr.mxu0 0.0
  %6431 = vmatpush1.msra.mxu0 0.0
  %6432 = vmatprep.subr.mxu0 0.0
  %6433 = vmatpush1.msra.mxu0 0.0
  %6434 = vmatprep.subr.mxu0 0.0
  %6435 = vmatpush1.msra.mxu0 0.0
  %6436 = vmatprep.subr.mxu0 0.0
  %6437 = vmatpush1.msra.mxu0 0.0
  %6438 = vmatprep.subr.mxu0 0.0
  %6439 = vmatpush1.msra.mxu0 0.0
  %6440 = vmatprep.subr.mxu0 0.0
  %6441 = vmatpush1.msra.mxu0 0.0
  %6442 = vmatprep.subr.mxu0 0.0
  %6443 = vmatpush1.msra.mxu0 0.0
  %6444 = vmatprep.subr.mxu0 0.0
  %6445 = vmatpush1.msra.mxu0 0.0
  %6446 = vmatprep.subr.mxu0 0.0
  %6447 = vmatpush1.msra.mxu0 0.0
  %6448 = vmatprep.subr.mxu0 0.0
  %6449 = vmatpush1.msra.mxu0 0.0
  %6450 = vmatprep.subr.mxu0 0.0
  %6451 = vmatpush1.msra.mxu0 0.0
  %6452 = vmatprep.subr.mxu0 0.0
  %6453 = vmatpush1.msra.mxu0 0.0
  %6454 = vmatprep.subr.mxu0 0.0
  %6455 = vmatpush1.msra.mxu0 0.0
  %6456 = vmatprep.subr.mxu0 0.0
  %6457 = vmatpush1.msra.mxu0 0.0
  %6458 = vmatprep.subr.mxu0 0.0
  %6459 = vmatpush1.msra.mxu0 0.0
  %6460 = vmatprep.subr.mxu0 0.0
  %6461 = vmatpush1.msra.mxu0 0.0
  %6462 = vmatprep.subr.mxu0 0.0
  %6463 = vmatpush1.msra.mxu0 0.0
  %6464 = vmatprep.mubr.f32.mxu0 0.0
  %6465 = vmatmul.mubr.f32.gmra.mrb[0].mxu0 %v6318
  %v6466 = vpop.f32.mrb[0].mxu0
  %v6467 = vadd.f32 0.0, %v6466
  %v6468 = vpop.f32.mrb[0].mxu0
  %6469 = vdwg.mxu0
  %v6471 = vrot.slane %v6467, 4
  %v6473 = vadd.f32 %v5383, %v6471
  %v6474 = vxor.u32 %v6473, 2147483648
  %v6475 = vmul.f32 %v6474, 1.442695
  %v6476 = vpow.pop %v6475
  %v6477 = vadd.f32 %v6476, 1.0
  %v6478 = vrcp.pop %v6477
  %v6479 = vmul.f32 1.0, %v6478
  %6480 = vmatprep.subr.mxu0 0.0
  %6481 = vmatpush1.msra.mxu0 %v5580
  %6482 = vmatprep.subr.mxu0 0.0
  %6483 = vmatpush1.msra.mxu0 %v5581
  %6484 = vmatprep.subr.mxu0 0.0
  %6485 = vmatpush1.msra.mxu0 %v5582
  %6486 = vmatprep.subr.mxu0 0.0
  %6487 = vmatpush1.msra.mxu0 %v5583
  %6488 = vmatprep.subr.mxu0 0.0
  %6489 = vmatpush1.msra.mxu0 0.0
  %6490 = vmatprep.subr.mxu0 0.0
  %6491 = vmatpush1.msra.mxu0 0.0
  %6492 = vmatprep.subr.mxu0 0.0
  %6493 = vmatpush1.msra.mxu0 0.0
  %6494 = vmatprep.subr.mxu0 0.0
  %6495 = vmatpush1.msra.mxu0 0.0
  %6496 = vmatprep.subr.mxu0 0.0
  %6497 = vmatpush1.msra.mxu0 0.0
  %6498 = vmatprep.subr.mxu0 0.0
  %6499 = vmatpush1.msra.mxu0 0.0
  %6500 = vmatprep.subr.mxu0 0.0
  %6501 = vmatpush1.msra.mxu0 0.0
  %6502 = vmatprep.subr.mxu0 0.0
  %6503 = vmatpush1.msra.mxu0 0.0
  %6504 = vmatprep.subr.mxu0 0.0
  %6505 = vmatpush1.msra.mxu0 0.0
  %6506 = vmatprep.subr.mxu0 0.0
  %6507 = vmatpush1.msra.mxu0 0.0
  %6508 = vmatprep.subr.mxu0 0.0
  %6509 = vmatpush1.msra.mxu0 0.0
  %6510 = vmatprep.subr.mxu0 0.0
  %6511 = vmatpush1.msra.mxu0 0.0
  %6512 = vmatprep.subr.mxu0 0.0
  %6513 = vmatpush1.msra.mxu0 0.0
  %6514 = vmatprep.subr.mxu0 0.0
  %6515 = vmatpush1.msra.mxu0 0.0
  %6516 = vmatprep.subr.mxu0 0.0
  %6517 = vmatpush1.msra.mxu0 0.0
  %6518 = vmatprep.subr.mxu0 0.0
  %6519 = vmatpush1.msra.mxu0 0.0
  %6520 = vmatprep.subr.mxu0 0.0
  %6521 = vmatpush1.msra.mxu0 0.0
  %6522 = vmatprep.subr.mxu0 0.0
  %6523 = vmatpush1.msra.mxu0 0.0
  %6524 = vmatprep.subr.mxu0 0.0
  %6525 = vmatpush1.msra.mxu0 0.0
  %6526 = vmatprep.subr.mxu0 0.0
  %6527 = vmatpush1.msra.mxu0 0.0
  %6528 = vmatprep.subr.mxu0 0.0
  %6529 = vmatpush1.msra.mxu0 0.0
  %6530 = vmatprep.subr.mxu0 0.0
  %6531 = vmatpush1.msra.mxu0 0.0
  %6532 = vmatprep.subr.mxu0 0.0
  %6533 = vmatpush1.msra.mxu0 0.0
  %6534 = vmatprep.subr.mxu0 0.0
  %6535 = vmatpush1.msra.mxu0 0.0
  %6536 = vmatprep.subr.mxu0 0.0
  %6537 = vmatpush1.msra.mxu0 0.0
  %6538 = vmatprep.subr.mxu0 0.0
  %6539 = vmatpush1.msra.mxu0 0.0
  %6540 = vmatprep.subr.mxu0 0.0
  %6541 = vmatpush1.msra.mxu0 0.0
  %6542 = vmatprep.subr.mxu0 0.0
  %6543 = vmatpush1.msra.mxu0 0.0
  %6544 = vmatprep.mubr.f32.mxu0 0.0
  %6545 = vmatmul.mubr.f32.gmra.mrb[0].mxu0 %v6318
  %v6546 = vpop.f32.mrb[0].mxu0
  %v6547 = vadd.f32 %v5989, %v6546
  %v6548 = vpop.f32.mrb[0].mxu0
  %6549 = vdwg.mxu0
  %v6551 = vrot.slane %v6547, 4
  %v6553 = vmul.f32 %v6399, %v6551
  %v6554 = vadd.f32 %v5553, %v6553
  %v6555 = vtanh.pop %v6554
  %v6556 = vsub.f32 1.0, %v6479
  %v6557 = vmul.f32 %v6556, %v6555
  %v6558 = vrot.slane %v6070, 2
  %v6560 = vmul.f32 %v6479, %v6558
  %v6561 = vadd.f32 %v6557, %v6560
  %v6563 = vrot.slane %v6315, 2
  %v6564 = vsel %vm47, %v6563, 0
  %6566 = vmatprep.subr.mxu0 0.0
  %6567 = vmatpush1.msra.mxu0 %v5555
  %6568 = vmatprep.subr.mxu0 0.0
  %6569 = vmatpush1.msra.mxu0 %v5556
  %6570 = vmatprep.subr.mxu0 0.0
  %6571 = vmatpush1.msra.mxu0 %v5557
  %6572 = vmatprep.subr.mxu0 0.0
  %6573 = vmatpush1.msra.mxu0 %v5558
  %6574 = vmatprep.subr.mxu0 0.0
  %6575 = vmatpush1.msra.mxu0 0.0
  %6576 = vmatprep.subr.mxu0 0.0
  %6577 = vmatpush1.msra.mxu0 0.0
  %6578 = vmatprep.subr.mxu0 0.0
  %6579 = vmatpush1.msra.mxu0 0.0
  %6580 = vmatprep.subr.mxu0 0.0
  %6581 = vmatpush1.msra.mxu0 0.0
  %6582 = vmatprep.subr.mxu0 0.0
  %6583 = vmatpush1.msra.mxu0 0.0
  %6584 = vmatprep.subr.mxu0 0.0
  %6585 = vmatpush1.msra.mxu0 0.0
  %6586 = vmatprep.subr.mxu0 0.0
  %6587 = vmatpush1.msra.mxu0 0.0
  %6588 = vmatprep.subr.mxu0 0.0
  %6589 = vmatpush1.msra.mxu0 0.0
  %6590 = vmatprep.subr.mxu0 0.0
  %6591 = vmatpush1.msra.mxu0 0.0
  %6592 = vmatprep.subr.mxu0 0.0
  %6593 = vmatpush1.msra.mxu0 0.0
  %6594 = vmatprep.subr.mxu0 0.0
  %6595 = vmatpush1.msra.mxu0 0.0
  %6596 = vmatprep.subr.mxu0 0.0
  %6597 = vmatpush1.msra.mxu0 0.0
  %6598 = vmatprep.subr.mxu0 0.0
  %6599 = vmatpush1.msra.mxu0 0.0
  %6600 = vmatprep.subr.mxu0 0.0
  %6601 = vmatpush1.msra.mxu0 0.0
  %6602 = vmatprep.subr.mxu0 0.0
  %6603 = vmatpush1.msra.mxu0 0.0
  %6604 = vmatprep.subr.mxu0 0.0
  %6605 = vmatpush1.msra.mxu0 0.0
  %6606 = vmatprep.subr.mxu0 0.0
  %6607 = vmatpush1.msra.mxu0 0.0
  %6608 = vmatprep.subr.mxu0 0.0
  %6609 = vmatpush1.msra.mxu0 0.0
  %6610 = vmatprep.subr.mxu0 0.0
  %6611 = vmatpush1.msra.mxu0 0.0
  %6612 = vmatprep.subr.mxu0 0.0
  %6613 = vmatpush1.msra.mxu0 0.0
  %6614 = vmatprep.subr.mxu0 0.0
  %6615 = vmatpush1.msra.mxu0 0.0
  %6616 = vmatprep.subr.mxu0 0.0
  %6617 = vmatpush1.msra.mxu0 0.0
  %6618 = vmatprep.subr.mxu0 0.0
  %6619 = vmatpush1.msra.mxu0 0.0
  %6620 = vmatprep.subr.mxu0 0.0
  %6621 = vmatpush1.msra.mxu0 0.0
  %6622 = vmatprep.subr.mxu0 0.0
  %6623 = vmatpush1.msra.mxu0 0.0
  %6624 = vmatprep.subr.mxu0 0.0
  %6625 = vmatpush1.msra.mxu0 0.0
  %6626 = vmatprep.subr.mxu0 0.0
  %6627 = vmatpush1.msra.mxu0 0.0
  %6628 = vmatprep.subr.mxu0 0.0
  %6629 = vmatpush1.msra.mxu0 0.0
  %6630 = vmatprep.mubr.f32.mxu0 0.0
  %6631 = vmatmul.mubr.f32.gmra.mrb[0].mxu0 %v6564
  %v6632 = vpop.f32.mrb[0].mxu0
  %v6633 = vadd.f32 0.0, %v6632
  %v6634 = vpop.f32.mrb[0].mxu0
  %6635 = vdwg.mxu0
  %v6637 = vrot.slane %v6633, 4
  %v6639 = vadd.f32 %v4702, %v6637
  %v6640 = vxor.u32 %v6639, 2147483648
  %v6641 = vmul.f32 %v6640, 1.442695
  %v6642 = vpow.pop %v6641
  %v6643 = vadd.f32 %v6642, 1.0
  %v6644 = vrcp.pop %v6643
  %v6645 = vmul.f32 1.0, %v6644
  %6646 = vmatprep.subr.mxu0 0.0
  %6647 = vmatpush1.msra.mxu0 %v5560
  %6648 = vmatprep.subr.mxu0 0.0
  %6649 = vmatpush1.msra.mxu0 %v5561
  %6650 = vmatprep.subr.mxu0 0.0
  %6651 = vmatpush1.msra.mxu0 %v5562
  %6652 = vmatprep.subr.mxu0 0.0
  %6653 = vmatpush1.msra.mxu0 %v5563
  %6654 = vmatprep.subr.mxu0 0.0
  %6655 = vmatpush1.msra.mxu0 0.0
  %6656 = vmatprep.subr.mxu0 0.0
  %6657 = vmatpush1.msra.mxu0 0.0
  %6658 = vmatprep.subr.mxu0 0.0
  %6659 = vmatpush1.msra.mxu0 0.0
  %6660 = vmatprep.subr.mxu0 0.0
  %6661 = vmatpush1.msra.mxu0 0.0
  %6662 = vmatprep.subr.mxu0 0.0
  %6663 = vmatpush1.msra.mxu0 0.0
  %6664 = vmatprep.subr.mxu0 0.0
  %6665 = vmatpush1.msra.mxu0 0.0
  %6666 = vmatprep.subr.mxu0 0.0
  %6667 = vmatpush1.msra.mxu0 0.0
  %6668 = vmatprep.subr.mxu0 0.0
  %6669 = vmatpush1.msra.mxu0 0.0
  %6670 = vmatprep.subr.mxu0 0.0
  %6671 = vmatpush1.msra.mxu0 0.0
  %6672 = vmatprep.subr.mxu0 0.0
  %6673 = vmatpush1.msra.mxu0 0.0
  %6674 = vmatprep.subr.mxu0 0.0
  %6675 = vmatpush1.msra.mxu0 0.0
  %6676 = vmatprep.subr.mxu0 0.0
  %6677 = vmatpush1.msra.mxu0 0.0
  %6678 = vmatprep.subr.mxu0 0.0
  %6679 = vmatpush1.msra.mxu0 0.0
  %6680 = vmatprep.subr.mxu0 0.0
  %6681 = vmatpush1.msra.mxu0 0.0
  %6682 = vmatprep.subr.mxu0 0.0
  %6683 = vmatpush1.msra.mxu0 0.0
  %6684 = vmatprep.subr.mxu0 0.0
  %6685 = vmatpush1.msra.mxu0 0.0
  %6686 = vmatprep.subr.mxu0 0.0
  %6687 = vmatpush1.msra.mxu0 0.0
  %6688 = vmatprep.subr.mxu0 0.0
  %6689 = vmatpush1.msra.mxu0 0.0
  %6690 = vmatprep.subr.mxu0 0.0
  %6691 = vmatpush1.msra.mxu0 0.0
  %6692 = vmatprep.subr.mxu0 0.0
  %6693 = vmatpush1.msra.mxu0 0.0
  %6694 = vmatprep.subr.mxu0 0.0
  %6695 = vmatpush1.msra.mxu0 0.0
  %6696 = vmatprep.subr.mxu0 0.0
  %6697 = vmatpush1.msra.mxu0 0.0
  %6698 = vmatprep.subr.mxu0 0.0
  %6699 = vmatpush1.msra.mxu0 0.0
  %6700 = vmatprep.subr.mxu0 0.0
  %6701 = vmatpush1.msra.mxu0 0.0
  %6702 = vmatprep.subr.mxu0 0.0
  %6703 = vmatpush1.msra.mxu0 0.0
  %6704 = vmatprep.subr.mxu0 0.0
  %6705 = vmatpush1.msra.mxu0 0.0
  %6706 = vmatprep.subr.mxu0 0.0
  %6707 = vmatpush1.msra.mxu0 0.0
  %6708 = vmatprep.subr.mxu0 0.0
  %6709 = vmatpush1.msra.mxu0 0.0
  %6710 = vmatprep.mubr.f32.mxu0 0.0
  %6711 = vmatmul.mubr.f32.gmra.mrb[0].mxu0 %v6564
  %v6712 = vpop.f32.mrb[0].mxu0
  %v6713 = vadd.f32 0.0, %v6712
  %v6714 = vpop.f32.mrb[0].mxu0
  %6715 = vdwg.mxu0
  %v6717 = vrot.slane %v6713, 4
  %v6719 = vadd.f32 %v4872, %v6717
  %v6720 = vxor.u32 %v6719, 2147483648
  %v6721 = vmul.f32 %v6720, 1.442695
  %v6722 = vpow.pop %v6721
  %v6723 = vadd.f32 %v6722, 1.0
  %v6724 = vrcp.pop %v6723
  %v6725 = vmul.f32 1.0, %v6724
  %6726 = vmatprep.subr.mxu0 0.0
  %6727 = vmatpush1.msra.mxu0 %v5565
  %6728 = vmatprep.subr.mxu0 0.0
  %6729 = vmatpush1.msra.mxu0 %v5566
  %6730 = vmatprep.subr.mxu0 0.0
  %6731 = vmatpush1.msra.mxu0 %v5567
  %6732 = vmatprep.subr.mxu0 0.0
  %6733 = vmatpush1.msra.mxu0 %v5568
  %6734 = vmatprep.subr.mxu0 0.0
  %6735 = vmatpush1.msra.mxu0 0.0
  %6736 = vmatprep.subr.mxu0 0.0
  %6737 = vmatpush1.msra.mxu0 0.0
  %6738 = vmatprep.subr.mxu0 0.0
  %6739 = vmatpush1.msra.mxu0 0.0
  %6740 = vmatprep.subr.mxu0 0.0
  %6741 = vmatpush1.msra.mxu0 0.0
  %6742 = vmatprep.subr.mxu0 0.0
  %6743 = vmatpush1.msra.mxu0 0.0
  %6744 = vmatprep.subr.mxu0 0.0
  %6745 = vmatpush1.msra.mxu0 0.0
  %6746 = vmatprep.subr.mxu0 0.0
  %6747 = vmatpush1.msra.mxu0 0.0
  %6748 = vmatprep.subr.mxu0 0.0
  %6749 = vmatpush1.msra.mxu0 0.0
  %6750 = vmatprep.subr.mxu0 0.0
  %6751 = vmatpush1.msra.mxu0 0.0
  %6752 = vmatprep.subr.mxu0 0.0
  %6753 = vmatpush1.msra.mxu0 0.0
  %6754 = vmatprep.subr.mxu0 0.0
  %6755 = vmatpush1.msra.mxu0 0.0
  %6756 = vmatprep.subr.mxu0 0.0
  %6757 = vmatpush1.msra.mxu0 0.0
  %6758 = vmatprep.subr.mxu0 0.0
  %6759 = vmatpush1.msra.mxu0 0.0
  %6760 = vmatprep.subr.mxu0 0.0
  %6761 = vmatpush1.msra.mxu0 0.0
  %6762 = vmatprep.subr.mxu0 0.0
  %6763 = vmatpush1.msra.mxu0 0.0
  %6764 = vmatprep.subr.mxu0 0.0
  %6765 = vmatpush1.msra.mxu0 0.0
  %6766 = vmatprep.subr.mxu0 0.0
  %6767 = vmatpush1.msra.mxu0 0.0
  %6768 = vmatprep.subr.mxu0 0.0
  %6769 = vmatpush1.msra.mxu0 0.0
  %6770 = vmatprep.subr.mxu0 0.0
  %6771 = vmatpush1.msra.mxu0 0.0
  %6772 = vmatprep.subr.mxu0 0.0
  %6773 = vmatpush1.msra.mxu0 0.0
  %6774 = vmatprep.subr.mxu0 0.0
  %6775 = vmatpush1.msra.mxu0 0.0
  %6776 = vmatprep.subr.mxu0 0.0
  %6777 = vmatpush1.msra.mxu0 0.0
  %6778 = vmatprep.subr.mxu0 0.0
  %6779 = vmatpush1.msra.mxu0 0.0
  %6780 = vmatprep.subr.mxu0 0.0
  %6781 = vmatpush1.msra.mxu0 0.0
  %6782 = vmatprep.subr.mxu0 0.0
  %6783 = vmatpush1.msra.mxu0 0.0
  %6784 = vmatprep.subr.mxu0 0.0
  %6785 = vmatpush1.msra.mxu0 0.0
  %6786 = vmatprep.subr.mxu0 0.0
  %6787 = vmatpush1.msra.mxu0 0.0
  %6788 = vmatprep.subr.mxu0 0.0
  %6789 = vmatpush1.msra.mxu0 0.0
  %6790 = vmatprep.mubr.f32.mxu0 0.0
  %6791 = vmatmul.mubr.f32.gmra.mrb[0].mxu0 %v6564
  %v6792 = vpop.f32.mrb[0].mxu0
  %v6793 = vadd.f32 %v5746, %v6792
  %v6794 = vpop.f32.mrb[0].mxu0
  %6795 = vdwg.mxu0
  %v6797 = vrot.slane %v6793, 4
  %v6799 = vmul.f32 %v6645, %v6797
  %v6800 = vadd.f32 %v5042, %v6799
  %v6801 = vtanh.pop %v6800
  %v6802 = vsub.f32 1.0, %v6725
  %v6803 = vmul.f32 %v6802, %v6801
  %v6804 = vrot.slane %v6315, 6
  %v6806 = vmul.f32 %v6725, %v6804
  %v6807 = vadd.f32 %v6803, %v6806
  %v6809 = vrot.slane %v6561, 4
  %v6810 = vsel %vm47, %v6809, 0
  %6812 = vmatprep.subr.mxu0 0.0
  %6813 = vmatpush1.msra.mxu0 %v5570
  %6814 = vmatprep.subr.mxu0 0.0
  %6815 = vmatpush1.msra.mxu0 %v5571
  %6816 = vmatprep.subr.mxu0 0.0
  %6817 = vmatpush1.msra.mxu0 %v5572
  %6818 = vmatprep.subr.mxu0 0.0
  %6819 = vmatpush1.msra.mxu0 %v5573
  %6820 = vmatprep.subr.mxu0 0.0
  %6821 = vmatpush1.msra.mxu0 0.0
  %6822 = vmatprep.subr.mxu0 0.0
  %6823 = vmatpush1.msra.mxu0 0.0
  %6824 = vmatprep.subr.mxu0 0.0
  %6825 = vmatpush1.msra.mxu0 0.0
  %6826 = vmatprep.subr.mxu0 0.0
  %6827 = vmatpush1.msra.mxu0 0.0
  %6828 = vmatprep.subr.mxu0 0.0
  %6829 = vmatpush1.msra.mxu0 0.0
  %6830 = vmatprep.subr.mxu0 0.0
  %6831 = vmatpush1.msra.mxu0 0.0
  %6832 = vmatprep.subr.mxu0 0.0
  %6833 = vmatpush1.msra.mxu0 0.0
  %6834 = vmatprep.subr.mxu0 0.0
  %6835 = vmatpush1.msra.mxu0 0.0
  %6836 = vmatprep.subr.mxu0 0.0
  %6837 = vmatpush1.msra.mxu0 0.0
  %6838 = vmatprep.subr.mxu0 0.0
  %6839 = vmatpush1.msra.mxu0 0.0
  %6840 = vmatprep.subr.mxu0 0.0
  %6841 = vmatpush1.msra.mxu0 0.0
  %6842 = vmatprep.subr.mxu0 0.0
  %6843 = vmatpush1.msra.mxu0 0.0
  %6844 = vmatprep.subr.mxu0 0.0
  %6845 = vmatpush1.msra.mxu0 0.0
  %6846 = vmatprep.subr.mxu0 0.0
  %6847 = vmatpush1.msra.mxu0 0.0
  %6848 = vmatprep.subr.mxu0 0.0
  %6849 = vmatpush1.msra.mxu0 0.0
  %6850 = vmatprep.subr.mxu0 0.0
  %6851 = vmatpush1.msra.mxu0 0.0
  %6852 = vmatprep.subr.mxu0 0.0
  %6853 = vmatpush1.msra.mxu0 0.0
  %6854 = vmatprep.subr.mxu0 0.0
  %6855 = vmatpush1.msra.mxu0 0.0
  %6856 = vmatprep.subr.mxu0 0.0
  %6857 = vmatpush1.msra.mxu0 0.0
  %6858 = vmatprep.subr.mxu0 0.0
  %6859 = vmatpush1.msra.mxu0 0.0
  %6860 = vmatprep.subr.mxu0 0.0
  %6861 = vmatpush1.msra.mxu0 0.0
  %6862 = vmatprep.subr.mxu0 0.0
  %6863 = vmatpush1.msra.mxu0 0.0
  %6864 = vmatprep.subr.mxu0 0.0
  %6865 = vmatpush1.msra.mxu0 0.0
  %6866 = vmatprep.subr.mxu0 0.0
  %6867 = vmatpush1.msra.mxu0 0.0
  %6868 = vmatprep.subr.mxu0 0.0
  %6869 = vmatpush1.msra.mxu0 0.0
  %6870 = vmatprep.subr.mxu0 0.0
  %6871 = vmatpush1.msra.mxu0 0.0
  %6872 = vmatprep.subr.mxu0 0.0
  %6873 = vmatpush1.msra.mxu0 0.0
  %6874 = vmatprep.subr.mxu0 0.0
  %6875 = vmatpush1.msra.mxu0 0.0
  %6876 = vmatprep.mubr.f32.mxu0 0.0
  %6877 = vmatmul.mubr.f32.gmra.mrb[0].mxu0 %v6810
  %v6878 = vpop.f32.mrb[0].mxu0
  %v6879 = vadd.f32 0.0, %v6878
  %v6880 = vpop.f32.mrb[0].mxu0
  %6881 = vdwg.mxu0
  %v6883 = vrot.slane %v6879, 6
  %v6885 = vadd.f32 %v5213, %v6883
  %v6886 = vxor.u32 %v6885, 2147483648
  %v6887 = vmul.f32 %v6886, 1.442695
  %v6888 = vpow.pop %v6887
  %v6889 = vadd.f32 %v6888, 1.0
  %v6890 = vrcp.pop %v6889
  %v6891 = vmul.f32 1.0, %v6890
  %6892 = vmatprep.subr.mxu0 0.0
  %6893 = vmatpush1.msra.mxu0 %v5575
  %6894 = vmatprep.subr.mxu0 0.0
  %6895 = vmatpush1.msra.mxu0 %v5576
  %6896 = vmatprep.subr.mxu0 0.0
  %6897 = vmatpush1.msra.mxu0 %v5577
  %6898 = vmatprep.subr.mxu0 0.0
  %6899 = vmatpush1.msra.mxu0 %v5578
  %6900 = vmatprep.subr.mxu0 0.0
  %6901 = vmatpush1.msra.mxu0 0.0
  %6902 = vmatprep.subr.mxu0 0.0
  %6903 = vmatpush1.msra.mxu0 0.0
  %6904 = vmatprep.subr.mxu0 0.0
  %6905 = vmatpush1.msra.mxu0 0.0
  %6906 = vmatprep.subr.mxu0 0.0
  %6907 = vmatpush1.msra.mxu0 0.0
  %6908 = vmatprep.subr.mxu0 0.0
  %6909 = vmatpush1.msra.mxu0 0.0
  %6910 = vmatprep.subr.mxu0 0.0
  %6911 = vmatpush1.msra.mxu0 0.0
  %6912 = vmatprep.subr.mxu0 0.0
  %6913 = vmatpush1.msra.mxu0 0.0
  %6914 = vmatprep.subr.mxu0 0.0
  %6915 = vmatpush1.msra.mxu0 0.0
  %6916 = vmatprep.subr.mxu0 0.0
  %6917 = vmatpush1.msra.mxu0 0.0
  %6918 = vmatprep.subr.mxu0 0.0
  %6919 = vmatpush1.msra.mxu0 0.0
  %6920 = vmatprep.subr.mxu0 0.0
  %6921 = vmatpush1.msra.mxu0 0.0
  %6922 = vmatprep.subr.mxu0 0.0
  %6923 = vmatpush1.msra.mxu0 0.0
  %6924 = vmatprep.subr.mxu0 0.0
  %6925 = vmatpush1.msra.mxu0 0.0
  %6926 = vmatprep.subr.mxu0 0.0
  %6927 = vmatpush1.msra.mxu0 0.0
  %6928 = vmatprep.subr.mxu0 0.0
  %6929 = vmatpush1.msra.mxu0 0.0
  %6930 = vmatprep.subr.mxu0 0.0
  %6931 = vmatpush1.msra.mxu0 0.0
  %6932 = vmatprep.subr.mxu0 0.0
  %6933 = vmatpush1.msra.mxu0 0.0
  %6934 = vmatprep.subr.mxu0 0.0
  %6935 = vmatpush1.msra.mxu0 0.0
  %6936 = vmatprep.subr.mxu0 0.0
  %6937 = vmatpush1.msra.mxu0 0.0
  %6938 = vmatprep.subr.mxu0 0.0
  %6939 = vmatpush1.msra.mxu0 0.0
  %6940 = vmatprep.subr.mxu0 0.0
  %6941 = vmatpush1.msra.mxu0 0.0
  %6942 = vmatprep.subr.mxu0 0.0
  %6943 = vmatpush1.msra.mxu0 0.0
  %6944 = vmatprep.subr.mxu0 0.0
  %6945 = vmatpush1.msra.mxu0 0.0
  %6946 = vmatprep.subr.mxu0 0.0
  %6947 = vmatpush1.msra.mxu0 0.0
  %6948 = vmatprep.subr.mxu0 0.0
  %6949 = vmatpush1.msra.mxu0 0.0
  %6950 = vmatprep.subr.mxu0 0.0
  %6951 = vmatpush1.msra.mxu0 0.0
  %6952 = vmatprep.subr.mxu0 0.0
  %6953 = vmatpush1.msra.mxu0 0.0
  %6954 = vmatprep.subr.mxu0 0.0
  %6955 = vmatpush1.msra.mxu0 0.0
  %6956 = vmatprep.mubr.f32.mxu0 0.0
  %6957 = vmatmul.mubr.f32.gmra.mrb[0].mxu0 %v6810
  %v6958 = vpop.f32.mrb[0].mxu0
  %v6959 = vadd.f32 0.0, %v6958
  %v6960 = vpop.f32.mrb[0].mxu0
  %6961 = vdwg.mxu0
  %v6963 = vrot.slane %v6959, 6
  %v6965 = vadd.f32 %v5383, %v6963
  %v6966 = vxor.u32 %v6965, 2147483648
  %v6967 = vmul.f32 %v6966, 1.442695
  %v6968 = vpow.pop %v6967
  %v6969 = vadd.f32 %v6968, 1.0
  %v6970 = vrcp.pop %v6969
  %v6971 = vmul.f32 1.0, %v6970
  %6972 = vmatprep.subr.mxu0 0.0
  %6973 = vmatpush1.msra.mxu0 %v5580
  %6974 = vmatprep.subr.mxu0 0.0
  %6975 = vmatpush1.msra.mxu0 %v5581
  %6976 = vmatprep.subr.mxu0 0.0
  %6977 = vmatpush1.msra.mxu0 %v5582
  %6978 = vmatprep.subr.mxu0 0.0
  %6979 = vmatpush1.msra.mxu0 %v5583
  %6980 = vmatprep.subr.mxu0 0.0
  %6981 = vmatpush1.msra.mxu0 0.0
  %6982 = vmatprep.subr.mxu0 0.0
  %6983 = vmatpush1.msra.mxu0 0.0
  %6984 = vmatprep.subr.mxu0 0.0
  %6985 = vmatpush1.msra.mxu0 0.0
  %6986 = vmatprep.subr.mxu0 0.0
  %6987 = vmatpush1.msra.mxu0 0.0
  %6988 = vmatprep.subr.mxu0 0.0
  %6989 = vmatpush1.msra.mxu0 0.0
  %6990 = vmatprep.subr.mxu0 0.0
  %6991 = vmatpush1.msra.mxu0 0.0
  %6992 = vmatprep.subr.mxu0 0.0
  %6993 = vmatpush1.msra.mxu0 0.0
  %6994 = vmatprep.subr.mxu0 0.0
  %6995 = vmatpush1.msra.mxu0 0.0
  %6996 = vmatprep.subr.mxu0 0.0
  %6997 = vmatpush1.msra.mxu0 0.0
  %6998 = vmatprep.subr.mxu0 0.0
  %6999 = vmatpush1.msra.mxu0 0.0
  %7000 = vmatprep.subr.mxu0 0.0
  %7001 = vmatpush1.msra.mxu0 0.0
  %7002 = vmatprep.subr.mxu0 0.0
  %7003 = vmatpush1.msra.mxu0 0.0
  %7004 = vmatprep.subr.mxu0 0.0
  %7005 = vmatpush1.msra.mxu0 0.0
  %7006 = vmatprep.subr.mxu0 0.0
  %7007 = vmatpush1.msra.mxu0 0.0
  %7008 = vmatprep.subr.mxu0 0.0
  %7009 = vmatpush1.msra.mxu0 0.0
  %7010 = vmatprep.subr.mxu0 0.0
  %7011 = vmatpush1.msra.mxu0 0.0
  %7012 = vmatprep.subr.mxu0 0.0
  %7013 = vmatpush1.msra.mxu0 0.0
  %7014 = vmatprep.subr.mxu0 0.0
  %7015 = vmatpush1.msra.mxu0 0.0
  %7016 = vmatprep.subr.mxu0 0.0
  %7017 = vmatpush1.msra.mxu0 0.0
  %7018 = vmatprep.subr.mxu0 0.0
  %7019 = vmatpush1.msra.mxu0 0.0
  %7020 = vmatprep.subr.mxu0 0.0
  %7021 = vmatpush1.msra.mxu0 0.0
  %7022 = vmatprep.subr.mxu0 0.0
  %7023 = vmatpush1.msra.mxu0 0.0
  %7024 = vmatprep.subr.mxu0 0.0
  %7025 = vmatpush1.msra.mxu0 0.0
  %7026 = vmatprep.subr.mxu0 0.0
  %7027 = vmatpush1.msra.mxu0 0.0
  %7028 = vmatprep.subr.mxu0 0.0
  %7029 = vmatpush1.msra.mxu0 0.0
  %7030 = vmatprep.subr.mxu0 0.0
  %7031 = vmatpush1.msra.mxu0 0.0
  %7032 = vmatprep.subr.mxu0 0.0
  %7033 = vmatpush1.msra.mxu0 0.0
  %7034 = vmatprep.subr.mxu0 0.0
  %7035 = vmatpush1.msra.mxu0 0.0
  %7036 = vmatprep.mubr.f32.mxu0 0.0
  %7037 = vmatmul.mubr.f32.gmra.mrb[0].mxu0 %v6810
  %v7038 = vpop.f32.mrb[0].mxu0
  %v7039 = vadd.f32 %v5989, %v7038
  %v7040 = vpop.f32.mrb[0].mxu0
  %7041 = vdwg.mxu0
  %v7043 = vrot.slane %v7039, 6
  %v7045 = vmul.f32 %v6891, %v7043
  %v7046 = vadd.f32 %v5553, %v7045
  %v7047 = vtanh.pop %v7046
  %v7048 = vsub.f32 1.0, %v6971
  %v7049 = vmul.f32 %v7048, %v7047
  %v7050 = vrot.slane %v6561, 2
  %v7052 = vmul.f32 %v6971, %v7050
  %v7053 = vadd.f32 %v7049, %v7052
  %v7055 = vrot.slane %v6807, 4
  %v7056 = vsel %vm47, %v7055, 0
  %7058 = vmatprep.subr.mxu0 0.0
  %7059 = vmatpush1.msra.mxu0 %v5555
  %7060 = vmatprep.subr.mxu0 0.0
  %7061 = vmatpush1.msra.mxu0 %v5556
  %7062 = vmatprep.subr.mxu0 0.0
  %7063 = vmatpush1.msra.mxu0 %v5557
  %7064 = vmatprep.subr.mxu0 0.0
  %7065 = vmatpush1.msra.mxu0 %v5558
  %7066 = vmatprep.subr.mxu0 0.0
  %7067 = vmatpush1.msra.mxu0 0.0
  %7068 = vmatprep.subr.mxu0 0.0
  %7069 = vmatpush1.msra.mxu0 0.0
  %7070 = vmatprep.subr.mxu0 0.0
  %7071 = vmatpush1.msra.mxu0 0.0
  %7072 = vmatprep.subr.mxu0 0.0
  %7073 = vmatpush1.msra.mxu0 0.0
  %7074 = vmatprep.subr.mxu0 0.0
  %7075 = vmatpush1.msra.mxu0 0.0
  %7076 = vmatprep.subr.mxu0 0.0
  %7077 = vmatpush1.msra.mxu0 0.0
  %7078 = vmatprep.subr.mxu0 0.0
  %7079 = vmatpush1.msra.mxu0 0.0
  %7080 = vmatprep.subr.mxu0 0.0
  %7081 = vmatpush1.msra.mxu0 0.0
  %7082 = vmatprep.subr.mxu0 0.0
  %7083 = vmatpush1.msra.mxu0 0.0
  %7084 = vmatprep.subr.mxu0 0.0
  %7085 = vmatpush1.msra.mxu0 0.0
  %7086 = vmatprep.subr.mxu0 0.0
  %7087 = vmatpush1.msra.mxu0 0.0
  %7088 = vmatprep.subr.mxu0 0.0
  %7089 = vmatpush1.msra.mxu0 0.0
  %7090 = vmatprep.subr.mxu0 0.0
  %7091 = vmatpush1.msra.mxu0 0.0
  %7092 = vmatprep.subr.mxu0 0.0
  %7093 = vmatpush1.msra.mxu0 0.0
  %7094 = vmatprep.subr.mxu0 0.0
  %7095 = vmatpush1.msra.mxu0 0.0
  %7096 = vmatprep.subr.mxu0 0.0
  %7097 = vmatpush1.msra.mxu0 0.0
  %7098 = vmatprep.subr.mxu0 0.0
  %7099 = vmatpush1.msra.mxu0 0.0
  %7100 = vmatprep.subr.mxu0 0.0
  %7101 = vmatpush1.msra.mxu0 0.0
  %7102 = vmatprep.subr.mxu0 0.0
  %7103 = vmatpush1.msra.mxu0 0.0
  %7104 = vmatprep.subr.mxu0 0.0
  %7105 = vmatpush1.msra.mxu0 0.0
  %7106 = vmatprep.subr.mxu0 0.0
  %7107 = vmatpush1.msra.mxu0 0.0
  %7108 = vmatprep.subr.mxu0 0.0
  %7109 = vmatpush1.msra.mxu0 0.0
  %7110 = vmatprep.subr.mxu0 0.0
  %7111 = vmatpush1.msra.mxu0 0.0
  %7112 = vmatprep.subr.mxu0 0.0
  %7113 = vmatpush1.msra.mxu0 0.0
  %7114 = vmatprep.subr.mxu0 0.0
  %7115 = vmatpush1.msra.mxu0 0.0
  %7116 = vmatprep.subr.mxu0 0.0
  %7117 = vmatpush1.msra.mxu0 0.0
  %7118 = vmatprep.subr.mxu0 0.0
  %7119 = vmatpush1.msra.mxu0 0.0
  %7120 = vmatprep.subr.mxu0 0.0
  %7121 = vmatpush1.msra.mxu0 0.0
  %7122 = vmatprep.mubr.f32.mxu0 0.0
  %7123 = vmatmul.mubr.f32.gmra.mrb[0].mxu0 %v7056
  %v7124 = vpop.f32.mrb[0].mxu0
  %v7125 = vadd.f32 0.0, %v7124
  %v7126 = vpop.f32.mrb[0].mxu0
  %7127 = vdwg.mxu0
  %v7129 = vrot.slane %v7125, 2
  %v7131 = vadd.f32 %v4702, %v7129
  %v7132 = vxor.u32 %v7131, 2147483648
  %v7133 = vmul.f32 %v7132, 1.442695
  %v7134 = vpow.pop %v7133
  %v7135 = vadd.f32 %v7134, 1.0
  %v7136 = vrcp.pop %v7135
  %v7137 = vmul.f32 1.0, %v7136
  %7138 = vmatprep.subr.mxu0 0.0
  %7139 = vmatpush1.msra.mxu0 %v5560
  %7140 = vmatprep.subr.mxu0 0.0
  %7141 = vmatpush1.msra.mxu0 %v5561
  %7142 = vmatprep.subr.mxu0 0.0
  %7143 = vmatpush1.msra.mxu0 %v5562
  %7144 = vmatprep.subr.mxu0 0.0
  %7145 = vmatpush1.msra.mxu0 %v5563
  %7146 = vmatprep.subr.mxu0 0.0
  %7147 = vmatpush1.msra.mxu0 0.0
  %7148 = vmatprep.subr.mxu0 0.0
  %7149 = vmatpush1.msra.mxu0 0.0
  %7150 = vmatprep.subr.mxu0 0.0
  %7151 = vmatpush1.msra.mxu0 0.0
  %7152 = vmatprep.subr.mxu0 0.0
  %7153 = vmatpush1.msra.mxu0 0.0
  %7154 = vmatprep.subr.mxu0 0.0
  %7155 = vmatpush1.msra.mxu0 0.0
  %7156 = vmatprep.subr.mxu0 0.0
  %7157 = vmatpush1.msra.mxu0 0.0
  %7158 = vmatprep.subr.mxu0 0.0
  %7159 = vmatpush1.msra.mxu0 0.0
  %7160 = vmatprep.subr.mxu0 0.0
  %7161 = vmatpush1.msra.mxu0 0.0
  %7162 = vmatprep.subr.mxu0 0.0
  %7163 = vmatpush1.msra.mxu0 0.0
  %7164 = vmatprep.subr.mxu0 0.0
  %7165 = vmatpush1.msra.mxu0 0.0
  %7166 = vmatprep.subr.mxu0 0.0
  %7167 = vmatpush1.msra.mxu0 0.0
  %7168 = vmatprep.subr.mxu0 0.0
  %7169 = vmatpush1.msra.mxu0 0.0
  %7170 = vmatprep.subr.mxu0 0.0
  %7171 = vmatpush1.msra.mxu0 0.0
  %7172 = vmatprep.subr.mxu0 0.0
  %7173 = vmatpush1.msra.mxu0 0.0
  %7174 = vmatprep.subr.mxu0 0.0
  %7175 = vmatpush1.msra.mxu0 0.0
  %7176 = vmatprep.subr.mxu0 0.0
  %7177 = vmatpush1.msra.mxu0 0.0
  %7178 = vmatprep.subr.mxu0 0.0
  %7179 = vmatpush1.msra.mxu0 0.0
  %7180 = vmatprep.subr.mxu0 0.0
  %7181 = vmatpush1.msra.mxu0 0.0
  %7182 = vmatprep.subr.mxu0 0.0
  %7183 = vmatpush1.msra.mxu0 0.0
  %7184 = vmatprep.subr.mxu0 0.0
  %7185 = vmatpush1.msra.mxu0 0.0
  %7186 = vmatprep.subr.mxu0 0.0
  %7187 = vmatpush1.msra.mxu0 0.0
  %7188 = vmatprep.subr.mxu0 0.0
  %7189 = vmatpush1.msra.mxu0 0.0
  %7190 = vmatprep.subr.mxu0 0.0
  %7191 = vmatpush1.msra.mxu0 0.0
  %7192 = vmatprep.subr.mxu0 0.0
  %7193 = vmatpush1.msra.mxu0 0.0
  %7194 = vmatprep.subr.mxu0 0.0
  %7195 = vmatpush1.msra.mxu0 0.0
  %7196 = vmatprep.subr.mxu0 0.0
  %7197 = vmatpush1.msra.mxu0 0.0
  %7198 = vmatprep.subr.mxu0 0.0
  %7199 = vmatpush1.msra.mxu0 0.0
  %7200 = vmatprep.subr.mxu0 0.0
  %7201 = vmatpush1.msra.mxu0 0.0
  %7202 = vmatprep.mubr.f32.mxu0 0.0
  %7203 = vmatmul.mubr.f32.gmra.mrb[0].mxu0 %v7056
  %v7204 = vpop.f32.mrb[0].mxu0
  %v7205 = vadd.f32 0.0, %v7204
  %v7206 = vpop.f32.mrb[0].mxu0
  %7207 = vdwg.mxu0
  %v7209 = vrot.slane %v7205, 2
  %v7211 = vadd.f32 %v4872, %v7209
  %v7212 = vxor.u32 %v7211, 2147483648
  %v7213 = vmul.f32 %v7212, 1.442695
  %v7214 = vpow.pop %v7213
  %v7215 = vadd.f32 %v7214, 1.0
  %v7216 = vrcp.pop %v7215
  %v7217 = vmul.f32 1.0, %v7216
  %7218 = vmatprep.subr.mxu0 0.0
  %7219 = vmatpush1.msra.mxu0 %v5565
  %7220 = vmatprep.subr.mxu0 0.0
  %7221 = vmatpush1.msra.mxu0 %v5566
  %7222 = vmatprep.subr.mxu0 0.0
  %7223 = vmatpush1.msra.mxu0 %v5567
  %7224 = vmatprep.subr.mxu0 0.0
  %7225 = vmatpush1.msra.mxu0 %v5568
  %7226 = vmatprep.subr.mxu0 0.0
  %7227 = vmatpush1.msra.mxu0 0.0
  %7228 = vmatprep.subr.mxu0 0.0
  %7229 = vmatpush1.msra.mxu0 0.0
  %7230 = vmatprep.subr.mxu0 0.0
  %7231 = vmatpush1.msra.mxu0 0.0
  %7232 = vmatprep.subr.mxu0 0.0
  %7233 = vmatpush1.msra.mxu0 0.0
  %7234 = vmatprep.subr.mxu0 0.0
  %7235 = vmatpush1.msra.mxu0 0.0
  %7236 = vmatprep.subr.mxu0 0.0
  %7237 = vmatpush1.msra.mxu0 0.0
  %7238 = vmatprep.subr.mxu0 0.0
  %7239 = vmatpush1.msra.mxu0 0.0
  %7240 = vmatprep.subr.mxu0 0.0
  %7241 = vmatpush1.msra.mxu0 0.0
  %7242 = vmatprep.subr.mxu0 0.0
  %7243 = vmatpush1.msra.mxu0 0.0
  %7244 = vmatprep.subr.mxu0 0.0
  %7245 = vmatpush1.msra.mxu0 0.0
  %7246 = vmatprep.subr.mxu0 0.0
  %7247 = vmatpush1.msra.mxu0 0.0
  %7248 = vmatprep.subr.mxu0 0.0
  %7249 = vmatpush1.msra.mxu0 0.0
  %7250 = vmatprep.subr.mxu0 0.0
  %7251 = vmatpush1.msra.mxu0 0.0
  %7252 = vmatprep.subr.mxu0 0.0
  %7253 = vmatpush1.msra.mxu0 0.0
  %7254 = vmatprep.subr.mxu0 0.0
  %7255 = vmatpush1.msra.mxu0 0.0
  %7256 = vmatprep.subr.mxu0 0.0
  %7257 = vmatpush1.msra.mxu0 0.0
  %7258 = vmatprep.subr.mxu0 0.0
  %7259 = vmatpush1.msra.mxu0 0.0
  %7260 = vmatprep.subr.mxu0 0.0
  %7261 = vmatpush1.msra.mxu0 0.0
  %7262 = vmatprep.subr.mxu0 0.0
  %7263 = vmatpush1.msra.mxu0 0.0
  %7264 = vmatprep.subr.mxu0 0.0
  %7265 = vmatpush1.msra.mxu0 0.0
  %7266 = vmatprep.subr.mxu0 0.0
  %7267 = vmatpush1.msra.mxu0 0.0
  %7268 = vmatprep.subr.mxu0 0.0
  %7269 = vmatpush1.msra.mxu0 0.0
  %7270 = vmatprep.subr.mxu0 0.0
  %7271 = vmatpush1.msra.mxu0 0.0
  %7272 = vmatprep.subr.mxu0 0.0
  %7273 = vmatpush1.msra.mxu0 0.0
  %7274 = vmatprep.subr.mxu0 0.0
  %7275 = vmatpush1.msra.mxu0 0.0
  %7276 = vmatprep.subr.mxu0 0.0
  %7277 = vmatpush1.msra.mxu0 0.0
  %7278 = vmatprep.subr.mxu0 0.0
  %7279 = vmatpush1.msra.mxu0 0.0
  %7280 = vmatprep.subr.mxu0 0.0
  %7281 = vmatpush1.msra.mxu0 0.0
  %7282 = vmatprep.mubr.f32.mxu0 0.0
  %7283 = vmatmul.mubr.f32.gmra.mrb[0].mxu0 %v7056
  %v7284 = vpop.f32.mrb[0].mxu0
  %v7285 = vadd.f32 %v5746, %v7284
  %v7286 = vpop.f32.mrb[0].mxu0
  %7287 = vdwg.mxu0
  %v7289 = vrot.slane %v7285, 2
  %v7291 = vmul.f32 %v7137, %v7289
  %v7292 = vadd.f32 %v5042, %v7291
  %v7293 = vtanh.pop %v7292
  %v7294 = vsub.f32 1.0, %v7217
  %v7295 = vmul.f32 %v7294, %v7293
  %v7296 = vrot.slane %v6807, 6
  %v7298 = vmul.f32 %v7217, %v7296
  %v7299 = vadd.f32 %v7295, %v7298
  %v7301 = vrot.slane %v7053, 2
  %v7302 = vsel %vm47, %v7301, 0
  %7304 = vmatprep.subr.mxu0 0.0
  %7305 = vmatpush1.msra.mxu0 %v5570
  %7306 = vmatprep.subr.mxu0 0.0
  %7307 = vmatpush1.msra.mxu0 %v5571
  %7308 = vmatprep.subr.mxu0 0.0
  %7309 = vmatpush1.msra.mxu0 %v5572
  %7310 = vmatprep.subr.mxu0 0.0
  %7311 = vmatpush1.msra.mxu0 %v5573
  %7312 = vmatprep.subr.mxu0 0.0
  %7313 = vmatpush1.msra.mxu0 0.0
  %7314 = vmatprep.subr.mxu0 0.0
  %7315 = vmatpush1.msra.mxu0 0.0
  %7316 = vmatprep.subr.mxu0 0.0
  %7317 = vmatpush1.msra.mxu0 0.0
  %7318 = vmatprep.subr.mxu0 0.0
  %7319 = vmatpush1.msra.mxu0 0.0
  %7320 = vmatprep.subr.mxu0 0.0
  %7321 = vmatpush1.msra.mxu0 0.0
  %7322 = vmatprep.subr.mxu0 0.0
  %7323 = vmatpush1.msra.mxu0 0.0
  %7324 = vmatprep.subr.mxu0 0.0
  %7325 = vmatpush1.msra.mxu0 0.0
  %7326 = vmatprep.subr.mxu0 0.0
  %7327 = vmatpush1.msra.mxu0 0.0
  %7328 = vmatprep.subr.mxu0 0.0
  %7329 = vmatpush1.msra.mxu0 0.0
  %7330 = vmatprep.subr.mxu0 0.0
  %7331 = vmatpush1.msra.mxu0 0.0
  %7332 = vmatprep.subr.mxu0 0.0
  %7333 = vmatpush1.msra.mxu0 0.0
  %7334 = vmatprep.subr.mxu0 0.0
  %7335 = vmatpush1.msra.mxu0 0.0
  %7336 = vmatprep.subr.mxu0 0.0
  %7337 = vmatpush1.msra.mxu0 0.0
  %7338 = vmatprep.subr.mxu0 0.0
  %7339 = vmatpush1.msra.mxu0 0.0
  %7340 = vmatprep.subr.mxu0 0.0
  %7341 = vmatpush1.msra.mxu0 0.0
  %7342 = vmatprep.subr.mxu0 0.0
  %7343 = vmatpush1.msra.mxu0 0.0
  %7344 = vmatprep.subr.mxu0 0.0
  %7345 = vmatpush1.msra.mxu0 0.0
  %7346 = vmatprep.subr.mxu0 0.0
  %7347 = vmatpush1.msra.mxu0 0.0
  %7348 = vmatprep.subr.mxu0 0.0
  %7349 = vmatpush1.msra.mxu0 0.0
  %7350 = vmatprep.subr.mxu0 0.0
  %7351 = vmatpush1.msra.mxu0 0.0
  %7352 = vmatprep.subr.mxu0 0.0
  %7353 = vmatpush1.msra.mxu0 0.0
  %7354 = vmatprep.subr.mxu0 0.0
  %7355 = vmatpush1.msra.mxu0 0.0
  %7356 = vmatprep.subr.mxu0 0.0
  %7357 = vmatpush1.msra.mxu0 0.0
  %7358 = vmatprep.subr.mxu0 0.0
  %7359 = vmatpush1.msra.mxu0 0.0
  %7360 = vmatprep.subr.mxu0 0.0
  %7361 = vmatpush1.msra.mxu0 0.0
  %7362 = vmatprep.subr.mxu0 0.0
  %7363 = vmatpush1.msra.mxu0 0.0
  %7364 = vmatprep.subr.mxu0 0.0
  %7365 = vmatpush1.msra.mxu0 0.0
  %7366 = vmatprep.subr.mxu0 0.0
  %7367 = vmatpush1.msra.mxu0 0.0
  %7368 = vmatprep.mubr.f32.mxu0 0.0
  %7369 = vmatmul.mubr.f32.gmra.mrb[0].mxu0 %v7302
  %v7370 = vpop.f32.mrb[0].mxu0
  %v7371 = vadd.f32 0.0, %v7370
  %v7372 = vpop.f32.mrb[0].mxu0
  %7373 = vdwg.mxu0
  %v7374 = vadd.f32 %v5213, %v7371
  %v7375 = vxor.u32 %v7374, 2147483648
  %v7376 = vmul.f32 %v7375, 1.442695
  %v7377 = vpow.pop %v7376
  %v7378 = vadd.f32 %v7377, 1.0
  %v7379 = vrcp.pop %v7378
  %v7380 = vmul.f32 1.0, %v7379
  %7381 = vmatprep.subr.mxu0 0.0
  %7382 = vmatpush1.msra.mxu0 %v5575
  %7383 = vmatprep.subr.mxu0 0.0
  %7384 = vmatpush1.msra.mxu0 %v5576
  %7385 = vmatprep.subr.mxu0 0.0
  %7386 = vmatpush1.msra.mxu0 %v5577
  %7387 = vmatprep.subr.mxu0 0.0
  %7388 = vmatpush1.msra.mxu0 %v5578
  %7389 = vmatprep.subr.mxu0 0.0
  %7390 = vmatpush1.msra.mxu0 0.0
  %7391 = vmatprep.subr.mxu0 0.0
  %7392 = vmatpush1.msra.mxu0 0.0
  %7393 = vmatprep.subr.mxu0 0.0
  %7394 = vmatpush1.msra.mxu0 0.0
  %7395 = vmatprep.subr.mxu0 0.0
  %7396 = vmatpush1.msra.mxu0 0.0
  %7397 = vmatprep.subr.mxu0 0.0
  %7398 = vmatpush1.msra.mxu0 0.0
  %7399 = vmatprep.subr.mxu0 0.0
  %7400 = vmatpush1.msra.mxu0 0.0
  %7401 = vmatprep.subr.mxu0 0.0
  %7402 = vmatpush1.msra.mxu0 0.0
  %7403 = vmatprep.subr.mxu0 0.0
  %7404 = vmatpush1.msra.mxu0 0.0
  %7405 = vmatprep.subr.mxu0 0.0
  %7406 = vmatpush1.msra.mxu0 0.0
  %7407 = vmatprep.subr.mxu0 0.0
  %7408 = vmatpush1.msra.mxu0 0.0
  %7409 = vmatprep.subr.mxu0 0.0
  %7410 = vmatpush1.msra.mxu0 0.0
  %7411 = vmatprep.subr.mxu0 0.0
  %7412 = vmatpush1.msra.mxu0 0.0
  %7413 = vmatprep.subr.mxu0 0.0
  %7414 = vmatpush1.msra.mxu0 0.0
  %7415 = vmatprep.subr.mxu0 0.0
  %7416 = vmatpush1.msra.mxu0 0.0
  %7417 = vmatprep.subr.mxu0 0.0
  %7418 = vmatpush1.msra.mxu0 0.0
  %7419 = vmatprep.subr.mxu0 0.0
  %7420 = vmatpush1.msra.mxu0 0.0
  %7421 = vmatprep.subr.mxu0 0.0
  %7422 = vmatpush1.msra.mxu0 0.0
  %7423 = vmatprep.subr.mxu0 0.0
  %7424 = vmatpush1.msra.mxu0 0.0
  %7425 = vmatprep.subr.mxu0 0.0
  %7426 = vmatpush1.msra.mxu0 0.0
  %7427 = vmatprep.subr.mxu0 0.0
  %7428 = vmatpush1.msra.mxu0 0.0
  %7429 = vmatprep.subr.mxu0 0.0
  %7430 = vmatpush1.msra.mxu0 0.0
  %7431 = vmatprep.subr.mxu0 0.0
  %7432 = vmatpush1.msra.mxu0 0.0
  %7433 = vmatprep.subr.mxu0 0.0
  %7434 = vmatpush1.msra.mxu0 0.0
  %7435 = vmatprep.subr.mxu0 0.0
  %7436 = vmatpush1.msra.mxu0 0.0
  %7437 = vmatprep.subr.mxu0 0.0
  %7438 = vmatpush1.msra.mxu0 0.0
  %7439 = vmatprep.subr.mxu0 0.0
  %7440 = vmatpush1.msra.mxu0 0.0
  %7441 = vmatprep.subr.mxu0 0.0
  %7442 = vmatpush1.msra.mxu0 0.0
  %7443 = vmatprep.subr.mxu0 0.0
  %7444 = vmatpush1.msra.mxu0 0.0
  %7445 = vmatprep.mubr.f32.mxu0 0.0
  %7446 = vmatmul.mubr.f32.gmra.mrb[0].mxu0 %v7302
  %v7447 = vpop.f32.mrb[0].mxu0
  %v7448 = vadd.f32 0.0, %v7447
  %v7449 = vpop.f32.mrb[0].mxu0
  %7450 = vdwg.mxu0
  %v7451 = vadd.f32 %v5383, %v7448
  %v7452 = vxor.u32 %v7451, 2147483648
  %v7453 = vmul.f32 %v7452, 1.442695
  %v7454 = vpow.pop %v7453
  %v7455 = vadd.f32 %v7454, 1.0
  %v7456 = vrcp.pop %v7455
  %v7457 = vmul.f32 1.0, %v7456
  %7458 = vmatprep.subr.mxu0 0.0
  %7459 = vmatpush1.msra.mxu0 %v5580
  %7460 = vmatprep.subr.mxu0 0.0
  %7461 = vmatpush1.msra.mxu0 %v5581
  %7462 = vmatprep.subr.mxu0 0.0
  %7463 = vmatpush1.msra.mxu0 %v5582
  %7464 = vmatprep.subr.mxu0 0.0
  %7465 = vmatpush1.msra.mxu0 %v5583
  %7466 = vmatprep.subr.mxu0 0.0
  %7467 = vmatpush1.msra.mxu0 0.0
  %7468 = vmatprep.subr.mxu0 0.0
  %7469 = vmatpush1.msra.mxu0 0.0
  %7470 = vmatprep.subr.mxu0 0.0
  %7471 = vmatpush1.msra.mxu0 0.0
  %7472 = vmatprep.subr.mxu0 0.0
  %7473 = vmatpush1.msra.mxu0 0.0
  %7474 = vmatprep.subr.mxu0 0.0
  %7475 = vmatpush1.msra.mxu0 0.0
  %7476 = vmatprep.subr.mxu0 0.0
  %7477 = vmatpush1.msra.mxu0 0.0
  %7478 = vmatprep.subr.mxu0 0.0
  %7479 = vmatpush1.msra.mxu0 0.0
  %7480 = vmatprep.subr.mxu0 0.0
  %7481 = vmatpush1.msra.mxu0 0.0
  %7482 = vmatprep.subr.mxu0 0.0
  %7483 = vmatpush1.msra.mxu0 0.0
  %7484 = vmatprep.subr.mxu0 0.0
  %7485 = vmatpush1.msra.mxu0 0.0
  %7486 = vmatprep.subr.mxu0 0.0
  %7487 = vmatpush1.msra.mxu0 0.0
  %7488 = vmatprep.subr.mxu0 0.0
  %7489 = vmatpush1.msra.mxu0 0.0
  %7490 = vmatprep.subr.mxu0 0.0
  %7491 = vmatpush1.msra.mxu0 0.0
  %7492 = vmatprep.subr.mxu0 0.0
  %7493 = vmatpush1.msra.mxu0 0.0
  %7494 = vmatprep.subr.mxu0 0.0
  %7495 = vmatpush1.msra.mxu0 0.0
  %7496 = vmatprep.subr.mxu0 0.0
  %7497 = vmatpush1.msra.mxu0 0.0
  %7498 = vmatprep.subr.mxu0 0.0
  %7499 = vmatpush1.msra.mxu0 0.0
  %7500 = vmatprep.subr.mxu0 0.0
  %7501 = vmatpush1.msra.mxu0 0.0
  %7502 = vmatprep.subr.mxu0 0.0
  %7503 = vmatpush1.msra.mxu0 0.0
  %7504 = vmatprep.subr.mxu0 0.0
  %7505 = vmatpush1.msra.mxu0 0.0
  %7506 = vmatprep.subr.mxu0 0.0
  %7507 = vmatpush1.msra.mxu0 0.0
  %7508 = vmatprep.subr.mxu0 0.0
  %7509 = vmatpush1.msra.mxu0 0.0
  %7510 = vmatprep.subr.mxu0 0.0
  %7511 = vmatpush1.msra.mxu0 0.0
  %7512 = vmatprep.subr.mxu0 0.0
  %7513 = vmatpush1.msra.mxu0 0.0
  %7514 = vmatprep.subr.mxu0 0.0
  %7515 = vmatpush1.msra.mxu0 0.0
  %7516 = vmatprep.subr.mxu0 0.0
  %7517 = vmatpush1.msra.mxu0 0.0
  %7518 = vmatprep.subr.mxu0 0.0
  %7519 = vmatpush1.msra.mxu0 0.0
  %7520 = vmatprep.subr.mxu0 0.0
  %7521 = vmatpush1.msra.mxu0 0.0
  %7522 = vmatprep.mubr.f32.mxu0 0.0
  %7523 = vmatmul.mubr.f32.gmra.mrb[0].mxu0 %v7302
  %v7524 = vpop.f32.mrb[0].mxu0
  %v7525 = vadd.f32 %v5989, %v7524
  %v7526 = vpop.f32.mrb[0].mxu0
  %7527 = vdwg.mxu0
  %v7528 = vmul.f32 %v7380, %v7525
  %v7529 = vadd.f32 %v5553, %v7528
  %v7530 = vtanh.pop %v7529
  %v7531 = vsub.f32 1.0, %v7457
  %v7532 = vmul.f32 %v7531, %v7530
  %v7534 = vmul.f32 %v7457, %v7301
  %v7535 = vadd.f32 %v7532, %v7534
  %v7537 = vrot.slane %v7299, 6
  %v7538 = vsel %vm47, %v7537, 0
  %7540 = vmatprep.subr.mxu0 0.0
  %7541 = vmatpush1.msra.mxu0 %v5555
  %7542 = vmatprep.subr.mxu0 0.0
  %7543 = vmatpush1.msra.mxu0 %v5556
  %7544 = vmatprep.subr.mxu0 0.0
  %7545 = vmatpush1.msra.mxu0 %v5557
  %7546 = vmatprep.subr.mxu0 0.0
  %7547 = vmatpush1.msra.mxu0 %v5558
  %7548 = vmatprep.subr.mxu0 0.0
  %7549 = vmatpush1.msra.mxu0 0.0
  %7550 = vmatprep.subr.mxu0 0.0
  %7551 = vmatpush1.msra.mxu0 0.0
  %7552 = vmatprep.subr.mxu0 0.0
  %7553 = vmatpush1.msra.mxu0 0.0
  %7554 = vmatprep.subr.mxu0 0.0
  %7555 = vmatpush1.msra.mxu0 0.0
  %7556 = vmatprep.subr.mxu0 0.0
  %7557 = vmatpush1.msra.mxu0 0.0
  %7558 = vmatprep.subr.mxu0 0.0
  %7559 = vmatpush1.msra.mxu0 0.0
  %7560 = vmatprep.subr.mxu0 0.0
  %7561 = vmatpush1.msra.mxu0 0.0
  %7562 = vmatprep.subr.mxu0 0.0
  %7563 = vmatpush1.msra.mxu0 0.0
  %7564 = vmatprep.subr.mxu0 0.0
  %7565 = vmatpush1.msra.mxu0 0.0
  %7566 = vmatprep.subr.mxu0 0.0
  %7567 = vmatpush1.msra.mxu0 0.0
  %7568 = vmatprep.subr.mxu0 0.0
  %7569 = vmatpush1.msra.mxu0 0.0
  %7570 = vmatprep.subr.mxu0 0.0
  %7571 = vmatpush1.msra.mxu0 0.0
  %7572 = vmatprep.subr.mxu0 0.0
  %7573 = vmatpush1.msra.mxu0 0.0
  %7574 = vmatprep.subr.mxu0 0.0
  %7575 = vmatpush1.msra.mxu0 0.0
  %7576 = vmatprep.subr.mxu0 0.0
  %7577 = vmatpush1.msra.mxu0 0.0
  %7578 = vmatprep.subr.mxu0 0.0
  %7579 = vmatpush1.msra.mxu0 0.0
  %7580 = vmatprep.subr.mxu0 0.0
  %7581 = vmatpush1.msra.mxu0 0.0
  %7582 = vmatprep.subr.mxu0 0.0
  %7583 = vmatpush1.msra.mxu0 0.0
  %7584 = vmatprep.subr.mxu0 0.0
  %7585 = vmatpush1.msra.mxu0 0.0
  %7586 = vmatprep.subr.mxu0 0.0
  %7587 = vmatpush1.msra.mxu0 0.0
  %7588 = vmatprep.subr.mxu0 0.0
  %7589 = vmatpush1.msra.mxu0 0.0
  %7590 = vmatprep.subr.mxu0 0.0
  %7591 = vmatpush1.msra.mxu0 0.0
  %7592 = vmatprep.subr.mxu0 0.0
  %7593 = vmatpush1.msra.mxu0 0.0
  %7594 = vmatprep.subr.mxu0 0.0
  %7595 = vmatpush1.msra.mxu0 0.0
  %7596 = vmatprep.subr.mxu0 0.0
  %7597 = vmatpush1.msra.mxu0 0.0
  %7598 = vmatprep.subr.mxu0 0.0
  %7599 = vmatpush1.msra.mxu0 0.0
  %7600 = vmatprep.subr.mxu0 0.0
  %7601 = vmatpush1.msra.mxu0 0.0
  %7602 = vmatprep.subr.mxu0 0.0
  %7603 = vmatpush1.msra.mxu0 0.0
  %7604 = vmatprep.mubr.f32.mxu0 0.0
  %7605 = vmatmul.mubr.f32.gmra.mrb[0].mxu0 %v7538
  %v7606 = vpop.f32.mrb[0].mxu0
  %v7607 = vadd.f32 0.0, %v7606
  %v7608 = vpop.f32.mrb[0].mxu0
  %7609 = vdwg.mxu0
  %v7610 = vadd.f32 %v4703, %v7607
  %v7611 = vxor.u32 %v7610, 2147483648
  %v7612 = vmul.f32 %v7611, 1.442695
  %v7613 = vpow.pop %v7612
  %v7614 = vadd.f32 %v7613, 1.0
  %v7615 = vrcp.pop %v7614
  %v7616 = vmul.f32 1.0, %v7615
  %7617 = vmatprep.subr.mxu0 0.0
  %7618 = vmatpush1.msra.mxu0 %v5560
  %7619 = vmatprep.subr.mxu0 0.0
  %7620 = vmatpush1.msra.mxu0 %v5561
  %7621 = vmatprep.subr.mxu0 0.0
  %7622 = vmatpush1.msra.mxu0 %v5562
  %7623 = vmatprep.subr.mxu0 0.0
  %7624 = vmatpush1.msra.mxu0 %v5563
  %7625 = vmatprep.subr.mxu0 0.0
  %7626 = vmatpush1.msra.mxu0 0.0
  %7627 = vmatprep.subr.mxu0 0.0
  %7628 = vmatpush1.msra.mxu0 0.0
  %7629 = vmatprep.subr.mxu0 0.0
  %7630 = vmatpush1.msra.mxu0 0.0
  %7631 = vmatprep.subr.mxu0 0.0
  %7632 = vmatpush1.msra.mxu0 0.0
  %7633 = vmatprep.subr.mxu0 0.0
  %7634 = vmatpush1.msra.mxu0 0.0
  %7635 = vmatprep.subr.mxu0 0.0
  %7636 = vmatpush1.msra.mxu0 0.0
  %7637 = vmatprep.subr.mxu0 0.0
  %7638 = vmatpush1.msra.mxu0 0.0
  %7639 = vmatprep.subr.mxu0 0.0
  %7640 = vmatpush1.msra.mxu0 0.0
  %7641 = vmatprep.subr.mxu0 0.0
  %7642 = vmatpush1.msra.mxu0 0.0
  %7643 = vmatprep.subr.mxu0 0.0
  %7644 = vmatpush1.msra.mxu0 0.0
  %7645 = vmatprep.subr.mxu0 0.0
  %7646 = vmatpush1.msra.mxu0 0.0
  %7647 = vmatprep.subr.mxu0 0.0
  %7648 = vmatpush1.msra.mxu0 0.0
  %7649 = vmatprep.subr.mxu0 0.0
  %7650 = vmatpush1.msra.mxu0 0.0
  %7651 = vmatprep.subr.mxu0 0.0
  %7652 = vmatpush1.msra.mxu0 0.0
  %7653 = vmatprep.subr.mxu0 0.0
  %7654 = vmatpush1.msra.mxu0 0.0
  %7655 = vmatprep.subr.mxu0 0.0
  %7656 = vmatpush1.msra.mxu0 0.0
  %7657 = vmatprep.subr.mxu0 0.0
  %7658 = vmatpush1.msra.mxu0 0.0
  %7659 = vmatprep.subr.mxu0 0.0
  %7660 = vmatpush1.msra.mxu0 0.0
  %7661 = vmatprep.subr.mxu0 0.0
  %7662 = vmatpush1.msra.mxu0 0.0
  %7663 = vmatprep.subr.mxu0 0.0
  %7664 = vmatpush1.msra.mxu0 0.0
  %7665 = vmatprep.subr.mxu0 0.0
  %7666 = vmatpush1.msra.mxu0 0.0
  %7667 = vmatprep.subr.mxu0 0.0
  %7668 = vmatpush1.msra.mxu0 0.0
  %7669 = vmatprep.subr.mxu0 0.0
  %7670 = vmatpush1.msra.mxu0 0.0
  %7671 = vmatprep.subr.mxu0 0.0
  %7672 = vmatpush1.msra.mxu0 0.0
  %7673 = vmatprep.subr.mxu0 0.0
  %7674 = vmatpush1.msra.mxu0 0.0
  %7675 = vmatprep.subr.mxu0 0.0
  %7676 = vmatpush1.msra.mxu0 0.0
  %7677 = vmatprep.subr.mxu0 0.0
  %7678 = vmatpush1.msra.mxu0 0.0
  %7679 = vmatprep.subr.mxu0 0.0
  %7680 = vmatpush1.msra.mxu0 0.0
  %7681 = vmatprep.mubr.f32.mxu0 0.0
  %7682 = vmatmul.mubr.f32.gmra.mrb[0].mxu0 %v7538
  %v7683 = vpop.f32.mrb[0].mxu0
  %v7684 = vadd.f32 0.0, %v7683
  %v7685 = vpop.f32.mrb[0].mxu0
  %7686 = vdwg.mxu0
  %v7687 = vadd.f32 %v4873, %v7684
  %v7688 = vxor.u32 %v7687, 2147483648
  %v7689 = vmul.f32 %v7688, 1.442695
  %v7690 = vpow.pop %v7689
  %v7691 = vadd.f32 %v7690, 1.0
  %v7692 = vrcp.pop %v7691
  %v7693 = vmul.f32 1.0, %v7692
  %7694 = vmatprep.subr.mxu0 0.0
  %7695 = vmatpush1.msra.mxu0 %v5565
  %7696 = vmatprep.subr.mxu0 0.0
  %7697 = vmatpush1.msra.mxu0 %v5566
  %7698 = vmatprep.subr.mxu0 0.0
  %7699 = vmatpush1.msra.mxu0 %v5567
  %7700 = vmatprep.subr.mxu0 0.0
  %7701 = vmatpush1.msra.mxu0 %v5568
  %7702 = vmatprep.subr.mxu0 0.0
  %7703 = vmatpush1.msra.mxu0 0.0
  %7704 = vmatprep.subr.mxu0 0.0
  %7705 = vmatpush1.msra.mxu0 0.0
  %7706 = vmatprep.subr.mxu0 0.0
  %7707 = vmatpush1.msra.mxu0 0.0
  %7708 = vmatprep.subr.mxu0 0.0
  %7709 = vmatpush1.msra.mxu0 0.0
  %7710 = vmatprep.subr.mxu0 0.0
  %7711 = vmatpush1.msra.mxu0 0.0
  %7712 = vmatprep.subr.mxu0 0.0
  %7713 = vmatpush1.msra.mxu0 0.0
  %7714 = vmatprep.subr.mxu0 0.0
  %7715 = vmatpush1.msra.mxu0 0.0
  %7716 = vmatprep.subr.mxu0 0.0
  %7717 = vmatpush1.msra.mxu0 0.0
  %7718 = vmatprep.subr.mxu0 0.0
  %7719 = vmatpush1.msra.mxu0 0.0
  %7720 = vmatprep.subr.mxu0 0.0
  %7721 = vmatpush1.msra.mxu0 0.0
  %7722 = vmatprep.subr.mxu0 0.0
  %7723 = vmatpush1.msra.mxu0 0.0
  %7724 = vmatprep.subr.mxu0 0.0
  %7725 = vmatpush1.msra.mxu0 0.0
  %7726 = vmatprep.subr.mxu0 0.0
  %7727 = vmatpush1.msra.mxu0 0.0
  %7728 = vmatprep.subr.mxu0 0.0
  %7729 = vmatpush1.msra.mxu0 0.0
  %7730 = vmatprep.subr.mxu0 0.0
  %7731 = vmatpush1.msra.mxu0 0.0
  %7732 = vmatprep.subr.mxu0 0.0
  %7733 = vmatpush1.msra.mxu0 0.0
  %7734 = vmatprep.subr.mxu0 0.0
  %7735 = vmatpush1.msra.mxu0 0.0
  %7736 = vmatprep.subr.mxu0 0.0
  %7737 = vmatpush1.msra.mxu0 0.0
  %7738 = vmatprep.subr.mxu0 0.0
  %7739 = vmatpush1.msra.mxu0 0.0
  %7740 = vmatprep.subr.mxu0 0.0
  %7741 = vmatpush1.msra.mxu0 0.0
  %7742 = vmatprep.subr.mxu0 0.0
  %7743 = vmatpush1.msra.mxu0 0.0
  %7744 = vmatprep.subr.mxu0 0.0
  %7745 = vmatpush1.msra.mxu0 0.0
  %7746 = vmatprep.subr.mxu0 0.0
  %7747 = vmatpush1.msra.mxu0 0.0
  %7748 = vmatprep.subr.mxu0 0.0
  %7749 = vmatpush1.msra.mxu0 0.0
  %7750 = vmatprep.subr.mxu0 0.0
  %7751 = vmatpush1.msra.mxu0 0.0
  %7752 = vmatprep.subr.mxu0 0.0
  %7753 = vmatpush1.msra.mxu0 0.0
  %7754 = vmatprep.subr.mxu0 0.0
  %7755 = vmatpush1.msra.mxu0 0.0
  %7756 = vmatprep.subr.mxu0 0.0
  %7757 = vmatpush1.msra.mxu0 0.0
  %7758 = vmatprep.mubr.f32.mxu0 0.0
  %7759 = vmatmul.mubr.f32.gmra.mrb[0].mxu0 %v7538
  %v7760 = vpop.f32.mrb[0].mxu0
  %v7761 = vadd.f32 %v5746, %v7760
  %v7762 = vpop.f32.mrb[0].mxu0
  %7763 = vdwg.mxu0
  %v7764 = vmul.f32 %v7616, %v7761
  %v7765 = vadd.f32 %v5043, %v7764
  %v7766 = vtanh.pop %v7765
  %v7767 = vsub.f32 1.0, %v7693
  %v7768 = vmul.f32 %v7767, %v7766
  %v7770 = vmul.f32 %v7693, %v7537
  %v7771 = vadd.f32 %v7768, %v7770
  %v7773 = vsel %vm47, %v7535, 0
  %7775 = vmatprep.subr.mxu0 0.0
  %7776 = vmatpush1.msra.mxu0 %v5570
  %7777 = vmatprep.subr.mxu0 0.0
  %7778 = vmatpush1.msra.mxu0 %v5571
  %7779 = vmatprep.subr.mxu0 0.0
  %7780 = vmatpush1.msra.mxu0 %v5572
  %7781 = vmatprep.subr.mxu0 0.0
  %7782 = vmatpush1.msra.mxu0 %v5573
  %7783 = vmatprep.subr.mxu0 0.0
  %7784 = vmatpush1.msra.mxu0 0.0
  %7785 = vmatprep.subr.mxu0 0.0
  %7786 = vmatpush1.msra.mxu0 0.0
  %7787 = vmatprep.subr.mxu0 0.0
  %7788 = vmatpush1.msra.mxu0 0.0
  %7789 = vmatprep.subr.mxu0 0.0
  %7790 = vmatpush1.msra.mxu0 0.0
  %7791 = vmatprep.subr.mxu0 0.0
  %7792 = vmatpush1.msra.mxu0 0.0
  %7793 = vmatprep.subr.mxu0 0.0
  %7794 = vmatpush1.msra.mxu0 0.0
  %7795 = vmatprep.subr.mxu0 0.0
  %7796 = vmatpush1.msra.mxu0 0.0
  %7797 = vmatprep.subr.mxu0 0.0
  %7798 = vmatpush1.msra.mxu0 0.0
  %7799 = vmatprep.subr.mxu0 0.0
  %7800 = vmatpush1.msra.mxu0 0.0
  %7801 = vmatprep.subr.mxu0 0.0
  %7802 = vmatpush1.msra.mxu0 0.0
  %7803 = vmatprep.subr.mxu0 0.0
  %7804 = vmatpush1.msra.mxu0 0.0
  %7805 = vmatprep.subr.mxu0 0.0
  %7806 = vmatpush1.msra.mxu0 0.0
  %7807 = vmatprep.subr.mxu0 0.0
  %7808 = vmatpush1.msra.mxu0 0.0
  %7809 = vmatprep.subr.mxu0 0.0
  %7810 = vmatpush1.msra.mxu0 0.0
  %7811 = vmatprep.subr.mxu0 0.0
  %7812 = vmatpush1.msra.mxu0 0.0
  %7813 = vmatprep.subr.mxu0 0.0
  %7814 = vmatpush1.msra.mxu0 0.0
  %7815 = vmatprep.subr.mxu0 0.0
  %7816 = vmatpush1.msra.mxu0 0.0
  %7817 = vmatprep.subr.mxu0 0.0
  %7818 = vmatpush1.msra.mxu0 0.0
  %7819 = vmatprep.subr.mxu0 0.0
  %7820 = vmatpush1.msra.mxu0 0.0
  %7821 = vmatprep.subr.mxu0 0.0
  %7822 = vmatpush1.msra.mxu0 0.0
  %7823 = vmatprep.subr.mxu0 0.0
  %7824 = vmatpush1.msra.mxu0 0.0
  %7825 = vmatprep.subr.mxu0 0.0
  %7826 = vmatpush1.msra.mxu0 0.0
  %7827 = vmatprep.subr.mxu0 0.0
  %7828 = vmatpush1.msra.mxu0 0.0
  %7829 = vmatprep.subr.mxu0 0.0
  %7830 = vmatpush1.msra.mxu0 0.0
  %7831 = vmatprep.subr.mxu0 0.0
  %7832 = vmatpush1.msra.mxu0 0.0
  %7833 = vmatprep.subr.mxu0 0.0
  %7834 = vmatpush1.msra.mxu0 0.0
  %7835 = vmatprep.subr.mxu0 0.0
  %7836 = vmatpush1.msra.mxu0 0.0
  %7837 = vmatprep.subr.mxu0 0.0
  %7838 = vmatpush1.msra.mxu0 0.0
  %7839 = vmatprep.mubr.f32.mxu0 0.0
  %7840 = vmatmul.mubr.f32.gmra.mrb[0].mxu0 %v7773
  %v7841 = vpop.f32.mrb[0].mxu0
  %v7842 = vadd.f32 0.0, %v7841
  %v7843 = vpop.f32.mrb[0].mxu0
  %7844 = vdwg.mxu0
  %v7846 = vrot.slane %v7842, 2
  %v7848 = vadd.f32 %v5212, %v7846
  %v7849 = vxor.u32 %v7848, 2147483648
  %v7850 = vmul.f32 %v7849, 1.442695
  %v7851 = vpow.pop %v7850
  %v7852 = vadd.f32 %v7851, 1.0
  %v7853 = vrcp.pop %v7852
  %v7854 = vmul.f32 1.0, %v7853
  %7855 = vmatprep.subr.mxu0 0.0
  %7856 = vmatpush1.msra.mxu0 %v5575
  %7857 = vmatprep.subr.mxu0 0.0
  %7858 = vmatpush1.msra.mxu0 %v5576
  %7859 = vmatprep.subr.mxu0 0.0
  %7860 = vmatpush1.msra.mxu0 %v5577
  %7861 = vmatprep.subr.mxu0 0.0
  %7862 = vmatpush1.msra.mxu0 %v5578
  %7863 = vmatprep.subr.mxu0 0.0
  %7864 = vmatpush1.msra.mxu0 0.0
  %7865 = vmatprep.subr.mxu0 0.0
  %7866 = vmatpush1.msra.mxu0 0.0
  %7867 = vmatprep.subr.mxu0 0.0
  %7868 = vmatpush1.msra.mxu0 0.0
  %7869 = vmatprep.subr.mxu0 0.0
  %7870 = vmatpush1.msra.mxu0 0.0
  %7871 = vmatprep.subr.mxu0 0.0
  %7872 = vmatpush1.msra.mxu0 0.0
  %7873 = vmatprep.subr.mxu0 0.0
  %7874 = vmatpush1.msra.mxu0 0.0
  %7875 = vmatprep.subr.mxu0 0.0
  %7876 = vmatpush1.msra.mxu0 0.0
  %7877 = vmatprep.subr.mxu0 0.0
  %7878 = vmatpush1.msra.mxu0 0.0
  %7879 = vmatprep.subr.mxu0 0.0
  %7880 = vmatpush1.msra.mxu0 0.0
  %7881 = vmatprep.subr.mxu0 0.0
  %7882 = vmatpush1.msra.mxu0 0.0
  %7883 = vmatprep.subr.mxu0 0.0
  %7884 = vmatpush1.msra.mxu0 0.0
  %7885 = vmatprep.subr.mxu0 0.0
  %7886 = vmatpush1.msra.mxu0 0.0
  %7887 = vmatprep.subr.mxu0 0.0
  %7888 = vmatpush1.msra.mxu0 0.0
  %7889 = vmatprep.subr.mxu0 0.0
  %7890 = vmatpush1.msra.mxu0 0.0
  %7891 = vmatprep.subr.mxu0 0.0
  %7892 = vmatpush1.msra.mxu0 0.0
  %7893 = vmatprep.subr.mxu0 0.0
  %7894 = vmatpush1.msra.mxu0 0.0
  %7895 = vmatprep.subr.mxu0 0.0
  %7896 = vmatpush1.msra.mxu0 0.0
  %7897 = vmatprep.subr.mxu0 0.0
  %7898 = vmatpush1.msra.mxu0 0.0
  %7899 = vmatprep.subr.mxu0 0.0
  %7900 = vmatpush1.msra.mxu0 0.0
  %7901 = vmatprep.subr.mxu0 0.0
  %7902 = vmatpush1.msra.mxu0 0.0
  %7903 = vmatprep.subr.mxu0 0.0
  %7904 = vmatpush1.msra.mxu0 0.0
  %7905 = vmatprep.subr.mxu0 0.0
  %7906 = vmatpush1.msra.mxu0 0.0
  %7907 = vmatprep.subr.mxu0 0.0
  %7908 = vmatpush1.msra.mxu0 0.0
  %7909 = vmatprep.subr.mxu0 0.0
  %7910 = vmatpush1.msra.mxu0 0.0
  %7911 = vmatprep.subr.mxu0 0.0
  %7912 = vmatpush1.msra.mxu0 0.0
  %7913 = vmatprep.subr.mxu0 0.0
  %7914 = vmatpush1.msra.mxu0 0.0
  %7915 = vmatprep.subr.mxu0 0.0
  %7916 = vmatpush1.msra.mxu0 0.0
  %7917 = vmatprep.subr.mxu0 0.0
  %7918 = vmatpush1.msra.mxu0 0.0
  %7919 = vmatprep.mubr.f32.mxu0 0.0
  %7920 = vmatmul.mubr.f32.gmra.mrb[0].mxu0 %v7773
  %v7921 = vpop.f32.mrb[0].mxu0
  %v7922 = vadd.f32 0.0, %v7921
  %v7923 = vpop.f32.mrb[0].mxu0
  %7924 = vdwg.mxu0
  %v7926 = vrot.slane %v7922, 2
  %v7928 = vadd.f32 %v5382, %v7926
  %v7929 = vxor.u32 %v7928, 2147483648
  %v7930 = vmul.f32 %v7929, 1.442695
  %v7931 = vpow.pop %v7930
  %v7932 = vadd.f32 %v7931, 1.0
  %v7933 = vrcp.pop %v7932
  %v7934 = vmul.f32 1.0, %v7933
  %7935 = vmatprep.subr.mxu0 0.0
  %7936 = vmatpush1.msra.mxu0 %v5580
  %7937 = vmatprep.subr.mxu0 0.0
  %7938 = vmatpush1.msra.mxu0 %v5581
  %7939 = vmatprep.subr.mxu0 0.0
  %7940 = vmatpush1.msra.mxu0 %v5582
  %7941 = vmatprep.subr.mxu0 0.0
  %7942 = vmatpush1.msra.mxu0 %v5583
  %7943 = vmatprep.subr.mxu0 0.0
  %7944 = vmatpush1.msra.mxu0 0.0
  %7945 = vmatprep.subr.mxu0 0.0
  %7946 = vmatpush1.msra.mxu0 0.0
  %7947 = vmatprep.subr.mxu0 0.0
  %7948 = vmatpush1.msra.mxu0 0.0
  %7949 = vmatprep.subr.mxu0 0.0
  %7950 = vmatpush1.msra.mxu0 0.0
  %7951 = vmatprep.subr.mxu0 0.0
  %7952 = vmatpush1.msra.mxu0 0.0
  %7953 = vmatprep.subr.mxu0 0.0
  %7954 = vmatpush1.msra.mxu0 0.0
  %7955 = vmatprep.subr.mxu0 0.0
  %7956 = vmatpush1.msra.mxu0 0.0
  %7957 = vmatprep.subr.mxu0 0.0
  %7958 = vmatpush1.msra.mxu0 0.0
  %7959 = vmatprep.subr.mxu0 0.0
  %7960 = vmatpush1.msra.mxu0 0.0
  %7961 = vmatprep.subr.mxu0 0.0
  %7962 = vmatpush1.msra.mxu0 0.0
  %7963 = vmatprep.subr.mxu0 0.0
  %7964 = vmatpush1.msra.mxu0 0.0
  %7965 = vmatprep.subr.mxu0 0.0
  %7966 = vmatpush1.msra.mxu0 0.0
  %7967 = vmatprep.subr.mxu0 0.0
  %7968 = vmatpush1.msra.mxu0 0.0
  %7969 = vmatprep.subr.mxu0 0.0
  %7970 = vmatpush1.msra.mxu0 0.0
  %7971 = vmatprep.subr.mxu0 0.0
  %7972 = vmatpush1.msra.mxu0 0.0
  %7973 = vmatprep.subr.mxu0 0.0
  %7974 = vmatpush1.msra.mxu0 0.0
  %7975 = vmatprep.subr.mxu0 0.0
  %7976 = vmatpush1.msra.mxu0 0.0
  %7977 = vmatprep.subr.mxu0 0.0
  %7978 = vmatpush1.msra.mxu0 0.0
  %7979 = vmatprep.subr.mxu0 0.0
  %7980 = vmatpush1.msra.mxu0 0.0
  %7981 = vmatprep.subr.mxu0 0.0
  %7982 = vmatpush1.msra.mxu0 0.0
  %7983 = vmatprep.subr.mxu0 0.0
  %7984 = vmatpush1.msra.mxu0 0.0
  %7985 = vmatprep.subr.mxu0 0.0
  %7986 = vmatpush1.msra.mxu0 0.0
  %7987 = vmatprep.subr.mxu0 0.0
  %7988 = vmatpush1.msra.mxu0 0.0
  %7989 = vmatprep.subr.mxu0 0.0
  %7990 = vmatpush1.msra.mxu0 0.0
  %7991 = vmatprep.subr.mxu0 0.0
  %7992 = vmatpush1.msra.mxu0 0.0
  %7993 = vmatprep.subr.mxu0 0.0
  %7994 = vmatpush1.msra.mxu0 0.0
  %7995 = vmatprep.subr.mxu0 0.0
  %7996 = vmatpush1.msra.mxu0 0.0
  %7997 = vmatprep.subr.mxu0 0.0
  %7998 = vmatpush1.msra.mxu0 0.0
  %7999 = vmatprep.mubr.f32.mxu0 0.0
  %8000 = vmatmul.mubr.f32.gmra.mrb[0].mxu0 %v7773
  %v8001 = vpop.f32.mrb[0].mxu0
  %v8002 = vadd.f32 %v5989, %v8001
  %v8003 = vpop.f32.mrb[0].mxu0
  %8004 = vdwg.mxu0
  %v8006 = vrot.slane %v8002, 2
  %v8008 = vmul.f32 %v7854, %v8006
  %v8009 = vadd.f32 %v5552, %v8008
  %v8010 = vtanh.pop %v8009
  %v8011 = vsub.f32 1.0, %v7934
  %v8012 = vmul.f32 %v8011, %v8010
  %v8013 = vrot.slane %v7535, 2
  %v8015 = vmul.f32 %v7934, %v8013
  %v8016 = vadd.f32 %v8012, %v8015
  %v8018 = vsel %vm47, %v7771, 0
  %8020 = vmatprep.subr.mxu0 0.0
  %8021 = vmatpush1.msra.mxu0 %v5555
  %8022 = vmatprep.subr.mxu0 0.0
  %8023 = vmatpush1.msra.mxu0 %v5556
  %8024 = vmatprep.subr.mxu0 0.0
  %8025 = vmatpush1.msra.mxu0 %v5557
  %8026 = vmatprep.subr.mxu0 0.0
  %8027 = vmatpush1.msra.mxu0 %v5558
  %8028 = vmatprep.subr.mxu0 0.0
  %8029 = vmatpush1.msra.mxu0 0.0
  %8030 = vmatprep.subr.mxu0 0.0
  %8031 = vmatpush1.msra.mxu0 0.0
  %8032 = vmatprep.subr.mxu0 0.0
  %8033 = vmatpush1.msra.mxu0 0.0
  %8034 = vmatprep.subr.mxu0 0.0
  %8035 = vmatpush1.msra.mxu0 0.0
  %8036 = vmatprep.subr.mxu0 0.0
  %8037 = vmatpush1.msra.mxu0 0.0
  %8038 = vmatprep.subr.mxu0 0.0
  %8039 = vmatpush1.msra.mxu0 0.0
  %8040 = vmatprep.subr.mxu0 0.0
  %8041 = vmatpush1.msra.mxu0 0.0
  %8042 = vmatprep.subr.mxu0 0.0
  %8043 = vmatpush1.msra.mxu0 0.0
  %8044 = vmatprep.subr.mxu0 0.0
  %8045 = vmatpush1.msra.mxu0 0.0
  %8046 = vmatprep.subr.mxu0 0.0
  %8047 = vmatpush1.msra.mxu0 0.0
  %8048 = vmatprep.subr.mxu0 0.0
  %8049 = vmatpush1.msra.mxu0 0.0
  %8050 = vmatprep.subr.mxu0 0.0
  %8051 = vmatpush1.msra.mxu0 0.0
  %8052 = vmatprep.subr.mxu0 0.0
  %8053 = vmatpush1.msra.mxu0 0.0
  %8054 = vmatprep.subr.mxu0 0.0
  %8055 = vmatpush1.msra.mxu0 0.0
  %8056 = vmatprep.subr.mxu0 0.0
  %8057 = vmatpush1.msra.mxu0 0.0
  %8058 = vmatprep.subr.mxu0 0.0
  %8059 = vmatpush1.msra.mxu0 0.0
  %8060 = vmatprep.subr.mxu0 0.0
  %8061 = vmatpush1.msra.mxu0 0.0
  %8062 = vmatprep.subr.mxu0 0.0
  %8063 = vmatpush1.msra.mxu0 0.0
  %8064 = vmatprep.subr.mxu0 0.0
  %8065 = vmatpush1.msra.mxu0 0.0
  %8066 = vmatprep.subr.mxu0 0.0
  %8067 = vmatpush1.msra.mxu0 0.0
  %8068 = vmatprep.subr.mxu0 0.0
  %8069 = vmatpush1.msra.mxu0 0.0
  %8070 = vmatprep.subr.mxu0 0.0
  %8071 = vmatpush1.msra.mxu0 0.0
  %8072 = vmatprep.subr.mxu0 0.0
  %8073 = vmatpush1.msra.mxu0 0.0
  %8074 = vmatprep.subr.mxu0 0.0
  %8075 = vmatpush1.msra.mxu0 0.0
  %8076 = vmatprep.subr.mxu0 0.0
  %8077 = vmatpush1.msra.mxu0 0.0
  %8078 = vmatprep.subr.mxu0 0.0
  %8079 = vmatpush1.msra.mxu0 0.0
  %8080 = vmatprep.subr.mxu0 0.0
  %8081 = vmatpush1.msra.mxu0 0.0
  %8082 = vmatprep.subr.mxu0 0.0
  %8083 = vmatpush1.msra.mxu0 0.0
  %8084 = vmatprep.mubr.f32.mxu0 0.0
  %8085 = vmatmul.mubr.f32.gmra.mrb[0].mxu0 %v8018
  %v8086 = vpop.f32.mrb[0].mxu0
  %v8087 = vadd.f32 0.0, %v8086
  %v8088 = vpop.f32.mrb[0].mxu0
  %8089 = vdwg.mxu0
  %v8091 = vrot.slane %v8087, 6
  %v8093 = vadd.f32 %v4703, %v8091
  %v8094 = vxor.u32 %v8093, 2147483648
  %v8095 = vmul.f32 %v8094, 1.442695
  %v8096 = vpow.pop %v8095
  %v8097 = vadd.f32 %v8096, 1.0
  %v8098 = vrcp.pop %v8097
  %v8099 = vmul.f32 1.0, %v8098
  %8100 = vmatprep.subr.mxu0 0.0
  %8101 = vmatpush1.msra.mxu0 %v5560
  %8102 = vmatprep.subr.mxu0 0.0
  %8103 = vmatpush1.msra.mxu0 %v5561
  %8104 = vmatprep.subr.mxu0 0.0
  %8105 = vmatpush1.msra.mxu0 %v5562
  %8106 = vmatprep.subr.mxu0 0.0
  %8107 = vmatpush1.msra.mxu0 %v5563
  %8108 = vmatprep.subr.mxu0 0.0
  %8109 = vmatpush1.msra.mxu0 0.0
  %8110 = vmatprep.subr.mxu0 0.0
  %8111 = vmatpush1.msra.mxu0 0.0
  %8112 = vmatprep.subr.mxu0 0.0
  %8113 = vmatpush1.msra.mxu0 0.0
  %8114 = vmatprep.subr.mxu0 0.0
  %8115 = vmatpush1.msra.mxu0 0.0
  %8116 = vmatprep.subr.mxu0 0.0
  %8117 = vmatpush1.msra.mxu0 0.0
  %8118 = vmatprep.subr.mxu0 0.0
  %8119 = vmatpush1.msra.mxu0 0.0
  %8120 = vmatprep.subr.mxu0 0.0
  %8121 = vmatpush1.msra.mxu0 0.0
  %8122 = vmatprep.subr.mxu0 0.0
  %8123 = vmatpush1.msra.mxu0 0.0
  %8124 = vmatprep.subr.mxu0 0.0
  %8125 = vmatpush1.msra.mxu0 0.0
  %8126 = vmatprep.subr.mxu0 0.0
  %8127 = vmatpush1.msra.mxu0 0.0
  %8128 = vmatprep.subr.mxu0 0.0
  %8129 = vmatpush1.msra.mxu0 0.0
  %8130 = vmatprep.subr.mxu0 0.0
  %8131 = vmatpush1.msra.mxu0 0.0
  %8132 = vmatprep.subr.mxu0 0.0
  %8133 = vmatpush1.msra.mxu0 0.0
  %8134 = vmatprep.subr.mxu0 0.0
  %8135 = vmatpush1.msra.mxu0 0.0
  %8136 = vmatprep.subr.mxu0 0.0
  %8137 = vmatpush1.msra.mxu0 0.0
  %8138 = vmatprep.subr.mxu0 0.0
  %8139 = vmatpush1.msra.mxu0 0.0
  %8140 = vmatprep.subr.mxu0 0.0
  %8141 = vmatpush1.msra.mxu0 0.0
  %8142 = vmatprep.subr.mxu0 0.0
  %8143 = vmatpush1.msra.mxu0 0.0
  %8144 = vmatprep.subr.mxu0 0.0
  %8145 = vmatpush1.msra.mxu0 0.0
  %8146 = vmatprep.subr.mxu0 0.0
  %8147 = vmatpush1.msra.mxu0 0.0
  %8148 = vmatprep.subr.mxu0 0.0
  %8149 = vmatpush1.msra.mxu0 0.0
  %8150 = vmatprep.subr.mxu0 0.0
  %8151 = vmatpush1.msra.mxu0 0.0
  %8152 = vmatprep.subr.mxu0 0.0
  %8153 = vmatpush1.msra.mxu0 0.0
  %8154 = vmatprep.subr.mxu0 0.0
  %8155 = vmatpush1.msra.mxu0 0.0
  %8156 = vmatprep.subr.mxu0 0.0
  %8157 = vmatpush1.msra.mxu0 0.0
  %8158 = vmatprep.subr.mxu0 0.0
  %8159 = vmatpush1.msra.mxu0 0.0
  %8160 = vmatprep.subr.mxu0 0.0
  %8161 = vmatpush1.msra.mxu0 0.0
  %8162 = vmatprep.subr.mxu0 0.0
  %8163 = vmatpush1.msra.mxu0 0.0
  %8164 = vmatprep.mubr.f32.mxu0 0.0
  %8165 = vmatmul.mubr.f32.gmra.mrb[0].mxu0 %v8018
  %v8166 = vpop.f32.mrb[0].mxu0
  %v8167 = vadd.f32 0.0, %v8166
  %v8168 = vpop.f32.mrb[0].mxu0
  %8169 = vdwg.mxu0
  %v8171 = vrot.slane %v8167, 6
  %v8173 = vadd.f32 %v4873, %v8171
  %v8174 = vxor.u32 %v8173, 2147483648
  %v8175 = vmul.f32 %v8174, 1.442695
  %v8176 = vpow.pop %v8175
  %v8177 = vadd.f32 %v8176, 1.0
  %v8178 = vrcp.pop %v8177
  %v8179 = vmul.f32 1.0, %v8178
  %8180 = vmatprep.subr.mxu0 0.0
  %8181 = vmatpush1.msra.mxu0 %v5565
  %8182 = vmatprep.subr.mxu0 0.0
  %8183 = vmatpush1.msra.mxu0 %v5566
  %8184 = vmatprep.subr.mxu0 0.0
  %8185 = vmatpush1.msra.mxu0 %v5567
  %8186 = vmatprep.subr.mxu0 0.0
  %8187 = vmatpush1.msra.mxu0 %v5568
  %8188 = vmatprep.subr.mxu0 0.0
  %8189 = vmatpush1.msra.mxu0 0.0
  %8190 = vmatprep.subr.mxu0 0.0
  %8191 = vmatpush1.msra.mxu0 0.0
  %8192 = vmatprep.subr.mxu0 0.0
  %8193 = vmatpush1.msra.mxu0 0.0
  %8194 = vmatprep.subr.mxu0 0.0
  %8195 = vmatpush1.msra.mxu0 0.0
  %8196 = vmatprep.subr.mxu0 0.0
  %8197 = vmatpush1.msra.mxu0 0.0
  %8198 = vmatprep.subr.mxu0 0.0
  %8199 = vmatpush1.msra.mxu0 0.0
  %8200 = vmatprep.subr.mxu0 0.0
  %8201 = vmatpush1.msra.mxu0 0.0
  %8202 = vmatprep.subr.mxu0 0.0
  %8203 = vmatpush1.msra.mxu0 0.0
  %8204 = vmatprep.subr.mxu0 0.0
  %8205 = vmatpush1.msra.mxu0 0.0
  %8206 = vmatprep.subr.mxu0 0.0
  %8207 = vmatpush1.msra.mxu0 0.0
  %8208 = vmatprep.subr.mxu0 0.0
  %8209 = vmatpush1.msra.mxu0 0.0
  %8210 = vmatprep.subr.mxu0 0.0
  %8211 = vmatpush1.msra.mxu0 0.0
  %8212 = vmatprep.subr.mxu0 0.0
  %8213 = vmatpush1.msra.mxu0 0.0
  %8214 = vmatprep.subr.mxu0 0.0
  %8215 = vmatpush1.msra.mxu0 0.0
  %8216 = vmatprep.subr.mxu0 0.0
  %8217 = vmatpush1.msra.mxu0 0.0
  %8218 = vmatprep.subr.mxu0 0.0
  %8219 = vmatpush1.msra.mxu0 0.0
  %8220 = vmatprep.subr.mxu0 0.0
  %8221 = vmatpush1.msra.mxu0 0.0
  %8222 = vmatprep.subr.mxu0 0.0
  %8223 = vmatpush1.msra.mxu0 0.0
  %8224 = vmatprep.subr.mxu0 0.0
  %8225 = vmatpush1.msra.mxu0 0.0
  %8226 = vmatprep.subr.mxu0 0.0
  %8227 = vmatpush1.msra.mxu0 0.0
  %8228 = vmatprep.subr.mxu0 0.0
  %8229 = vmatpush1.msra.mxu0 0.0
  %8230 = vmatprep.subr.mxu0 0.0
  %8231 = vmatpush1.msra.mxu0 0.0
  %8232 = vmatprep.subr.mxu0 0.0
  %8233 = vmatpush1.msra.mxu0 0.0
  %8234 = vmatprep.subr.mxu0 0.0
  %8235 = vmatpush1.msra.mxu0 0.0
  %8236 = vmatprep.subr.mxu0 0.0
  %8237 = vmatpush1.msra.mxu0 0.0
  %8238 = vmatprep.subr.mxu0 0.0
  %8239 = vmatpush1.msra.mxu0 0.0
  %8240 = vmatprep.subr.mxu0 0.0
  %8241 = vmatpush1.msra.mxu0 0.0
  %8242 = vmatprep.subr.mxu0 0.0
  %8243 = vmatpush1.msra.mxu0 0.0
  %8244 = vmatprep.mubr.f32.mxu0 0.0
  %8245 = vmatmul.mubr.f32.gmra.mrb[0].mxu0 %v8018
  %v8246 = vpop.f32.mrb[0].mxu0
  %v8247 = vadd.f32 %v5746, %v8246
  %v8248 = vpop.f32.mrb[0].mxu0
  %8249 = vdwg.mxu0
  %v8251 = vrot.slane %v8247, 6
  %v8253 = vmul.f32 %v8099, %v8251
  %v8254 = vadd.f32 %v5043, %v8253
  %v8255 = vtanh.pop %v8254
  %v8256 = vsub.f32 1.0, %v8179
  %v8257 = vmul.f32 %v8256, %v8255
  %v8258 = vrot.slane %v7771, 6
  %v8260 = vmul.f32 %v8179, %v8258
  %v8261 = vadd.f32 %v8257, %v8260
  %v8263 = vrot.slane %v8016, 6
  %v8264 = vsel %vm47, %v8263, 0
  %8266 = vmatprep.subr.mxu0 0.0
  %8267 = vmatpush1.msra.mxu0 %v5570
  %8268 = vmatprep.subr.mxu0 0.0
  %8269 = vmatpush1.msra.mxu0 %v5571
  %8270 = vmatprep.subr.mxu0 0.0
  %8271 = vmatpush1.msra.mxu0 %v5572
  %8272 = vmatprep.subr.mxu0 0.0
  %8273 = vmatpush1.msra.mxu0 %v5573
  %8274 = vmatprep.subr.mxu0 0.0
  %8275 = vmatpush1.msra.mxu0 0.0
  %8276 = vmatprep.subr.mxu0 0.0
  %8277 = vmatpush1.msra.mxu0 0.0
  %8278 = vmatprep.subr.mxu0 0.0
  %8279 = vmatpush1.msra.mxu0 0.0
  %8280 = vmatprep.subr.mxu0 0.0
  %8281 = vmatpush1.msra.mxu0 0.0
  %8282 = vmatprep.subr.mxu0 0.0
  %8283 = vmatpush1.msra.mxu0 0.0
  %8284 = vmatprep.subr.mxu0 0.0
  %8285 = vmatpush1.msra.mxu0 0.0
  %8286 = vmatprep.subr.mxu0 0.0
  %8287 = vmatpush1.msra.mxu0 0.0
  %8288 = vmatprep.subr.mxu0 0.0
  %8289 = vmatpush1.msra.mxu0 0.0
  %8290 = vmatprep.subr.mxu0 0.0
  %8291 = vmatpush1.msra.mxu0 0.0
  %8292 = vmatprep.subr.mxu0 0.0
  %8293 = vmatpush1.msra.mxu0 0.0
  %8294 = vmatprep.subr.mxu0 0.0
  %8295 = vmatpush1.msra.mxu0 0.0
  %8296 = vmatprep.subr.mxu0 0.0
  %8297 = vmatpush1.msra.mxu0 0.0
  %8298 = vmatprep.subr.mxu0 0.0
  %8299 = vmatpush1.msra.mxu0 0.0
  %8300 = vmatprep.subr.mxu0 0.0
  %8301 = vmatpush1.msra.mxu0 0.0
  %8302 = vmatprep.subr.mxu0 0.0
  %8303 = vmatpush1.msra.mxu0 0.0
  %8304 = vmatprep.subr.mxu0 0.0
  %8305 = vmatpush1.msra.mxu0 0.0
  %8306 = vmatprep.subr.mxu0 0.0
  %8307 = vmatpush1.msra.mxu0 0.0
  %8308 = vmatprep.subr.mxu0 0.0
  %8309 = vmatpush1.msra.mxu0 0.0
  %8310 = vmatprep.subr.mxu0 0.0
  %8311 = vmatpush1.msra.mxu0 0.0
  %8312 = vmatprep.subr.mxu0 0.0
  %8313 = vmatpush1.msra.mxu0 0.0
  %8314 = vmatprep.subr.mxu0 0.0
  %8315 = vmatpush1.msra.mxu0 0.0
  %8316 = vmatprep.subr.mxu0 0.0
  %8317 = vmatpush1.msra.mxu0 0.0
  %8318 = vmatprep.subr.mxu0 0.0
  %8319 = vmatpush1.msra.mxu0 0.0
  %8320 = vmatprep.subr.mxu0 0.0
  %8321 = vmatpush1.msra.mxu0 0.0
  %8322 = vmatprep.subr.mxu0 0.0
  %8323 = vmatpush1.msra.mxu0 0.0
  %8324 = vmatprep.subr.mxu0 0.0
  %8325 = vmatpush1.msra.mxu0 0.0
  %8326 = vmatprep.subr.mxu0 0.0
  %8327 = vmatpush1.msra.mxu0 0.0
  %8328 = vmatprep.subr.mxu0 0.0
  %8329 = vmatpush1.msra.mxu0 0.0
  %8330 = vmatprep.mubr.f32.mxu0 0.0
  %8331 = vmatmul.mubr.f32.gmra.mrb[0].mxu0 %v8264
  %v8332 = vpop.f32.mrb[0].mxu0
  %v8333 = vadd.f32 0.0, %v8332
  %v8334 = vpop.f32.mrb[0].mxu0
  %8335 = vdwg.mxu0
  %v8337 = vrot.slane %v8333, 4
  %v8339 = vadd.f32 %v5212, %v8337
  %v8340 = vxor.u32 %v8339, 2147483648
  %v8341 = vmul.f32 %v8340, 1.442695
  %v8342 = vpow.pop %v8341
  %v8343 = vadd.f32 %v8342, 1.0
  %v8344 = vrcp.pop %v8343
  %v8345 = vmul.f32 1.0, %v8344
  %8346 = vmatprep.subr.mxu0 0.0
  %8347 = vmatpush1.msra.mxu0 %v5575
  %8348 = vmatprep.subr.mxu0 0.0
  %8349 = vmatpush1.msra.mxu0 %v5576
  %8350 = vmatprep.subr.mxu0 0.0
  %8351 = vmatpush1.msra.mxu0 %v5577
  %8352 = vmatprep.subr.mxu0 0.0
  %8353 = vmatpush1.msra.mxu0 %v5578
  %8354 = vmatprep.subr.mxu0 0.0
  %8355 = vmatpush1.msra.mxu0 0.0
  %8356 = vmatprep.subr.mxu0 0.0
  %8357 = vmatpush1.msra.mxu0 0.0
  %8358 = vmatprep.subr.mxu0 0.0
  %8359 = vmatpush1.msra.mxu0 0.0
  %8360 = vmatprep.subr.mxu0 0.0
  %8361 = vmatpush1.msra.mxu0 0.0
  %8362 = vmatprep.subr.mxu0 0.0
  %8363 = vmatpush1.msra.mxu0 0.0
  %8364 = vmatprep.subr.mxu0 0.0
  %8365 = vmatpush1.msra.mxu0 0.0
  %8366 = vmatprep.subr.mxu0 0.0
  %8367 = vmatpush1.msra.mxu0 0.0
  %8368 = vmatprep.subr.mxu0 0.0
  %8369 = vmatpush1.msra.mxu0 0.0
  %8370 = vmatprep.subr.mxu0 0.0
  %8371 = vmatpush1.msra.mxu0 0.0
  %8372 = vmatprep.subr.mxu0 0.0
  %8373 = vmatpush1.msra.mxu0 0.0
  %8374 = vmatprep.subr.mxu0 0.0
  %8375 = vmatpush1.msra.mxu0 0.0
  %8376 = vmatprep.subr.mxu0 0.0
  %8377 = vmatpush1.msra.mxu0 0.0
  %8378 = vmatprep.subr.mxu0 0.0
  %8379 = vmatpush1.msra.mxu0 0.0
  %8380 = vmatprep.subr.mxu0 0.0
  %8381 = vmatpush1.msra.mxu0 0.0
  %8382 = vmatprep.subr.mxu0 0.0
  %8383 = vmatpush1.msra.mxu0 0.0
  %8384 = vmatprep.subr.mxu0 0.0
  %8385 = vmatpush1.msra.mxu0 0.0
  %8386 = vmatprep.subr.mxu0 0.0
  %8387 = vmatpush1.msra.mxu0 0.0
  %8388 = vmatprep.subr.mxu0 0.0
  %8389 = vmatpush1.msra.mxu0 0.0
  %8390 = vmatprep.subr.mxu0 0.0
  %8391 = vmatpush1.msra.mxu0 0.0
  %8392 = vmatprep.subr.mxu0 0.0
  %8393 = vmatpush1.msra.mxu0 0.0
  %8394 = vmatprep.subr.mxu0 0.0
  %8395 = vmatpush1.msra.mxu0 0.0
  %8396 = vmatprep.subr.mxu0 0.0
  %8397 = vmatpush1.msra.mxu0 0.0
  %8398 = vmatprep.subr.mxu0 0.0
  %8399 = vmatpush1.msra.mxu0 0.0
  %8400 = vmatprep.subr.mxu0 0.0
  %8401 = vmatpush1.msra.mxu0 0.0
  %8402 = vmatprep.subr.mxu0 0.0
  %8403 = vmatpush1.msra.mxu0 0.0
  %8404 = vmatprep.subr.mxu0 0.0
  %8405 = vmatpush1.msra.mxu0 0.0
  %8406 = vmatprep.subr.mxu0 0.0
  %8407 = vmatpush1.msra.mxu0 0.0
  %8408 = vmatprep.subr.mxu0 0.0
  %8409 = vmatpush1.msra.mxu0 0.0
  %8410 = vmatprep.mubr.f32.mxu0 0.0
  %8411 = vmatmul.mubr.f32.gmra.mrb[0].mxu0 %v8264
  %v8412 = vpop.f32.mrb[0].mxu0
  %v8413 = vadd.f32 0.0, %v8412
  %v8414 = vpop.f32.mrb[0].mxu0
  %8415 = vdwg.mxu0
  %v8417 = vrot.slane %v8413, 4
  %v8419 = vadd.f32 %v5382, %v8417
  %v8420 = vxor.u32 %v8419, 2147483648
  %v8421 = vmul.f32 %v8420, 1.442695
  %v8422 = vpow.pop %v8421
  %v8423 = vadd.f32 %v8422, 1.0
  %v8424 = vrcp.pop %v8423
  %v8425 = vmul.f32 1.0, %v8424
  %8426 = vmatprep.subr.mxu0 0.0
  %8427 = vmatpush1.msra.mxu0 %v5580
  %8428 = vmatprep.subr.mxu0 0.0
  %8429 = vmatpush1.msra.mxu0 %v5581
  %8430 = vmatprep.subr.mxu0 0.0
  %8431 = vmatpush1.msra.mxu0 %v5582
  %8432 = vmatprep.subr.mxu0 0.0
  %8433 = vmatpush1.msra.mxu0 %v5583
  %8434 = vmatprep.subr.mxu0 0.0
  %8435 = vmatpush1.msra.mxu0 0.0
  %8436 = vmatprep.subr.mxu0 0.0
  %8437 = vmatpush1.msra.mxu0 0.0
  %8438 = vmatprep.subr.mxu0 0.0
  %8439 = vmatpush1.msra.mxu0 0.0
  %8440 = vmatprep.subr.mxu0 0.0
  %8441 = vmatpush1.msra.mxu0 0.0
  %8442 = vmatprep.subr.mxu0 0.0
  %8443 = vmatpush1.msra.mxu0 0.0
  %8444 = vmatprep.subr.mxu0 0.0
  %8445 = vmatpush1.msra.mxu0 0.0
  %8446 = vmatprep.subr.mxu0 0.0
  %8447 = vmatpush1.msra.mxu0 0.0
  %8448 = vmatprep.subr.mxu0 0.0
  %8449 = vmatpush1.msra.mxu0 0.0
  %8450 = vmatprep.subr.mxu0 0.0
  %8451 = vmatpush1.msra.mxu0 0.0
  %8452 = vmatprep.subr.mxu0 0.0
  %8453 = vmatpush1.msra.mxu0 0.0
  %8454 = vmatprep.subr.mxu0 0.0
  %8455 = vmatpush1.msra.mxu0 0.0
  %8456 = vmatprep.subr.mxu0 0.0
  %8457 = vmatpush1.msra.mxu0 0.0
  %8458 = vmatprep.subr.mxu0 0.0
  %8459 = vmatpush1.msra.mxu0 0.0
  %8460 = vmatprep.subr.mxu0 0.0
  %8461 = vmatpush1.msra.mxu0 0.0
  %8462 = vmatprep.subr.mxu0 0.0
  %8463 = vmatpush1.msra.mxu0 0.0
  %8464 = vmatprep.subr.mxu0 0.0
  %8465 = vmatpush1.msra.mxu0 0.0
  %8466 = vmatprep.subr.mxu0 0.0
  %8467 = vmatpush1.msra.mxu0 0.0
  %8468 = vmatprep.subr.mxu0 0.0
  %8469 = vmatpush1.msra.mxu0 0.0
  %8470 = vmatprep.subr.mxu0 0.0
  %8471 = vmatpush1.msra.mxu0 0.0
  %8472 = vmatprep.subr.mxu0 0.0
  %8473 = vmatpush1.msra.mxu0 0.0
  %8474 = vmatprep.subr.mxu0 0.0
  %8475 = vmatpush1.msra.mxu0 0.0
  %8476 = vmatprep.subr.mxu0 0.0
  %8477 = vmatpush1.msra.mxu0 0.0
  %8478 = vmatprep.subr.mxu0 0.0
  %8479 = vmatpush1.msra.mxu0 0.0
  %8480 = vmatprep.subr.mxu0 0.0
  %8481 = vmatpush1.msra.mxu0 0.0
  %8482 = vmatprep.subr.mxu0 0.0
  %8483 = vmatpush1.msra.mxu0 0.0
  %8484 = vmatprep.subr.mxu0 0.0
  %8485 = vmatpush1.msra.mxu0 0.0
  %8486 = vmatprep.subr.mxu0 0.0
  %8487 = vmatpush1.msra.mxu0 0.0
  %8488 = vmatprep.subr.mxu0 0.0
  %8489 = vmatpush1.msra.mxu0 0.0
  %8490 = vmatprep.mubr.f32.mxu0 0.0
  %8491 = vmatmul.mubr.f32.gmra.mrb[0].mxu0 %v8264
  %v8492 = vpop.f32.mrb[0].mxu0
  %v8493 = vadd.f32 %v5989, %v8492
  %v8494 = vpop.f32.mrb[0].mxu0
  %8495 = vdwg.mxu0
  %v8497 = vrot.slane %v8493, 4
  %v8499 = vmul.f32 %v8345, %v8497
  %v8500 = vadd.f32 %v5552, %v8499
  %v8501 = vtanh.pop %v8500
  %v8502 = vsub.f32 1.0, %v8425
  %v8503 = vmul.f32 %v8502, %v8501
  %v8504 = vrot.slane %v8016, 2
  %v8506 = vmul.f32 %v8425, %v8504
  %v8507 = vadd.f32 %v8503, %v8506
  %v8509 = vrot.slane %v8261, 2
  %v8510 = vsel %vm47, %v8509, 0
  %8512 = vmatprep.subr.mxu0 0.0
  %8513 = vmatpush1.msra.mxu0 %v5555
  %8514 = vmatprep.subr.mxu0 0.0
  %8515 = vmatpush1.msra.mxu0 %v5556
  %8516 = vmatprep.subr.mxu0 0.0
  %8517 = vmatpush1.msra.mxu0 %v5557
  %8518 = vmatprep.subr.mxu0 0.0
  %8519 = vmatpush1.msra.mxu0 %v5558
  %8520 = vmatprep.subr.mxu0 0.0
  %8521 = vmatpush1.msra.mxu0 0.0
  %8522 = vmatprep.subr.mxu0 0.0
  %8523 = vmatpush1.msra.mxu0 0.0
  %8524 = vmatprep.subr.mxu0 0.0
  %8525 = vmatpush1.msra.mxu0 0.0
  %8526 = vmatprep.subr.mxu0 0.0
  %8527 = vmatpush1.msra.mxu0 0.0
  %8528 = vmatprep.subr.mxu0 0.0
  %8529 = vmatpush1.msra.mxu0 0.0
  %8530 = vmatprep.subr.mxu0 0.0
  %8531 = vmatpush1.msra.mxu0 0.0
  %8532 = vmatprep.subr.mxu0 0.0
  %8533 = vmatpush1.msra.mxu0 0.0
  %8534 = vmatprep.subr.mxu0 0.0
  %8535 = vmatpush1.msra.mxu0 0.0
  %8536 = vmatprep.subr.mxu0 0.0
  %8537 = vmatpush1.msra.mxu0 0.0
  %8538 = vmatprep.subr.mxu0 0.0
  %8539 = vmatpush1.msra.mxu0 0.0
  %8540 = vmatprep.subr.mxu0 0.0
  %8541 = vmatpush1.msra.mxu0 0.0
  %8542 = vmatprep.subr.mxu0 0.0
  %8543 = vmatpush1.msra.mxu0 0.0
  %8544 = vmatprep.subr.mxu0 0.0
  %8545 = vmatpush1.msra.mxu0 0.0
  %8546 = vmatprep.subr.mxu0 0.0
  %8547 = vmatpush1.msra.mxu0 0.0
  %8548 = vmatprep.subr.mxu0 0.0
  %8549 = vmatpush1.msra.mxu0 0.0
  %8550 = vmatprep.subr.mxu0 0.0
  %8551 = vmatpush1.msra.mxu0 0.0
  %8552 = vmatprep.subr.mxu0 0.0
  %8553 = vmatpush1.msra.mxu0 0.0
  %8554 = vmatprep.subr.mxu0 0.0
  %8555 = vmatpush1.msra.mxu0 0.0
  %8556 = vmatprep.subr.mxu0 0.0
  %8557 = vmatpush1.msra.mxu0 0.0
  %8558 = vmatprep.subr.mxu0 0.0
  %8559 = vmatpush1.msra.mxu0 0.0
  %8560 = vmatprep.subr.mxu0 0.0
  %8561 = vmatpush1.msra.mxu0 0.0
  %8562 = vmatprep.subr.mxu0 0.0
  %8563 = vmatpush1.msra.mxu0 0.0
  %8564 = vmatprep.subr.mxu0 0.0
  %8565 = vmatpush1.msra.mxu0 0.0
  %8566 = vmatprep.subr.mxu0 0.0
  %8567 = vmatpush1.msra.mxu0 0.0
  %8568 = vmatprep.subr.mxu0 0.0
  %8569 = vmatpush1.msra.mxu0 0.0
  %8570 = vmatprep.subr.mxu0 0.0
  %8571 = vmatpush1.msra.mxu0 0.0
  %8572 = vmatprep.subr.mxu0 0.0
  %8573 = vmatpush1.msra.mxu0 0.0
  %8574 = vmatprep.subr.mxu0 0.0
  %8575 = vmatpush1.msra.mxu0 0.0
  %8576 = vmatprep.mubr.f32.mxu0 0.0
  %8577 = vmatmul.mubr.f32.gmra.mrb[0].mxu0 %v8510
  %v8578 = vpop.f32.mrb[0].mxu0
  %v8579 = vadd.f32 0.0, %v8578
  %v8580 = vpop.f32.mrb[0].mxu0
  %8581 = vdwg.mxu0
  %v8583 = vrot.slane %v8579, 4
  %v8585 = vadd.f32 %v4703, %v8583
  %v8586 = vxor.u32 %v8585, 2147483648
  %v8587 = vmul.f32 %v8586, 1.442695
  %v8588 = vpow.pop %v8587
  %v8589 = vadd.f32 %v8588, 1.0
  %v8590 = vrcp.pop %v8589
  %v8591 = vmul.f32 1.0, %v8590
  %8592 = vmatprep.subr.mxu0 0.0
  %8593 = vmatpush1.msra.mxu0 %v5560
  %8594 = vmatprep.subr.mxu0 0.0
  %8595 = vmatpush1.msra.mxu0 %v5561
  %8596 = vmatprep.subr.mxu0 0.0
  %8597 = vmatpush1.msra.mxu0 %v5562
  %8598 = vmatprep.subr.mxu0 0.0
  %8599 = vmatpush1.msra.mxu0 %v5563
  %8600 = vmatprep.subr.mxu0 0.0
  %8601 = vmatpush1.msra.mxu0 0.0
  %8602 = vmatprep.subr.mxu0 0.0
  %8603 = vmatpush1.msra.mxu0 0.0
  %8604 = vmatprep.subr.mxu0 0.0
  %8605 = vmatpush1.msra.mxu0 0.0
  %8606 = vmatprep.subr.mxu0 0.0
  %8607 = vmatpush1.msra.mxu0 0.0
  %8608 = vmatprep.subr.mxu0 0.0
  %8609 = vmatpush1.msra.mxu0 0.0
  %8610 = vmatprep.subr.mxu0 0.0
  %8611 = vmatpush1.msra.mxu0 0.0
  %8612 = vmatprep.subr.mxu0 0.0
  %8613 = vmatpush1.msra.mxu0 0.0
  %8614 = vmatprep.subr.mxu0 0.0
  %8615 = vmatpush1.msra.mxu0 0.0
  %8616 = vmatprep.subr.mxu0 0.0
  %8617 = vmatpush1.msra.mxu0 0.0
  %8618 = vmatprep.subr.mxu0 0.0
  %8619 = vmatpush1.msra.mxu0 0.0
  %8620 = vmatprep.subr.mxu0 0.0
  %8621 = vmatpush1.msra.mxu0 0.0
  %8622 = vmatprep.subr.mxu0 0.0
  %8623 = vmatpush1.msra.mxu0 0.0
  %8624 = vmatprep.subr.mxu0 0.0
  %8625 = vmatpush1.msra.mxu0 0.0
  %8626 = vmatprep.subr.mxu0 0.0
  %8627 = vmatpush1.msra.mxu0 0.0
  %8628 = vmatprep.subr.mxu0 0.0
  %8629 = vmatpush1.msra.mxu0 0.0
  %8630 = vmatprep.subr.mxu0 0.0
  %8631 = vmatpush1.msra.mxu0 0.0
  %8632 = vmatprep.subr.mxu0 0.0
  %8633 = vmatpush1.msra.mxu0 0.0
  %8634 = vmatprep.subr.mxu0 0.0
  %8635 = vmatpush1.msra.mxu0 0.0
  %8636 = vmatprep.subr.mxu0 0.0
  %8637 = vmatpush1.msra.mxu0 0.0
  %8638 = vmatprep.subr.mxu0 0.0
  %8639 = vmatpush1.msra.mxu0 0.0
  %8640 = vmatprep.subr.mxu0 0.0
  %8641 = vmatpush1.msra.mxu0 0.0
  %8642 = vmatprep.subr.mxu0 0.0
  %8643 = vmatpush1.msra.mxu0 0.0
  %8644 = vmatprep.subr.mxu0 0.0
  %8645 = vmatpush1.msra.mxu0 0.0
  %8646 = vmatprep.subr.mxu0 0.0
  %8647 = vmatpush1.msra.mxu0 0.0
  %8648 = vmatprep.subr.mxu0 0.0
  %8649 = vmatpush1.msra.mxu0 0.0
  %8650 = vmatprep.subr.mxu0 0.0
  %8651 = vmatpush1.msra.mxu0 0.0
  %8652 = vmatprep.subr.mxu0 0.0
  %8653 = vmatpush1.msra.mxu0 0.0
  %8654 = vmatprep.subr.mxu0 0.0
  %8655 = vmatpush1.msra.mxu0 0.0
  %8656 = vmatprep.mubr.f32.mxu0 0.0
  %8657 = vmatmul.mubr.f32.gmra.mrb[0].mxu0 %v8510
  %v8658 = vpop.f32.mrb[0].mxu0
  %v8659 = vadd.f32 0.0, %v8658
  %v8660 = vpop.f32.mrb[0].mxu0
  %8661 = vdwg.mxu0
  %v8663 = vrot.slane %v8659, 4
  %v8665 = vadd.f32 %v4873, %v8663
  %v8666 = vxor.u32 %v8665, 2147483648
  %v8667 = vmul.f32 %v8666, 1.442695
  %v8668 = vpow.pop %v8667
  %v8669 = vadd.f32 %v8668, 1.0
  %v8670 = vrcp.pop %v8669
  %v8671 = vmul.f32 1.0, %v8670
  %8672 = vmatprep.subr.mxu0 0.0
  %8673 = vmatpush1.msra.mxu0 %v5565
  %8674 = vmatprep.subr.mxu0 0.0
  %8675 = vmatpush1.msra.mxu0 %v5566
  %8676 = vmatprep.subr.mxu0 0.0
  %8677 = vmatpush1.msra.mxu0 %v5567
  %8678 = vmatprep.subr.mxu0 0.0
  %8679 = vmatpush1.msra.mxu0 %v5568
  %8680 = vmatprep.subr.mxu0 0.0
  %8681 = vmatpush1.msra.mxu0 0.0
  %8682 = vmatprep.subr.mxu0 0.0
  %8683 = vmatpush1.msra.mxu0 0.0
  %8684 = vmatprep.subr.mxu0 0.0
  %8685 = vmatpush1.msra.mxu0 0.0
  %8686 = vmatprep.subr.mxu0 0.0
  %8687 = vmatpush1.msra.mxu0 0.0
  %8688 = vmatprep.subr.mxu0 0.0
  %8689 = vmatpush1.msra.mxu0 0.0
  %8690 = vmatprep.subr.mxu0 0.0
  %8691 = vmatpush1.msra.mxu0 0.0
  %8692 = vmatprep.subr.mxu0 0.0
  %8693 = vmatpush1.msra.mxu0 0.0
  %8694 = vmatprep.subr.mxu0 0.0
  %8695 = vmatpush1.msra.mxu0 0.0
  %8696 = vmatprep.subr.mxu0 0.0
  %8697 = vmatpush1.msra.mxu0 0.0
  %8698 = vmatprep.subr.mxu0 0.0
  %8699 = vmatpush1.msra.mxu0 0.0
  %8700 = vmatprep.subr.mxu0 0.0
  %8701 = vmatpush1.msra.mxu0 0.0
  %8702 = vmatprep.subr.mxu0 0.0
  %8703 = vmatpush1.msra.mxu0 0.0
  %8704 = vmatprep.subr.mxu0 0.0
  %8705 = vmatpush1.msra.mxu0 0.0
  %8706 = vmatprep.subr.mxu0 0.0
  %8707 = vmatpush1.msra.mxu0 0.0
  %8708 = vmatprep.subr.mxu0 0.0
  %8709 = vmatpush1.msra.mxu0 0.0
  %8710 = vmatprep.subr.mxu0 0.0
  %8711 = vmatpush1.msra.mxu0 0.0
  %8712 = vmatprep.subr.mxu0 0.0
  %8713 = vmatpush1.msra.mxu0 0.0
  %8714 = vmatprep.subr.mxu0 0.0
  %8715 = vmatpush1.msra.mxu0 0.0
  %8716 = vmatprep.subr.mxu0 0.0
  %8717 = vmatpush1.msra.mxu0 0.0
  %8718 = vmatprep.subr.mxu0 0.0
  %8719 = vmatpush1.msra.mxu0 0.0
  %8720 = vmatprep.subr.mxu0 0.0
  %8721 = vmatpush1.msra.mxu0 0.0
  %8722 = vmatprep.subr.mxu0 0.0
  %8723 = vmatpush1.msra.mxu0 0.0
  %8724 = vmatprep.subr.mxu0 0.0
  %8725 = vmatpush1.msra.mxu0 0.0
  %8726 = vmatprep.subr.mxu0 0.0
  %8727 = vmatpush1.msra.mxu0 0.0
  %8728 = vmatprep.subr.mxu0 0.0
  %8729 = vmatpush1.msra.mxu0 0.0
  %8730 = vmatprep.subr.mxu0 0.0
  %8731 = vmatpush1.msra.mxu0 0.0
  %8732 = vmatprep.subr.mxu0 0.0
  %8733 = vmatpush1.msra.mxu0 0.0
  %8734 = vmatprep.subr.mxu0 0.0
  %8735 = vmatpush1.msra.mxu0 0.0
  %8736 = vmatprep.mubr.f32.mxu0 0.0
  %8737 = vmatmul.mubr.f32.gmra.mrb[0].mxu0 %v8510
  %v8738 = vpop.f32.mrb[0].mxu0
  %v8739 = vadd.f32 %v5746, %v8738
  %v8740 = vpop.f32.mrb[0].mxu0
  %8741 = vdwg.mxu0
  %v8743 = vrot.slane %v8739, 4
  %v8745 = vmul.f32 %v8591, %v8743
  %v8746 = vadd.f32 %v5043, %v8745
  %v8747 = vtanh.pop %v8746
  %v8748 = vsub.f32 1.0, %v8671
  %v8749 = vmul.f32 %v8748, %v8747
  %v8750 = vrot.slane %v8261, 6
  %v8752 = vmul.f32 %v8671, %v8750
  %v8753 = vadd.f32 %v8749, %v8752
  %v8755 = vrot.slane %v8507, 4
  %v8756 = vsel %vm47, %v8755, 0
  %8758 = vmatprep.subr.mxu0 0.0
  %8759 = vmatpush1.msra.mxu0 %v5570
  %8760 = vmatprep.subr.mxu0 0.0
  %8761 = vmatpush1.msra.mxu0 %v5571
  %8762 = vmatprep.subr.mxu0 0.0
  %8763 = vmatpush1.msra.mxu0 %v5572
  %8764 = vmatprep.subr.mxu0 0.0
  %8765 = vmatpush1.msra.mxu0 %v5573
  %8766 = vmatprep.subr.mxu0 0.0
  %8767 = vmatpush1.msra.mxu0 0.0
  %8768 = vmatprep.subr.mxu0 0.0
  %8769 = vmatpush1.msra.mxu0 0.0
  %8770 = vmatprep.subr.mxu0 0.0
  %8771 = vmatpush1.msra.mxu0 0.0
  %8772 = vmatprep.subr.mxu0 0.0
  %8773 = vmatpush1.msra.mxu0 0.0
  %8774 = vmatprep.subr.mxu0 0.0
  %8775 = vmatpush1.msra.mxu0 0.0
  %8776 = vmatprep.subr.mxu0 0.0
  %8777 = vmatpush1.msra.mxu0 0.0
  %8778 = vmatprep.subr.mxu0 0.0
  %8779 = vmatpush1.msra.mxu0 0.0
  %8780 = vmatprep.subr.mxu0 0.0
  %8781 = vmatpush1.msra.mxu0 0.0
  %8782 = vmatprep.subr.mxu0 0.0
  %8783 = vmatpush1.msra.mxu0 0.0
  %8784 = vmatprep.subr.mxu0 0.0
  %8785 = vmatpush1.msra.mxu0 0.0
  %8786 = vmatprep.subr.mxu0 0.0
  %8787 = vmatpush1.msra.mxu0 0.0
  %8788 = vmatprep.subr.mxu0 0.0
  %8789 = vmatpush1.msra.mxu0 0.0
  %8790 = vmatprep.subr.mxu0 0.0
  %8791 = vmatpush1.msra.mxu0 0.0
  %8792 = vmatprep.subr.mxu0 0.0
  %8793 = vmatpush1.msra.mxu0 0.0
  %8794 = vmatprep.subr.mxu0 0.0
  %8795 = vmatpush1.msra.mxu0 0.0
  %8796 = vmatprep.subr.mxu0 0.0
  %8797 = vmatpush1.msra.mxu0 0.0
  %8798 = vmatprep.subr.mxu0 0.0
  %8799 = vmatpush1.msra.mxu0 0.0
  %8800 = vmatprep.subr.mxu0 0.0
  %8801 = vmatpush1.msra.mxu0 0.0
  %8802 = vmatprep.subr.mxu0 0.0
  %8803 = vmatpush1.msra.mxu0 0.0
  %8804 = vmatprep.subr.mxu0 0.0
  %8805 = vmatpush1.msra.mxu0 0.0
  %8806 = vmatprep.subr.mxu0 0.0
  %8807 = vmatpush1.msra.mxu0 0.0
  %8808 = vmatprep.subr.mxu0 0.0
  %8809 = vmatpush1.msra.mxu0 0.0
  %8810 = vmatprep.subr.mxu0 0.0
  %8811 = vmatpush1.msra.mxu0 0.0
  %8812 = vmatprep.subr.mxu0 0.0
  %8813 = vmatpush1.msra.mxu0 0.0
  %8814 = vmatprep.subr.mxu0 0.0
  %8815 = vmatpush1.msra.mxu0 0.0
  %8816 = vmatprep.subr.mxu0 0.0
  %8817 = vmatpush1.msra.mxu0 0.0
  %8818 = vmatprep.subr.mxu0 0.0
  %8819 = vmatpush1.msra.mxu0 0.0
  %8820 = vmatprep.subr.mxu0 0.0
  %8821 = vmatpush1.msra.mxu0 0.0
  %8822 = vmatprep.mubr.f32.mxu0 0.0
  %8823 = vmatmul.mubr.f32.gmra.mrb[0].mxu0 %v8756
  %v8824 = vpop.f32.mrb[0].mxu0
  %v8825 = vadd.f32 0.0, %v8824
  %v8826 = vpop.f32.mrb[0].mxu0
  %8827 = vdwg.mxu0
  %v8829 = vrot.slane %v8825, 6
  %v8831 = vadd.f32 %v5212, %v8829
  %v8832 = vxor.u32 %v8831, 2147483648
  %v8833 = vmul.f32 %v8832, 1.442695
  %v8834 = vpow.pop %v8833
  %v8835 = vadd.f32 %v8834, 1.0
  %v8836 = vrcp.pop %v8835
  %v8837 = vmul.f32 1.0, %v8836
  %8838 = vmatprep.subr.mxu0 0.0
  %8839 = vmatpush1.msra.mxu0 %v5575
  %8840 = vmatprep.subr.mxu0 0.0
  %8841 = vmatpush1.msra.mxu0 %v5576
  %8842 = vmatprep.subr.mxu0 0.0
  %8843 = vmatpush1.msra.mxu0 %v5577
  %8844 = vmatprep.subr.mxu0 0.0
  %8845 = vmatpush1.msra.mxu0 %v5578
  %8846 = vmatprep.subr.mxu0 0.0
  %8847 = vmatpush1.msra.mxu0 0.0
  %8848 = vmatprep.subr.mxu0 0.0
  %8849 = vmatpush1.msra.mxu0 0.0
  %8850 = vmatprep.subr.mxu0 0.0
  %8851 = vmatpush1.msra.mxu0 0.0
  %8852 = vmatprep.subr.mxu0 0.0
  %8853 = vmatpush1.msra.mxu0 0.0
  %8854 = vmatprep.subr.mxu0 0.0
  %8855 = vmatpush1.msra.mxu0 0.0
  %8856 = vmatprep.subr.mxu0 0.0
  %8857 = vmatpush1.msra.mxu0 0.0
  %8858 = vmatprep.subr.mxu0 0.0
  %8859 = vmatpush1.msra.mxu0 0.0
  %8860 = vmatprep.subr.mxu0 0.0
  %8861 = vmatpush1.msra.mxu0 0.0
  %8862 = vmatprep.subr.mxu0 0.0
  %8863 = vmatpush1.msra.mxu0 0.0
  %8864 = vmatprep.subr.mxu0 0.0
  %8865 = vmatpush1.msra.mxu0 0.0
  %8866 = vmatprep.subr.mxu0 0.0
  %8867 = vmatpush1.msra.mxu0 0.0
  %8868 = vmatprep.subr.mxu0 0.0
  %8869 = vmatpush1.msra.mxu0 0.0
  %8870 = vmatprep.subr.mxu0 0.0
  %8871 = vmatpush1.msra.mxu0 0.0
  %8872 = vmatprep.subr.mxu0 0.0
  %8873 = vmatpush1.msra.mxu0 0.0
  %8874 = vmatprep.subr.mxu0 0.0
  %8875 = vmatpush1.msra.mxu0 0.0
  %8876 = vmatprep.subr.mxu0 0.0
  %8877 = vmatpush1.msra.mxu0 0.0
  %8878 = vmatprep.subr.mxu0 0.0
  %8879 = vmatpush1.msra.mxu0 0.0
  %8880 = vmatprep.subr.mxu0 0.0
  %8881 = vmatpush1.msra.mxu0 0.0
  %8882 = vmatprep.subr.mxu0 0.0
  %8883 = vmatpush1.msra.mxu0 0.0
  %8884 = vmatprep.subr.mxu0 0.0
  %8885 = vmatpush1.msra.mxu0 0.0
  %8886 = vmatprep.subr.mxu0 0.0
  %8887 = vmatpush1.msra.mxu0 0.0
  %8888 = vmatprep.subr.mxu0 0.0
  %8889 = vmatpush1.msra.mxu0 0.0
  %8890 = vmatprep.subr.mxu0 0.0
  %8891 = vmatpush1.msra.mxu0 0.0
  %8892 = vmatprep.subr.mxu0 0.0
  %8893 = vmatpush1.msra.mxu0 0.0
  %8894 = vmatprep.subr.mxu0 0.0
  %8895 = vmatpush1.msra.mxu0 0.0
  %8896 = vmatprep.subr.mxu0 0.0
  %8897 = vmatpush1.msra.mxu0 0.0
  %8898 = vmatprep.subr.mxu0 0.0
  %8899 = vmatpush1.msra.mxu0 0.0
  %8900 = vmatprep.subr.mxu0 0.0
  %8901 = vmatpush1.msra.mxu0 0.0
  %8902 = vmatprep.mubr.f32.mxu0 0.0
  %8903 = vmatmul.mubr.f32.gmra.mrb[0].mxu0 %v8756
  %v8904 = vpop.f32.mrb[0].mxu0
  %v8905 = vadd.f32 0.0, %v8904
  %v8906 = vpop.f32.mrb[0].mxu0
  %8907 = vdwg.mxu0
  %v8909 = vrot.slane %v8905, 6
  %v8911 = vadd.f32 %v5382, %v8909
  %v8912 = vxor.u32 %v8911, 2147483648
  %v8913 = vmul.f32 %v8912, 1.442695
  %v8914 = vpow.pop %v8913
  %v8915 = vadd.f32 %v8914, 1.0
  %v8916 = vrcp.pop %v8915
  %v8917 = vmul.f32 1.0, %v8916
  %8918 = vmatprep.subr.mxu0 0.0
  %8919 = vmatpush1.msra.mxu0 %v5580
  %8920 = vmatprep.subr.mxu0 0.0
  %8921 = vmatpush1.msra.mxu0 %v5581
  %8922 = vmatprep.subr.mxu0 0.0
  %8923 = vmatpush1.msra.mxu0 %v5582
  %8924 = vmatprep.subr.mxu0 0.0
  %8925 = vmatpush1.msra.mxu0 %v5583
  %8926 = vmatprep.subr.mxu0 0.0
  %8927 = vmatpush1.msra.mxu0 0.0
  %8928 = vmatprep.subr.mxu0 0.0
  %8929 = vmatpush1.msra.mxu0 0.0
  %8930 = vmatprep.subr.mxu0 0.0
  %8931 = vmatpush1.msra.mxu0 0.0
  %8932 = vmatprep.subr.mxu0 0.0
  %8933 = vmatpush1.msra.mxu0 0.0
  %8934 = vmatprep.subr.mxu0 0.0
  %8935 = vmatpush1.msra.mxu0 0.0
  %8936 = vmatprep.subr.mxu0 0.0
  %8937 = vmatpush1.msra.mxu0 0.0
  %8938 = vmatprep.subr.mxu0 0.0
  %8939 = vmatpush1.msra.mxu0 0.0
  %8940 = vmatprep.subr.mxu0 0.0
  %8941 = vmatpush1.msra.mxu0 0.0
  %8942 = vmatprep.subr.mxu0 0.0
  %8943 = vmatpush1.msra.mxu0 0.0
  %8944 = vmatprep.subr.mxu0 0.0
  %8945 = vmatpush1.msra.mxu0 0.0
  %8946 = vmatprep.subr.mxu0 0.0
  %8947 = vmatpush1.msra.mxu0 0.0
  %8948 = vmatprep.subr.mxu0 0.0
  %8949 = vmatpush1.msra.mxu0 0.0
  %8950 = vmatprep.subr.mxu0 0.0
  %8951 = vmatpush1.msra.mxu0 0.0
  %8952 = vmatprep.subr.mxu0 0.0
  %8953 = vmatpush1.msra.mxu0 0.0
  %8954 = vmatprep.subr.mxu0 0.0
  %8955 = vmatpush1.msra.mxu0 0.0
  %8956 = vmatprep.subr.mxu0 0.0
  %8957 = vmatpush1.msra.mxu0 0.0
  %8958 = vmatprep.subr.mxu0 0.0
  %8959 = vmatpush1.msra.mxu0 0.0
  %8960 = vmatprep.subr.mxu0 0.0
  %8961 = vmatpush1.msra.mxu0 0.0
  %8962 = vmatprep.subr.mxu0 0.0
  %8963 = vmatpush1.msra.mxu0 0.0
  %8964 = vmatprep.subr.mxu0 0.0
  %8965 = vmatpush1.msra.mxu0 0.0
  %8966 = vmatprep.subr.mxu0 0.0
  %8967 = vmatpush1.msra.mxu0 0.0
  %8968 = vmatprep.subr.mxu0 0.0
  %8969 = vmatpush1.msra.mxu0 0.0
  %8970 = vmatprep.subr.mxu0 0.0
  %8971 = vmatpush1.msra.mxu0 0.0
  %8972 = vmatprep.subr.mxu0 0.0
  %8973 = vmatpush1.msra.mxu0 0.0
  %8974 = vmatprep.subr.mxu0 0.0
  %8975 = vmatpush1.msra.mxu0 0.0
  %8976 = vmatprep.subr.mxu0 0.0
  %8977 = vmatpush1.msra.mxu0 0.0
  %8978 = vmatprep.subr.mxu0 0.0
  %8979 = vmatpush1.msra.mxu0 0.0
  %8980 = vmatprep.subr.mxu0 0.0
  %8981 = vmatpush1.msra.mxu0 0.0
  %8982 = vmatprep.mubr.f32.mxu0 0.0
  %8983 = vmatmul.mubr.f32.gmra.mrb[0].mxu0 %v8756
  %v8984 = vpop.f32.mrb[0].mxu0
  %v8985 = vadd.f32 %v5989, %v8984
  %v8986 = vpop.f32.mrb[0].mxu0
  %8987 = vdwg.mxu0
  %v8989 = vrot.slane %v8985, 6
  %v8991 = vmul.f32 %v8837, %v8989
  %v8992 = vadd.f32 %v5552, %v8991
  %v8993 = vtanh.pop %v8992
  %v8994 = vsub.f32 1.0, %v8917
  %v8995 = vmul.f32 %v8994, %v8993
  %v8996 = vrot.slane %v8507, 2
  %v8998 = vmul.f32 %v8917, %v8996
  %v8999 = vadd.f32 %v8995, %v8998
  %v9001 = vrot.slane %v8753, 4
  %v9002 = vsel %vm47, %v9001, 0
  %9004 = vmatprep.subr.mxu0 0.0
  %9005 = vmatpush1.msra.mxu0 %v5555
  %9006 = vmatprep.subr.mxu0 0.0
  %9007 = vmatpush1.msra.mxu0 %v5556
  %9008 = vmatprep.subr.mxu0 0.0
  %9009 = vmatpush1.msra.mxu0 %v5557
  %9010 = vmatprep.subr.mxu0 0.0
  %9011 = vmatpush1.msra.mxu0 %v5558
  %9012 = vmatprep.subr.mxu0 0.0
  %9013 = vmatpush1.msra.mxu0 0.0
  %9014 = vmatprep.subr.mxu0 0.0
  %9015 = vmatpush1.msra.mxu0 0.0
  %9016 = vmatprep.subr.mxu0 0.0
  %9017 = vmatpush1.msra.mxu0 0.0
  %9018 = vmatprep.subr.mxu0 0.0
  %9019 = vmatpush1.msra.mxu0 0.0
  %9020 = vmatprep.subr.mxu0 0.0
  %9021 = vmatpush1.msra.mxu0 0.0
  %9022 = vmatprep.subr.mxu0 0.0
  %9023 = vmatpush1.msra.mxu0 0.0
  %9024 = vmatprep.subr.mxu0 0.0
  %9025 = vmatpush1.msra.mxu0 0.0
  %9026 = vmatprep.subr.mxu0 0.0
  %9027 = vmatpush1.msra.mxu0 0.0
  %9028 = vmatprep.subr.mxu0 0.0
  %9029 = vmatpush1.msra.mxu0 0.0
  %9030 = vmatprep.subr.mxu0 0.0
  %9031 = vmatpush1.msra.mxu0 0.0
  %9032 = vmatprep.subr.mxu0 0.0
  %9033 = vmatpush1.msra.mxu0 0.0
  %9034 = vmatprep.subr.mxu0 0.0
  %9035 = vmatpush1.msra.mxu0 0.0
  %9036 = vmatprep.subr.mxu0 0.0
  %9037 = vmatpush1.msra.mxu0 0.0
  %9038 = vmatprep.subr.mxu0 0.0
  %9039 = vmatpush1.msra.mxu0 0.0
  %9040 = vmatprep.subr.mxu0 0.0
  %9041 = vmatpush1.msra.mxu0 0.0
  %9042 = vmatprep.subr.mxu0 0.0
  %9043 = vmatpush1.msra.mxu0 0.0
  %9044 = vmatprep.subr.mxu0 0.0
  %9045 = vmatpush1.msra.mxu0 0.0
  %9046 = vmatprep.subr.mxu0 0.0
  %9047 = vmatpush1.msra.mxu0 0.0
  %9048 = vmatprep.subr.mxu0 0.0
  %9049 = vmatpush1.msra.mxu0 0.0
  %9050 = vmatprep.subr.mxu0 0.0
  %9051 = vmatpush1.msra.mxu0 0.0
  %9052 = vmatprep.subr.mxu0 0.0
  %9053 = vmatpush1.msra.mxu0 0.0
  %9054 = vmatprep.subr.mxu0 0.0
  %9055 = vmatpush1.msra.mxu0 0.0
  %9056 = vmatprep.subr.mxu0 0.0
  %9057 = vmatpush1.msra.mxu0 0.0
  %9058 = vmatprep.subr.mxu0 0.0
  %9059 = vmatpush1.msra.mxu0 0.0
  %9060 = vmatprep.subr.mxu0 0.0
  %9061 = vmatpush1.msra.mxu0 0.0
  %9062 = vmatprep.subr.mxu0 0.0
  %9063 = vmatpush1.msra.mxu0 0.0
  %9064 = vmatprep.subr.mxu0 0.0
  %9065 = vmatpush1.msra.mxu0 0.0
  %9066 = vmatprep.subr.mxu0 0.0
  %9067 = vmatpush1.msra.mxu0 0.0
  %9068 = vmatprep.mubr.f32.mxu0 0.0
  %9069 = vmatmul.mubr.f32.gmra.mrb[0].mxu0 %v9002
  %v9070 = vpop.f32.mrb[0].mxu0
  %v9071 = vadd.f32 0.0, %v9070
  %v9072 = vpop.f32.mrb[0].mxu0
  %9073 = vdwg.mxu0
  %v9075 = vrot.slane %v9071, 2
  %v9077 = vadd.f32 %v4703, %v9075
  %v9078 = vxor.u32 %v9077, 2147483648
  %v9079 = vmul.f32 %v9078, 1.442695
  %v9080 = vpow.pop %v9079
  %v9081 = vadd.f32 %v9080, 1.0
  %v9082 = vrcp.pop %v9081
  %v9083 = vmul.f32 1.0, %v9082
  %9084 = vmatprep.subr.mxu0 0.0
  %9085 = vmatpush1.msra.mxu0 %v5560
  %9086 = vmatprep.subr.mxu0 0.0
  %9087 = vmatpush1.msra.mxu0 %v5561
  %9088 = vmatprep.subr.mxu0 0.0
  %9089 = vmatpush1.msra.mxu0 %v5562
  %9090 = vmatprep.subr.mxu0 0.0
  %9091 = vmatpush1.msra.mxu0 %v5563
  %9092 = vmatprep.subr.mxu0 0.0
  %9093 = vmatpush1.msra.mxu0 0.0
  %9094 = vmatprep.subr.mxu0 0.0
  %9095 = vmatpush1.msra.mxu0 0.0
  %9096 = vmatprep.subr.mxu0 0.0
  %9097 = vmatpush1.msra.mxu0 0.0
  %9098 = vmatprep.subr.mxu0 0.0
  %9099 = vmatpush1.msra.mxu0 0.0
  %9100 = vmatprep.subr.mxu0 0.0
  %9101 = vmatpush1.msra.mxu0 0.0
  %9102 = vmatprep.subr.mxu0 0.0
  %9103 = vmatpush1.msra.mxu0 0.0
  %9104 = vmatprep.subr.mxu0 0.0
  %9105 = vmatpush1.msra.mxu0 0.0
  %9106 = vmatprep.subr.mxu0 0.0
  %9107 = vmatpush1.msra.mxu0 0.0
  %9108 = vmatprep.subr.mxu0 0.0
  %9109 = vmatpush1.msra.mxu0 0.0
  %9110 = vmatprep.subr.mxu0 0.0
  %9111 = vmatpush1.msra.mxu0 0.0
  %9112 = vmatprep.subr.mxu0 0.0
  %9113 = vmatpush1.msra.mxu0 0.0
  %9114 = vmatprep.subr.mxu0 0.0
  %9115 = vmatpush1.msra.mxu0 0.0
  %9116 = vmatprep.subr.mxu0 0.0
  %9117 = vmatpush1.msra.mxu0 0.0
  %9118 = vmatprep.subr.mxu0 0.0
  %9119 = vmatpush1.msra.mxu0 0.0
  %9120 = vmatprep.subr.mxu0 0.0
  %9121 = vmatpush1.msra.mxu0 0.0
  %9122 = vmatprep.subr.mxu0 0.0
  %9123 = vmatpush1.msra.mxu0 0.0
  %9124 = vmatprep.subr.mxu0 0.0
  %9125 = vmatpush1.msra.mxu0 0.0
  %9126 = vmatprep.subr.mxu0 0.0
  %9127 = vmatpush1.msra.mxu0 0.0
  %9128 = vmatprep.subr.mxu0 0.0
  %9129 = vmatpush1.msra.mxu0 0.0
  %9130 = vmatprep.subr.mxu0 0.0
  %9131 = vmatpush1.msra.mxu0 0.0
  %9132 = vmatprep.subr.mxu0 0.0
  %9133 = vmatpush1.msra.mxu0 0.0
  %9134 = vmatprep.subr.mxu0 0.0
  %9135 = vmatpush1.msra.mxu0 0.0
  %9136 = vmatprep.subr.mxu0 0.0
  %9137 = vmatpush1.msra.mxu0 0.0
  %9138 = vmatprep.subr.mxu0 0.0
  %9139 = vmatpush1.msra.mxu0 0.0
  %9140 = vmatprep.subr.mxu0 0.0
  %9141 = vmatpush1.msra.mxu0 0.0
  %9142 = vmatprep.subr.mxu0 0.0
  %9143 = vmatpush1.msra.mxu0 0.0
  %9144 = vmatprep.subr.mxu0 0.0
  %9145 = vmatpush1.msra.mxu0 0.0
  %9146 = vmatprep.subr.mxu0 0.0
  %9147 = vmatpush1.msra.mxu0 0.0
  %9148 = vmatprep.mubr.f32.mxu0 0.0
  %9149 = vmatmul.mubr.f32.gmra.mrb[0].mxu0 %v9002
  %v9150 = vpop.f32.mrb[0].mxu0
  %v9151 = vadd.f32 0.0, %v9150
  %v9152 = vpop.f32.mrb[0].mxu0
  %9153 = vdwg.mxu0
  %v9155 = vrot.slane %v9151, 2
  %v9157 = vadd.f32 %v4873, %v9155
  %v9158 = vxor.u32 %v9157, 2147483648
  %v9159 = vmul.f32 %v9158, 1.442695
  %v9160 = vpow.pop %v9159
  %v9161 = vadd.f32 %v9160, 1.0
  %v9162 = vrcp.pop %v9161
  %v9163 = vmul.f32 1.0, %v9162
  %9164 = vmatprep.subr.mxu0 0.0
  %9165 = vmatpush1.msra.mxu0 %v5565
  %9166 = vmatprep.subr.mxu0 0.0
  %9167 = vmatpush1.msra.mxu0 %v5566
  %9168 = vmatprep.subr.mxu0 0.0
  %9169 = vmatpush1.msra.mxu0 %v5567
  %9170 = vmatprep.subr.mxu0 0.0
  %9171 = vmatpush1.msra.mxu0 %v5568
  %9172 = vmatprep.subr.mxu0 0.0
  %9173 = vmatpush1.msra.mxu0 0.0
  %9174 = vmatprep.subr.mxu0 0.0
  %9175 = vmatpush1.msra.mxu0 0.0
  %9176 = vmatprep.subr.mxu0 0.0
  %9177 = vmatpush1.msra.mxu0 0.0
  %9178 = vmatprep.subr.mxu0 0.0
  %9179 = vmatpush1.msra.mxu0 0.0
  %9180 = vmatprep.subr.mxu0 0.0
  %9181 = vmatpush1.msra.mxu0 0.0
  %9182 = vmatprep.subr.mxu0 0.0
  %9183 = vmatpush1.msra.mxu0 0.0
  %9184 = vmatprep.subr.mxu0 0.0
  %9185 = vmatpush1.msra.mxu0 0.0
  %9186 = vmatprep.subr.mxu0 0.0
  %9187 = vmatpush1.msra.mxu0 0.0
  %9188 = vmatprep.subr.mxu0 0.0
  %9189 = vmatpush1.msra.mxu0 0.0
  %9190 = vmatprep.subr.mxu0 0.0
  %9191 = vmatpush1.msra.mxu0 0.0
  %9192 = vmatprep.subr.mxu0 0.0
  %9193 = vmatpush1.msra.mxu0 0.0
  %9194 = vmatprep.subr.mxu0 0.0
  %9195 = vmatpush1.msra.mxu0 0.0
  %9196 = vmatprep.subr.mxu0 0.0
  %9197 = vmatpush1.msra.mxu0 0.0
  %9198 = vmatprep.subr.mxu0 0.0
  %9199 = vmatpush1.msra.mxu0 0.0
  %9200 = vmatprep.subr.mxu0 0.0
  %9201 = vmatpush1.msra.mxu0 0.0
  %9202 = vmatprep.subr.mxu0 0.0
  %9203 = vmatpush1.msra.mxu0 0.0
  %9204 = vmatprep.subr.mxu0 0.0
  %9205 = vmatpush1.msra.mxu0 0.0
  %9206 = vmatprep.subr.mxu0 0.0
  %9207 = vmatpush1.msra.mxu0 0.0
  %9208 = vmatprep.subr.mxu0 0.0
  %9209 = vmatpush1.msra.mxu0 0.0
  %9210 = vmatprep.subr.mxu0 0.0
  %9211 = vmatpush1.msra.mxu0 0.0
  %9212 = vmatprep.subr.mxu0 0.0
  %9213 = vmatpush1.msra.mxu0 0.0
  %9214 = vmatprep.subr.mxu0 0.0
  %9215 = vmatpush1.msra.mxu0 0.0
  %9216 = vmatprep.subr.mxu0 0.0
  %9217 = vmatpush1.msra.mxu0 0.0
  %9218 = vmatprep.subr.mxu0 0.0
  %9219 = vmatpush1.msra.mxu0 0.0
  %9220 = vmatprep.subr.mxu0 0.0
  %9221 = vmatpush1.msra.mxu0 0.0
  %9222 = vmatprep.subr.mxu0 0.0
  %9223 = vmatpush1.msra.mxu0 0.0
  %9224 = vmatprep.subr.mxu0 0.0
  %9225 = vmatpush1.msra.mxu0 0.0
  %9226 = vmatprep.subr.mxu0 0.0
  %9227 = vmatpush1.msra.mxu0 0.0
  %9228 = vmatprep.mubr.f32.mxu0 0.0
  %9229 = vmatmul.mubr.f32.gmra.mrb[0].mxu0 %v9002
  %v9230 = vpop.f32.mrb[0].mxu0
  %v9231 = vadd.f32 %v5746, %v9230
  %v9232 = vpop.f32.mrb[0].mxu0
  %9233 = vdwg.mxu0
  %v9235 = vrot.slane %v9231, 2
  %v9237 = vmul.f32 %v9083, %v9235
  %v9238 = vadd.f32 %v5043, %v9237
  %v9239 = vtanh.pop %v9238
  %v9240 = vsub.f32 1.0, %v9163
  %v9241 = vmul.f32 %v9240, %v9239
  %v9242 = vrot.slane %v8753, 6
  %v9244 = vmul.f32 %v9163, %v9242
  %v9245 = vadd.f32 %v9241, %v9244
  %v9247 = vrot.slane %v8999, 2
  %v9248 = vsel %vm47, %v9247, 0
  %9250 = vmatprep.subr.mxu0 0.0
  %9251 = vmatpush1.msra.mxu0 %v5570
  %9252 = vmatprep.subr.mxu0 0.0
  %9253 = vmatpush1.msra.mxu0 %v5571
  %9254 = vmatprep.subr.mxu0 0.0
  %9255 = vmatpush1.msra.mxu0 %v5572
  %9256 = vmatprep.subr.mxu0 0.0
  %9257 = vmatpush1.msra.mxu0 %v5573
  %9258 = vmatprep.subr.mxu0 0.0
  %9259 = vmatpush1.msra.mxu0 0.0
  %9260 = vmatprep.subr.mxu0 0.0
  %9261 = vmatpush1.msra.mxu0 0.0
  %9262 = vmatprep.subr.mxu0 0.0
  %9263 = vmatpush1.msra.mxu0 0.0
  %9264 = vmatprep.subr.mxu0 0.0
  %9265 = vmatpush1.msra.mxu0 0.0
  %9266 = vmatprep.subr.mxu0 0.0
  %9267 = vmatpush1.msra.mxu0 0.0
  %9268 = vmatprep.subr.mxu0 0.0
  %9269 = vmatpush1.msra.mxu0 0.0
  %9270 = vmatprep.subr.mxu0 0.0
  %9271 = vmatpush1.msra.mxu0 0.0
  %9272 = vmatprep.subr.mxu0 0.0
  %9273 = vmatpush1.msra.mxu0 0.0
  %9274 = vmatprep.subr.mxu0 0.0
  %9275 = vmatpush1.msra.mxu0 0.0
  %9276 = vmatprep.subr.mxu0 0.0
  %9277 = vmatpush1.msra.mxu0 0.0
  %9278 = vmatprep.subr.mxu0 0.0
  %9279 = vmatpush1.msra.mxu0 0.0
  %9280 = vmatprep.subr.mxu0 0.0
  %9281 = vmatpush1.msra.mxu0 0.0
  %9282 = vmatprep.subr.mxu0 0.0
  %9283 = vmatpush1.msra.mxu0 0.0
  %9284 = vmatprep.subr.mxu0 0.0
  %9285 = vmatpush1.msra.mxu0 0.0
  %9286 = vmatprep.subr.mxu0 0.0
  %9287 = vmatpush1.msra.mxu0 0.0
  %9288 = vmatprep.subr.mxu0 0.0
  %9289 = vmatpush1.msra.mxu0 0.0
  %9290 = vmatprep.subr.mxu0 0.0
  %9291 = vmatpush1.msra.mxu0 0.0
  %9292 = vmatprep.subr.mxu0 0.0
  %9293 = vmatpush1.msra.mxu0 0.0
  %9294 = vmatprep.subr.mxu0 0.0
  %9295 = vmatpush1.msra.mxu0 0.0
  %9296 = vmatprep.subr.mxu0 0.0
  %9297 = vmatpush1.msra.mxu0 0.0
  %9298 = vmatprep.subr.mxu0 0.0
  %9299 = vmatpush1.msra.mxu0 0.0
  %9300 = vmatprep.subr.mxu0 0.0
  %9301 = vmatpush1.msra.mxu0 0.0
  %9302 = vmatprep.subr.mxu0 0.0
  %9303 = vmatpush1.msra.mxu0 0.0
  %9304 = vmatprep.subr.mxu0 0.0
  %9305 = vmatpush1.msra.mxu0 0.0
  %9306 = vmatprep.subr.mxu0 0.0
  %9307 = vmatpush1.msra.mxu0 0.0
  %9308 = vmatprep.subr.mxu0 0.0
  %9309 = vmatpush1.msra.mxu0 0.0
  %9310 = vmatprep.subr.mxu0 0.0
  %9311 = vmatpush1.msra.mxu0 0.0
  %9312 = vmatprep.subr.mxu0 0.0
  %9313 = vmatpush1.msra.mxu0 0.0
  %9314 = vmatprep.mubr.f32.mxu0 0.0
  %9315 = vmatmul.mubr.f32.gmra.mrb[0].mxu0 %v9248
  %v9316 = vpop.f32.mrb[0].mxu0
  %v9317 = vadd.f32 0.0, %v9316
  %v9318 = vpop.f32.mrb[0].mxu0
  %9319 = vdwg.mxu0
  %v9320 = vadd.f32 %v5212, %v9317
  %v9321 = vxor.u32 %v9320, 2147483648
  %v9322 = vmul.f32 %v9321, 1.442695
  %v9323 = vpow.pop %v9322
  %v9324 = vadd.f32 %v9323, 1.0
  %v9325 = vrcp.pop %v9324
  %v9326 = vmul.f32 1.0, %v9325
  %9327 = vmatprep.subr.mxu0 0.0
  %9328 = vmatpush1.msra.mxu0 %v5575
  %9329 = vmatprep.subr.mxu0 0.0
  %9330 = vmatpush1.msra.mxu0 %v5576
  %9331 = vmatprep.subr.mxu0 0.0
  %9332 = vmatpush1.msra.mxu0 %v5577
  %9333 = vmatprep.subr.mxu0 0.0
  %9334 = vmatpush1.msra.mxu0 %v5578
  %9335 = vmatprep.subr.mxu0 0.0
  %9336 = vmatpush1.msra.mxu0 0.0
  %9337 = vmatprep.subr.mxu0 0.0
  %9338 = vmatpush1.msra.mxu0 0.0
  %9339 = vmatprep.subr.mxu0 0.0
  %9340 = vmatpush1.msra.mxu0 0.0
  %9341 = vmatprep.subr.mxu0 0.0
  %9342 = vmatpush1.msra.mxu0 0.0
  %9343 = vmatprep.subr.mxu0 0.0
  %9344 = vmatpush1.msra.mxu0 0.0
  %9345 = vmatprep.subr.mxu0 0.0
  %9346 = vmatpush1.msra.mxu0 0.0
  %9347 = vmatprep.subr.mxu0 0.0
  %9348 = vmatpush1.msra.mxu0 0.0
  %9349 = vmatprep.subr.mxu0 0.0
  %9350 = vmatpush1.msra.mxu0 0.0
  %9351 = vmatprep.subr.mxu0 0.0
  %9352 = vmatpush1.msra.mxu0 0.0
  %9353 = vmatprep.subr.mxu0 0.0
  %9354 = vmatpush1.msra.mxu0 0.0
  %9355 = vmatprep.subr.mxu0 0.0
  %9356 = vmatpush1.msra.mxu0 0.0
  %9357 = vmatprep.subr.mxu0 0.0
  %9358 = vmatpush1.msra.mxu0 0.0
  %9359 = vmatprep.subr.mxu0 0.0
  %9360 = vmatpush1.msra.mxu0 0.0
  %9361 = vmatprep.subr.mxu0 0.0
  %9362 = vmatpush1.msra.mxu0 0.0
  %9363 = vmatprep.subr.mxu0 0.0
  %9364 = vmatpush1.msra.mxu0 0.0
  %9365 = vmatprep.subr.mxu0 0.0
  %9366 = vmatpush1.msra.mxu0 0.0
  %9367 = vmatprep.subr.mxu0 0.0
  %9368 = vmatpush1.msra.mxu0 0.0
  %9369 = vmatprep.subr.mxu0 0.0
  %9370 = vmatpush1.msra.mxu0 0.0
  %9371 = vmatprep.subr.mxu0 0.0
  %9372 = vmatpush1.msra.mxu0 0.0
  %9373 = vmatprep.subr.mxu0 0.0
  %9374 = vmatpush1.msra.mxu0 0.0
  %9375 = vmatprep.subr.mxu0 0.0
  %9376 = vmatpush1.msra.mxu0 0.0
  %9377 = vmatprep.subr.mxu0 0.0
  %9378 = vmatpush1.msra.mxu0 0.0
  %9379 = vmatprep.subr.mxu0 0.0
  %9380 = vmatpush1.msra.mxu0 0.0
  %9381 = vmatprep.subr.mxu0 0.0
  %9382 = vmatpush1.msra.mxu0 0.0
  %9383 = vmatprep.subr.mxu0 0.0
  %9384 = vmatpush1.msra.mxu0 0.0
  %9385 = vmatprep.subr.mxu0 0.0
  %9386 = vmatpush1.msra.mxu0 0.0
  %9387 = vmatprep.subr.mxu0 0.0
  %9388 = vmatpush1.msra.mxu0 0.0
  %9389 = vmatprep.subr.mxu0 0.0
  %9390 = vmatpush1.msra.mxu0 0.0
  %9391 = vmatprep.mubr.f32.mxu0 0.0
  %9392 = vmatmul.mubr.f32.gmra.mrb[0].mxu0 %v9248
  %v9393 = vpop.f32.mrb[0].mxu0
  %v9394 = vadd.f32 0.0, %v9393
  %v9395 = vpop.f32.mrb[0].mxu0
  %9396 = vdwg.mxu0
  %v9397 = vadd.f32 %v5382, %v9394
  %v9398 = vxor.u32 %v9397, 2147483648
  %v9399 = vmul.f32 %v9398, 1.442695
  %v9400 = vpow.pop %v9399
  %v9401 = vadd.f32 %v9400, 1.0
  %v9402 = vrcp.pop %v9401
  %v9403 = vmul.f32 1.0, %v9402
  %9404 = vmatprep.subr.mxu0 0.0
  %9405 = vmatpush1.msra.mxu0 %v5580
  %9406 = vmatprep.subr.mxu0 0.0
  %9407 = vmatpush1.msra.mxu0 %v5581
  %9408 = vmatprep.subr.mxu0 0.0
  %9409 = vmatpush1.msra.mxu0 %v5582
  %9410 = vmatprep.subr.mxu0 0.0
  %9411 = vmatpush1.msra.mxu0 %v5583
  %9412 = vmatprep.subr.mxu0 0.0
  %9413 = vmatpush1.msra.mxu0 0.0
  %9414 = vmatprep.subr.mxu0 0.0
  %9415 = vmatpush1.msra.mxu0 0.0
  %9416 = vmatprep.subr.mxu0 0.0
  %9417 = vmatpush1.msra.mxu0 0.0
  %9418 = vmatprep.subr.mxu0 0.0
  %9419 = vmatpush1.msra.mxu0 0.0
  %9420 = vmatprep.subr.mxu0 0.0
  %9421 = vmatpush1.msra.mxu0 0.0
  %9422 = vmatprep.subr.mxu0 0.0
  %9423 = vmatpush1.msra.mxu0 0.0
  %9424 = vmatprep.subr.mxu0 0.0
  %9425 = vmatpush1.msra.mxu0 0.0
  %9426 = vmatprep.subr.mxu0 0.0
  %9427 = vmatpush1.msra.mxu0 0.0
  %9428 = vmatprep.subr.mxu0 0.0
  %9429 = vmatpush1.msra.mxu0 0.0
  %9430 = vmatprep.subr.mxu0 0.0
  %9431 = vmatpush1.msra.mxu0 0.0
  %9432 = vmatprep.subr.mxu0 0.0
  %9433 = vmatpush1.msra.mxu0 0.0
  %9434 = vmatprep.subr.mxu0 0.0
  %9435 = vmatpush1.msra.mxu0 0.0
  %9436 = vmatprep.subr.mxu0 0.0
  %9437 = vmatpush1.msra.mxu0 0.0
  %9438 = vmatprep.subr.mxu0 0.0
  %9439 = vmatpush1.msra.mxu0 0.0
  %9440 = vmatprep.subr.mxu0 0.0
  %9441 = vmatpush1.msra.mxu0 0.0
  %9442 = vmatprep.subr.mxu0 0.0
  %9443 = vmatpush1.msra.mxu0 0.0
  %9444 = vmatprep.subr.mxu0 0.0
  %9445 = vmatpush1.msra.mxu0 0.0
  %9446 = vmatprep.subr.mxu0 0.0
  %9447 = vmatpush1.msra.mxu0 0.0
  %9448 = vmatprep.subr.mxu0 0.0
  %9449 = vmatpush1.msra.mxu0 0.0
  %9450 = vmatprep.subr.mxu0 0.0
  %9451 = vmatpush1.msra.mxu0 0.0
  %9452 = vmatprep.subr.mxu0 0.0
  %9453 = vmatpush1.msra.mxu0 0.0
  %9454 = vmatprep.subr.mxu0 0.0
  %9455 = vmatpush1.msra.mxu0 0.0
  %9456 = vmatprep.subr.mxu0 0.0
  %9457 = vmatpush1.msra.mxu0 0.0
  %9458 = vmatprep.subr.mxu0 0.0
  %9459 = vmatpush1.msra.mxu0 0.0
  %9460 = vmatprep.subr.mxu0 0.0
  %9461 = vmatpush1.msra.mxu0 0.0
  %9462 = vmatprep.subr.mxu0 0.0
  %9463 = vmatpush1.msra.mxu0 0.0
  %9464 = vmatprep.subr.mxu0 0.0
  %9465 = vmatpush1.msra.mxu0 0.0
  %9466 = vmatprep.subr.mxu0 0.0
  %9467 = vmatpush1.msra.mxu0 0.0
  %9468 = vmatprep.mubr.f32.mxu0 0.0
  %9469 = vmatmul.mubr.f32.gmra.mrb[0].mxu0 %v9248
  %v9470 = vpop.f32.mrb[0].mxu0
  %v9471 = vadd.f32 %v5989, %v9470
  %v9472 = vpop.f32.mrb[0].mxu0
  %9473 = vdwg.mxu0
  %v9474 = vmul.f32 %v9326, %v9471
  %v9475 = vadd.f32 %v5552, %v9474
  %v9476 = vtanh.pop %v9475
  %v9477 = vsub.f32 1.0, %v9403
  %v9478 = vmul.f32 %v9477, %v9476
  %v9480 = vmul.f32 %v9403, %v9247
  %v9481 = vadd.f32 %v9478, %v9480
  %v9482 = vld [vmem:[%s5] sm:$0xff]
  %v9483 = vld [vmem:[%s5 + $0x8] sm:$0xff]
  %v9484 = vld [vmem:[%s5 + $0x10] sm:$0xff]
  %v9485 = vld [vmem:[%s5 + $0x18] sm:$0xff]
  %s9486 = scalar_lea.vmem %s5, 32
  %v9487 = vld [vmem:[%s9486] sm:$0xff]
  %v9488 = vld [vmem:[%s9486 + $0x8] sm:$0xff]
  %v9489 = vld [vmem:[%s9486 + $0x10] sm:$0xff]
  %v9490 = vld [vmem:[%s9486 + $0x18] sm:$0xff]
  %v9492 = vsel %vm47, %v9481, 0
  %9494 = vmatprep.subr.mxu0 0.0
  %9495 = vmatpush1.msra.mxu0 %v9487
  %9496 = vmatprep.subr.mxu0 0.0
  %9497 = vmatpush1.msra.mxu0 %v9488
  %9498 = vmatprep.subr.mxu0 0.0
  %9499 = vmatpush1.msra.mxu0 %v9489
  %9500 = vmatprep.subr.mxu0 0.0
  %9501 = vmatpush1.msra.mxu0 %v9490
  %9502 = vmatprep.subr.mxu0 0.0
  %9503 = vmatpush1.msra.mxu0 0.0
  %9504 = vmatprep.subr.mxu0 0.0
  %9505 = vmatpush1.msra.mxu0 0.0
  %9506 = vmatprep.subr.mxu0 0.0
  %9507 = vmatpush1.msra.mxu0 0.0
  %9508 = vmatprep.subr.mxu0 0.0
  %9509 = vmatpush1.msra.mxu0 0.0
  %9510 = vmatprep.subr.mxu0 0.0
  %9511 = vmatpush1.msra.mxu0 0.0
  %9512 = vmatprep.subr.mxu0 0.0
  %9513 = vmatpush1.msra.mxu0 0.0
  %9514 = vmatprep.subr.mxu0 0.0
  %9515 = vmatpush1.msra.mxu0 0.0
  %9516 = vmatprep.subr.mxu0 0.0
  %9517 = vmatpush1.msra.mxu0 0.0
  %9518 = vmatprep.subr.mxu0 0.0
  %9519 = vmatpush1.msra.mxu0 0.0
  %9520 = vmatprep.subr.mxu0 0.0
  %9521 = vmatpush1.msra.mxu0 0.0
  %9522 = vmatprep.subr.mxu0 0.0
  %9523 = vmatpush1.msra.mxu0 0.0
  %9524 = vmatprep.subr.mxu0 0.0
  %9525 = vmatpush1.msra.mxu0 0.0
  %9526 = vmatprep.subr.mxu0 0.0
  %9527 = vmatpush1.msra.mxu0 0.0
  %9528 = vmatprep.subr.mxu0 0.0
  %9529 = vmatpush1.msra.mxu0 0.0
  %9530 = vmatprep.subr.mxu0 0.0
  %9531 = vmatpush1.msra.mxu0 0.0
  %9532 = vmatprep.subr.mxu0 0.0
  %9533 = vmatpush1.msra.mxu0 0.0
  %9534 = vmatprep.subr.mxu0 0.0
  %9535 = vmatpush1.msra.mxu0 0.0
  %9536 = vmatprep.subr.mxu0 0.0
  %9537 = vmatpush1.msra.mxu0 0.0
  %9538 = vmatprep.subr.mxu0 0.0
  %9539 = vmatpush1.msra.mxu0 0.0
  %9540 = vmatprep.subr.mxu0 0.0
  %9541 = vmatpush1.msra.mxu0 0.0
  %9542 = vmatprep.subr.mxu0 0.0
  %9543 = vmatpush1.msra.mxu0 0.0
  %9544 = vmatprep.subr.mxu0 0.0
  %9545 = vmatpush1.msra.mxu0 0.0
  %9546 = vmatprep.subr.mxu0 0.0
  %9547 = vmatpush1.msra.mxu0 0.0
  %9548 = vmatprep.subr.mxu0 0.0
  %9549 = vmatpush1.msra.mxu0 0.0
  %9550 = vmatprep.subr.mxu0 0.0
  %9551 = vmatpush1.msra.mxu0 0.0
  %9552 = vmatprep.subr.mxu0 0.0
  %9553 = vmatpush1.msra.mxu0 0.0
  %9554 = vmatprep.subr.mxu0 0.0
  %9555 = vmatpush1.msra.mxu0 0.0
  %9556 = vmatprep.subr.mxu0 0.0
  %9557 = vmatpush1.msra.mxu0 0.0
  %9558 = vmatprep.mubr.f32.mxu0 0.0
  %9559 = vmatmul.mubr.f32.gmra.mrb[0].mxu0 %v9492
  %v9560 = vpop.f32.mrb[0].mxu0
  %v9561 = vadd.f32 0.0, %v9560
  %v9562 = vpop.f32.mrb[0].mxu0
  %9563 = vdwg.mxu0
  %v9565 = vrot.slane %v9245, 6
  %v9566 = vsel %vm47, %v9565, 0
  %9568 = vmatprep.subr.mxu0 0.0
  %9569 = vmatpush1.msra.mxu0 %v9482
  %9570 = vmatprep.subr.mxu0 0.0
  %9571 = vmatpush1.msra.mxu0 %v9483
  %9572 = vmatprep.subr.mxu0 0.0
  %9573 = vmatpush1.msra.mxu0 %v9484
  %9574 = vmatprep.subr.mxu0 0.0
  %9575 = vmatpush1.msra.mxu0 %v9485
  %9576 = vmatprep.subr.mxu0 0.0
  %9577 = vmatpush1.msra.mxu0 0.0
  %9578 = vmatprep.subr.mxu0 0.0
  %9579 = vmatpush1.msra.mxu0 0.0
  %9580 = vmatprep.subr.mxu0 0.0
  %9581 = vmatpush1.msra.mxu0 0.0
  %9582 = vmatprep.subr.mxu0 0.0
  %9583 = vmatpush1.msra.mxu0 0.0
  %9584 = vmatprep.subr.mxu0 0.0
  %9585 = vmatpush1.msra.mxu0 0.0
  %9586 = vmatprep.subr.mxu0 0.0
  %9587 = vmatpush1.msra.mxu0 0.0
  %9588 = vmatprep.subr.mxu0 0.0
  %9589 = vmatpush1.msra.mxu0 0.0
  %9590 = vmatprep.subr.mxu0 0.0
  %9591 = vmatpush1.msra.mxu0 0.0
  %9592 = vmatprep.subr.mxu0 0.0
  %9593 = vmatpush1.msra.mxu0 0.0
  %9594 = vmatprep.subr.mxu0 0.0
  %9595 = vmatpush1.msra.mxu0 0.0
  %9596 = vmatprep.subr.mxu0 0.0
  %9597 = vmatpush1.msra.mxu0 0.0
  %9598 = vmatprep.subr.mxu0 0.0
  %9599 = vmatpush1.msra.mxu0 0.0
  %9600 = vmatprep.subr.mxu0 0.0
  %9601 = vmatpush1.msra.mxu0 0.0
  %9602 = vmatprep.subr.mxu0 0.0
  %9603 = vmatpush1.msra.mxu0 0.0
  %9604 = vmatprep.subr.mxu0 0.0
  %9605 = vmatpush1.msra.mxu0 0.0
  %9606 = vmatprep.subr.mxu0 0.0
  %9607 = vmatpush1.msra.mxu0 0.0
  %9608 = vmatprep.subr.mxu0 0.0
  %9609 = vmatpush1.msra.mxu0 0.0
  %9610 = vmatprep.subr.mxu0 0.0
  %9611 = vmatpush1.msra.mxu0 0.0
  %9612 = vmatprep.subr.mxu0 0.0
  %9613 = vmatpush1.msra.mxu0 0.0
  %9614 = vmatprep.subr.mxu0 0.0
  %9615 = vmatpush1.msra.mxu0 0.0
  %9616 = vmatprep.subr.mxu0 0.0
  %9617 = vmatpush1.msra.mxu0 0.0
  %9618 = vmatprep.subr.mxu0 0.0
  %9619 = vmatpush1.msra.mxu0 0.0
  %9620 = vmatprep.subr.mxu0 0.0
  %9621 = vmatpush1.msra.mxu0 0.0
  %9622 = vmatprep.subr.mxu0 0.0
  %9623 = vmatpush1.msra.mxu0 0.0
  %9624 = vmatprep.subr.mxu0 0.0
  %9625 = vmatpush1.msra.mxu0 0.0
  %9626 = vmatprep.subr.mxu0 0.0
  %9627 = vmatpush1.msra.mxu0 0.0
  %9628 = vmatprep.subr.mxu0 0.0
  %9629 = vmatpush1.msra.mxu0 0.0
  %9630 = vmatprep.subr.mxu0 0.0
  %9631 = vmatpush1.msra.mxu0 0.0
  %9632 = vmatprep.mubr.f32.mxu0 0.0
  %9633 = vmatmul.mubr.f32.gmra.mrb[0].mxu0 %v9566
  %v9634 = vpop.f32.mrb[0].mxu0
  %v9635 = vadd.f32 %v9561, %v9634
  %v9636 = vpop.f32.mrb[0].mxu0
  %9637 = vdwg.mxu0
  %v9638 = vld [vmem:[%s6] sm:$0x1]
  %v9640 = vlaneseq
  %v9641 = vshrl.u32 %v9640, 7
  %v9642 = vsub.s32 0, %v9641
  %v9643 = vrot.slane %v9638, %v9642
  %v9645 = vadd.f32 %v9635, %v9643
  %v9646 = vmax.f32 %v9645, 0.0
  %v9647 = vld [vmem:[%s7] sm:$0xff]
  %v9648 = vld [vmem:[%s7 + $0x8] sm:$0xff]
  %v9649 = vld [vmem:[%s7 + $0x10] sm:$0xff]
  %v9650 = vld [vmem:[%s7 + $0x18] sm:$0xff]
  %v9651 = vld [vmem:[%s7 + $0x20] sm:$0xff]
  %v9652 = vld [vmem:[%s7 + $0x28] sm:$0xff]
  %v9653 = vld [vmem:[%s7 + $0x30] sm:$0xff]
  %v9654 = vld [vmem:[%s7 + $0x38] sm:$0xff]
  %v9655 = vld [vmem:[#allocation4] sm:$0x1]
  %v9657 = vlaneseq
  %v9658 = vshrl.u32 %v9657, 7
  %v9659 = vsub.s32 0, %v9658
  %v9660 = vrot.slane %v9655, %v9659
  %vm9662 = vcmask 523264
  %v9664 = vsel %vm9662, %v9646, 0
  %9666 = vmatprep.subr.mxu0 0.0
  %9667 = vmatpush1.msra.mxu0 %v9647
  %9668 = vmatprep.subr.mxu0 0.0
  %9669 = vmatpush1.msra.mxu0 %v9648
  %9670 = vmatprep.subr.mxu0 0.0
  %9671 = vmatpush1.msra.mxu0 %v9649
  %9672 = vmatprep.subr.mxu0 0.0
  %9673 = vmatpush1.msra.mxu0 %v9650
  %9674 = vmatprep.subr.mxu0 0.0
  %9675 = vmatpush1.msra.mxu0 %v9651
  %9676 = vmatprep.subr.mxu0 0.0
  %9677 = vmatpush1.msra.mxu0 %v9652
  %9678 = vmatprep.subr.mxu0 0.0
  %9679 = vmatpush1.msra.mxu0 %v9653
  %9680 = vmatprep.subr.mxu0 0.0
  %9681 = vmatpush1.msra.mxu0 %v9654
  %9682 = vmatprep.subr.mxu0 0.0
  %9683 = vmatpush1.msra.mxu0 0.0
  %9684 = vmatprep.subr.mxu0 0.0
  %9685 = vmatpush1.msra.mxu0 0.0
  %9686 = vmatprep.subr.mxu0 0.0
  %9687 = vmatpush1.msra.mxu0 0.0
  %9688 = vmatprep.subr.mxu0 0.0
  %9689 = vmatpush1.msra.mxu0 0.0
  %9690 = vmatprep.subr.mxu0 0.0
  %9691 = vmatpush1.msra.mxu0 0.0
  %9692 = vmatprep.subr.mxu0 0.0
  %9693 = vmatpush1.msra.mxu0 0.0
  %9694 = vmatprep.subr.mxu0 0.0
  %9695 = vmatpush1.msra.mxu0 0.0
  %9696 = vmatprep.subr.mxu0 0.0
  %9697 = vmatpush1.msra.mxu0 0.0
  %9698 = vmatprep.subr.mxu0 0.0
  %9699 = vmatpush1.msra.mxu0 0.0
  %9700 = vmatprep.subr.mxu0 0.0
  %9701 = vmatpush1.msra.mxu0 0.0
  %9702 = vmatprep.subr.mxu0 0.0
  %9703 = vmatpush1.msra.mxu0 0.0
  %9704 = vmatprep.subr.mxu0 0.0
  %9705 = vmatpush1.msra.mxu0 0.0
  %9706 = vmatprep.subr.mxu0 0.0
  %9707 = vmatpush1.msra.mxu0 0.0
  %9708 = vmatprep.subr.mxu0 0.0
  %9709 = vmatpush1.msra.mxu0 0.0
  %9710 = vmatprep.subr.mxu0 0.0
  %9711 = vmatpush1.msra.mxu0 0.0
  %9712 = vmatprep.subr.mxu0 0.0
  %9713 = vmatpush1.msra.mxu0 0.0
  %9714 = vmatprep.subr.mxu0 0.0
  %9715 = vmatpush1.msra.mxu0 0.0
  %9716 = vmatprep.subr.mxu0 0.0
  %9717 = vmatpush1.msra.mxu0 0.0
  %9718 = vmatprep.subr.mxu0 0.0
  %9719 = vmatpush1.msra.mxu0 0.0
  %9720 = vmatprep.subr.mxu0 0.0
  %9721 = vmatpush1.msra.mxu0 0.0
  %9722 = vmatprep.subr.mxu0 0.0
  %9723 = vmatpush1.msra.mxu0 0.0
  %9724 = vmatprep.subr.mxu0 0.0
  %9725 = vmatpush1.msra.mxu0 0.0
  %9726 = vmatprep.subr.mxu0 0.0
  %9727 = vmatpush1.msra.mxu0 0.0
  %9728 = vmatprep.subr.mxu0 0.0
  %9729 = vmatpush1.msra.mxu0 0.0
  %9730 = vmatprep.mubr.f32.mxu0 0.0
  %9731 = vmatmul.mubr.f32.gmra.mrb[0].mxu0 %v9664
  %v9732 = vpop.f32.mrb[0].mxu0
  %v9733 = vadd.f32 %v9660, %v9732
  %v9734 = vpop.f32.mrb[0].mxu0
  %9735 = vdwg.mxu0
  %v9736 = vxor.u32 %v9733, 2147483648
  %v9737 = vmul.f32 %v9736, 1.442695
  %v9738 = vpow.pop %v9737
  %v9739 = vadd.f32 %v9738, 1.0
  %v9740 = vrcp.pop %v9739
  %v9741 = vmul.f32 1.0, %v9740
  %vm9742 = vcmask 1024
  %9743 = vst.msk [vmem:[%s9] sm:$0x3] %vm9742, %v9741
  // Predicated region
  $region38: #{disaster_tweets_bigru.1} parent=0 // pred_check
    _
  $region39: #{disaster_tweets_bigru.1} parent=0 // pred_check_branch
    %9745 = sbr.rel (0) target = $region41
  $region40: #{disaster_tweets_bigru.1} parent=0 // pred_region
    _
  $region41: #{disaster_tweets_bigru.1} parent=0 // pred_fallthru
    _
  // Predicated region
  $region42: #{disaster_tweets_bigru.1} parent=0 // pred_check
    _
  $region43: #{disaster_tweets_bigru.1} parent=0 // pred_check_branch
    %9747 = sbr.rel (0) target = $region45
  $region44: #{disaster_tweets_bigru.1} parent=0 // pred_region
    _
  $region45: #{disaster_tweets_bigru.1} parent=0 // pred_fallthru
    _

</llo_original>
